<compile_context>
chip_gen: v6e
topology: v6e:2x2x1
jax: 0.10.0
libtpu: 0.0.40
codegen_flags: <defaults>
</compile_context>

<pallas_src>
import functools

import jax
import jax.numpy as jnp
from jax.experimental import pallas as pl
from jax.experimental.pallas import tpu as pltpu


def rcab_kernel(x_ref, w1_ref, b1_ref, w2_ref, b2_ref,
                wd_ref, bd_ref, wu_ref, bu_ref, o_ref, pad_ref, *, H, W):
    # x_ref  : (1, H*W, Cp) f32   unpadded input slab (channels lane-padded)
    # w*_ref : (9*Cp, Cp)   bf16  im2col conv weights ((dy,dx,cin) row-major)
    # b*_ref : (1, Cp)      f32   conv biases
    # wd/bd  : (1, Cp)/(1,1) f32  squeeze 1x1 conv (C->1)
    # wu/bu  : (1, Cp)/(1, Cp) f32 excite 1x1 conv (1->C)
    # o_ref  : (1, H*W, Cp) f32
    # pad_ref: (H+2, W+2, Cp) bf16 VMEM scratch (zero border + interior activ.)
    Cp = x_ref.shape[-1]
    HW = H * W

    # Zero only the 1-pixel border (interior is fully overwritten below).
    # Done every step (cheap) so it is correct even when the batch grid is
    # sharded across TensorCores.
    zr = jnp.zeros((1, W + 2, Cp), pad_ref.dtype)
    zc = jnp.zeros((H + 2, 1, Cp), pad_ref.dtype)
    pad_ref[0:1, :, :] = zr
    pad_ref[H + 1:H + 2, :, :] = zr
    pad_ref[:, 0:1, :] = zc
    pad_ref[:, W + 1:W + 2, :] = zc

    x = x_ref[0]                                              # (HW, Cp) f32

    def conv3x3(w_ref, b_ref):
        # im2col: gather the 9 shifted taps once, then a single big-K matmul.
        taps = [pad_ref[dy:dy + H, dx:dx + W, :].reshape(HW, Cp)
                for dy in range(3) for dx in range(3)]
        patches = jnp.concatenate(taps, axis=1)               # (HW, 9*Cp) bf16
        return jnp.dot(patches, w_ref[...],
                       preferred_element_type=jnp.float32) + b_ref[...]

    # ---- conv1 (3x3, pad 1) + ReLU ----
    pad_ref[1:H + 1, 1:W + 1, :] = x.reshape(H, W, Cp).astype(pad_ref.dtype)
    r1 = jnp.maximum(conv3x3(w1_ref, b1_ref), 0.0)            # (HW, Cp) f32

    # ---- conv2 (3x3, pad 1) ----
    pad_ref[1:H + 1, 1:W + 1, :] = r1.reshape(H, W, Cp).astype(pad_ref.dtype)
    r2 = conv3x3(w2_ref, b2_ref)                              # (HW, Cp) f32

    # ---- channel attention (C -> 1 -> C squeeze-excite) ----
    pooled = jnp.mean(r2, axis=0, keepdims=True)              # (1, Cp)   AdaptiveAvgPool2d(1)
    d = jnp.sum(pooled * wd_ref[...]) + bd_ref[0, 0]          # scalar    Conv2d(C,1,1)
    d = jnp.maximum(d, 0.0)                                   # ReLU
    u = d * wu_ref[...] + bu_ref[...]                         # (1, Cp)   Conv2d(1,C,1)
    u = jnp.clip(u / 6.0 + 0.5, 0.0, 1.0)                     # Hardsigmoid

    # ---- scale + residual add (lane-dense (HW, Cp) store) ----
    o_ref[0] = (r2 * u + x).astype(o_ref.dtype)


def _vmem_limit_bytes(H, W, Cp):
    hw = H * W
    io_blocks = 2 * 2 * hw * Cp * 4                 # x / out blocks, double-buffered
    weights = 2 * 2 * 9 * Cp * Cp * 2               # two bf16 conv weight slabs
    smalls = 2 * 6 * Cp * 4                         # biases / CA vectors
    scratch = (H + 2) * (W + 2) * Cp * 2            # padded bf16 scratch
    temps = hw * 9 * Cp * 2 + 3 * hw * Cp * 4       # im2col slab + r1/r2/out temps
    need = io_blocks + weights + smalls + scratch + temps
    # Headroom x2, floor 16 MiB, cap 48 MiB (safe on v7x's 64 MiB VMEM).
    return int(min(48 * 2**20, max(16 * 2**20, 2 * need)))


def rcab_forward(x_nchw, p):
    N, C, H, W = x_nchw.shape
    Cp = ((C + 127) // 128) * 128                   # lane-pad channels to 128

    def cpad(a, axes):
        pads = [(0, 0)] * a.ndim
        for ax in axes:
            pads[ax] = (0, Cp - a.shape[ax])
        return jnp.pad(a, pads)

    # NCHW -> NHWC, zero-pad channels, flatten spatial (reshapes in wrapper).
    x = jnp.transpose(x_nchw, (0, 2, 3, 1)).astype(jnp.float32)
    x = cpad(x, (3,)).reshape(N, H * W, Cp)

    # Conv weights: HWIO -> channel-padded -> (9*Cp, Cp) bf16 for im2col matmul.
    w1 = cpad(p["w1"], (2, 3)).reshape(9 * Cp, Cp).astype(jnp.bfloat16)
    w2 = cpad(p["w2"], (2, 3)).reshape(9 * Cp, Cp).astype(jnp.bfloat16)
    b1 = cpad(p["b1"], (1,)).astype(jnp.float32)
    b2 = cpad(p["b2"], (1,)).astype(jnp.float32)
    wd = cpad(p["wd"], (1,)).astype(jnp.float32)
    bd = p["bd"].astype(jnp.float32)
    wu = cpad(p["wu"], (1,)).astype(jnp.float32)
    bu = cpad(p["bu"], (1,)).astype(jnp.float32)

    kernel = functools.partial(rcab_kernel, H=H, W=W)

    out = pl.pallas_call(
        kernel,
        out_shape=jax.ShapeDtypeStruct((N, H * W, Cp), jnp.float32),
        grid_spec=pltpu.PrefetchScalarGridSpec(
            num_scalar_prefetch=0,
            grid=(N,),
            in_specs=[
                pl.BlockSpec((1, H * W, Cp), lambda b: (b, 0, 0)),   # x
                pl.BlockSpec((9 * Cp, Cp), lambda b: (0, 0)),        # w1
                pl.BlockSpec((1, Cp), lambda b: (0, 0)),             # b1
                pl.BlockSpec((9 * Cp, Cp), lambda b: (0, 0)),        # w2
                pl.BlockSpec((1, Cp), lambda b: (0, 0)),             # b2
                pl.BlockSpec((1, Cp), lambda b: (0, 0)),             # wd
                pl.BlockSpec((1, 1), lambda b: (0, 0)),              # bd
                pl.BlockSpec((1, Cp), lambda b: (0, 0)),             # wu
                pl.BlockSpec((1, Cp), lambda b: (0, 0)),             # bu
            ],
            out_specs=pl.BlockSpec((1, H * W, Cp), lambda b: (b, 0, 0)),
            scratch_shapes=[pltpu.VMEM((H + 2, W + 2, Cp), jnp.bfloat16)],
        ),
        compiler_params=pltpu.CompilerParams(
            dimension_semantics=("parallel",),
            vmem_limit_bytes=_vmem_limit_bytes(H, W, Cp),
        ),
    )(x, w1, b1, w2, b2, wd, bd, wu, bu)

    out = out.reshape(N, H, W, Cp)[..., :C]         # drop lane padding
    return jnp.transpose(out, (0, 3, 1, 2))         # -> NCHW


def ref_forward(x_nchw, p):
    """Pure-JAX f32 reference (lax.conv) for the correctness check."""
    x = jnp.transpose(x_nchw, (0, 2, 3, 1)).astype(jnp.float32)
    dn = ("NHWC", "HWIO", "NHWC")
    r = jax.lax.conv_general_dilated(x, p["w1"], (1, 1), "SAME",
                                     dimension_numbers=dn) + p["b1"].reshape(1, 1, 1, -1)
    r = jnp.maximum(r, 0.0)
    r = jax.lax.conv_general_dilated(r, p["w2"], (1, 1), "SAME",
                                     dimension_numbers=dn) + p["b2"].reshape(1, 1, 1, -1)
    pooled = jnp.mean(r, axis=(1, 2), keepdims=True)
    d = jnp.sum(pooled * p["wd"].reshape(1, 1, 1, -1), axis=-1,
                keepdims=True) + p["bd"].reshape(1, 1, 1, 1)
    d = jnp.maximum(d, 0.0)
    u = d * p["wu"].reshape(1, 1, 1, -1) + p["bu"].reshape(1, 1, 1, -1)
    u = jnp.clip(u / 6.0 + 0.5, 0.0, 1.0)
    out = r * u + x
    return jnp.transpose(out, (0, 3, 1, 2))


def make_params(key, n_feat, kernel_size=3):
    ks = jax.random.split(key, 8)
    s = 0.2
    return {
        "w1": s * jax.random.normal(ks[0], (kernel_size, kernel_size, n_feat, n_feat), jnp.float32),
        "b1": s * jax.random.normal(ks[1], (1, n_feat), jnp.float32),
        "w2": s * jax.random.normal(ks[2], (kernel_size, kernel_size, n_feat, n_feat), jnp.float32),
        "b2": s * jax.random.normal(ks[3], (1, n_feat), jnp.float32),
        "wd": s * jax.random.normal(ks[4], (1, n_feat), jnp.float32),   # Conv2d(C,1,1) weight
        "bd": s * jax.random.normal(ks[5], (1, 1), jnp.float32),        # Conv2d(C,1,1) bias
        "wu": s * jax.random.normal(ks[6], (1, n_feat), jnp.float32),   # Conv2d(1,C,1) weight
        "bu": s * jax.random.normal(ks[7], (1, n_feat), jnp.float32),   # Conv2d(1,C,1) bias
    }


if __name__ == "__main__":
    key = jax.random.PRNGKey(0)
    k_x, k_p = jax.random.split(key)

    N, C, H, W = 2, 4, 16, 16          # n_feat = 4, kernel_size = 3
    x = jax.random.normal(k_x, (N, C, H, W), jnp.float32)
    params = make_params(k_p, n_feat=C, kernel_size=3)

    out = jax.block_until_ready(rcab_forward(x, params))
    ref = jax.block_until_ready(ref_forward(x, params))

    assert out.shape == (N, C, H, W)
    # bf16 MXU inputs with f32 accumulation -> relaxed tolerance vs f32 reference.
    err = float(jnp.max(jnp.abs(out - ref)))
    assert err < 5e-2, err
    print("KERNEL_OK")
</pallas_src>

<mosaic_0001>
module attributes {stable_mosaic.version = 11 : i64} {
  func.func @rcab_kernel(%arg0: i32, %arg1: memref<1x256x128xf32, #tpu.memory_space<vmem>>, %arg2: memref<1152x128xbf16, #tpu.memory_space<vmem>>, %arg3: memref<1x128xf32, #tpu.memory_space<vmem>>, %arg4: memref<1152x128xbf16, #tpu.memory_space<vmem>>, %arg5: memref<1x128xf32, #tpu.memory_space<vmem>>, %arg6: memref<1x128xf32, #tpu.memory_space<vmem>>, %arg7: memref<1x1xf32, #tpu.memory_space<vmem>>, %arg8: memref<1x128xf32, #tpu.memory_space<vmem>>, %arg9: memref<1x128xf32, #tpu.memory_space<vmem>>, %arg10: memref<1x256x128xf32, #tpu.memory_space<vmem>>, %arg11: memref<18x18x128xbf16, #tpu.memory_space<vmem>>) attributes {dimension_semantics = [#tpu.dimension_semantics<parallel>], iteration_bounds = array<i64: 2>, scalar_prefetch = 0 : i64, scratch_operands = 1 : i64, tpu.core_type = #tpu.core_type<tc>, window_params = [{transform_indices = @transform_0, window_bounds = array<i64: 1, 256, 128>}, {pipeline_mode = #tpu.pipeline_mode<synchronous>, transform_indices = @transform_1, window_bounds = array<i64: 1152, 128>}, {pipeline_mode = #tpu.pipeline_mode<synchronous>, transform_indices = @transform_2, window_bounds = array<i64: 1, 128>}, {pipeline_mode = #tpu.pipeline_mode<synchronous>, transform_indices = @transform_3, window_bounds = array<i64: 1152, 128>}, {pipeline_mode = #tpu.pipeline_mode<synchronous>, transform_indices = @transform_4, window_bounds = array<i64: 1, 128>}, {pipeline_mode = #tpu.pipeline_mode<synchronous>, transform_indices = @transform_5, window_bounds = array<i64: 1, 128>}, {pipeline_mode = #tpu.pipeline_mode<synchronous>, transform_indices = @transform_6, window_bounds = array<i64: 1, 1>}, {pipeline_mode = #tpu.pipeline_mode<synchronous>, transform_indices = @transform_7, window_bounds = array<i64: 1, 128>}, {pipeline_mode = #tpu.pipeline_mode<synchronous>, transform_indices = @transform_8, window_bounds = array<i64: 1, 128>}, {transform_indices = @transform_9, window_bounds = array<i64: 1, 256, 128>}]} {
    %cst = arith.constant 0.000000e+00 : bf16
    %0 = vector.broadcast %cst : bf16 to vector<1x18x128xbf16>
    %cst_0 = arith.constant 0.000000e+00 : bf16
    %1 = vector.broadcast %cst_0 : bf16 to vector<18x1x128xbf16>
    %c0 = arith.constant 0 : index
    %c0_1 = arith.constant 0 : index
    %c0_2 = arith.constant 0 : index
    %2 = vector.load %arg11[%c0, %c0_1, %c0_2] : memref<18x18x128xbf16, #tpu.memory_space<vmem>>, vector<1x18x128xbf16>
    tpu.vector_store %arg11[%c0, %c0_1, %c0_2], %0 {strides = array<i32>} : memref<18x18x128xbf16, #tpu.memory_space<vmem>>, vector<1x18x128xbf16>,
    %c17 = arith.constant 17 : index
    %c0_3 = arith.constant 0 : index
    %c0_4 = arith.constant 0 : index
    %3 = vector.load %arg11[%c17, %c0_3, %c0_4] : memref<18x18x128xbf16, #tpu.memory_space<vmem>>, vector<1x18x128xbf16>
    tpu.vector_store %arg11[%c17, %c0_3, %c0_4], %0 {strides = array<i32>} : memref<18x18x128xbf16, #tpu.memory_space<vmem>>, vector<1x18x128xbf16>,
    %c0_5 = arith.constant 0 : index
    %c0_6 = arith.constant 0 : index
    %c0_7 = arith.constant 0 : index
    %4 = vector.load %arg11[%c0_5, %c0_6, %c0_7] : memref<18x18x128xbf16, #tpu.memory_space<vmem>>, vector<18x1x128xbf16>
    tpu.vector_store %arg11[%c0_5, %c0_6, %c0_7], %1 {strides = array<i32>} : memref<18x18x128xbf16, #tpu.memory_space<vmem>>, vector<18x1x128xbf16>,
    %c0_8 = arith.constant 0 : index
    %c17_9 = arith.constant 17 : index
    %c0_10 = arith.constant 0 : index
    %5 = vector.load %arg11[%c0_8, %c17_9, %c0_10] : memref<18x18x128xbf16, #tpu.memory_space<vmem>>, vector<18x1x128xbf16>
    tpu.vector_store %arg11[%c0_8, %c17_9, %c0_10], %1 {strides = array<i32>} : memref<18x18x128xbf16, #tpu.memory_space<vmem>>, vector<18x1x128xbf16>,
    %c0_11 = arith.constant 0 : index
    %c0_12 = arith.constant 0 : index
    %c0_13 = arith.constant 0 : index
    %6 = vector.load %arg1[%c0_11, %c0_12, %c0_13] : memref<1x256x128xf32, #tpu.memory_space<vmem>>, vector<1x256x128xf32>
    %7 = vector.shape_cast %6 : vector<1x256x128xf32> to vector<256x128xf32>
    %8 = vector.shape_cast %7 : vector<256x128xf32> to vector<16x16x128xf32>
    %9 = arith.truncf %8 : vector<16x16x128xf32> to vector<16x16x128xbf16>
    %c1 = arith.constant 1 : index
    %c1_14 = arith.constant 1 : index
    %c0_15 = arith.constant 0 : index
    %10 = vector.load %arg11[%c1, %c1_14, %c0_15] : memref<18x18x128xbf16, #tpu.memory_space<vmem>>, vector<16x16x128xbf16>
    tpu.vector_store %arg11[%c1, %c1_14, %c0_15], %9 {strides = array<i32>} : memref<18x18x128xbf16, #tpu.memory_space<vmem>>, vector<16x16x128xbf16>,
    %c0_16 = arith.constant 0 : index
    %c0_17 = arith.constant 0 : index
    %c0_18 = arith.constant 0 : index
    %11 = vector.load %arg11[%c0_16, %c0_17, %c0_18] : memref<18x18x128xbf16, #tpu.memory_space<vmem>>, vector<16x16x128xbf16>
    %12 = vector.shape_cast %11 : vector<16x16x128xbf16> to vector<256x128xbf16>
    %c0_19 = arith.constant 0 : index
    %c1_20 = arith.constant 1 : index
    %c0_21 = arith.constant 0 : index
    %13 = vector.load %arg11[%c0_19, %c1_20, %c0_21] : memref<18x18x128xbf16, #tpu.memory_space<vmem>>, vector<16x16x128xbf16>
    %14 = vector.shape_cast %13 : vector<16x16x128xbf16> to vector<256x128xbf16>
    %c0_22 = arith.constant 0 : index
    %c2 = arith.constant 2 : index
    %c0_23 = arith.constant 0 : index
    %15 = vector.load %arg11[%c0_22, %c2, %c0_23] : memref<18x18x128xbf16, #tpu.memory_space<vmem>>, vector<16x16x128xbf16>
    %16 = vector.shape_cast %15 : vector<16x16x128xbf16> to vector<256x128xbf16>
    %c1_24 = arith.constant 1 : index
    %c0_25 = arith.constant 0 : index
    %c0_26 = arith.constant 0 : index
    %17 = vector.load %arg11[%c1_24, %c0_25, %c0_26] : memref<18x18x128xbf16, #tpu.memory_space<vmem>>, vector<16x16x128xbf16>
    %18 = vector.shape_cast %17 : vector<16x16x128xbf16> to vector<256x128xbf16>
    %c1_27 = arith.constant 1 : index
    %c1_28 = arith.constant 1 : index
    %c0_29 = arith.constant 0 : index
    %19 = vector.load %arg11[%c1_27, %c1_28, %c0_29] : memref<18x18x128xbf16, #tpu.memory_space<vmem>>, vector<16x16x128xbf16>
    %20 = vector.shape_cast %19 : vector<16x16x128xbf16> to vector<256x128xbf16>
    %c1_30 = arith.constant 1 : index
    %c2_31 = arith.constant 2 : index
    %c0_32 = arith.constant 0 : index
    %21 = vector.load %arg11[%c1_30, %c2_31, %c0_32] : memref<18x18x128xbf16, #tpu.memory_space<vmem>>, vector<16x16x128xbf16>
    %22 = vector.shape_cast %21 : vector<16x16x128xbf16> to vector<256x128xbf16>
    %c2_33 = arith.constant 2 : index
    %c0_34 = arith.constant 0 : index
    %c0_35 = arith.constant 0 : index
    %23 = vector.load %arg11[%c2_33, %c0_34, %c0_35] : memref<18x18x128xbf16, #tpu.memory_space<vmem>>, vector<16x16x128xbf16>
    %24 = vector.shape_cast %23 : vector<16x16x128xbf16> to vector<256x128xbf16>
    %c2_36 = arith.constant 2 : index
    %c1_37 = arith.constant 1 : index
    %c0_38 = arith.constant 0 : index
    %25 = vector.load %arg11[%c2_36, %c1_37, %c0_38] : memref<18x18x128xbf16, #tpu.memory_space<vmem>>, vector<16x16x128xbf16>
    %26 = vector.shape_cast %25 : vector<16x16x128xbf16> to vector<256x128xbf16>
    %c2_39 = arith.constant 2 : index
    %c2_40 = arith.constant 2 : index
    %c0_41 = arith.constant 0 : index
    %27 = vector.load %arg11[%c2_39, %c2_40, %c0_41] : memref<18x18x128xbf16, #tpu.memory_space<vmem>>, vector<16x16x128xbf16>
    %28 = vector.shape_cast %27 : vector<16x16x128xbf16> to vector<256x128xbf16>
    %29 = tpu.concatenate %12, %14, %16, %18, %20, %22, %24, %26, %28 in 1 : vector<256x128xbf16>, vector<256x128xbf16>, vector<256x128xbf16>, vector<256x128xbf16>, vector<256x128xbf16>, vector<256x128xbf16>, vector<256x128xbf16>, vector<256x128xbf16>, vector<256x128xbf16> -> vector<256x1152xbf16>
    %c0_42 = arith.constant 0 : index
    %c0_43 = arith.constant 0 : index
    %30 = vector.load %arg2[%c0_42, %c0_43] : memref<1152x128xbf16, #tpu.memory_space<vmem>>, vector<1152x128xbf16>
    %cst_44 = arith.constant dense<0.000000e+00> : vector<256x128xf32>
    %31 = tpu.matmul %29, %30, %cst_44 {dimension_numbers = #tpu.dot_dimension_numbers<[1], [0], [0], [1], [0, 0, 1, 1], [], []>} : vector<256x1152xbf16>, vector<1152x128xbf16>, vector<256x128xf32> -> vector<256x128xf32>
    %c0_45 = arith.constant 0 : index
    %c0_46 = arith.constant 0 : index
    %32 = vector.load %arg3[%c0_45, %c0_46] : memref<1x128xf32, #tpu.memory_space<vmem>>, vector<1x128xf32>
    %33 = vector.broadcast %32 : vector<1x128xf32> to vector<256x128xf32>
    %34 = arith.addf %31, %33 : vector<256x128xf32>
    %cst_47 = arith.constant 0.000000e+00 : f32
    %35 = vector.broadcast %cst_47 : f32 to vector<256x128xf32>
    %36 = arith.maximumf %34, %35 : vector<256x128xf32>
    %37 = vector.shape_cast %36 : vector<256x128xf32> to vector<16x16x128xf32>
    %38 = arith.truncf %37 : vector<16x16x128xf32> to vector<16x16x128xbf16>
    %c1_48 = arith.constant 1 : index
    %c1_49 = arith.constant 1 : index
    %c0_50 = arith.constant 0 : index
    %39 = vector.load %arg11[%c1_48, %c1_49, %c0_50] : memref<18x18x128xbf16, #tpu.memory_space<vmem>>, vector<16x16x128xbf16>
    tpu.vector_store %arg11[%c1_48, %c1_49, %c0_50], %38 {strides = array<i32>} : memref<18x18x128xbf16, #tpu.memory_space<vmem>>, vector<16x16x128xbf16>,
    %c0_51 = arith.constant 0 : index
    %c0_52 = arith.constant 0 : index
    %c0_53 = arith.constant 0 : index
    %40 = vector.load %arg11[%c0_51, %c0_52, %c0_53] : memref<18x18x128xbf16, #tpu.memory_space<vmem>>, vector<16x16x128xbf16>
    %41 = vector.shape_cast %40 : vector<16x16x128xbf16> to vector<256x128xbf16>
    %c0_54 = arith.constant 0 : index
    %c1_55 = arith.constant 1 : index
    %c0_56 = arith.constant 0 : index
    %42 = vector.load %arg11[%c0_54, %c1_55, %c0_56] : memref<18x18x128xbf16, #tpu.memory_space<vmem>>, vector<16x16x128xbf16>
    %43 = vector.shape_cast %42 : vector<16x16x128xbf16> to vector<256x128xbf16>
    %c0_57 = arith.constant 0 : index
    %c2_58 = arith.constant 2 : index
    %c0_59 = arith.constant 0 : index
    %44 = vector.load %arg11[%c0_57, %c2_58, %c0_59] : memref<18x18x128xbf16, #tpu.memory_space<vmem>>, vector<16x16x128xbf16>
    %45 = vector.shape_cast %44 : vector<16x16x128xbf16> to vector<256x128xbf16>
    %c1_60 = arith.constant 1 : index
    %c0_61 = arith.constant 0 : index
    %c0_62 = arith.constant 0 : index
    %46 = vector.load %arg11[%c1_60, %c0_61, %c0_62] : memref<18x18x128xbf16, #tpu.memory_space<vmem>>, vector<16x16x128xbf16>
    %47 = vector.shape_cast %46 : vector<16x16x128xbf16> to vector<256x128xbf16>
    %c1_63 = arith.constant 1 : index
    %c1_64 = arith.constant 1 : index
    %c0_65 = arith.constant 0 : index
    %48 = vector.load %arg11[%c1_63, %c1_64, %c0_65] : memref<18x18x128xbf16, #tpu.memory_space<vmem>>, vector<16x16x128xbf16>
    %49 = vector.shape_cast %48 : vector<16x16x128xbf16> to vector<256x128xbf16>
    %c1_66 = arith.constant 1 : index
    %c2_67 = arith.constant 2 : index
    %c0_68 = arith.constant 0 : index
    %50 = vector.load %arg11[%c1_66, %c2_67, %c0_68] : memref<18x18x128xbf16, #tpu.memory_space<vmem>>, vector<16x16x128xbf16>
    %51 = vector.shape_cast %50 : vector<16x16x128xbf16> to vector<256x128xbf16>
    %c2_69 = arith.constant 2 : index
    %c0_70 = arith.constant 0 : index
    %c0_71 = arith.constant 0 : index
    %52 = vector.load %arg11[%c2_69, %c0_70, %c0_71] : memref<18x18x128xbf16, #tpu.memory_space<vmem>>, vector<16x16x128xbf16>
    %53 = vector.shape_cast %52 : vector<16x16x128xbf16> to vector<256x128xbf16>
    %c2_72 = arith.constant 2 : index
    %c1_73 = arith.constant 1 : index
    %c0_74 = arith.constant 0 : index
    %54 = vector.load %arg11[%c2_72, %c1_73, %c0_74] : memref<18x18x128xbf16, #tpu.memory_space<vmem>>, vector<16x16x128xbf16>
    %55 = vector.shape_cast %54 : vector<16x16x128xbf16> to vector<256x128xbf16>
    %c2_75 = arith.constant 2 : index
    %c2_76 = arith.constant 2 : index
    %c0_77 = arith.constant 0 : index
    %56 = vector.load %arg11[%c2_75, %c2_76, %c0_77] : memref<18x18x128xbf16, #tpu.memory_space<vmem>>, vector<16x16x128xbf16>
    %57 = vector.shape_cast %56 : vector<16x16x128xbf16> to vector<256x128xbf16>
    %58 = tpu.concatenate %41, %43, %45, %47, %49, %51, %53, %55, %57 in 1 : vector<256x128xbf16>, vector<256x128xbf16>, vector<256x128xbf16>, vector<256x128xbf16>, vector<256x128xbf16>, vector<256x128xbf16>, vector<256x128xbf16>, vector<256x128xbf16>, vector<256x128xbf16> -> vector<256x1152xbf16>
    %c0_78 = arith.constant 0 : index
    %c0_79 = arith.constant 0 : index
    %59 = vector.load %arg4[%c0_78, %c0_79] : memref<1152x128xbf16, #tpu.memory_space<vmem>>, vector<1152x128xbf16>
    %cst_80 = arith.constant dense<0.000000e+00> : vector<256x128xf32>
    %60 = tpu.matmul %58, %59, %cst_80 {dimension_numbers = #tpu.dot_dimension_numbers<[1], [0], [0], [1], [0, 0, 1, 1], [], []>} : vector<256x1152xbf16>, vector<1152x128xbf16>, vector<256x128xf32> -> vector<256x128xf32>
    %c0_81 = arith.constant 0 : index
    %c0_82 = arith.constant 0 : index
    %61 = vector.load %arg5[%c0_81, %c0_82] : memref<1x128xf32, #tpu.memory_space<vmem>>, vector<1x128xf32>
    %62 = vector.broadcast %61 : vector<1x128xf32> to vector<256x128xf32>
    %63 = arith.addf %60, %62 : vector<256x128xf32>
    %cst_83 = arith.constant dense<0.000000e+00> : vector<128xf32>
    %64 = vector.multi_reduction <add>, %63, %cst_83 [0] : vector<256x128xf32> to vector<128xf32>
    %65 = vector.shape_cast %64 : vector<128xf32> to vector<1x128xf32>
    %cst_84 = arith.constant 2.560000e+02 : f32
    %66 = vector.broadcast %cst_84 : f32 to vector<1x128xf32>
    %67 = arith.divf %65, %66 : vector<1x128xf32>
    %c0_85 = arith.constant 0 : index
    %c0_86 = arith.constant 0 : index
    %68 = vector.load %arg6[%c0_85, %c0_86] : memref<1x128xf32, #tpu.memory_space<vmem>>, vector<1x128xf32>
    %69 = arith.mulf %67, %68 : vector<1x128xf32>
    %70 = vector.shape_cast %69 : vector<1x128xf32> to vector<1x1x128xf32>
    %cst_87 = arith.constant dense<0.000000e+00> : vector<1xf32>
    %71 = vector.multi_reduction <add>, %70, %cst_87 [1, 2] : vector<1x1x128xf32> to vector<1xf32>
    %72 = vector.shape_cast %71 : vector<1xf32> to vector<1x1x1xf32>
    %73 = vector.extract %72[0, 0, 0] : f32 from vector<1x1x1xf32>
    %c0_88 = arith.constant 0 : index
    %c0_89 = arith.constant 0 : index
    %74 = vector.load %arg7[%c0_88, %c0_89] : memref<1x1xf32, #tpu.memory_space<vmem>>, vector<1x1xf32>
    %75 = vector.extract %74[0, 0] : f32 from vector<1x1xf32>
    %76 = arith.addf %73, %75 : f32
    %cst_90 = arith.constant 0.000000e+00 : f32
    %77 = arith.maximumf %76, %cst_90 : f32
    %c0_91 = arith.constant 0 : index
    %c0_92 = arith.constant 0 : index
    %78 = vector.load %arg8[%c0_91, %c0_92] : memref<1x128xf32, #tpu.memory_space<vmem>>, vector<1x128xf32>
    %79 = vector.broadcast %77 : f32 to vector<1x128xf32>
    %80 = arith.mulf %79, %78 : vector<1x128xf32>
    %c0_93 = arith.constant 0 : index
    %c0_94 = arith.constant 0 : index
    %81 = vector.load %arg9[%c0_93, %c0_94] : memref<1x128xf32, #tpu.memory_space<vmem>>, vector<1x128xf32>
    %82 = arith.addf %80, %81 : vector<1x128xf32>
    %cst_95 = arith.constant 6.000000e+00 : f32
    %83 = vector.broadcast %cst_95 : f32 to vector<1x128xf32>
    %84 = arith.divf %82, %83 : vector<1x128xf32>
    %cst_96 = arith.constant 5.000000e-01 : f32
    %85 = vector.broadcast %cst_96 : f32 to vector<1x128xf32>
    %86 = arith.addf %84, %85 : vector<1x128xf32>
    %cst_97 = arith.constant 0.000000e+00 : f32
    %cst_98 = arith.constant 1.000000e+00 : f32
    %87 = vector.broadcast %cst_97 : f32 to vector<1x128xf32>
    %88 = arith.maximumf %87, %86 : vector<1x128xf32>
    %89 = vector.broadcast %cst_98 : f32 to vector<1x128xf32>
    %90 = arith.minimumf %89, %88 : vector<1x128xf32>
    %91 = vector.broadcast %90 : vector<1x128xf32> to vector<256x128xf32>
    %92 = arith.mulf %63, %91 : vector<256x128xf32>
    %93 = arith.addf %92, %7 : vector<256x128xf32>
    %c0_99 = arith.constant 0 : index
    %c0_100 = arith.constant 0 : index
    %c0_101 = arith.constant 0 : index
    %94 = vector.load %arg10[%c0_99, %c0_100, %c0_101] : memref<1x256x128xf32, #tpu.memory_space<vmem>>, vector<1x256x128xf32>
    %95 = vector.shape_cast %94 : vector<1x256x128xf32> to vector<256x128xf32>
    %96 = vector.shape_cast %93 : vector<256x128xf32> to vector<1x256x128xf32>
    tpu.vector_store %arg10[%c0_99, %c0_100, %c0_101], %96 {strides = array<i32>} : memref<1x256x128xf32, #tpu.memory_space<vmem>>, vector<1x256x128xf32>,
    return
  }
  func.func @transform_0(%arg0: i32) -> (i32, i32, i32) {
    %c0_i32 = arith.constant 0 : i32
    %c0_i32_0 = arith.constant 0 : i32
    %c0_i32_1 = arith.constant 0 : i32
    return %arg0, %c0_i32, %c0_i32_0 : i32, i32, i32
  }
  func.func @transform_1(%arg0: i32) -> (i32, i32) {
    %c0_i32 = arith.constant 0 : i32
    %c0_i32_0 = arith.constant 0 : i32
    %c0_i32_1 = arith.constant 0 : i32
    return %c0_i32, %c0_i32_0 : i32, i32
  }
  func.func @transform_2(%arg0: i32) -> (i32, i32) {
    %c0_i32 = arith.constant 0 : i32
    %c0_i32_0 = arith.constant 0 : i32
    %c0_i32_1 = arith.constant 0 : i32
    return %c0_i32, %c0_i32_0 : i32, i32
  }
  func.func @transform_3(%arg0: i32) -> (i32, i32) {
    %c0_i32 = arith.constant 0 : i32
    %c0_i32_0 = arith.constant 0 : i32
    %c0_i32_1 = arith.constant 0 : i32
    return %c0_i32, %c0_i32_0 : i32, i32
  }
  func.func @transform_4(%arg0: i32) -> (i32, i32) {
    %c0_i32 = arith.constant 0 : i32
    %c0_i32_0 = arith.constant 0 : i32
    %c0_i32_1 = arith.constant 0 : i32
    return %c0_i32, %c0_i32_0 : i32, i32
  }
  func.func @transform_5(%arg0: i32) -> (i32, i32) {
    %c0_i32 = arith.constant 0 : i32
    %c0_i32_0 = arith.constant 0 : i32
    %c0_i32_1 = arith.constant 0 : i32
    return %c0_i32, %c0_i32_0 : i32, i32
  }
  func.func @transform_6(%arg0: i32) -> (i32, i32) {
    %c0_i32 = arith.constant 0 : i32
    %c0_i32_0 = arith.constant 0 : i32
    %c0_i32_1 = arith.constant 0 : i32
    return %c0_i32, %c0_i32_0 : i32, i32
  }
  func.func @transform_7(%arg0: i32) -> (i32, i32) {
    %c0_i32 = arith.constant 0 : i32
    %c0_i32_0 = arith.constant 0 : i32
    %c0_i32_1 = arith.constant 0 : i32
    return %c0_i32, %c0_i32_0 : i32, i32
  }
  func.func @transform_8(%arg0: i32) -> (i32, i32) {
    %c0_i32 = arith.constant 0 : i32
    %c0_i32_0 = arith.constant 0 : i32
    %c0_i32_1 = arith.constant 0 : i32
    return %c0_i32, %c0_i32_0 : i32, i32
  }
  func.func @transform_9(%arg0: i32) -> (i32, i32, i32) {
    %c0_i32 = arith.constant 0 : i32
    %c0_i32_0 = arith.constant 0 : i32
    %c0_i32_1 = arith.constant 0 : i32
    return %arg0, %c0_i32, %c0_i32_0 : i32, i32, i32
  }
}

</mosaic_0001>

<llo_original>
// kernel: tpu_custom_call.1
$region0: #{tpu_custom_call.1}
  #allocation0 [shape = 'u32[]', space=smem, size = 0x4, offset = 0x4, fixed_abs, tag = 'smem constant byte address 0x4 - core index']
  #allocation1 [shape = 'u32[144,128]{1,0:T(1,128)}', space=vmem, size = 0x12000, scoped, tag = 'internal scratch']
  #allocation2 [shape = 'bf16[18,18,128]{2,1,0:T(8,128)(2,1)}', space=vmem, size = 0x1b000, scoped, tag = 'scratch operand']
  #allocation3 [shape = 'f32[1,1]{1,0:T(1,128)S(1)}', space=vmem, size = 0x200, scoped, tag = 'scoped memory for tpu_custom_call.1']
  %s0 = inlined_call_operand.hbm [shape: f32[2,256,128], index: 0, kind: input, shape index: {}]
  %s1 = inlined_call_operand.hbm [shape: bf16[1152,128], index: 1, kind: input, shape index: {}]
  %s2 = inlined_call_operand.vmem [shape: f32[1,128], index: 2, kind: input, shape index: {}]
  %s3 = inlined_call_operand.hbm [shape: bf16[1152,128], index: 3, kind: input, shape index: {}]
  %s4 = inlined_call_operand.vmem [shape: f32[1,128], index: 4, kind: input, shape index: {}]
  %s5 = inlined_call_operand.vmem [shape: f32[1,128], index: 5, kind: input, shape index: {}]
  %s6 = inlined_call_operand.<no memory space> [shape: f32[1,1], index: 6, kind: input, shape index: {}]
  %s7 = inlined_call_operand.vmem [shape: f32[1,128], index: 7, kind: input, shape index: {}]
  %s8 = inlined_call_operand.vmem [shape: f32[1,128], index: 8, kind: input, shape index: {}]
  %s9 = inlined_call_operand.hbm [shape: f32[2,256,128], index: 9, kind: output, shape index: {}]
  %s10 = sld [smem:[#allocation0]]
  $region81: #{tpu_custom_call.1} parent=0
    _
  %s12 = ssub.s32 1, %s10
  %s13 = scalar_select 0, %s12, %s10
  %v14 = vstv %s6
  %15 = vst [vmem:[#allocation3] sm:$0x1] %v14
  $region1: #{tpu_custom_call.1} parent=0
    #allocation4 [shape = 'u8[262144]{0}', space=vmem, size = 0x40000, scoped, tag = 'input window, operand 0']
    #allocation5 [shape = 's32[2]{0}', space=sflag, size = 0x8, scoped, tag = 'scoped memory for tpu_custom_call.1']
    #allocation6 [shape = 's32[2]{0}', space=sflag, size = 0x8, scoped, tag = 'scoped memory for tpu_custom_call.1']
    #allocation7 [shape = 'u8[294912]{0}', space=vmem, size = 0x48000, scoped, tag = 'input window, operand 1, single buffered']
    #allocation8 [shape = 's32[1]{0}', space=sflag, size = 0x4, scoped, tag = 'scoped memory for tpu_custom_call.1']
    #allocation9 [shape = 'u8[294912]{0}', space=vmem, size = 0x48000, scoped, tag = 'input window, operand 3, single buffered']
    #allocation10 [shape = 'u8[262144]{0}', space=vmem, size = 0x40000, scoped, tag = 'output window, operand 0']
    %16 = vsyncpa [#allocation5], 0
    %s17 = scalar_lea.sflag [#allocation5], 1
    %18 = vsyncpa %s17, 0
    %19 = vsyncpa [#allocation8], 0
    %20 = vsyncpa [#allocation6], 0
    %s21 = scalar_lea.sflag [#allocation6], 1
    %22 = vsyncpa %s21, 0
    loop: start=0, step=1, limit=4
    $region2: #{tpu_custom_call.1} parent=1 // loop_pre_header
      _
    $region3: #{tpu_custom_call.1} parent=1 // loop_header
      %s24 = sphi 0, %s28
      %p25 = scmp.ge.s32.totalorder %s24, 4
      %s34 = sphi 0, %s36
      %s37 = sphi 0, %s34
      %s38 = sphi 0, %s37
      %s54 = sphi 0, %s38
      %s58 = sphi 0, %s58
      %s60 = sphi 0, %s58
      %s61 = sphi 0, %s60
      %s75 = sphi 0, %s61
      %s79 = sphi 0, %s79
      %s81 = sphi 0, %s79
      %s82 = sphi 0, %s81
      %s96 = sphi 0, %s82
      %s100 = sphi 0, %s100
      %s102 = sphi 0, %s100
      %s103 = sphi 0, %s102
      %s117 = sphi 0, %s103
      %s121 = sphi 0, %s121
      %s123 = sphi 0, %s121
      %s124 = sphi 0, %s123
      %s138 = sphi 0, %s124
      %s142 = sphi 0, %s142
      %s144 = sphi 0, %s142
      %s145 = sphi 0, %s144
      %s159 = sphi 0, %s145
      %s163 = sphi 0, %s163
      %s165 = sphi 0, %s163
      %s166 = sphi 0, %s165
      %s180 = sphi 0, %s166
      %s184 = sphi 0, %s184
      %s186 = sphi 0, %s184
      %s187 = sphi 0, %s186
      %s201 = sphi 0, %s187
      %s205 = sphi 0, %s205
      %s207 = sphi 0, %s205
      %s208 = sphi 0, %s207
      %s222 = sphi 0, %s208
      %s228 = sphi 0, %s230
      %s231 = sphi 0, %s228
      %s232 = sphi 0, %s231
      %s248 = sphi 0, %s232
    $region4: #{tpu_custom_call.1} parent=1 // loop_header_branch
      %27 = sbr.rel (%p25) target = $region8
    $region5: #{tpu_custom_call.1} parent=1 // loop_body
      %s29 = ssub.s32 %s24, 1
      %s30 = ssub.s32 %s24, 2
      %s31 = sadd.s32 %s24, 1
      %s32 = ssub.s32 %s24, %s31
      %p33 = scmp.eq.s32.totalorder %s32, 0
      %s35 = sadd.s32 %s34, 1
      %s36 = scalar_select %p33, %s34, %s35
      %p39 = pneg %p33
      %p40 = scmp.eq.s32.totalorder %s24, 1
      %p41 = por %p39, %p40
      %p42 = scmp.ne.s32.totalorder %s34, %s37
      %p43 = scmp.eq.s32.totalorder %s24, 0
      %p44 = por %p42, %p43
      %p45 = scmp.ne.s32.totalorder %s34, %s37
      %p46 = scmp.eq.s32.totalorder %s29, 1
      %p47 = por %p45, %p46
      %p48 = scmp.ne.s32.totalorder %s37, %s38
      %p49 = scmp.eq.s32.totalorder %s29, 0
      %p50 = por %p48, %p49
      %p51 = scmp.ne.s32.totalorder %s37, %s38
      %p52 = scmp.eq.s32.totalorder %s30, 1
      %p53 = por %p51, %p52
      %p55 = scmp.ne.s32.totalorder %s38, %s54
      %p56 = scmp.eq.s32.totalorder %s30, 0
      %p57 = por %p55, %p56
      %s59 = sadd.s32 %s58, 1
      %p62 = scmp.eq.s32.totalorder %s24, 1
      %p63 = scmp.ne.s32.totalorder %s58, %s60
      %p64 = scmp.eq.s32.totalorder %s24, 0
      %p65 = por %p63, %p64
      %p66 = scmp.ne.s32.totalorder %s58, %s60
      %p67 = scmp.eq.s32.totalorder %s29, 1
      %p68 = por %p66, %p67
      %p69 = scmp.ne.s32.totalorder %s60, %s61
      %p70 = scmp.eq.s32.totalorder %s29, 0
      %p71 = por %p69, %p70
      %p72 = scmp.ne.s32.totalorder %s60, %s61
      %p73 = scmp.eq.s32.totalorder %s30, 1
      %p74 = por %p72, %p73
      %p76 = scmp.ne.s32.totalorder %s61, %s75
      %p77 = scmp.eq.s32.totalorder %s30, 0
      %p78 = por %p76, %p77
      %s80 = sadd.s32 %s79, 1
      %p83 = scmp.eq.s32.totalorder %s24, 1
      %p84 = scmp.ne.s32.totalorder %s79, %s81
      %p85 = scmp.eq.s32.totalorder %s24, 0
      %p86 = por %p84, %p85
      %p87 = scmp.ne.s32.totalorder %s79, %s81
      %p88 = scmp.eq.s32.totalorder %s29, 1
      %p89 = por %p87, %p88
      %p90 = scmp.ne.s32.totalorder %s81, %s82
      %p91 = scmp.eq.s32.totalorder %s29, 0
      %p92 = por %p90, %p91
      %p93 = scmp.ne.s32.totalorder %s81, %s82
      %p94 = scmp.eq.s32.totalorder %s30, 1
      %p95 = por %p93, %p94
      %p97 = scmp.ne.s32.totalorder %s82, %s96
      %p98 = scmp.eq.s32.totalorder %s30, 0
      %p99 = por %p97, %p98
      %s101 = sadd.s32 %s100, 1
      %p104 = scmp.eq.s32.totalorder %s24, 1
      %p105 = scmp.ne.s32.totalorder %s100, %s102
      %p106 = scmp.eq.s32.totalorder %s24, 0
      %p107 = por %p105, %p106
      %p108 = scmp.ne.s32.totalorder %s100, %s102
      %p109 = scmp.eq.s32.totalorder %s29, 1
      %p110 = por %p108, %p109
      %p111 = scmp.ne.s32.totalorder %s102, %s103
      %p112 = scmp.eq.s32.totalorder %s29, 0
      %p113 = por %p111, %p112
      %p114 = scmp.ne.s32.totalorder %s102, %s103
      %p115 = scmp.eq.s32.totalorder %s30, 1
      %p116 = por %p114, %p115
      %p118 = scmp.ne.s32.totalorder %s103, %s117
      %p119 = scmp.eq.s32.totalorder %s30, 0
      %p120 = por %p118, %p119
      %s122 = sadd.s32 %s121, 1
      %p125 = scmp.eq.s32.totalorder %s24, 1
      %p126 = scmp.ne.s32.totalorder %s121, %s123
      %p127 = scmp.eq.s32.totalorder %s24, 0
      %p128 = por %p126, %p127
      %p129 = scmp.ne.s32.totalorder %s121, %s123
      %p130 = scmp.eq.s32.totalorder %s29, 1
      %p131 = por %p129, %p130
      %p132 = scmp.ne.s32.totalorder %s123, %s124
      %p133 = scmp.eq.s32.totalorder %s29, 0
      %p134 = por %p132, %p133
      %p135 = scmp.ne.s32.totalorder %s123, %s124
      %p136 = scmp.eq.s32.totalorder %s30, 1
      %p137 = por %p135, %p136
      %p139 = scmp.ne.s32.totalorder %s124, %s138
      %p140 = scmp.eq.s32.totalorder %s30, 0
      %p141 = por %p139, %p140
      %s143 = sadd.s32 %s142, 1
      %p146 = scmp.eq.s32.totalorder %s24, 1
      %p147 = scmp.ne.s32.totalorder %s142, %s144
      %p148 = scmp.eq.s32.totalorder %s24, 0
      %p149 = por %p147, %p148
      %p150 = scmp.ne.s32.totalorder %s142, %s144
      %p151 = scmp.eq.s32.totalorder %s29, 1
      %p152 = por %p150, %p151
      %p153 = scmp.ne.s32.totalorder %s144, %s145
      %p154 = scmp.eq.s32.totalorder %s29, 0
      %p155 = por %p153, %p154
      %p156 = scmp.ne.s32.totalorder %s144, %s145
      %p157 = scmp.eq.s32.totalorder %s30, 1
      %p158 = por %p156, %p157
      %p160 = scmp.ne.s32.totalorder %s145, %s159
      %p161 = scmp.eq.s32.totalorder %s30, 0
      %p162 = por %p160, %p161
      %s164 = sadd.s32 %s163, 1
      %p167 = scmp.eq.s32.totalorder %s24, 1
      %p168 = scmp.ne.s32.totalorder %s163, %s165
      %p169 = scmp.eq.s32.totalorder %s24, 0
      %p170 = por %p168, %p169
      %p171 = scmp.ne.s32.totalorder %s163, %s165
      %p172 = scmp.eq.s32.totalorder %s29, 1
      %p173 = por %p171, %p172
      %p174 = scmp.ne.s32.totalorder %s165, %s166
      %p175 = scmp.eq.s32.totalorder %s29, 0
      %p176 = por %p174, %p175
      %p177 = scmp.ne.s32.totalorder %s165, %s166
      %p178 = scmp.eq.s32.totalorder %s30, 1
      %p179 = por %p177, %p178
      %p181 = scmp.ne.s32.totalorder %s166, %s180
      %p182 = scmp.eq.s32.totalorder %s30, 0
      %p183 = por %p181, %p182
      %s185 = sadd.s32 %s184, 1
      %p188 = scmp.eq.s32.totalorder %s24, 1
      %p189 = scmp.ne.s32.totalorder %s184, %s186
      %p190 = scmp.eq.s32.totalorder %s24, 0
      %p191 = por %p189, %p190
      %p192 = scmp.ne.s32.totalorder %s184, %s186
      %p193 = scmp.eq.s32.totalorder %s29, 1
      %p194 = por %p192, %p193
      %p195 = scmp.ne.s32.totalorder %s186, %s187
      %p196 = scmp.eq.s32.totalorder %s29, 0
      %p197 = por %p195, %p196
      %p198 = scmp.ne.s32.totalorder %s186, %s187
      %p199 = scmp.eq.s32.totalorder %s30, 1
      %p200 = por %p198, %p199
      %p202 = scmp.ne.s32.totalorder %s187, %s201
      %p203 = scmp.eq.s32.totalorder %s30, 0
      %p204 = por %p202, %p203
      %s206 = sadd.s32 %s205, 1
      %p209 = scmp.eq.s32.totalorder %s24, 1
      %p210 = scmp.ne.s32.totalorder %s205, %s207
      %p211 = scmp.eq.s32.totalorder %s24, 0
      %p212 = por %p210, %p211
      %p213 = scmp.ne.s32.totalorder %s205, %s207
      %p214 = scmp.eq.s32.totalorder %s29, 1
      %p215 = por %p213, %p214
      %p216 = scmp.ne.s32.totalorder %s207, %s208
      %p217 = scmp.eq.s32.totalorder %s29, 0
      %p218 = por %p216, %p217
      %p219 = scmp.ne.s32.totalorder %s207, %s208
      %p220 = scmp.eq.s32.totalorder %s30, 1
      %p221 = por %p219, %p220
      %p223 = scmp.ne.s32.totalorder %s208, %s222
      %p224 = scmp.eq.s32.totalorder %s30, 0
      %p225 = por %p223, %p224
      %s226 = ssub.s32 %s24, %s31
      %p227 = scmp.eq.s32.totalorder %s226, 0
      %s229 = sadd.s32 %s228, 1
      %s230 = scalar_select %p227, %s228, %s229
      %p233 = pneg %p227
      %p234 = scmp.eq.s32.totalorder %s24, 1
      %p235 = por %p233, %p234
      %p236 = scmp.ne.s32.totalorder %s228, %s231
      %p237 = scmp.eq.s32.totalorder %s24, 0
      %p238 = por %p236, %p237
      %p239 = scmp.ne.s32.totalorder %s228, %s231
      %p240 = scmp.eq.s32.totalorder %s29, 1
      %p241 = por %p239, %p240
      %p242 = scmp.ne.s32.totalorder %s231, %s232
      %p243 = scmp.eq.s32.totalorder %s29, 0
      %p244 = por %p242, %p243
      %p245 = scmp.ne.s32.totalorder %s231, %s232
      %p246 = scmp.eq.s32.totalorder %s30, 1
      %p247 = por %p245, %p246
      %p249 = scmp.ne.s32.totalorder %s232, %s248
      %p250 = scmp.eq.s32.totalorder %s30, 0
      %p251 = por %p249, %p250
      %p252 = scmp.le.s32.totalorder 1, %s24
      %p253 = scmp.lt.s32.totalorder %s24, 3
      %p254 = pnand %p252, %p253
      %p255 = pneg %p254
      // Predicated region
      $region9: #{tpu_custom_call.1} parent=5 // pred_check
        _
      $region10: #{tpu_custom_call.1} parent=5 // pred_check_branch
        %257 = sbr.rel (%p254) target = $region12
      $region11: #{tpu_custom_call.1} parent=5 // pred_region
        %s258 = ssub.s32 %s24, 1
        // Predicated region
        $region13: #{tpu_custom_call.1} parent=11 // pred_check
          %p259 = pneg %p71
        $region14: #{tpu_custom_call.1} parent=11 // pred_check_branch
          %261 = sbr.rel (%p259) target = $region16
        $region15: #{tpu_custom_call.1} parent=11 // pred_region
          %s263 = ssub.s32 9216, 9216
          %264 = vsyncadd [#allocation8], %s263
          %s265 = sshll.u32 [#allocation7], 4
          %s266 = int_to_ptr.vmem [resolvable:$true] %s265
          %271 = dma.hbm_to_vmem [thread:$0]  %s1, 9216, %s266, [#allocation8], 64, 64, 4
        $region16: #{tpu_custom_call.1} parent=11 // pred_fallthru
          _
        // Predicated region
        $region17: #{tpu_custom_call.1} parent=11 // pred_check
          %p272 = pneg %p92
        $region18: #{tpu_custom_call.1} parent=11 // pred_check_branch
          %274 = sbr.rel (%p272) target = $region20
        $region19: #{tpu_custom_call.1} parent=11 // pred_region
          _
        $region20: #{tpu_custom_call.1} parent=11 // pred_fallthru
          _
        // Predicated region
        $region21: #{tpu_custom_call.1} parent=11 // pred_check
          %p275 = pneg %p113
        $region22: #{tpu_custom_call.1} parent=11 // pred_check_branch
          %277 = sbr.rel (%p275) target = $region24
        $region23: #{tpu_custom_call.1} parent=11 // pred_region
          %s279 = ssub.s32 9216, 9216
          %280 = vsyncadd [#allocation8], %s279
          %s281 = sshll.u32 [#allocation9], 4
          %s282 = int_to_ptr.vmem [resolvable:$true] %s281
          %287 = dma.hbm_to_vmem [thread:$0]  %s3, 9216, %s282, [#allocation8], 64, 64, 4
        $region24: #{tpu_custom_call.1} parent=11 // pred_fallthru
          _
        // Predicated region
        $region25: #{tpu_custom_call.1} parent=11 // pred_check
          %p288 = pneg %p134
        $region26: #{tpu_custom_call.1} parent=11 // pred_check_branch
          %290 = sbr.rel (%p288) target = $region28
        $region27: #{tpu_custom_call.1} parent=11 // pred_region
          _
        $region28: #{tpu_custom_call.1} parent=11 // pred_fallthru
          _
        // Predicated region
        $region29: #{tpu_custom_call.1} parent=11 // pred_check
          %p291 = pneg %p155
        $region30: #{tpu_custom_call.1} parent=11 // pred_check_branch
          %293 = sbr.rel (%p291) target = $region32
        $region31: #{tpu_custom_call.1} parent=11 // pred_region
          _
        $region32: #{tpu_custom_call.1} parent=11 // pred_fallthru
          _
        // Predicated region
        $region33: #{tpu_custom_call.1} parent=11 // pred_check
          %p294 = pneg %p176
        $region34: #{tpu_custom_call.1} parent=11 // pred_check_branch
          %296 = sbr.rel (%p294) target = $region36
        $region35: #{tpu_custom_call.1} parent=11 // pred_region
          _
        $region36: #{tpu_custom_call.1} parent=11 // pred_fallthru
          _
        // Predicated region
        $region37: #{tpu_custom_call.1} parent=11 // pred_check
          %p297 = pneg %p197
        $region38: #{tpu_custom_call.1} parent=11 // pred_check_branch
          %299 = sbr.rel (%p297) target = $region40
        $region39: #{tpu_custom_call.1} parent=11 // pred_region
          _
        $region40: #{tpu_custom_call.1} parent=11 // pred_fallthru
          _
        // Predicated region
        $region41: #{tpu_custom_call.1} parent=11 // pred_check
          %p300 = pneg %p218
        $region42: #{tpu_custom_call.1} parent=11 // pred_check_branch
          %302 = sbr.rel (%p300) target = $region44
        $region43: #{tpu_custom_call.1} parent=11 // pred_region
          _
        $region44: #{tpu_custom_call.1} parent=11 // pred_fallthru
          _
      $region12: #{tpu_custom_call.1} parent=5 // pred_fallthru
        _
      %p303 = scmp.lt.s32.totalorder %s24, 2
      // Predicated region
      $region45: #{tpu_custom_call.1} parent=5 // pred_check
        %p304 = pneg %p303
      $region46: #{tpu_custom_call.1} parent=5 // pred_check_branch
        %306 = sbr.rel (%p304) target = $region48
      $region47: #{tpu_custom_call.1} parent=5 // pred_region
        // Predicated region
        $region49: #{tpu_custom_call.1} parent=47 // pred_check
          %p307 = pneg %p44
        $region50: #{tpu_custom_call.1} parent=47 // pred_check_branch
          %309 = sbr.rel (%p307) target = $region52
        $region51: #{tpu_custom_call.1} parent=47 // pred_region
          %s310 = sand.u32 %s34, 1
          %s311 = scalar_lea.sflag [#allocation5], %s310
          %s312 = sand.u32 %s34, 1
          %s313 = smul.addr %s312, 256
          %s314 = scalar_lea.vmem [#allocation4], %s313
          %s316 = ssub.s32 4096, 4096
          %317 = vsyncadd %s311, %s316
          %s318 = smul.addr %s24, 32
          %s319 = smul.addr %s318, 128
          %s320 = scalar_lea.hbm %s0, %s319
          %s321 = sshll.u32 %s314, 4
          %s322 = int_to_ptr.vmem [resolvable:$true] %s321
          %327 = dma.hbm_to_vmem [thread:$0]  %s320, 4096, %s322, %s311, 128, 128, 8
        $region52: #{tpu_custom_call.1} parent=47 // pred_fallthru
          _
      $region48: #{tpu_custom_call.1} parent=5 // pred_fallthru
        _
      %p328 = scmp.le.s32.totalorder 1, %s24
      %p329 = scmp.lt.s32.totalorder %s24, 3
      %p330 = pnand %p328, %p329
      %p331 = pneg %p330
      // Predicated region
      $region53: #{tpu_custom_call.1} parent=5 // pred_check
        _
      $region54: #{tpu_custom_call.1} parent=5 // pred_check_branch
        %333 = sbr.rel (%p330) target = $region56
      $region55: #{tpu_custom_call.1} parent=5 // pred_region
        %s334 = ssub.s32 %s24, 1
        %s335 = sand.u32 %s37, 1
        %s336 = scalar_lea.sflag [#allocation5], %s335
        %s337 = sand.u32 %s37, 1
        %s338 = smul.addr %s337, 256
        %s339 = scalar_lea.vmem [#allocation4], %s338
        // Predicated region
        $region57: #{tpu_custom_call.1} parent=55 // pred_check
          %p340 = pneg %p50
        $region58: #{tpu_custom_call.1} parent=55 // pred_check_branch
          %342 = sbr.rel (%p340) target = $region60
        $region59: #{tpu_custom_call.1} parent=55 // pred_region
          %343 = dma.done %s336, 4096
        $region60: #{tpu_custom_call.1} parent=55 // pred_fallthru
          _
        // Predicated region
        $region61: #{tpu_custom_call.1} parent=55 // pred_check
          %p344 = pneg %p71
        $region62: #{tpu_custom_call.1} parent=55 // pred_check_branch
          %346 = sbr.rel (%p344) target = $region64
        $region63: #{tpu_custom_call.1} parent=55 // pred_region
          %347 = dma.done [#allocation8], 9216
        $region64: #{tpu_custom_call.1} parent=55 // pred_fallthru
          _
        // Predicated region
        $region65: #{tpu_custom_call.1} parent=55 // pred_check
          %p348 = pneg %p113
        $region66: #{tpu_custom_call.1} parent=55 // pred_check_branch
          %350 = sbr.rel (%p348) target = $region68
        $region67: #{tpu_custom_call.1} parent=55 // pred_region
          %351 = dma.done [#allocation8], 9216
        $region68: #{tpu_custom_call.1} parent=55 // pred_fallthru
          _
        %s352 = sand.u32 %s37, 1
        %s353 = scalar_lea.sflag [#allocation5], %s352
        %s354 = sand.u32 %s37, 1
        %s355 = smul.addr %s354, 256
        %s356 = scalar_lea.vmem [#allocation4], %s355
        %p357 = pneg %p50
        %p358 = pneg %p47
        %p359 = pneg %p71
        %p360 = pneg %p68
        %p361 = pneg %p92
        %p362 = pneg %p89
        %p363 = pneg %p113
        %p364 = pneg %p110
        %p365 = pneg %p134
        %p366 = pneg %p131
        %p367 = pneg %p155
        %p368 = pneg %p152
        %p369 = pneg %p176
        %p370 = pneg %p173
        %p371 = pneg %p197
        %p372 = pneg %p194
        %p373 = pneg %p218
        %p374 = pneg %p215
        %p375 = pneg %p244
        %p376 = pneg %p241
        %s377 = sand.u32 %s231, 1
        %s378 = scalar_lea.sflag [#allocation6], %s377
        %s379 = sand.u32 %s231, 1
        %s380 = smul.addr %s379, 256
        %s381 = scalar_lea.vmem [#allocation10], %s380
        %383 = vst [vmem:[#allocation2] sm:$0xf] 0
        %384 = vst [vmem:[#allocation2 + $0x4] sm:$0xf] 0
        %385 = vst [vmem:[#allocation2 + $0x8] sm:$0x1] 0
        %s386 = scalar_lea.vmem [#allocation2], 204
        %387 = vst [vmem:[%s386] sm:$0xf] 0
        %388 = vst [vmem:[%s386 + $0x4] sm:$0xf] 0
        %389 = vst [vmem:[%s386 + $0x8] sm:$0x1] 0
        %vm390 = vcmask 1040384
        %vm391 = vsmask.f32 256
        %vm392 = vmand %vm390, %vm391
        %v393 = vld [vmem:[#allocation2] sm:$0x1]
        %v394 = vsel %vm392, 0, %v393
        %395 = vst [vmem:[#allocation2] sm:$0x1] %v394
        %v396 = vld [vmem:[#allocation2 + $0xc] sm:$0x1]
        %v397 = vsel %vm392, 0, %v396
        %398 = vst [vmem:[#allocation2 + $0xc] sm:$0x1] %v397
        %v399 = vld [vmem:[#allocation2 + $0x18] sm:$0x1]
        %v400 = vsel %vm392, 0, %v399
        %401 = vst [vmem:[#allocation2 + $0x18] sm:$0x1] %v400
        %v402 = vld [vmem:[#allocation2 + $0x24] sm:$0x1]
        %v403 = vsel %vm392, 0, %v402
        %404 = vst [vmem:[#allocation2 + $0x24] sm:$0x1] %v403
        %v405 = vld [vmem:[#allocation2 + $0x30] sm:$0x1]
        %v406 = vsel %vm392, 0, %v405
        %407 = vst [vmem:[#allocation2 + $0x30] sm:$0x1] %v406
        %v408 = vld [vmem:[#allocation2 + $0x3c] sm:$0x1]
        %v409 = vsel %vm392, 0, %v408
        %410 = vst [vmem:[#allocation2 + $0x3c] sm:$0x1] %v409
        %v411 = vld [vmem:[#allocation2 + $0x48] sm:$0x1]
        %v412 = vsel %vm392, 0, %v411
        %413 = vst [vmem:[#allocation2 + $0x48] sm:$0x1] %v412
        %v414 = vld [vmem:[#allocation2 + $0x54] sm:$0x1]
        %v415 = vsel %vm392, 0, %v414
        %416 = vst [vmem:[#allocation2 + $0x54] sm:$0x1] %v415
        %v417 = vld [vmem:[#allocation2 + $0x60] sm:$0x1]
        %v418 = vsel %vm392, 0, %v417
        %419 = vst [vmem:[#allocation2 + $0x60] sm:$0x1] %v418
        %v420 = vld [vmem:[#allocation2 + $0x6c] sm:$0x1]
        %v421 = vsel %vm392, 0, %v420
        %422 = vst [vmem:[#allocation2 + $0x6c] sm:$0x1] %v421
        %v423 = vld [vmem:[#allocation2 + $0x78] sm:$0x1]
        %v424 = vsel %vm392, 0, %v423
        %425 = vst [vmem:[#allocation2 + $0x78] sm:$0x1] %v424
        %v426 = vld [vmem:[#allocation2 + $0x84] sm:$0x1]
        %v427 = vsel %vm392, 0, %v426
        %428 = vst [vmem:[#allocation2 + $0x84] sm:$0x1] %v427
        %v429 = vld [vmem:[#allocation2 + $0x90] sm:$0x1]
        %v430 = vsel %vm392, 0, %v429
        %431 = vst [vmem:[#allocation2 + $0x90] sm:$0x1] %v430
        %v432 = vld [vmem:[#allocation2 + $0x9c] sm:$0x1]
        %v433 = vsel %vm392, 0, %v432
        %434 = vst [vmem:[#allocation2 + $0x9c] sm:$0x1] %v433
        %v435 = vld [vmem:[#allocation2 + $0xa8] sm:$0x1]
        %v436 = vsel %vm392, 0, %v435
        %437 = vst [vmem:[#allocation2 + $0xa8] sm:$0x1] %v436
        %v438 = vld [vmem:[#allocation2 + $0xb4] sm:$0x1]
        %v439 = vsel %vm392, 0, %v438
        %440 = vst [vmem:[#allocation2 + $0xb4] sm:$0x1] %v439
        %v441 = vld [vmem:[#allocation2 + $0xc0] sm:$0x1]
        %v442 = vsel %vm392, 0, %v441
        %443 = vst [vmem:[#allocation2 + $0xc0] sm:$0x1] %v442
        %v444 = vld [vmem:[#allocation2 + $0xcc] sm:$0x1]
        %v445 = vsel %vm392, 0, %v444
        %446 = vst [vmem:[#allocation2 + $0xcc] sm:$0x1] %v445
        %vm447 = vsmask.f32 7938
        %vm448 = vmand %vm390, %vm447
        %v449 = vld [vmem:[#allocation2 + $0x8] sm:$0x1]
        %v450 = vsel %vm448, 0, %v449
        %451 = vst [vmem:[#allocation2 + $0x8] sm:$0x1] %v450
        %v452 = vld [vmem:[#allocation2 + $0x14] sm:$0x1]
        %v453 = vsel %vm448, 0, %v452
        %454 = vst [vmem:[#allocation2 + $0x14] sm:$0x1] %v453
        %v455 = vld [vmem:[#allocation2 + $0x20] sm:$0x1]
        %v456 = vsel %vm448, 0, %v455
        %457 = vst [vmem:[#allocation2 + $0x20] sm:$0x1] %v456
        %v458 = vld [vmem:[#allocation2 + $0x2c] sm:$0x1]
        %v459 = vsel %vm448, 0, %v458
        %460 = vst [vmem:[#allocation2 + $0x2c] sm:$0x1] %v459
        %v461 = vld [vmem:[#allocation2 + $0x38] sm:$0x1]
        %v462 = vsel %vm448, 0, %v461
        %463 = vst [vmem:[#allocation2 + $0x38] sm:$0x1] %v462
        %v464 = vld [vmem:[#allocation2 + $0x44] sm:$0x1]
        %v465 = vsel %vm448, 0, %v464
        %466 = vst [vmem:[#allocation2 + $0x44] sm:$0x1] %v465
        %v467 = vld [vmem:[#allocation2 + $0x50] sm:$0x1]
        %v468 = vsel %vm448, 0, %v467
        %469 = vst [vmem:[#allocation2 + $0x50] sm:$0x1] %v468
        %v470 = vld [vmem:[#allocation2 + $0x5c] sm:$0x1]
        %v471 = vsel %vm448, 0, %v470
        %472 = vst [vmem:[#allocation2 + $0x5c] sm:$0x1] %v471
        %v473 = vld [vmem:[#allocation2 + $0x68] sm:$0x1]
        %v474 = vsel %vm448, 0, %v473
        %475 = vst [vmem:[#allocation2 + $0x68] sm:$0x1] %v474
        %v476 = vld [vmem:[#allocation2 + $0x74] sm:$0x1]
        %v477 = vsel %vm448, 0, %v476
        %478 = vst [vmem:[#allocation2 + $0x74] sm:$0x1] %v477
        %v479 = vld [vmem:[#allocation2 + $0x80] sm:$0x1]
        %v480 = vsel %vm448, 0, %v479
        %481 = vst [vmem:[#allocation2 + $0x80] sm:$0x1] %v480
        %v482 = vld [vmem:[#allocation2 + $0x8c] sm:$0x1]
        %v483 = vsel %vm448, 0, %v482
        %484 = vst [vmem:[#allocation2 + $0x8c] sm:$0x1] %v483
        %v485 = vld [vmem:[#allocation2 + $0x98] sm:$0x1]
        %v486 = vsel %vm448, 0, %v485
        %487 = vst [vmem:[#allocation2 + $0x98] sm:$0x1] %v486
        %v488 = vld [vmem:[#allocation2 + $0xa4] sm:$0x1]
        %v489 = vsel %vm448, 0, %v488
        %490 = vst [vmem:[#allocation2 + $0xa4] sm:$0x1] %v489
        %v491 = vld [vmem:[#allocation2 + $0xb0] sm:$0x1]
        %v492 = vsel %vm448, 0, %v491
        %493 = vst [vmem:[#allocation2 + $0xb0] sm:$0x1] %v492
        %v494 = vld [vmem:[#allocation2 + $0xbc] sm:$0x1]
        %v495 = vsel %vm448, 0, %v494
        %496 = vst [vmem:[#allocation2 + $0xbc] sm:$0x1] %v495
        %v497 = vld [vmem:[#allocation2 + $0xc8] sm:$0x1]
        %v498 = vsel %vm448, 0, %v497
        %499 = vst [vmem:[#allocation2 + $0xc8] sm:$0x1] %v498
        %v500 = vld [vmem:[#allocation2 + $0xd4] sm:$0x1]
        %v501 = vsel %vm448, 0, %v500
        %502 = vst [vmem:[#allocation2 + $0xd4] sm:$0x1] %v501
        %v503 = vld [vmem:[%s339] sm:$0xff]
        %v504 = vld [vmem:[%s339 + $0x8] sm:$0xff]
        %v505 = vld [vmem:[%s339 + $0x10] sm:$0xff]
        %v506 = vld [vmem:[%s339 + $0x18] sm:$0xff]
        %v507 = vld [vmem:[%s339 + $0x20] sm:$0xff]
        %v508 = vld [vmem:[%s339 + $0x28] sm:$0xff]
        %v509 = vld [vmem:[%s339 + $0x30] sm:$0xff]
        %v510 = vld [vmem:[%s339 + $0x38] sm:$0xff]
        %v511 = vld [vmem:[%s339 + $0x40] sm:$0xff]
        %v512 = vld [vmem:[%s339 + $0x48] sm:$0xff]
        %v513 = vld [vmem:[%s339 + $0x50] sm:$0xff]
        %v514 = vld [vmem:[%s339 + $0x58] sm:$0xff]
        %v515 = vld [vmem:[%s339 + $0x60] sm:$0xff]
        %v516 = vld [vmem:[%s339 + $0x68] sm:$0xff]
        %v517 = vld [vmem:[%s339 + $0x70] sm:$0xff]
        %v518 = vld [vmem:[%s339 + $0x78] sm:$0xff]
        %v519 = vld [vmem:[%s339 + $0x80] sm:$0xff]
        %v520 = vld [vmem:[%s339 + $0x88] sm:$0xff]
        %v521 = vld [vmem:[%s339 + $0x90] sm:$0xff]
        %v522 = vld [vmem:[%s339 + $0x98] sm:$0xff]
        %v523 = vld [vmem:[%s339 + $0xa0] sm:$0xff]
        %v524 = vld [vmem:[%s339 + $0xa8] sm:$0xff]
        %v525 = vld [vmem:[%s339 + $0xb0] sm:$0xff]
        %v526 = vld [vmem:[%s339 + $0xb8] sm:$0xff]
        %v527 = vld [vmem:[%s339 + $0xc0] sm:$0xff]
        %v528 = vld [vmem:[%s339 + $0xc8] sm:$0xff]
        %v529 = vld [vmem:[%s339 + $0xd0] sm:$0xff]
        %v530 = vld [vmem:[%s339 + $0xd8] sm:$0xff]
        %v531 = vld [vmem:[%s339 + $0xe0] sm:$0xff]
        %v532 = vld [vmem:[%s339 + $0xe8] sm:$0xff]
        %v533 = vld [vmem:[%s339 + $0xf0] sm:$0xff]
        %v534 = vld [vmem:[%s339 + $0xf8] sm:$0xff]
        %v535 = vpack.c.bf16 %v504, %v503
        %v536 = vpack.c.bf16 %v506, %v505
        %v537 = vpack.c.bf16 %v508, %v507
        %v538 = vpack.c.bf16 %v510, %v509
        %v539 = vpack.c.bf16 %v512, %v511
        %v540 = vpack.c.bf16 %v514, %v513
        %v541 = vpack.c.bf16 %v516, %v515
        %v542 = vpack.c.bf16 %v518, %v517
        %v543 = vpack.c.bf16 %v520, %v519
        %v544 = vpack.c.bf16 %v522, %v521
        %v545 = vpack.c.bf16 %v524, %v523
        %v546 = vpack.c.bf16 %v526, %v525
        %v547 = vpack.c.bf16 %v528, %v527
        %v548 = vpack.c.bf16 %v530, %v529
        %v549 = vpack.c.bf16 %v532, %v531
        %v550 = vpack.c.bf16 %v534, %v533
        %v567 = vunpack.c.l.b16 %v535
        %v568 = vunpack.c.h.b16 %v535
        %v569 = vunpack.c.l.b16 %v536
        %v570 = vunpack.c.h.b16 %v536
        %v571 = vunpack.c.l.b16 %v537
        %v572 = vunpack.c.h.b16 %v537
        %v573 = vunpack.c.l.b16 %v538
        %v574 = vunpack.c.h.b16 %v538
        %v575 = vunpack.c.l.b16 %v539
        %v576 = vunpack.c.h.b16 %v539
        %v577 = vunpack.c.l.b16 %v540
        %v578 = vunpack.c.h.b16 %v540
        %v579 = vunpack.c.l.b16 %v541
        %v580 = vunpack.c.h.b16 %v541
        %v581 = vunpack.c.l.b16 %v542
        %v582 = vunpack.c.h.b16 %v542
        %v583 = vunpack.c.l.b16 %v543
        %v584 = vunpack.c.h.b16 %v543
        %v585 = vunpack.c.l.b16 %v544
        %v586 = vunpack.c.h.b16 %v544
        %v587 = vunpack.c.l.b16 %v545
        %v588 = vunpack.c.h.b16 %v545
        %v589 = vunpack.c.l.b16 %v546
        %v590 = vunpack.c.h.b16 %v546
        %v591 = vunpack.c.l.b16 %v547
        %v592 = vunpack.c.h.b16 %v547
        %v593 = vunpack.c.l.b16 %v548
        %v594 = vunpack.c.h.b16 %v548
        %v595 = vunpack.c.l.b16 %v549
        %v596 = vunpack.c.h.b16 %v549
        %v597 = vunpack.c.l.b16 %v550
        %v598 = vunpack.c.h.b16 %v550
        %v599 = vpack.c.b16 %v567, %v567
        %v600 = vpack.c.b16 %v568, %v568
        %v601 = vpack.c.b16 %v569, %v569
        %v602 = vpack.c.b16 %v570, %v570
        %v603 = vpack.c.b16 %v571, %v571
        %v604 = vpack.c.b16 %v572, %v572
        %v605 = vpack.c.b16 %v573, %v573
        %v606 = vpack.c.b16 %v574, %v574
        %v607 = vpack.c.b16 %v575, %v575
        %v608 = vpack.c.b16 %v576, %v576
        %v609 = vpack.c.b16 %v577, %v577
        %v610 = vpack.c.b16 %v578, %v578
        %v611 = vpack.c.b16 %v579, %v579
        %v612 = vpack.c.b16 %v580, %v580
        %v613 = vpack.c.b16 %v581, %v581
        %v614 = vpack.c.b16 %v582, %v582
        %v615 = vpack.c.b16 %v583, %v583
        %v616 = vpack.c.b16 %v584, %v584
        %v617 = vpack.c.b16 %v585, %v585
        %v618 = vpack.c.b16 %v586, %v586
        %v619 = vpack.c.b16 %v587, %v587
        %v620 = vpack.c.b16 %v588, %v588
        %v621 = vpack.c.b16 %v589, %v589
        %v622 = vpack.c.b16 %v590, %v590
        %v623 = vpack.c.b16 %v591, %v591
        %v624 = vpack.c.b16 %v592, %v592
        %v625 = vpack.c.b16 %v593, %v593
        %v626 = vpack.c.b16 %v594, %v594
        %v627 = vpack.c.b16 %v595, %v595
        %v628 = vpack.c.b16 %v596, %v596
        %v629 = vpack.c.b16 %v597, %v597
        %v630 = vpack.c.b16 %v598, %v598
        %vm631 = vsmask.f32 4368
        %vm632 = vmor %vm391, %vm631
        %v634 = vshrl.u32 %v599, 16
        %v636 = vrot.slane %v634, 7
        %v637 = vshll.u32 %v599, 16
        %v639 = vor.u32 %v636, %v637
        %v640 = vrot.slane %v636, 4
        %v642 = vshrl.u32 %v600, 16
        %v644 = vrot.slane %v642, 7
        %v645 = vshll.u32 %v600, 16
        %v647 = vor.u32 %v644, %v645
        %v648 = vsel %vm632, %v640, %v647
        %v649 = vrot.slane %v644, 4
        %v651 = vshrl.u32 %v601, 16
        %v653 = vrot.slane %v651, 7
        %v654 = vshll.u32 %v601, 16
        %v656 = vor.u32 %v653, %v654
        %v657 = vrot.slane %v653, 4
        %v659 = vshrl.u32 %v602, 16
        %v661 = vrot.slane %v659, 7
        %v662 = vshll.u32 %v602, 16
        %v664 = vor.u32 %v661, %v662
        %v665 = vsel %vm632, %v657, %v664
        %v666 = vrot.slane %v661, 4
        %v668 = vshrl.u32 %v603, 16
        %v670 = vrot.slane %v668, 7
        %v671 = vshll.u32 %v603, 16
        %v673 = vor.u32 %v670, %v671
        %v674 = vrot.slane %v670, 4
        %v676 = vshrl.u32 %v604, 16
        %v678 = vrot.slane %v676, 7
        %v679 = vshll.u32 %v604, 16
        %v681 = vor.u32 %v678, %v679
        %v682 = vsel %vm632, %v674, %v681
        %v683 = vrot.slane %v678, 4
        %v685 = vshrl.u32 %v605, 16
        %v687 = vrot.slane %v685, 7
        %v688 = vshll.u32 %v605, 16
        %v690 = vor.u32 %v687, %v688
        %v691 = vrot.slane %v687, 4
        %v693 = vshrl.u32 %v606, 16
        %v695 = vrot.slane %v693, 7
        %v696 = vshll.u32 %v606, 16
        %v698 = vor.u32 %v695, %v696
        %v699 = vsel %vm632, %v691, %v698
        %v700 = vrot.slane %v695, 4
        %v702 = vshrl.u32 %v607, 16
        %v704 = vrot.slane %v702, 7
        %v705 = vshll.u32 %v607, 16
        %v707 = vor.u32 %v704, %v705
        %v708 = vrot.slane %v704, 4
        %v710 = vshrl.u32 %v608, 16
        %v712 = vrot.slane %v710, 7
        %v713 = vshll.u32 %v608, 16
        %v715 = vor.u32 %v712, %v713
        %v716 = vsel %vm632, %v708, %v715
        %v717 = vrot.slane %v712, 4
        %v719 = vshrl.u32 %v609, 16
        %v721 = vrot.slane %v719, 7
        %v722 = vshll.u32 %v609, 16
        %v724 = vor.u32 %v721, %v722
        %v725 = vrot.slane %v721, 4
        %v727 = vshrl.u32 %v610, 16
        %v729 = vrot.slane %v727, 7
        %v730 = vshll.u32 %v610, 16
        %v732 = vor.u32 %v729, %v730
        %v733 = vsel %vm632, %v725, %v732
        %v734 = vrot.slane %v729, 4
        %v736 = vshrl.u32 %v611, 16
        %v738 = vrot.slane %v736, 7
        %v739 = vshll.u32 %v611, 16
        %v741 = vor.u32 %v738, %v739
        %v742 = vrot.slane %v738, 4
        %v744 = vshrl.u32 %v612, 16
        %v746 = vrot.slane %v744, 7
        %v747 = vshll.u32 %v612, 16
        %v749 = vor.u32 %v746, %v747
        %v750 = vsel %vm632, %v742, %v749
        %v751 = vrot.slane %v746, 4
        %v753 = vshrl.u32 %v613, 16
        %v755 = vrot.slane %v753, 7
        %v756 = vshll.u32 %v613, 16
        %v758 = vor.u32 %v755, %v756
        %v759 = vrot.slane %v755, 4
        %v761 = vshrl.u32 %v614, 16
        %v763 = vrot.slane %v761, 7
        %v764 = vshll.u32 %v614, 16
        %v766 = vor.u32 %v763, %v764
        %v767 = vsel %vm632, %v759, %v766
        %v768 = vrot.slane %v763, 4
        %v770 = vshrl.u32 %v615, 16
        %v772 = vrot.slane %v770, 7
        %v773 = vshll.u32 %v615, 16
        %v775 = vor.u32 %v772, %v773
        %v776 = vrot.slane %v772, 4
        %v778 = vshrl.u32 %v616, 16
        %v780 = vrot.slane %v778, 7
        %v781 = vshll.u32 %v616, 16
        %v783 = vor.u32 %v780, %v781
        %v784 = vsel %vm632, %v776, %v783
        %v785 = vrot.slane %v780, 4
        %v787 = vshrl.u32 %v617, 16
        %v789 = vrot.slane %v787, 7
        %v790 = vshll.u32 %v617, 16
        %v792 = vor.u32 %v789, %v790
        %v793 = vrot.slane %v789, 4
        %v795 = vshrl.u32 %v618, 16
        %v797 = vrot.slane %v795, 7
        %v798 = vshll.u32 %v618, 16
        %v800 = vor.u32 %v797, %v798
        %v801 = vsel %vm632, %v793, %v800
        %v802 = vrot.slane %v797, 4
        %v804 = vshrl.u32 %v619, 16
        %v806 = vrot.slane %v804, 7
        %v807 = vshll.u32 %v619, 16
        %v809 = vor.u32 %v806, %v807
        %v810 = vrot.slane %v806, 4
        %v812 = vshrl.u32 %v620, 16
        %v814 = vrot.slane %v812, 7
        %v815 = vshll.u32 %v620, 16
        %v817 = vor.u32 %v814, %v815
        %v818 = vsel %vm632, %v810, %v817
        %v819 = vrot.slane %v814, 4
        %v821 = vshrl.u32 %v621, 16
        %v823 = vrot.slane %v821, 7
        %v824 = vshll.u32 %v621, 16
        %v826 = vor.u32 %v823, %v824
        %v827 = vrot.slane %v823, 4
        %v829 = vshrl.u32 %v622, 16
        %v831 = vrot.slane %v829, 7
        %v832 = vshll.u32 %v622, 16
        %v834 = vor.u32 %v831, %v832
        %v835 = vsel %vm632, %v827, %v834
        %v836 = vrot.slane %v831, 4
        %v838 = vshrl.u32 %v623, 16
        %v840 = vrot.slane %v838, 7
        %v841 = vshll.u32 %v623, 16
        %v843 = vor.u32 %v840, %v841
        %v844 = vrot.slane %v840, 4
        %v846 = vshrl.u32 %v624, 16
        %v848 = vrot.slane %v846, 7
        %v849 = vshll.u32 %v624, 16
        %v851 = vor.u32 %v848, %v849
        %v852 = vsel %vm632, %v844, %v851
        %v853 = vrot.slane %v848, 4
        %v855 = vshrl.u32 %v625, 16
        %v857 = vrot.slane %v855, 7
        %v858 = vshll.u32 %v625, 16
        %v860 = vor.u32 %v857, %v858
        %v861 = vrot.slane %v857, 4
        %v863 = vshrl.u32 %v626, 16
        %v865 = vrot.slane %v863, 7
        %v866 = vshll.u32 %v626, 16
        %v868 = vor.u32 %v865, %v866
        %v869 = vsel %vm632, %v861, %v868
        %v870 = vrot.slane %v865, 4
        %v872 = vshrl.u32 %v627, 16
        %v874 = vrot.slane %v872, 7
        %v875 = vshll.u32 %v627, 16
        %v877 = vor.u32 %v874, %v875
        %v878 = vrot.slane %v874, 4
        %v880 = vshrl.u32 %v628, 16
        %v882 = vrot.slane %v880, 7
        %v883 = vshll.u32 %v628, 16
        %v885 = vor.u32 %v882, %v883
        %v886 = vsel %vm632, %v878, %v885
        %v887 = vrot.slane %v882, 4
        %v889 = vshrl.u32 %v629, 16
        %v891 = vrot.slane %v889, 7
        %v892 = vshll.u32 %v629, 16
        %v894 = vor.u32 %v891, %v892
        %v895 = vrot.slane %v891, 4
        %v897 = vshrl.u32 %v630, 16
        %v899 = vrot.slane %v897, 7
        %v900 = vshll.u32 %v630, 16
        %v902 = vor.u32 %v899, %v900
        %v903 = vsel %vm632, %v895, %v902
        %v904 = vrot.slane %v899, 4
        %s953 = scalar_lea.vmem [#allocation2], 12
        %vm954 = vcmask 1043456
        %vm955 = vmand %vm954, %vm447
        %v956 = vld [vmem:[%s953] sm:$0xf]
        %v957 = vsel %vm955, %v639, %v956
        %958 = vst [vmem:[%s953] sm:$0xf] %v957
        %959 = vst [vmem:[%s953 + $0x4] sm:$0xf] %v648
        %v960 = vld [vmem:[%s953 + $0x8] sm:$0x1]
        %v961 = vsel %vm392, %v649, %v960
        %962 = vst [vmem:[%s953 + $0x8] sm:$0x1] %v961
        %v963 = vld [vmem:[%s953 + $0xc] sm:$0xf]
        %v964 = vsel %vm955, %v656, %v963
        %965 = vst [vmem:[%s953 + $0xc] sm:$0xf] %v964
        %966 = vst [vmem:[%s953 + $0x10] sm:$0xf] %v665
        %v967 = vld [vmem:[%s953 + $0x14] sm:$0x1]
        %v968 = vsel %vm392, %v666, %v967
        %969 = vst [vmem:[%s953 + $0x14] sm:$0x1] %v968
        %v970 = vld [vmem:[%s953 + $0x18] sm:$0xf]
        %v971 = vsel %vm955, %v673, %v970
        %972 = vst [vmem:[%s953 + $0x18] sm:$0xf] %v971
        %973 = vst [vmem:[%s953 + $0x1c] sm:$0xf] %v682
        %v974 = vld [vmem:[%s953 + $0x20] sm:$0x1]
        %v975 = vsel %vm392, %v683, %v974
        %976 = vst [vmem:[%s953 + $0x20] sm:$0x1] %v975
        %v977 = vld [vmem:[%s953 + $0x24] sm:$0xf]
        %v978 = vsel %vm955, %v690, %v977
        %979 = vst [vmem:[%s953 + $0x24] sm:$0xf] %v978
        %980 = vst [vmem:[%s953 + $0x28] sm:$0xf] %v699
        %v981 = vld [vmem:[%s953 + $0x2c] sm:$0x1]
        %v982 = vsel %vm392, %v700, %v981
        %983 = vst [vmem:[%s953 + $0x2c] sm:$0x1] %v982
        %v984 = vld [vmem:[%s953 + $0x30] sm:$0xf]
        %v985 = vsel %vm955, %v707, %v984
        %986 = vst [vmem:[%s953 + $0x30] sm:$0xf] %v985
        %987 = vst [vmem:[%s953 + $0x34] sm:$0xf] %v716
        %v988 = vld [vmem:[%s953 + $0x38] sm:$0x1]
        %v989 = vsel %vm392, %v717, %v988
        %990 = vst [vmem:[%s953 + $0x38] sm:$0x1] %v989
        %v991 = vld [vmem:[%s953 + $0x3c] sm:$0xf]
        %v992 = vsel %vm955, %v724, %v991
        %993 = vst [vmem:[%s953 + $0x3c] sm:$0xf] %v992
        %994 = vst [vmem:[%s953 + $0x40] sm:$0xf] %v733
        %v995 = vld [vmem:[%s953 + $0x44] sm:$0x1]
        %v996 = vsel %vm392, %v734, %v995
        %997 = vst [vmem:[%s953 + $0x44] sm:$0x1] %v996
        %v998 = vld [vmem:[%s953 + $0x48] sm:$0xf]
        %v999 = vsel %vm955, %v741, %v998
        %1000 = vst [vmem:[%s953 + $0x48] sm:$0xf] %v999
        %1001 = vst [vmem:[%s953 + $0x4c] sm:$0xf] %v750
        %v1002 = vld [vmem:[%s953 + $0x50] sm:$0x1]
        %v1003 = vsel %vm392, %v751, %v1002
        %1004 = vst [vmem:[%s953 + $0x50] sm:$0x1] %v1003
        %v1005 = vld [vmem:[%s953 + $0x54] sm:$0xf]
        %v1006 = vsel %vm955, %v758, %v1005
        %1007 = vst [vmem:[%s953 + $0x54] sm:$0xf] %v1006
        %1008 = vst [vmem:[%s953 + $0x58] sm:$0xf] %v767
        %v1009 = vld [vmem:[%s953 + $0x5c] sm:$0x1]
        %v1010 = vsel %vm392, %v768, %v1009
        %1011 = vst [vmem:[%s953 + $0x5c] sm:$0x1] %v1010
        %v1012 = vld [vmem:[%s953 + $0x60] sm:$0xf]
        %v1013 = vsel %vm955, %v775, %v1012
        %1014 = vst [vmem:[%s953 + $0x60] sm:$0xf] %v1013
        %1015 = vst [vmem:[%s953 + $0x64] sm:$0xf] %v784
        %v1016 = vld [vmem:[%s953 + $0x68] sm:$0x1]
        %v1017 = vsel %vm392, %v785, %v1016
        %1018 = vst [vmem:[%s953 + $0x68] sm:$0x1] %v1017
        %v1019 = vld [vmem:[%s953 + $0x6c] sm:$0xf]
        %v1020 = vsel %vm955, %v792, %v1019
        %1021 = vst [vmem:[%s953 + $0x6c] sm:$0xf] %v1020
        %1022 = vst [vmem:[%s953 + $0x70] sm:$0xf] %v801
        %v1023 = vld [vmem:[%s953 + $0x74] sm:$0x1]
        %v1024 = vsel %vm392, %v802, %v1023
        %1025 = vst [vmem:[%s953 + $0x74] sm:$0x1] %v1024
        %v1026 = vld [vmem:[%s953 + $0x78] sm:$0xf]
        %v1027 = vsel %vm955, %v809, %v1026
        %1028 = vst [vmem:[%s953 + $0x78] sm:$0xf] %v1027
        %1029 = vst [vmem:[%s953 + $0x7c] sm:$0xf] %v818
        %v1030 = vld [vmem:[%s953 + $0x80] sm:$0x1]
        %v1031 = vsel %vm392, %v819, %v1030
        %1032 = vst [vmem:[%s953 + $0x80] sm:$0x1] %v1031
        %v1033 = vld [vmem:[%s953 + $0x84] sm:$0xf]
        %v1034 = vsel %vm955, %v826, %v1033
        %1035 = vst [vmem:[%s953 + $0x84] sm:$0xf] %v1034
        %1036 = vst [vmem:[%s953 + $0x88] sm:$0xf] %v835
        %v1037 = vld [vmem:[%s953 + $0x8c] sm:$0x1]
        %v1038 = vsel %vm392, %v836, %v1037
        %1039 = vst [vmem:[%s953 + $0x8c] sm:$0x1] %v1038
        %v1040 = vld [vmem:[%s953 + $0x90] sm:$0xf]
        %v1041 = vsel %vm955, %v843, %v1040
        %1042 = vst [vmem:[%s953 + $0x90] sm:$0xf] %v1041
        %1043 = vst [vmem:[%s953 + $0x94] sm:$0xf] %v852
        %v1044 = vld [vmem:[%s953 + $0x98] sm:$0x1]
        %v1045 = vsel %vm392, %v853, %v1044
        %1046 = vst [vmem:[%s953 + $0x98] sm:$0x1] %v1045
        %v1047 = vld [vmem:[%s953 + $0x9c] sm:$0xf]
        %v1048 = vsel %vm955, %v860, %v1047
        %1049 = vst [vmem:[%s953 + $0x9c] sm:$0xf] %v1048
        %1050 = vst [vmem:[%s953 + $0xa0] sm:$0xf] %v869
        %v1051 = vld [vmem:[%s953 + $0xa4] sm:$0x1]
        %v1052 = vsel %vm392, %v870, %v1051
        %1053 = vst [vmem:[%s953 + $0xa4] sm:$0x1] %v1052
        %v1054 = vld [vmem:[%s953 + $0xa8] sm:$0xf]
        %v1055 = vsel %vm955, %v877, %v1054
        %1056 = vst [vmem:[%s953 + $0xa8] sm:$0xf] %v1055
        %1057 = vst [vmem:[%s953 + $0xac] sm:$0xf] %v886
        %v1058 = vld [vmem:[%s953 + $0xb0] sm:$0x1]
        %v1059 = vsel %vm392, %v887, %v1058
        %1060 = vst [vmem:[%s953 + $0xb0] sm:$0x1] %v1059
        %v1061 = vld [vmem:[%s953 + $0xb4] sm:$0xf]
        %v1062 = vsel %vm955, %v894, %v1061
        %1063 = vst [vmem:[%s953 + $0xb4] sm:$0xf] %v1062
        %1064 = vst [vmem:[%s953 + $0xb8] sm:$0xf] %v903
        %v1065 = vld [vmem:[%s953 + $0xbc] sm:$0x1]
        %v1066 = vsel %vm392, %v904, %v1065
        %1067 = vst [vmem:[%s953 + $0xbc] sm:$0x1] %v1066
        %v1068 = vld [vmem:[#allocation2] sm:$0xf]
        %v1069 = vld [vmem:[#allocation2 + $0x4] sm:$0xf]
        %v1070 = vld [vmem:[#allocation2 + $0xc] sm:$0xf]
        %v1071 = vld [vmem:[#allocation2 + $0x10] sm:$0xf]
        %v1072 = vld [vmem:[#allocation2 + $0x18] sm:$0xf]
        %v1073 = vld [vmem:[#allocation2 + $0x1c] sm:$0xf]
        %v1074 = vld [vmem:[#allocation2 + $0x24] sm:$0xf]
        %v1075 = vld [vmem:[#allocation2 + $0x28] sm:$0xf]
        %v1076 = vld [vmem:[#allocation2 + $0x30] sm:$0xf]
        %v1077 = vld [vmem:[#allocation2 + $0x34] sm:$0xf]
        %v1078 = vld [vmem:[#allocation2 + $0x3c] sm:$0xf]
        %v1079 = vld [vmem:[#allocation2 + $0x40] sm:$0xf]
        %v1080 = vld [vmem:[#allocation2 + $0x48] sm:$0xf]
        %v1081 = vld [vmem:[#allocation2 + $0x4c] sm:$0xf]
        %v1082 = vld [vmem:[#allocation2 + $0x54] sm:$0xf]
        %v1083 = vld [vmem:[#allocation2 + $0x58] sm:$0xf]
        %v1084 = vld [vmem:[#allocation2 + $0x60] sm:$0xf]
        %v1085 = vld [vmem:[#allocation2 + $0x64] sm:$0xf]
        %v1086 = vld [vmem:[#allocation2 + $0x6c] sm:$0xf]
        %v1087 = vld [vmem:[#allocation2 + $0x70] sm:$0xf]
        %v1088 = vld [vmem:[#allocation2 + $0x78] sm:$0xf]
        %v1089 = vld [vmem:[#allocation2 + $0x7c] sm:$0xf]
        %v1090 = vld [vmem:[#allocation2 + $0x84] sm:$0xf]
        %v1091 = vld [vmem:[#allocation2 + $0x88] sm:$0xf]
        %v1092 = vld [vmem:[#allocation2 + $0x90] sm:$0xf]
        %v1093 = vld [vmem:[#allocation2 + $0x94] sm:$0xf]
        %v1094 = vld [vmem:[#allocation2 + $0x9c] sm:$0xf]
        %v1095 = vld [vmem:[#allocation2 + $0xa0] sm:$0xf]
        %v1096 = vld [vmem:[#allocation2 + $0xa8] sm:$0xf]
        %v1097 = vld [vmem:[#allocation2 + $0xac] sm:$0xf]
        %v1098 = vld [vmem:[#allocation2 + $0xb4] sm:$0xf]
        %v1099 = vld [vmem:[#allocation2 + $0xb8] sm:$0xf]
        %v1100 = vld [vmem:[#allocation2 + $0x8] sm:$0x1]
        %v1101 = vld [vmem:[#allocation2 + $0x14] sm:$0x1]
        %v1102 = vld [vmem:[#allocation2 + $0x20] sm:$0x1]
        %v1103 = vld [vmem:[#allocation2 + $0x2c] sm:$0x1]
        %v1104 = vld [vmem:[#allocation2 + $0x38] sm:$0x1]
        %v1105 = vld [vmem:[#allocation2 + $0x44] sm:$0x1]
        %v1106 = vld [vmem:[#allocation2 + $0x50] sm:$0x1]
        %v1107 = vld [vmem:[#allocation2 + $0x5c] sm:$0x1]
        %v1108 = vld [vmem:[#allocation2 + $0x68] sm:$0x1]
        %v1109 = vld [vmem:[#allocation2 + $0x74] sm:$0x1]
        %v1110 = vld [vmem:[#allocation2 + $0x80] sm:$0x1]
        %v1111 = vld [vmem:[#allocation2 + $0x8c] sm:$0x1]
        %v1112 = vld [vmem:[#allocation2 + $0x98] sm:$0x1]
        %v1113 = vld [vmem:[#allocation2 + $0xa4] sm:$0x1]
        %v1114 = vld [vmem:[#allocation2 + $0xb0] sm:$0x1]
        %v1115 = vld [vmem:[#allocation2 + $0xbc] sm:$0x1]
        %vm1116 = vsmask.f32 3328
        %vm1117 = vsmask.f32 7440
        %vm1118 = vmor %vm1116, %vm1117
        %v1120 = vshrl.u32 %v1068, 16
        %v1122 = vrot.slane %v1120, 4
        %v1123 = vshll.u32 %v1068, 16
        %v1125 = vrot.slane %v1123, 5
        %v1126 = vor.u32 %v1122, %v1125
        %v1127 = vrot.slane %v1126, 4
        %v1129 = vshll.u32 %v1069, 16
        %v1131 = vrot.slane %v1129, 5
        %v1132 = vsel %vm1118, %v1127, %v1131
        %v1133 = vshrl.u32 %v1069, 16
        %v1135 = vrot.slane %v1133, 4
        %v1136 = vor.u32 %v1135, %v1131
        %v1137 = vrot.slane %v1136, 4
        %v1139 = vshll.u32 %v1100, 16
        %v1141 = vrot.slane %v1139, 5
        %v1142 = vsel %vm1118, %v1137, %v1141
        %v1144 = vshrl.u32 %v1070, 16
        %v1146 = vrot.slane %v1144, 4
        %v1147 = vshll.u32 %v1070, 16
        %v1149 = vrot.slane %v1147, 5
        %v1150 = vor.u32 %v1146, %v1149
        %v1151 = vrot.slane %v1150, 4
        %v1153 = vshll.u32 %v1071, 16
        %v1155 = vrot.slane %v1153, 5
        %v1156 = vsel %vm1118, %v1151, %v1155
        %v1157 = vshrl.u32 %v1071, 16
        %v1159 = vrot.slane %v1157, 4
        %v1160 = vor.u32 %v1159, %v1155
        %v1161 = vrot.slane %v1160, 4
        %v1163 = vshll.u32 %v1101, 16
        %v1165 = vrot.slane %v1163, 5
        %v1166 = vsel %vm1118, %v1161, %v1165
        %v1168 = vshrl.u32 %v1072, 16
        %v1170 = vrot.slane %v1168, 4
        %v1171 = vshll.u32 %v1072, 16
        %v1173 = vrot.slane %v1171, 5
        %v1174 = vor.u32 %v1170, %v1173
        %v1175 = vrot.slane %v1174, 4
        %v1177 = vshll.u32 %v1073, 16
        %v1179 = vrot.slane %v1177, 5
        %v1180 = vsel %vm1118, %v1175, %v1179
        %v1181 = vshrl.u32 %v1073, 16
        %v1183 = vrot.slane %v1181, 4
        %v1184 = vor.u32 %v1183, %v1179
        %v1185 = vrot.slane %v1184, 4
        %v1187 = vshll.u32 %v1102, 16
        %v1189 = vrot.slane %v1187, 5
        %v1190 = vsel %vm1118, %v1185, %v1189
        %v1192 = vshrl.u32 %v1074, 16
        %v1194 = vrot.slane %v1192, 4
        %v1195 = vshll.u32 %v1074, 16
        %v1197 = vrot.slane %v1195, 5
        %v1198 = vor.u32 %v1194, %v1197
        %v1199 = vrot.slane %v1198, 4
        %v1201 = vshll.u32 %v1075, 16
        %v1203 = vrot.slane %v1201, 5
        %v1204 = vsel %vm1118, %v1199, %v1203
        %v1205 = vshrl.u32 %v1075, 16
        %v1207 = vrot.slane %v1205, 4
        %v1208 = vor.u32 %v1207, %v1203
        %v1209 = vrot.slane %v1208, 4
        %v1211 = vshll.u32 %v1103, 16
        %v1213 = vrot.slane %v1211, 5
        %v1214 = vsel %vm1118, %v1209, %v1213
        %v1216 = vshrl.u32 %v1076, 16
        %v1218 = vrot.slane %v1216, 4
        %v1219 = vshll.u32 %v1076, 16
        %v1221 = vrot.slane %v1219, 5
        %v1222 = vor.u32 %v1218, %v1221
        %v1223 = vrot.slane %v1222, 4
        %v1225 = vshll.u32 %v1077, 16
        %v1227 = vrot.slane %v1225, 5
        %v1228 = vsel %vm1118, %v1223, %v1227
        %v1229 = vshrl.u32 %v1077, 16
        %v1231 = vrot.slane %v1229, 4
        %v1232 = vor.u32 %v1231, %v1227
        %v1233 = vrot.slane %v1232, 4
        %v1235 = vshll.u32 %v1104, 16
        %v1237 = vrot.slane %v1235, 5
        %v1238 = vsel %vm1118, %v1233, %v1237
        %v1240 = vshrl.u32 %v1078, 16
        %v1242 = vrot.slane %v1240, 4
        %v1243 = vshll.u32 %v1078, 16
        %v1245 = vrot.slane %v1243, 5
        %v1246 = vor.u32 %v1242, %v1245
        %v1247 = vrot.slane %v1246, 4
        %v1249 = vshll.u32 %v1079, 16
        %v1251 = vrot.slane %v1249, 5
        %v1252 = vsel %vm1118, %v1247, %v1251
        %v1253 = vshrl.u32 %v1079, 16
        %v1255 = vrot.slane %v1253, 4
        %v1256 = vor.u32 %v1255, %v1251
        %v1257 = vrot.slane %v1256, 4
        %v1259 = vshll.u32 %v1105, 16
        %v1261 = vrot.slane %v1259, 5
        %v1262 = vsel %vm1118, %v1257, %v1261
        %v1264 = vshrl.u32 %v1080, 16
        %v1266 = vrot.slane %v1264, 4
        %v1267 = vshll.u32 %v1080, 16
        %v1269 = vrot.slane %v1267, 5
        %v1270 = vor.u32 %v1266, %v1269
        %v1271 = vrot.slane %v1270, 4
        %v1273 = vshll.u32 %v1081, 16
        %v1275 = vrot.slane %v1273, 5
        %v1276 = vsel %vm1118, %v1271, %v1275
        %v1277 = vshrl.u32 %v1081, 16
        %v1279 = vrot.slane %v1277, 4
        %v1280 = vor.u32 %v1279, %v1275
        %v1281 = vrot.slane %v1280, 4
        %v1283 = vshll.u32 %v1106, 16
        %v1285 = vrot.slane %v1283, 5
        %v1286 = vsel %vm1118, %v1281, %v1285
        %v1288 = vshrl.u32 %v1082, 16
        %v1290 = vrot.slane %v1288, 4
        %v1291 = vshll.u32 %v1082, 16
        %v1293 = vrot.slane %v1291, 5
        %v1294 = vor.u32 %v1290, %v1293
        %v1295 = vrot.slane %v1294, 4
        %v1297 = vshll.u32 %v1083, 16
        %v1299 = vrot.slane %v1297, 5
        %v1300 = vsel %vm1118, %v1295, %v1299
        %v1301 = vshrl.u32 %v1083, 16
        %v1303 = vrot.slane %v1301, 4
        %v1304 = vor.u32 %v1303, %v1299
        %v1305 = vrot.slane %v1304, 4
        %v1307 = vshll.u32 %v1107, 16
        %v1309 = vrot.slane %v1307, 5
        %v1310 = vsel %vm1118, %v1305, %v1309
        %v1312 = vshrl.u32 %v1084, 16
        %v1314 = vrot.slane %v1312, 4
        %v1315 = vshll.u32 %v1084, 16
        %v1317 = vrot.slane %v1315, 5
        %v1318 = vor.u32 %v1314, %v1317
        %v1319 = vrot.slane %v1318, 4
        %v1321 = vshll.u32 %v1085, 16
        %v1323 = vrot.slane %v1321, 5
        %v1324 = vsel %vm1118, %v1319, %v1323
        %v1325 = vshrl.u32 %v1085, 16
        %v1327 = vrot.slane %v1325, 4
        %v1328 = vor.u32 %v1327, %v1323
        %v1329 = vrot.slane %v1328, 4
        %v1331 = vshll.u32 %v1108, 16
        %v1333 = vrot.slane %v1331, 5
        %v1334 = vsel %vm1118, %v1329, %v1333
        %v1336 = vshrl.u32 %v1086, 16
        %v1338 = vrot.slane %v1336, 4
        %v1339 = vshll.u32 %v1086, 16
        %v1341 = vrot.slane %v1339, 5
        %v1342 = vor.u32 %v1338, %v1341
        %v1343 = vrot.slane %v1342, 4
        %v1345 = vshll.u32 %v1087, 16
        %v1347 = vrot.slane %v1345, 5
        %v1348 = vsel %vm1118, %v1343, %v1347
        %v1349 = vshrl.u32 %v1087, 16
        %v1351 = vrot.slane %v1349, 4
        %v1352 = vor.u32 %v1351, %v1347
        %v1353 = vrot.slane %v1352, 4
        %v1355 = vshll.u32 %v1109, 16
        %v1357 = vrot.slane %v1355, 5
        %v1358 = vsel %vm1118, %v1353, %v1357
        %v1360 = vshrl.u32 %v1088, 16
        %v1362 = vrot.slane %v1360, 4
        %v1363 = vshll.u32 %v1088, 16
        %v1365 = vrot.slane %v1363, 5
        %v1366 = vor.u32 %v1362, %v1365
        %v1367 = vrot.slane %v1366, 4
        %v1369 = vshll.u32 %v1089, 16
        %v1371 = vrot.slane %v1369, 5
        %v1372 = vsel %vm1118, %v1367, %v1371
        %v1373 = vshrl.u32 %v1089, 16
        %v1375 = vrot.slane %v1373, 4
        %v1376 = vor.u32 %v1375, %v1371
        %v1377 = vrot.slane %v1376, 4
        %v1379 = vshll.u32 %v1110, 16
        %v1381 = vrot.slane %v1379, 5
        %v1382 = vsel %vm1118, %v1377, %v1381
        %v1384 = vshrl.u32 %v1090, 16
        %v1386 = vrot.slane %v1384, 4
        %v1387 = vshll.u32 %v1090, 16
        %v1389 = vrot.slane %v1387, 5
        %v1390 = vor.u32 %v1386, %v1389
        %v1391 = vrot.slane %v1390, 4
        %v1393 = vshll.u32 %v1091, 16
        %v1395 = vrot.slane %v1393, 5
        %v1396 = vsel %vm1118, %v1391, %v1395
        %v1397 = vshrl.u32 %v1091, 16
        %v1399 = vrot.slane %v1397, 4
        %v1400 = vor.u32 %v1399, %v1395
        %v1401 = vrot.slane %v1400, 4
        %v1403 = vshll.u32 %v1111, 16
        %v1405 = vrot.slane %v1403, 5
        %v1406 = vsel %vm1118, %v1401, %v1405
        %v1408 = vshrl.u32 %v1092, 16
        %v1410 = vrot.slane %v1408, 4
        %v1411 = vshll.u32 %v1092, 16
        %v1413 = vrot.slane %v1411, 5
        %v1414 = vor.u32 %v1410, %v1413
        %v1415 = vrot.slane %v1414, 4
        %v1417 = vshll.u32 %v1093, 16
        %v1419 = vrot.slane %v1417, 5
        %v1420 = vsel %vm1118, %v1415, %v1419
        %v1421 = vshrl.u32 %v1093, 16
        %v1423 = vrot.slane %v1421, 4
        %v1424 = vor.u32 %v1423, %v1419
        %v1425 = vrot.slane %v1424, 4
        %v1427 = vshll.u32 %v1112, 16
        %v1429 = vrot.slane %v1427, 5
        %v1430 = vsel %vm1118, %v1425, %v1429
        %v1432 = vshrl.u32 %v1094, 16
        %v1434 = vrot.slane %v1432, 4
        %v1435 = vshll.u32 %v1094, 16
        %v1437 = vrot.slane %v1435, 5
        %v1438 = vor.u32 %v1434, %v1437
        %v1439 = vrot.slane %v1438, 4
        %v1441 = vshll.u32 %v1095, 16
        %v1443 = vrot.slane %v1441, 5
        %v1444 = vsel %vm1118, %v1439, %v1443
        %v1445 = vshrl.u32 %v1095, 16
        %v1447 = vrot.slane %v1445, 4
        %v1448 = vor.u32 %v1447, %v1443
        %v1449 = vrot.slane %v1448, 4
        %v1451 = vshll.u32 %v1113, 16
        %v1453 = vrot.slane %v1451, 5
        %v1454 = vsel %vm1118, %v1449, %v1453
        %v1456 = vshrl.u32 %v1096, 16
        %v1458 = vrot.slane %v1456, 4
        %v1459 = vshll.u32 %v1096, 16
        %v1461 = vrot.slane %v1459, 5
        %v1462 = vor.u32 %v1458, %v1461
        %v1463 = vrot.slane %v1462, 4
        %v1465 = vshll.u32 %v1097, 16
        %v1467 = vrot.slane %v1465, 5
        %v1468 = vsel %vm1118, %v1463, %v1467
        %v1469 = vshrl.u32 %v1097, 16
        %v1471 = vrot.slane %v1469, 4
        %v1472 = vor.u32 %v1471, %v1467
        %v1473 = vrot.slane %v1472, 4
        %v1475 = vshll.u32 %v1114, 16
        %v1477 = vrot.slane %v1475, 5
        %v1478 = vsel %vm1118, %v1473, %v1477
        %v1480 = vshrl.u32 %v1098, 16
        %v1482 = vrot.slane %v1480, 4
        %v1483 = vshll.u32 %v1098, 16
        %v1485 = vrot.slane %v1483, 5
        %v1486 = vor.u32 %v1482, %v1485
        %v1487 = vrot.slane %v1486, 4
        %v1489 = vshll.u32 %v1099, 16
        %v1491 = vrot.slane %v1489, 5
        %v1492 = vsel %vm1118, %v1487, %v1491
        %v1493 = vshrl.u32 %v1099, 16
        %v1495 = vrot.slane %v1493, 4
        %v1496 = vor.u32 %v1495, %v1491
        %v1497 = vrot.slane %v1496, 4
        %v1499 = vshll.u32 %v1115, 16
        %v1501 = vrot.slane %v1499, 5
        %v1502 = vsel %vm1118, %v1497, %v1501
        %v1503 = vld [vmem:[#allocation2] sm:$0xe]
        %v1504 = vld [vmem:[#allocation2 + $0xc] sm:$0xe]
        %v1505 = vld [vmem:[#allocation2 + $0x18] sm:$0xe]
        %v1506 = vld [vmem:[#allocation2 + $0x24] sm:$0xe]
        %v1507 = vld [vmem:[#allocation2 + $0x30] sm:$0xe]
        %v1508 = vld [vmem:[#allocation2 + $0x3c] sm:$0xe]
        %v1509 = vld [vmem:[#allocation2 + $0x48] sm:$0xe]
        %v1510 = vld [vmem:[#allocation2 + $0x54] sm:$0xe]
        %v1511 = vld [vmem:[#allocation2 + $0x60] sm:$0xe]
        %v1512 = vld [vmem:[#allocation2 + $0x6c] sm:$0xe]
        %v1513 = vld [vmem:[#allocation2 + $0x78] sm:$0xe]
        %v1514 = vld [vmem:[#allocation2 + $0x84] sm:$0xe]
        %v1515 = vld [vmem:[#allocation2 + $0x90] sm:$0xe]
        %v1516 = vld [vmem:[#allocation2 + $0x9c] sm:$0xe]
        %v1517 = vld [vmem:[#allocation2 + $0xa8] sm:$0xe]
        %v1518 = vld [vmem:[#allocation2 + $0xb4] sm:$0xe]
        %vm1567 = vcmask 1042432
        %vm1568 = vcmask 1046532
        %vm1569 = vmor %vm1567, %vm1568
        %v1570 = vrot.slane %v1503, 5
        %v1571 = vrot.slane %v1570, 4
        %v1572 = vrot.slane %v1069, 5
        %v1573 = vsel %vm1569, %v1571, %v1572
        %v1574 = vrot.slane %v1572, 4
        %v1575 = vrot.slane %v1100, 5
        %v1576 = vsel %vm1569, %v1574, %v1575
        %v1577 = vrot.slane %v1504, 5
        %v1578 = vrot.slane %v1577, 4
        %v1579 = vrot.slane %v1071, 5
        %v1580 = vsel %vm1569, %v1578, %v1579
        %v1581 = vrot.slane %v1579, 4
        %v1582 = vrot.slane %v1101, 5
        %v1583 = vsel %vm1569, %v1581, %v1582
        %v1584 = vrot.slane %v1505, 5
        %v1585 = vrot.slane %v1584, 4
        %v1586 = vrot.slane %v1073, 5
        %v1587 = vsel %vm1569, %v1585, %v1586
        %v1588 = vrot.slane %v1586, 4
        %v1589 = vrot.slane %v1102, 5
        %v1590 = vsel %vm1569, %v1588, %v1589
        %v1591 = vrot.slane %v1506, 5
        %v1592 = vrot.slane %v1591, 4
        %v1593 = vrot.slane %v1075, 5
        %v1594 = vsel %vm1569, %v1592, %v1593
        %v1595 = vrot.slane %v1593, 4
        %v1596 = vrot.slane %v1103, 5
        %v1597 = vsel %vm1569, %v1595, %v1596
        %v1598 = vrot.slane %v1507, 5
        %v1599 = vrot.slane %v1598, 4
        %v1600 = vrot.slane %v1077, 5
        %v1601 = vsel %vm1569, %v1599, %v1600
        %v1602 = vrot.slane %v1600, 4
        %v1603 = vrot.slane %v1104, 5
        %v1604 = vsel %vm1569, %v1602, %v1603
        %v1605 = vrot.slane %v1508, 5
        %v1606 = vrot.slane %v1605, 4
        %v1607 = vrot.slane %v1079, 5
        %v1608 = vsel %vm1569, %v1606, %v1607
        %v1609 = vrot.slane %v1607, 4
        %v1610 = vrot.slane %v1105, 5
        %v1611 = vsel %vm1569, %v1609, %v1610
        %v1612 = vrot.slane %v1509, 5
        %v1613 = vrot.slane %v1612, 4
        %v1614 = vrot.slane %v1081, 5
        %v1615 = vsel %vm1569, %v1613, %v1614
        %v1616 = vrot.slane %v1614, 4
        %v1617 = vrot.slane %v1106, 5
        %v1618 = vsel %vm1569, %v1616, %v1617
        %v1619 = vrot.slane %v1510, 5
        %v1620 = vrot.slane %v1619, 4
        %v1621 = vrot.slane %v1083, 5
        %v1622 = vsel %vm1569, %v1620, %v1621
        %v1623 = vrot.slane %v1621, 4
        %v1624 = vrot.slane %v1107, 5
        %v1625 = vsel %vm1569, %v1623, %v1624
        %v1626 = vrot.slane %v1511, 5
        %v1627 = vrot.slane %v1626, 4
        %v1628 = vrot.slane %v1085, 5
        %v1629 = vsel %vm1569, %v1627, %v1628
        %v1630 = vrot.slane %v1628, 4
        %v1631 = vrot.slane %v1108, 5
        %v1632 = vsel %vm1569, %v1630, %v1631
        %v1633 = vrot.slane %v1512, 5
        %v1634 = vrot.slane %v1633, 4
        %v1635 = vrot.slane %v1087, 5
        %v1636 = vsel %vm1569, %v1634, %v1635
        %v1637 = vrot.slane %v1635, 4
        %v1638 = vrot.slane %v1109, 5
        %v1639 = vsel %vm1569, %v1637, %v1638
        %v1640 = vrot.slane %v1513, 5
        %v1641 = vrot.slane %v1640, 4
        %v1642 = vrot.slane %v1089, 5
        %v1643 = vsel %vm1569, %v1641, %v1642
        %v1644 = vrot.slane %v1642, 4
        %v1645 = vrot.slane %v1110, 5
        %v1646 = vsel %vm1569, %v1644, %v1645
        %v1647 = vrot.slane %v1514, 5
        %v1648 = vrot.slane %v1647, 4
        %v1649 = vrot.slane %v1091, 5
        %v1650 = vsel %vm1569, %v1648, %v1649
        %v1651 = vrot.slane %v1649, 4
        %v1652 = vrot.slane %v1111, 5
        %v1653 = vsel %vm1569, %v1651, %v1652
        %v1654 = vrot.slane %v1515, 5
        %v1655 = vrot.slane %v1654, 4
        %v1656 = vrot.slane %v1093, 5
        %v1657 = vsel %vm1569, %v1655, %v1656
        %v1658 = vrot.slane %v1656, 4
        %v1659 = vrot.slane %v1112, 5
        %v1660 = vsel %vm1569, %v1658, %v1659
        %v1661 = vrot.slane %v1516, 5
        %v1662 = vrot.slane %v1661, 4
        %v1663 = vrot.slane %v1095, 5
        %v1664 = vsel %vm1569, %v1662, %v1663
        %v1665 = vrot.slane %v1663, 4
        %v1666 = vrot.slane %v1113, 5
        %v1667 = vsel %vm1569, %v1665, %v1666
        %v1668 = vrot.slane %v1517, 5
        %v1669 = vrot.slane %v1668, 4
        %v1670 = vrot.slane %v1097, 5
        %v1671 = vsel %vm1569, %v1669, %v1670
        %v1672 = vrot.slane %v1670, 4
        %v1673 = vrot.slane %v1114, 5
        %v1674 = vsel %vm1569, %v1672, %v1673
        %v1675 = vrot.slane %v1518, 5
        %v1676 = vrot.slane %v1675, 4
        %v1677 = vrot.slane %v1099, 5
        %v1678 = vsel %vm1569, %v1676, %v1677
        %v1679 = vrot.slane %v1677, 4
        %v1680 = vrot.slane %v1115, 5
        %v1681 = vsel %vm1569, %v1679, %v1680
        %v1682 = vld [vmem:[%s953] sm:$0xf]
        %v1683 = vld [vmem:[%s953 + $0x4] sm:$0xf]
        %v1684 = vld [vmem:[%s953 + $0xc] sm:$0xf]
        %v1685 = vld [vmem:[%s953 + $0x10] sm:$0xf]
        %v1686 = vld [vmem:[%s953 + $0x18] sm:$0xf]
        %v1687 = vld [vmem:[%s953 + $0x1c] sm:$0xf]
        %v1688 = vld [vmem:[%s953 + $0x24] sm:$0xf]
        %v1689 = vld [vmem:[%s953 + $0x28] sm:$0xf]
        %v1690 = vld [vmem:[%s953 + $0x30] sm:$0xf]
        %v1691 = vld [vmem:[%s953 + $0x34] sm:$0xf]
        %v1692 = vld [vmem:[%s953 + $0x3c] sm:$0xf]
        %v1693 = vld [vmem:[%s953 + $0x40] sm:$0xf]
        %v1694 = vld [vmem:[%s953 + $0x48] sm:$0xf]
        %v1695 = vld [vmem:[%s953 + $0x4c] sm:$0xf]
        %v1696 = vld [vmem:[%s953 + $0x54] sm:$0xf]
        %v1697 = vld [vmem:[%s953 + $0x58] sm:$0xf]
        %v1698 = vld [vmem:[%s953 + $0x60] sm:$0xf]
        %v1699 = vld [vmem:[%s953 + $0x64] sm:$0xf]
        %v1700 = vld [vmem:[%s953 + $0x6c] sm:$0xf]
        %v1701 = vld [vmem:[%s953 + $0x70] sm:$0xf]
        %v1702 = vld [vmem:[%s953 + $0x78] sm:$0xf]
        %v1703 = vld [vmem:[%s953 + $0x7c] sm:$0xf]
        %v1704 = vld [vmem:[%s953 + $0x84] sm:$0xf]
        %v1705 = vld [vmem:[%s953 + $0x88] sm:$0xf]
        %v1706 = vld [vmem:[%s953 + $0x90] sm:$0xf]
        %v1707 = vld [vmem:[%s953 + $0x94] sm:$0xf]
        %v1708 = vld [vmem:[%s953 + $0x9c] sm:$0xf]
        %v1709 = vld [vmem:[%s953 + $0xa0] sm:$0xf]
        %v1710 = vld [vmem:[%s953 + $0xa8] sm:$0xf]
        %v1711 = vld [vmem:[%s953 + $0xac] sm:$0xf]
        %v1712 = vld [vmem:[%s953 + $0xb4] sm:$0xf]
        %v1713 = vld [vmem:[%s953 + $0xb8] sm:$0xf]
        %v1714 = vld [vmem:[%s953 + $0x8] sm:$0x1]
        %v1715 = vld [vmem:[%s953 + $0x14] sm:$0x1]
        %v1716 = vld [vmem:[%s953 + $0x20] sm:$0x1]
        %v1717 = vld [vmem:[%s953 + $0x2c] sm:$0x1]
        %v1718 = vld [vmem:[%s953 + $0x38] sm:$0x1]
        %v1719 = vld [vmem:[%s953 + $0x44] sm:$0x1]
        %v1720 = vld [vmem:[%s953 + $0x50] sm:$0x1]
        %v1721 = vld [vmem:[%s953 + $0x5c] sm:$0x1]
        %v1722 = vld [vmem:[%s953 + $0x68] sm:$0x1]
        %v1723 = vld [vmem:[%s953 + $0x74] sm:$0x1]
        %v1724 = vld [vmem:[%s953 + $0x80] sm:$0x1]
        %v1725 = vld [vmem:[%s953 + $0x8c] sm:$0x1]
        %v1726 = vld [vmem:[%s953 + $0x98] sm:$0x1]
        %v1727 = vld [vmem:[%s953 + $0xa4] sm:$0x1]
        %v1728 = vld [vmem:[%s953 + $0xb0] sm:$0x1]
        %v1729 = vld [vmem:[%s953 + $0xbc] sm:$0x1]
        %v1731 = vshrl.u32 %v1682, 16
        %v1733 = vrot.slane %v1731, 4
        %v1734 = vshll.u32 %v1682, 16
        %v1736 = vrot.slane %v1734, 5
        %v1737 = vor.u32 %v1733, %v1736
        %v1738 = vrot.slane %v1737, 4
        %v1740 = vshll.u32 %v1683, 16
        %v1742 = vrot.slane %v1740, 5
        %v1743 = vsel %vm1118, %v1738, %v1742
        %v1744 = vshrl.u32 %v1683, 16
        %v1746 = vrot.slane %v1744, 4
        %v1747 = vor.u32 %v1746, %v1742
        %v1748 = vrot.slane %v1747, 4
        %v1750 = vshll.u32 %v1714, 16
        %v1752 = vrot.slane %v1750, 5
        %v1753 = vsel %vm1118, %v1748, %v1752
        %v1755 = vshrl.u32 %v1684, 16
        %v1757 = vrot.slane %v1755, 4
        %v1758 = vshll.u32 %v1684, 16
        %v1760 = vrot.slane %v1758, 5
        %v1761 = vor.u32 %v1757, %v1760
        %v1762 = vrot.slane %v1761, 4
        %v1764 = vshll.u32 %v1685, 16
        %v1766 = vrot.slane %v1764, 5
        %v1767 = vsel %vm1118, %v1762, %v1766
        %v1768 = vshrl.u32 %v1685, 16
        %v1770 = vrot.slane %v1768, 4
        %v1771 = vor.u32 %v1770, %v1766
        %v1772 = vrot.slane %v1771, 4
        %v1774 = vshll.u32 %v1715, 16
        %v1776 = vrot.slane %v1774, 5
        %v1777 = vsel %vm1118, %v1772, %v1776
        %v1779 = vshrl.u32 %v1686, 16
        %v1781 = vrot.slane %v1779, 4
        %v1782 = vshll.u32 %v1686, 16
        %v1784 = vrot.slane %v1782, 5
        %v1785 = vor.u32 %v1781, %v1784
        %v1786 = vrot.slane %v1785, 4
        %v1788 = vshll.u32 %v1687, 16
        %v1790 = vrot.slane %v1788, 5
        %v1791 = vsel %vm1118, %v1786, %v1790
        %v1792 = vshrl.u32 %v1687, 16
        %v1794 = vrot.slane %v1792, 4
        %v1795 = vor.u32 %v1794, %v1790
        %v1796 = vrot.slane %v1795, 4
        %v1798 = vshll.u32 %v1716, 16
        %v1800 = vrot.slane %v1798, 5
        %v1801 = vsel %vm1118, %v1796, %v1800
        %v1803 = vshrl.u32 %v1688, 16
        %v1805 = vrot.slane %v1803, 4
        %v1806 = vshll.u32 %v1688, 16
        %v1808 = vrot.slane %v1806, 5
        %v1809 = vor.u32 %v1805, %v1808
        %v1810 = vrot.slane %v1809, 4
        %v1812 = vshll.u32 %v1689, 16
        %v1814 = vrot.slane %v1812, 5
        %v1815 = vsel %vm1118, %v1810, %v1814
        %v1816 = vshrl.u32 %v1689, 16
        %v1818 = vrot.slane %v1816, 4
        %v1819 = vor.u32 %v1818, %v1814
        %v1820 = vrot.slane %v1819, 4
        %v1822 = vshll.u32 %v1717, 16
        %v1824 = vrot.slane %v1822, 5
        %v1825 = vsel %vm1118, %v1820, %v1824
        %v1827 = vshrl.u32 %v1690, 16
        %v1829 = vrot.slane %v1827, 4
        %v1830 = vshll.u32 %v1690, 16
        %v1832 = vrot.slane %v1830, 5
        %v1833 = vor.u32 %v1829, %v1832
        %v1834 = vrot.slane %v1833, 4
        %v1836 = vshll.u32 %v1691, 16
        %v1838 = vrot.slane %v1836, 5
        %v1839 = vsel %vm1118, %v1834, %v1838
        %v1840 = vshrl.u32 %v1691, 16
        %v1842 = vrot.slane %v1840, 4
        %v1843 = vor.u32 %v1842, %v1838
        %v1844 = vrot.slane %v1843, 4
        %v1846 = vshll.u32 %v1718, 16
        %v1848 = vrot.slane %v1846, 5
        %v1849 = vsel %vm1118, %v1844, %v1848
        %v1851 = vshrl.u32 %v1692, 16
        %v1853 = vrot.slane %v1851, 4
        %v1854 = vshll.u32 %v1692, 16
        %v1856 = vrot.slane %v1854, 5
        %v1857 = vor.u32 %v1853, %v1856
        %v1858 = vrot.slane %v1857, 4
        %v1860 = vshll.u32 %v1693, 16
        %v1862 = vrot.slane %v1860, 5
        %v1863 = vsel %vm1118, %v1858, %v1862
        %v1864 = vshrl.u32 %v1693, 16
        %v1866 = vrot.slane %v1864, 4
        %v1867 = vor.u32 %v1866, %v1862
        %v1868 = vrot.slane %v1867, 4
        %v1870 = vshll.u32 %v1719, 16
        %v1872 = vrot.slane %v1870, 5
        %v1873 = vsel %vm1118, %v1868, %v1872
        %v1875 = vshrl.u32 %v1694, 16
        %v1877 = vrot.slane %v1875, 4
        %v1878 = vshll.u32 %v1694, 16
        %v1880 = vrot.slane %v1878, 5
        %v1881 = vor.u32 %v1877, %v1880
        %v1882 = vrot.slane %v1881, 4
        %v1884 = vshll.u32 %v1695, 16
        %v1886 = vrot.slane %v1884, 5
        %v1887 = vsel %vm1118, %v1882, %v1886
        %v1888 = vshrl.u32 %v1695, 16
        %v1890 = vrot.slane %v1888, 4
        %v1891 = vor.u32 %v1890, %v1886
        %v1892 = vrot.slane %v1891, 4
        %v1894 = vshll.u32 %v1720, 16
        %v1896 = vrot.slane %v1894, 5
        %v1897 = vsel %vm1118, %v1892, %v1896
        %v1899 = vshrl.u32 %v1696, 16
        %v1901 = vrot.slane %v1899, 4
        %v1902 = vshll.u32 %v1696, 16
        %v1904 = vrot.slane %v1902, 5
        %v1905 = vor.u32 %v1901, %v1904
        %v1906 = vrot.slane %v1905, 4
        %v1908 = vshll.u32 %v1697, 16
        %v1910 = vrot.slane %v1908, 5
        %v1911 = vsel %vm1118, %v1906, %v1910
        %v1912 = vshrl.u32 %v1697, 16
        %v1914 = vrot.slane %v1912, 4
        %v1915 = vor.u32 %v1914, %v1910
        %v1916 = vrot.slane %v1915, 4
        %v1918 = vshll.u32 %v1721, 16
        %v1920 = vrot.slane %v1918, 5
        %v1921 = vsel %vm1118, %v1916, %v1920
        %v1923 = vshrl.u32 %v1698, 16
        %v1925 = vrot.slane %v1923, 4
        %v1926 = vshll.u32 %v1698, 16
        %v1928 = vrot.slane %v1926, 5
        %v1929 = vor.u32 %v1925, %v1928
        %v1930 = vrot.slane %v1929, 4
        %v1932 = vshll.u32 %v1699, 16
        %v1934 = vrot.slane %v1932, 5
        %v1935 = vsel %vm1118, %v1930, %v1934
        %v1936 = vshrl.u32 %v1699, 16
        %v1938 = vrot.slane %v1936, 4
        %v1939 = vor.u32 %v1938, %v1934
        %v1940 = vrot.slane %v1939, 4
        %v1942 = vshll.u32 %v1722, 16
        %v1944 = vrot.slane %v1942, 5
        %v1945 = vsel %vm1118, %v1940, %v1944
        %v1947 = vshrl.u32 %v1700, 16
        %v1949 = vrot.slane %v1947, 4
        %v1950 = vshll.u32 %v1700, 16
        %v1952 = vrot.slane %v1950, 5
        %v1953 = vor.u32 %v1949, %v1952
        %v1954 = vrot.slane %v1953, 4
        %v1956 = vshll.u32 %v1701, 16
        %v1958 = vrot.slane %v1956, 5
        %v1959 = vsel %vm1118, %v1954, %v1958
        %v1960 = vshrl.u32 %v1701, 16
        %v1962 = vrot.slane %v1960, 4
        %v1963 = vor.u32 %v1962, %v1958
        %v1964 = vrot.slane %v1963, 4
        %v1966 = vshll.u32 %v1723, 16
        %v1968 = vrot.slane %v1966, 5
        %v1969 = vsel %vm1118, %v1964, %v1968
        %v1971 = vshrl.u32 %v1702, 16
        %v1973 = vrot.slane %v1971, 4
        %v1974 = vshll.u32 %v1702, 16
        %v1976 = vrot.slane %v1974, 5
        %v1977 = vor.u32 %v1973, %v1976
        %v1978 = vrot.slane %v1977, 4
        %v1980 = vshll.u32 %v1703, 16
        %v1982 = vrot.slane %v1980, 5
        %v1983 = vsel %vm1118, %v1978, %v1982
        %v1984 = vshrl.u32 %v1703, 16
        %v1986 = vrot.slane %v1984, 4
        %v1987 = vor.u32 %v1986, %v1982
        %v1988 = vrot.slane %v1987, 4
        %v1990 = vshll.u32 %v1724, 16
        %v1992 = vrot.slane %v1990, 5
        %v1993 = vsel %vm1118, %v1988, %v1992
        %v1995 = vshrl.u32 %v1704, 16
        %v1997 = vrot.slane %v1995, 4
        %v1998 = vshll.u32 %v1704, 16
        %v2000 = vrot.slane %v1998, 5
        %v2001 = vor.u32 %v1997, %v2000
        %v2002 = vrot.slane %v2001, 4
        %v2004 = vshll.u32 %v1705, 16
        %v2006 = vrot.slane %v2004, 5
        %v2007 = vsel %vm1118, %v2002, %v2006
        %v2008 = vshrl.u32 %v1705, 16
        %v2010 = vrot.slane %v2008, 4
        %v2011 = vor.u32 %v2010, %v2006
        %v2012 = vrot.slane %v2011, 4
        %v2014 = vshll.u32 %v1725, 16
        %v2016 = vrot.slane %v2014, 5
        %v2017 = vsel %vm1118, %v2012, %v2016
        %v2019 = vshrl.u32 %v1706, 16
        %v2021 = vrot.slane %v2019, 4
        %v2022 = vshll.u32 %v1706, 16
        %v2024 = vrot.slane %v2022, 5
        %v2025 = vor.u32 %v2021, %v2024
        %v2026 = vrot.slane %v2025, 4
        %v2028 = vshll.u32 %v1707, 16
        %v2030 = vrot.slane %v2028, 5
        %v2031 = vsel %vm1118, %v2026, %v2030
        %v2032 = vshrl.u32 %v1707, 16
        %v2034 = vrot.slane %v2032, 4
        %v2035 = vor.u32 %v2034, %v2030
        %v2036 = vrot.slane %v2035, 4
        %v2038 = vshll.u32 %v1726, 16
        %v2040 = vrot.slane %v2038, 5
        %v2041 = vsel %vm1118, %v2036, %v2040
        %v2043 = vshrl.u32 %v1708, 16
        %v2045 = vrot.slane %v2043, 4
        %v2046 = vshll.u32 %v1708, 16
        %v2048 = vrot.slane %v2046, 5
        %v2049 = vor.u32 %v2045, %v2048
        %v2050 = vrot.slane %v2049, 4
        %v2052 = vshll.u32 %v1709, 16
        %v2054 = vrot.slane %v2052, 5
        %v2055 = vsel %vm1118, %v2050, %v2054
        %v2056 = vshrl.u32 %v1709, 16
        %v2058 = vrot.slane %v2056, 4
        %v2059 = vor.u32 %v2058, %v2054
        %v2060 = vrot.slane %v2059, 4
        %v2062 = vshll.u32 %v1727, 16
        %v2064 = vrot.slane %v2062, 5
        %v2065 = vsel %vm1118, %v2060, %v2064
        %v2067 = vshrl.u32 %v1710, 16
        %v2069 = vrot.slane %v2067, 4
        %v2070 = vshll.u32 %v1710, 16
        %v2072 = vrot.slane %v2070, 5
        %v2073 = vor.u32 %v2069, %v2072
        %v2074 = vrot.slane %v2073, 4
        %v2076 = vshll.u32 %v1711, 16
        %v2078 = vrot.slane %v2076, 5
        %v2079 = vsel %vm1118, %v2074, %v2078
        %v2080 = vshrl.u32 %v1711, 16
        %v2082 = vrot.slane %v2080, 4
        %v2083 = vor.u32 %v2082, %v2078
        %v2084 = vrot.slane %v2083, 4
        %v2086 = vshll.u32 %v1728, 16
        %v2088 = vrot.slane %v2086, 5
        %v2089 = vsel %vm1118, %v2084, %v2088
        %v2091 = vshrl.u32 %v1712, 16
        %v2093 = vrot.slane %v2091, 4
        %v2094 = vshll.u32 %v1712, 16
        %v2096 = vrot.slane %v2094, 5
        %v2097 = vor.u32 %v2093, %v2096
        %v2098 = vrot.slane %v2097, 4
        %v2100 = vshll.u32 %v1713, 16
        %v2102 = vrot.slane %v2100, 5
        %v2103 = vsel %vm1118, %v2098, %v2102
        %v2104 = vshrl.u32 %v1713, 16
        %v2106 = vrot.slane %v2104, 4
        %v2107 = vor.u32 %v2106, %v2102
        %v2108 = vrot.slane %v2107, 4
        %v2110 = vshll.u32 %v1729, 16
        %v2112 = vrot.slane %v2110, 5
        %v2113 = vsel %vm1118, %v2108, %v2112
        %v2114 = vld [vmem:[%s953] sm:$0xe]
        %v2115 = vld [vmem:[%s953 + $0xc] sm:$0xe]
        %v2116 = vld [vmem:[%s953 + $0x18] sm:$0xe]
        %v2117 = vld [vmem:[%s953 + $0x24] sm:$0xe]
        %v2118 = vld [vmem:[%s953 + $0x30] sm:$0xe]
        %v2119 = vld [vmem:[%s953 + $0x3c] sm:$0xe]
        %v2120 = vld [vmem:[%s953 + $0x48] sm:$0xe]
        %v2121 = vld [vmem:[%s953 + $0x54] sm:$0xe]
        %v2122 = vld [vmem:[%s953 + $0x60] sm:$0xe]
        %v2123 = vld [vmem:[%s953 + $0x6c] sm:$0xe]
        %v2124 = vld [vmem:[%s953 + $0x78] sm:$0xe]
        %v2125 = vld [vmem:[%s953 + $0x84] sm:$0xe]
        %v2126 = vld [vmem:[%s953 + $0x90] sm:$0xe]
        %v2127 = vld [vmem:[%s953 + $0x9c] sm:$0xe]
        %v2128 = vld [vmem:[%s953 + $0xa8] sm:$0xe]
        %v2129 = vld [vmem:[%s953 + $0xb4] sm:$0xe]
        %v2178 = vrot.slane %v2114, 5
        %v2179 = vrot.slane %v2178, 4
        %v2180 = vrot.slane %v1683, 5
        %v2181 = vsel %vm1569, %v2179, %v2180
        %v2182 = vrot.slane %v2180, 4
        %v2183 = vrot.slane %v1714, 5
        %v2184 = vsel %vm1569, %v2182, %v2183
        %v2185 = vrot.slane %v2115, 5
        %v2186 = vrot.slane %v2185, 4
        %v2187 = vrot.slane %v1685, 5
        %v2188 = vsel %vm1569, %v2186, %v2187
        %v2189 = vrot.slane %v2187, 4
        %v2190 = vrot.slane %v1715, 5
        %v2191 = vsel %vm1569, %v2189, %v2190
        %v2192 = vrot.slane %v2116, 5
        %v2193 = vrot.slane %v2192, 4
        %v2194 = vrot.slane %v1687, 5
        %v2195 = vsel %vm1569, %v2193, %v2194
        %v2196 = vrot.slane %v2194, 4
        %v2197 = vrot.slane %v1716, 5
        %v2198 = vsel %vm1569, %v2196, %v2197
        %v2199 = vrot.slane %v2117, 5
        %v2200 = vrot.slane %v2199, 4
        %v2201 = vrot.slane %v1689, 5
        %v2202 = vsel %vm1569, %v2200, %v2201
        %v2203 = vrot.slane %v2201, 4
        %v2204 = vrot.slane %v1717, 5
        %v2205 = vsel %vm1569, %v2203, %v2204
        %v2206 = vrot.slane %v2118, 5
        %v2207 = vrot.slane %v2206, 4
        %v2208 = vrot.slane %v1691, 5
        %v2209 = vsel %vm1569, %v2207, %v2208
        %v2210 = vrot.slane %v2208, 4
        %v2211 = vrot.slane %v1718, 5
        %v2212 = vsel %vm1569, %v2210, %v2211
        %v2213 = vrot.slane %v2119, 5
        %v2214 = vrot.slane %v2213, 4
        %v2215 = vrot.slane %v1693, 5
        %v2216 = vsel %vm1569, %v2214, %v2215
        %v2217 = vrot.slane %v2215, 4
        %v2218 = vrot.slane %v1719, 5
        %v2219 = vsel %vm1569, %v2217, %v2218
        %v2220 = vrot.slane %v2120, 5
        %v2221 = vrot.slane %v2220, 4
        %v2222 = vrot.slane %v1695, 5
        %v2223 = vsel %vm1569, %v2221, %v2222
        %v2224 = vrot.slane %v2222, 4
        %v2225 = vrot.slane %v1720, 5
        %v2226 = vsel %vm1569, %v2224, %v2225
        %v2227 = vrot.slane %v2121, 5
        %v2228 = vrot.slane %v2227, 4
        %v2229 = vrot.slane %v1697, 5
        %v2230 = vsel %vm1569, %v2228, %v2229
        %v2231 = vrot.slane %v2229, 4
        %v2232 = vrot.slane %v1721, 5
        %v2233 = vsel %vm1569, %v2231, %v2232
        %v2234 = vrot.slane %v2122, 5
        %v2235 = vrot.slane %v2234, 4
        %v2236 = vrot.slane %v1699, 5
        %v2237 = vsel %vm1569, %v2235, %v2236
        %v2238 = vrot.slane %v2236, 4
        %v2239 = vrot.slane %v1722, 5
        %v2240 = vsel %vm1569, %v2238, %v2239
        %v2241 = vrot.slane %v2123, 5
        %v2242 = vrot.slane %v2241, 4
        %v2243 = vrot.slane %v1701, 5
        %v2244 = vsel %vm1569, %v2242, %v2243
        %v2245 = vrot.slane %v2243, 4
        %v2246 = vrot.slane %v1723, 5
        %v2247 = vsel %vm1569, %v2245, %v2246
        %v2248 = vrot.slane %v2124, 5
        %v2249 = vrot.slane %v2248, 4
        %v2250 = vrot.slane %v1703, 5
        %v2251 = vsel %vm1569, %v2249, %v2250
        %v2252 = vrot.slane %v2250, 4
        %v2253 = vrot.slane %v1724, 5
        %v2254 = vsel %vm1569, %v2252, %v2253
        %v2255 = vrot.slane %v2125, 5
        %v2256 = vrot.slane %v2255, 4
        %v2257 = vrot.slane %v1705, 5
        %v2258 = vsel %vm1569, %v2256, %v2257
        %v2259 = vrot.slane %v2257, 4
        %v2260 = vrot.slane %v1725, 5
        %v2261 = vsel %vm1569, %v2259, %v2260
        %v2262 = vrot.slane %v2126, 5
        %v2263 = vrot.slane %v2262, 4
        %v2264 = vrot.slane %v1707, 5
        %v2265 = vsel %vm1569, %v2263, %v2264
        %v2266 = vrot.slane %v2264, 4
        %v2267 = vrot.slane %v1726, 5
        %v2268 = vsel %vm1569, %v2266, %v2267
        %v2269 = vrot.slane %v2127, 5
        %v2270 = vrot.slane %v2269, 4
        %v2271 = vrot.slane %v1709, 5
        %v2272 = vsel %vm1569, %v2270, %v2271
        %v2273 = vrot.slane %v2271, 4
        %v2274 = vrot.slane %v1727, 5
        %v2275 = vsel %vm1569, %v2273, %v2274
        %v2276 = vrot.slane %v2128, 5
        %v2277 = vrot.slane %v2276, 4
        %v2278 = vrot.slane %v1711, 5
        %v2279 = vsel %vm1569, %v2277, %v2278
        %v2280 = vrot.slane %v2278, 4
        %v2281 = vrot.slane %v1728, 5
        %v2282 = vsel %vm1569, %v2280, %v2281
        %v2283 = vrot.slane %v2129, 5
        %v2284 = vrot.slane %v2283, 4
        %v2285 = vrot.slane %v1713, 5
        %v2286 = vsel %vm1569, %v2284, %v2285
        %v2287 = vrot.slane %v2285, 4
        %v2288 = vrot.slane %v1729, 5
        %v2289 = vsel %vm1569, %v2287, %v2288
        %s2290 = scalar_lea.vmem [#allocation2], 24
        %v2291 = vld [vmem:[%s2290] sm:$0xf]
        %v2292 = vld [vmem:[%s2290 + $0x4] sm:$0xf]
        %v2293 = vld [vmem:[%s2290 + $0xc] sm:$0xf]
        %v2294 = vld [vmem:[%s2290 + $0x10] sm:$0xf]
        %v2295 = vld [vmem:[%s2290 + $0x18] sm:$0xf]
        %v2296 = vld [vmem:[%s2290 + $0x1c] sm:$0xf]
        %v2297 = vld [vmem:[%s2290 + $0x24] sm:$0xf]
        %v2298 = vld [vmem:[%s2290 + $0x28] sm:$0xf]
        %v2299 = vld [vmem:[%s2290 + $0x30] sm:$0xf]
        %v2300 = vld [vmem:[%s2290 + $0x34] sm:$0xf]
        %v2301 = vld [vmem:[%s2290 + $0x3c] sm:$0xf]
        %v2302 = vld [vmem:[%s2290 + $0x40] sm:$0xf]
        %v2303 = vld [vmem:[%s2290 + $0x48] sm:$0xf]
        %v2304 = vld [vmem:[%s2290 + $0x4c] sm:$0xf]
        %v2305 = vld [vmem:[%s2290 + $0x54] sm:$0xf]
        %v2306 = vld [vmem:[%s2290 + $0x58] sm:$0xf]
        %v2307 = vld [vmem:[%s2290 + $0x60] sm:$0xf]
        %v2308 = vld [vmem:[%s2290 + $0x64] sm:$0xf]
        %v2309 = vld [vmem:[%s2290 + $0x6c] sm:$0xf]
        %v2310 = vld [vmem:[%s2290 + $0x70] sm:$0xf]
        %v2311 = vld [vmem:[%s2290 + $0x78] sm:$0xf]
        %v2312 = vld [vmem:[%s2290 + $0x7c] sm:$0xf]
        %v2313 = vld [vmem:[%s2290 + $0x84] sm:$0xf]
        %v2314 = vld [vmem:[%s2290 + $0x88] sm:$0xf]
        %v2315 = vld [vmem:[%s2290 + $0x90] sm:$0xf]
        %v2316 = vld [vmem:[%s2290 + $0x94] sm:$0xf]
        %v2317 = vld [vmem:[%s2290 + $0x9c] sm:$0xf]
        %v2318 = vld [vmem:[%s2290 + $0xa0] sm:$0xf]
        %v2319 = vld [vmem:[%s2290 + $0xa8] sm:$0xf]
        %v2320 = vld [vmem:[%s2290 + $0xac] sm:$0xf]
        %v2321 = vld [vmem:[%s2290 + $0xb4] sm:$0xf]
        %v2322 = vld [vmem:[%s2290 + $0xb8] sm:$0xf]
        %v2323 = vld [vmem:[%s2290 + $0x8] sm:$0x1]
        %v2324 = vld [vmem:[%s2290 + $0x14] sm:$0x1]
        %v2325 = vld [vmem:[%s2290 + $0x20] sm:$0x1]
        %v2326 = vld [vmem:[%s2290 + $0x2c] sm:$0x1]
        %v2327 = vld [vmem:[%s2290 + $0x38] sm:$0x1]
        %v2328 = vld [vmem:[%s2290 + $0x44] sm:$0x1]
        %v2329 = vld [vmem:[%s2290 + $0x50] sm:$0x1]
        %v2330 = vld [vmem:[%s2290 + $0x5c] sm:$0x1]
        %v2331 = vld [vmem:[%s2290 + $0x68] sm:$0x1]
        %v2332 = vld [vmem:[%s2290 + $0x74] sm:$0x1]
        %v2333 = vld [vmem:[%s2290 + $0x80] sm:$0x1]
        %v2334 = vld [vmem:[%s2290 + $0x8c] sm:$0x1]
        %v2335 = vld [vmem:[%s2290 + $0x98] sm:$0x1]
        %v2336 = vld [vmem:[%s2290 + $0xa4] sm:$0x1]
        %v2337 = vld [vmem:[%s2290 + $0xb0] sm:$0x1]
        %v2338 = vld [vmem:[%s2290 + $0xbc] sm:$0x1]
        %v2340 = vshrl.u32 %v2291, 16
        %v2342 = vrot.slane %v2340, 4
        %v2343 = vshll.u32 %v2291, 16
        %v2345 = vrot.slane %v2343, 5
        %v2346 = vor.u32 %v2342, %v2345
        %v2347 = vrot.slane %v2346, 4
        %v2349 = vshll.u32 %v2292, 16
        %v2351 = vrot.slane %v2349, 5
        %v2352 = vsel %vm1118, %v2347, %v2351
        %v2353 = vshrl.u32 %v2292, 16
        %v2355 = vrot.slane %v2353, 4
        %v2356 = vor.u32 %v2355, %v2351
        %v2357 = vrot.slane %v2356, 4
        %v2359 = vshll.u32 %v2323, 16
        %v2361 = vrot.slane %v2359, 5
        %v2362 = vsel %vm1118, %v2357, %v2361
        %v2364 = vshrl.u32 %v2293, 16
        %v2366 = vrot.slane %v2364, 4
        %v2367 = vshll.u32 %v2293, 16
        %v2369 = vrot.slane %v2367, 5
        %v2370 = vor.u32 %v2366, %v2369
        %v2371 = vrot.slane %v2370, 4
        %v2373 = vshll.u32 %v2294, 16
        %v2375 = vrot.slane %v2373, 5
        %v2376 = vsel %vm1118, %v2371, %v2375
        %v2377 = vshrl.u32 %v2294, 16
        %v2379 = vrot.slane %v2377, 4
        %v2380 = vor.u32 %v2379, %v2375
        %v2381 = vrot.slane %v2380, 4
        %v2383 = vshll.u32 %v2324, 16
        %v2385 = vrot.slane %v2383, 5
        %v2386 = vsel %vm1118, %v2381, %v2385
        %v2388 = vshrl.u32 %v2295, 16
        %v2390 = vrot.slane %v2388, 4
        %v2391 = vshll.u32 %v2295, 16
        %v2393 = vrot.slane %v2391, 5
        %v2394 = vor.u32 %v2390, %v2393
        %v2395 = vrot.slane %v2394, 4
        %v2397 = vshll.u32 %v2296, 16
        %v2399 = vrot.slane %v2397, 5
        %v2400 = vsel %vm1118, %v2395, %v2399
        %v2401 = vshrl.u32 %v2296, 16
        %v2403 = vrot.slane %v2401, 4
        %v2404 = vor.u32 %v2403, %v2399
        %v2405 = vrot.slane %v2404, 4
        %v2407 = vshll.u32 %v2325, 16
        %v2409 = vrot.slane %v2407, 5
        %v2410 = vsel %vm1118, %v2405, %v2409
        %v2412 = vshrl.u32 %v2297, 16
        %v2414 = vrot.slane %v2412, 4
        %v2415 = vshll.u32 %v2297, 16
        %v2417 = vrot.slane %v2415, 5
        %v2418 = vor.u32 %v2414, %v2417
        %v2419 = vrot.slane %v2418, 4
        %v2421 = vshll.u32 %v2298, 16
        %v2423 = vrot.slane %v2421, 5
        %v2424 = vsel %vm1118, %v2419, %v2423
        %v2425 = vshrl.u32 %v2298, 16
        %v2427 = vrot.slane %v2425, 4
        %v2428 = vor.u32 %v2427, %v2423
        %v2429 = vrot.slane %v2428, 4
        %v2431 = vshll.u32 %v2326, 16
        %v2433 = vrot.slane %v2431, 5
        %v2434 = vsel %vm1118, %v2429, %v2433
        %v2436 = vshrl.u32 %v2299, 16
        %v2438 = vrot.slane %v2436, 4
        %v2439 = vshll.u32 %v2299, 16
        %v2441 = vrot.slane %v2439, 5
        %v2442 = vor.u32 %v2438, %v2441
        %v2443 = vrot.slane %v2442, 4
        %v2445 = vshll.u32 %v2300, 16
        %v2447 = vrot.slane %v2445, 5
        %v2448 = vsel %vm1118, %v2443, %v2447
        %v2449 = vshrl.u32 %v2300, 16
        %v2451 = vrot.slane %v2449, 4
        %v2452 = vor.u32 %v2451, %v2447
        %v2453 = vrot.slane %v2452, 4
        %v2455 = vshll.u32 %v2327, 16
        %v2457 = vrot.slane %v2455, 5
        %v2458 = vsel %vm1118, %v2453, %v2457
        %v2460 = vshrl.u32 %v2301, 16
        %v2462 = vrot.slane %v2460, 4
        %v2463 = vshll.u32 %v2301, 16
        %v2465 = vrot.slane %v2463, 5
        %v2466 = vor.u32 %v2462, %v2465
        %v2467 = vrot.slane %v2466, 4
        %v2469 = vshll.u32 %v2302, 16
        %v2471 = vrot.slane %v2469, 5
        %v2472 = vsel %vm1118, %v2467, %v2471
        %v2473 = vshrl.u32 %v2302, 16
        %v2475 = vrot.slane %v2473, 4
        %v2476 = vor.u32 %v2475, %v2471
        %v2477 = vrot.slane %v2476, 4
        %v2479 = vshll.u32 %v2328, 16
        %v2481 = vrot.slane %v2479, 5
        %v2482 = vsel %vm1118, %v2477, %v2481
        %v2484 = vshrl.u32 %v2303, 16
        %v2486 = vrot.slane %v2484, 4
        %v2487 = vshll.u32 %v2303, 16
        %v2489 = vrot.slane %v2487, 5
        %v2490 = vor.u32 %v2486, %v2489
        %v2491 = vrot.slane %v2490, 4
        %v2493 = vshll.u32 %v2304, 16
        %v2495 = vrot.slane %v2493, 5
        %v2496 = vsel %vm1118, %v2491, %v2495
        %v2497 = vshrl.u32 %v2304, 16
        %v2499 = vrot.slane %v2497, 4
        %v2500 = vor.u32 %v2499, %v2495
        %v2501 = vrot.slane %v2500, 4
        %v2503 = vshll.u32 %v2329, 16
        %v2505 = vrot.slane %v2503, 5
        %v2506 = vsel %vm1118, %v2501, %v2505
        %v2508 = vshrl.u32 %v2305, 16
        %v2510 = vrot.slane %v2508, 4
        %v2511 = vshll.u32 %v2305, 16
        %v2513 = vrot.slane %v2511, 5
        %v2514 = vor.u32 %v2510, %v2513
        %v2515 = vrot.slane %v2514, 4
        %v2517 = vshll.u32 %v2306, 16
        %v2519 = vrot.slane %v2517, 5
        %v2520 = vsel %vm1118, %v2515, %v2519
        %v2521 = vshrl.u32 %v2306, 16
        %v2523 = vrot.slane %v2521, 4
        %v2524 = vor.u32 %v2523, %v2519
        %v2525 = vrot.slane %v2524, 4
        %v2527 = vshll.u32 %v2330, 16
        %v2529 = vrot.slane %v2527, 5
        %v2530 = vsel %vm1118, %v2525, %v2529
        %v2532 = vshrl.u32 %v2307, 16
        %v2534 = vrot.slane %v2532, 4
        %v2535 = vshll.u32 %v2307, 16
        %v2537 = vrot.slane %v2535, 5
        %v2538 = vor.u32 %v2534, %v2537
        %v2539 = vrot.slane %v2538, 4
        %v2541 = vshll.u32 %v2308, 16
        %v2543 = vrot.slane %v2541, 5
        %v2544 = vsel %vm1118, %v2539, %v2543
        %v2545 = vshrl.u32 %v2308, 16
        %v2547 = vrot.slane %v2545, 4
        %v2548 = vor.u32 %v2547, %v2543
        %v2549 = vrot.slane %v2548, 4
        %v2551 = vshll.u32 %v2331, 16
        %v2553 = vrot.slane %v2551, 5
        %v2554 = vsel %vm1118, %v2549, %v2553
        %v2556 = vshrl.u32 %v2309, 16
        %v2558 = vrot.slane %v2556, 4
        %v2559 = vshll.u32 %v2309, 16
        %v2561 = vrot.slane %v2559, 5
        %v2562 = vor.u32 %v2558, %v2561
        %v2563 = vrot.slane %v2562, 4
        %v2565 = vshll.u32 %v2310, 16
        %v2567 = vrot.slane %v2565, 5
        %v2568 = vsel %vm1118, %v2563, %v2567
        %v2569 = vshrl.u32 %v2310, 16
        %v2571 = vrot.slane %v2569, 4
        %v2572 = vor.u32 %v2571, %v2567
        %v2573 = vrot.slane %v2572, 4
        %v2575 = vshll.u32 %v2332, 16
        %v2577 = vrot.slane %v2575, 5
        %v2578 = vsel %vm1118, %v2573, %v2577
        %v2580 = vshrl.u32 %v2311, 16
        %v2582 = vrot.slane %v2580, 4
        %v2583 = vshll.u32 %v2311, 16
        %v2585 = vrot.slane %v2583, 5
        %v2586 = vor.u32 %v2582, %v2585
        %v2587 = vrot.slane %v2586, 4
        %v2589 = vshll.u32 %v2312, 16
        %v2591 = vrot.slane %v2589, 5
        %v2592 = vsel %vm1118, %v2587, %v2591
        %v2593 = vshrl.u32 %v2312, 16
        %v2595 = vrot.slane %v2593, 4
        %v2596 = vor.u32 %v2595, %v2591
        %v2597 = vrot.slane %v2596, 4
        %v2599 = vshll.u32 %v2333, 16
        %v2601 = vrot.slane %v2599, 5
        %v2602 = vsel %vm1118, %v2597, %v2601
        %v2604 = vshrl.u32 %v2313, 16
        %v2606 = vrot.slane %v2604, 4
        %v2607 = vshll.u32 %v2313, 16
        %v2609 = vrot.slane %v2607, 5
        %v2610 = vor.u32 %v2606, %v2609
        %v2611 = vrot.slane %v2610, 4
        %v2613 = vshll.u32 %v2314, 16
        %v2615 = vrot.slane %v2613, 5
        %v2616 = vsel %vm1118, %v2611, %v2615
        %v2617 = vshrl.u32 %v2314, 16
        %v2619 = vrot.slane %v2617, 4
        %v2620 = vor.u32 %v2619, %v2615
        %v2621 = vrot.slane %v2620, 4
        %v2623 = vshll.u32 %v2334, 16
        %v2625 = vrot.slane %v2623, 5
        %v2626 = vsel %vm1118, %v2621, %v2625
        %v2628 = vshrl.u32 %v2315, 16
        %v2630 = vrot.slane %v2628, 4
        %v2631 = vshll.u32 %v2315, 16
        %v2633 = vrot.slane %v2631, 5
        %v2634 = vor.u32 %v2630, %v2633
        %v2635 = vrot.slane %v2634, 4
        %v2637 = vshll.u32 %v2316, 16
        %v2639 = vrot.slane %v2637, 5
        %v2640 = vsel %vm1118, %v2635, %v2639
        %v2641 = vshrl.u32 %v2316, 16
        %v2643 = vrot.slane %v2641, 4
        %v2644 = vor.u32 %v2643, %v2639
        %v2645 = vrot.slane %v2644, 4
        %v2647 = vshll.u32 %v2335, 16
        %v2649 = vrot.slane %v2647, 5
        %v2650 = vsel %vm1118, %v2645, %v2649
        %v2652 = vshrl.u32 %v2317, 16
        %v2654 = vrot.slane %v2652, 4
        %v2655 = vshll.u32 %v2317, 16
        %v2657 = vrot.slane %v2655, 5
        %v2658 = vor.u32 %v2654, %v2657
        %v2659 = vrot.slane %v2658, 4
        %v2661 = vshll.u32 %v2318, 16
        %v2663 = vrot.slane %v2661, 5
        %v2664 = vsel %vm1118, %v2659, %v2663
        %v2665 = vshrl.u32 %v2318, 16
        %v2667 = vrot.slane %v2665, 4
        %v2668 = vor.u32 %v2667, %v2663
        %v2669 = vrot.slane %v2668, 4
        %v2671 = vshll.u32 %v2336, 16
        %v2673 = vrot.slane %v2671, 5
        %v2674 = vsel %vm1118, %v2669, %v2673
        %v2676 = vshrl.u32 %v2319, 16
        %v2678 = vrot.slane %v2676, 4
        %v2679 = vshll.u32 %v2319, 16
        %v2681 = vrot.slane %v2679, 5
        %v2682 = vor.u32 %v2678, %v2681
        %v2683 = vrot.slane %v2682, 4
        %v2685 = vshll.u32 %v2320, 16
        %v2687 = vrot.slane %v2685, 5
        %v2688 = vsel %vm1118, %v2683, %v2687
        %v2689 = vshrl.u32 %v2320, 16
        %v2691 = vrot.slane %v2689, 4
        %v2692 = vor.u32 %v2691, %v2687
        %v2693 = vrot.slane %v2692, 4
        %v2695 = vshll.u32 %v2337, 16
        %v2697 = vrot.slane %v2695, 5
        %v2698 = vsel %vm1118, %v2693, %v2697
        %v2700 = vshrl.u32 %v2321, 16
        %v2702 = vrot.slane %v2700, 4
        %v2703 = vshll.u32 %v2321, 16
        %v2705 = vrot.slane %v2703, 5
        %v2706 = vor.u32 %v2702, %v2705
        %v2707 = vrot.slane %v2706, 4
        %v2709 = vshll.u32 %v2322, 16
        %v2711 = vrot.slane %v2709, 5
        %v2712 = vsel %vm1118, %v2707, %v2711
        %v2713 = vshrl.u32 %v2322, 16
        %v2715 = vrot.slane %v2713, 4
        %v2716 = vor.u32 %v2715, %v2711
        %v2717 = vrot.slane %v2716, 4
        %v2719 = vshll.u32 %v2338, 16
        %v2721 = vrot.slane %v2719, 5
        %v2722 = vsel %vm1118, %v2717, %v2721
        %v2723 = vld [vmem:[%s2290] sm:$0xe]
        %v2724 = vld [vmem:[%s2290 + $0xc] sm:$0xe]
        %v2725 = vld [vmem:[%s2290 + $0x18] sm:$0xe]
        %v2726 = vld [vmem:[%s2290 + $0x24] sm:$0xe]
        %v2727 = vld [vmem:[%s2290 + $0x30] sm:$0xe]
        %v2728 = vld [vmem:[%s2290 + $0x3c] sm:$0xe]
        %v2729 = vld [vmem:[%s2290 + $0x48] sm:$0xe]
        %v2730 = vld [vmem:[%s2290 + $0x54] sm:$0xe]
        %v2731 = vld [vmem:[%s2290 + $0x60] sm:$0xe]
        %v2732 = vld [vmem:[%s2290 + $0x6c] sm:$0xe]
        %v2733 = vld [vmem:[%s2290 + $0x78] sm:$0xe]
        %v2734 = vld [vmem:[%s2290 + $0x84] sm:$0xe]
        %v2735 = vld [vmem:[%s2290 + $0x90] sm:$0xe]
        %v2736 = vld [vmem:[%s2290 + $0x9c] sm:$0xe]
        %v2737 = vld [vmem:[%s2290 + $0xa8] sm:$0xe]
        %v2738 = vld [vmem:[%s2290 + $0xb4] sm:$0xe]
        %v2787 = vrot.slane %v2723, 5
        %v2788 = vrot.slane %v2787, 4
        %v2789 = vrot.slane %v2292, 5
        %v2790 = vsel %vm1569, %v2788, %v2789
        %v2791 = vrot.slane %v2789, 4
        %v2792 = vrot.slane %v2323, 5
        %v2793 = vsel %vm1569, %v2791, %v2792
        %v2794 = vrot.slane %v2724, 5
        %v2795 = vrot.slane %v2794, 4
        %v2796 = vrot.slane %v2294, 5
        %v2797 = vsel %vm1569, %v2795, %v2796
        %v2798 = vrot.slane %v2796, 4
        %v2799 = vrot.slane %v2324, 5
        %v2800 = vsel %vm1569, %v2798, %v2799
        %v2801 = vrot.slane %v2725, 5
        %v2802 = vrot.slane %v2801, 4
        %v2803 = vrot.slane %v2296, 5
        %v2804 = vsel %vm1569, %v2802, %v2803
        %v2805 = vrot.slane %v2803, 4
        %v2806 = vrot.slane %v2325, 5
        %v2807 = vsel %vm1569, %v2805, %v2806
        %v2808 = vrot.slane %v2726, 5
        %v2809 = vrot.slane %v2808, 4
        %v2810 = vrot.slane %v2298, 5
        %v2811 = vsel %vm1569, %v2809, %v2810
        %v2812 = vrot.slane %v2810, 4
        %v2813 = vrot.slane %v2326, 5
        %v2814 = vsel %vm1569, %v2812, %v2813
        %v2815 = vrot.slane %v2727, 5
        %v2816 = vrot.slane %v2815, 4
        %v2817 = vrot.slane %v2300, 5
        %v2818 = vsel %vm1569, %v2816, %v2817
        %v2819 = vrot.slane %v2817, 4
        %v2820 = vrot.slane %v2327, 5
        %v2821 = vsel %vm1569, %v2819, %v2820
        %v2822 = vrot.slane %v2728, 5
        %v2823 = vrot.slane %v2822, 4
        %v2824 = vrot.slane %v2302, 5
        %v2825 = vsel %vm1569, %v2823, %v2824
        %v2826 = vrot.slane %v2824, 4
        %v2827 = vrot.slane %v2328, 5
        %v2828 = vsel %vm1569, %v2826, %v2827
        %v2829 = vrot.slane %v2729, 5
        %v2830 = vrot.slane %v2829, 4
        %v2831 = vrot.slane %v2304, 5
        %v2832 = vsel %vm1569, %v2830, %v2831
        %v2833 = vrot.slane %v2831, 4
        %v2834 = vrot.slane %v2329, 5
        %v2835 = vsel %vm1569, %v2833, %v2834
        %v2836 = vrot.slane %v2730, 5
        %v2837 = vrot.slane %v2836, 4
        %v2838 = vrot.slane %v2306, 5
        %v2839 = vsel %vm1569, %v2837, %v2838
        %v2840 = vrot.slane %v2838, 4
        %v2841 = vrot.slane %v2330, 5
        %v2842 = vsel %vm1569, %v2840, %v2841
        %v2843 = vrot.slane %v2731, 5
        %v2844 = vrot.slane %v2843, 4
        %v2845 = vrot.slane %v2308, 5
        %v2846 = vsel %vm1569, %v2844, %v2845
        %v2847 = vrot.slane %v2845, 4
        %v2848 = vrot.slane %v2331, 5
        %v2849 = vsel %vm1569, %v2847, %v2848
        %v2850 = vrot.slane %v2732, 5
        %v2851 = vrot.slane %v2850, 4
        %v2852 = vrot.slane %v2310, 5
        %v2853 = vsel %vm1569, %v2851, %v2852
        %v2854 = vrot.slane %v2852, 4
        %v2855 = vrot.slane %v2332, 5
        %v2856 = vsel %vm1569, %v2854, %v2855
        %v2857 = vrot.slane %v2733, 5
        %v2858 = vrot.slane %v2857, 4
        %v2859 = vrot.slane %v2312, 5
        %v2860 = vsel %vm1569, %v2858, %v2859
        %v2861 = vrot.slane %v2859, 4
        %v2862 = vrot.slane %v2333, 5
        %v2863 = vsel %vm1569, %v2861, %v2862
        %v2864 = vrot.slane %v2734, 5
        %v2865 = vrot.slane %v2864, 4
        %v2866 = vrot.slane %v2314, 5
        %v2867 = vsel %vm1569, %v2865, %v2866
        %v2868 = vrot.slane %v2866, 4
        %v2869 = vrot.slane %v2334, 5
        %v2870 = vsel %vm1569, %v2868, %v2869
        %v2871 = vrot.slane %v2735, 5
        %v2872 = vrot.slane %v2871, 4
        %v2873 = vrot.slane %v2316, 5
        %v2874 = vsel %vm1569, %v2872, %v2873
        %v2875 = vrot.slane %v2873, 4
        %v2876 = vrot.slane %v2335, 5
        %v2877 = vsel %vm1569, %v2875, %v2876
        %v2878 = vrot.slane %v2736, 5
        %v2879 = vrot.slane %v2878, 4
        %v2880 = vrot.slane %v2318, 5
        %v2881 = vsel %vm1569, %v2879, %v2880
        %v2882 = vrot.slane %v2880, 4
        %v2883 = vrot.slane %v2336, 5
        %v2884 = vsel %vm1569, %v2882, %v2883
        %v2885 = vrot.slane %v2737, 5
        %v2886 = vrot.slane %v2885, 4
        %v2887 = vrot.slane %v2320, 5
        %v2888 = vsel %vm1569, %v2886, %v2887
        %v2889 = vrot.slane %v2887, 4
        %v2890 = vrot.slane %v2337, 5
        %v2891 = vsel %vm1569, %v2889, %v2890
        %v2892 = vrot.slane %v2738, 5
        %v2893 = vrot.slane %v2892, 4
        %v2894 = vrot.slane %v2322, 5
        %v2895 = vsel %vm1569, %v2893, %v2894
        %v2896 = vrot.slane %v2894, 4
        %v2897 = vrot.slane %v2338, 5
        %v2898 = vsel %vm1569, %v2896, %v2897
        %v2915 = vunpack.c.l.b16 %v1068
        %v2916 = vunpack.c.l.b16 %v1069
        %v2917 = vunpack.c.l.b16 %v1070
        %v2918 = vunpack.c.l.b16 %v1071
        %v2919 = vunpack.c.l.b16 %v1072
        %v2920 = vunpack.c.l.b16 %v1073
        %v2921 = vunpack.c.l.b16 %v1074
        %v2922 = vunpack.c.l.b16 %v1075
        %v2923 = vunpack.c.l.b16 %v1076
        %v2924 = vunpack.c.l.b16 %v1077
        %v2925 = vunpack.c.l.b16 %v1078
        %v2926 = vunpack.c.l.b16 %v1079
        %v2927 = vunpack.c.l.b16 %v1080
        %v2928 = vunpack.c.l.b16 %v1081
        %v2929 = vunpack.c.l.b16 %v1082
        %v2930 = vunpack.c.l.b16 %v1083
        %v2931 = vunpack.c.l.b16 %v1084
        %v2932 = vunpack.c.l.b16 %v1085
        %v2933 = vunpack.c.l.b16 %v1086
        %v2934 = vunpack.c.l.b16 %v1087
        %v2935 = vunpack.c.l.b16 %v1088
        %v2936 = vunpack.c.l.b16 %v1089
        %v2937 = vunpack.c.l.b16 %v1090
        %v2938 = vunpack.c.l.b16 %v1091
        %v2939 = vunpack.c.l.b16 %v1092
        %v2940 = vunpack.c.l.b16 %v1093
        %v2941 = vunpack.c.l.b16 %v1094
        %v2942 = vunpack.c.l.b16 %v1095
        %v2943 = vunpack.c.l.b16 %v1096
        %v2944 = vunpack.c.l.b16 %v1097
        %v2945 = vunpack.c.l.b16 %v1098
        %v2946 = vunpack.c.l.b16 %v1099
        %v2947 = vpack.c.b16 %v2916, %v2915
        %v2948 = vpack.c.b16 %v2918, %v2917
        %v2949 = vpack.c.b16 %v2920, %v2919
        %v2950 = vpack.c.b16 %v2922, %v2921
        %v2951 = vpack.c.b16 %v2924, %v2923
        %v2952 = vpack.c.b16 %v2926, %v2925
        %v2953 = vpack.c.b16 %v2928, %v2927
        %v2954 = vpack.c.b16 %v2930, %v2929
        %v2955 = vpack.c.b16 %v2932, %v2931
        %v2956 = vpack.c.b16 %v2934, %v2933
        %v2957 = vpack.c.b16 %v2936, %v2935
        %v2958 = vpack.c.b16 %v2938, %v2937
        %v2959 = vpack.c.b16 %v2940, %v2939
        %v2960 = vpack.c.b16 %v2942, %v2941
        %v2961 = vpack.c.b16 %v2944, %v2943
        %v2962 = vpack.c.b16 %v2946, %v2945
        %v2979 = vunpack.c.l.b16 %v1132
        %v2980 = vunpack.c.l.b16 %v1142
        %v2981 = vunpack.c.l.b16 %v1156
        %v2982 = vunpack.c.l.b16 %v1166
        %v2983 = vunpack.c.l.b16 %v1180
        %v2984 = vunpack.c.l.b16 %v1190
        %v2985 = vunpack.c.l.b16 %v1204
        %v2986 = vunpack.c.l.b16 %v1214
        %v2987 = vunpack.c.l.b16 %v1228
        %v2988 = vunpack.c.l.b16 %v1238
        %v2989 = vunpack.c.l.b16 %v1252
        %v2990 = vunpack.c.l.b16 %v1262
        %v2991 = vunpack.c.l.b16 %v1276
        %v2992 = vunpack.c.l.b16 %v1286
        %v2993 = vunpack.c.l.b16 %v1300
        %v2994 = vunpack.c.l.b16 %v1310
        %v2995 = vunpack.c.l.b16 %v1324
        %v2996 = vunpack.c.l.b16 %v1334
        %v2997 = vunpack.c.l.b16 %v1348
        %v2998 = vunpack.c.l.b16 %v1358
        %v2999 = vunpack.c.l.b16 %v1372
        %v3000 = vunpack.c.l.b16 %v1382
        %v3001 = vunpack.c.l.b16 %v1396
        %v3002 = vunpack.c.l.b16 %v1406
        %v3003 = vunpack.c.l.b16 %v1420
        %v3004 = vunpack.c.l.b16 %v1430
        %v3005 = vunpack.c.l.b16 %v1444
        %v3006 = vunpack.c.l.b16 %v1454
        %v3007 = vunpack.c.l.b16 %v1468
        %v3008 = vunpack.c.l.b16 %v1478
        %v3009 = vunpack.c.l.b16 %v1492
        %v3010 = vunpack.c.l.b16 %v1502
        %v3011 = vpack.c.b16 %v2980, %v2979
        %v3012 = vpack.c.b16 %v2982, %v2981
        %v3013 = vpack.c.b16 %v2984, %v2983
        %v3014 = vpack.c.b16 %v2986, %v2985
        %v3015 = vpack.c.b16 %v2988, %v2987
        %v3016 = vpack.c.b16 %v2990, %v2989
        %v3017 = vpack.c.b16 %v2992, %v2991
        %v3018 = vpack.c.b16 %v2994, %v2993
        %v3019 = vpack.c.b16 %v2996, %v2995
        %v3020 = vpack.c.b16 %v2998, %v2997
        %v3021 = vpack.c.b16 %v3000, %v2999
        %v3022 = vpack.c.b16 %v3002, %v3001
        %v3023 = vpack.c.b16 %v3004, %v3003
        %v3024 = vpack.c.b16 %v3006, %v3005
        %v3025 = vpack.c.b16 %v3008, %v3007
        %v3026 = vpack.c.b16 %v3010, %v3009
        %v3043 = vunpack.c.l.b16 %v1573
        %v3044 = vunpack.c.l.b16 %v1576
        %v3045 = vunpack.c.l.b16 %v1580
        %v3046 = vunpack.c.l.b16 %v1583
        %v3047 = vunpack.c.l.b16 %v1587
        %v3048 = vunpack.c.l.b16 %v1590
        %v3049 = vunpack.c.l.b16 %v1594
        %v3050 = vunpack.c.l.b16 %v1597
        %v3051 = vunpack.c.l.b16 %v1601
        %v3052 = vunpack.c.l.b16 %v1604
        %v3053 = vunpack.c.l.b16 %v1608
        %v3054 = vunpack.c.l.b16 %v1611
        %v3055 = vunpack.c.l.b16 %v1615
        %v3056 = vunpack.c.l.b16 %v1618
        %v3057 = vunpack.c.l.b16 %v1622
        %v3058 = vunpack.c.l.b16 %v1625
        %v3059 = vunpack.c.l.b16 %v1629
        %v3060 = vunpack.c.l.b16 %v1632
        %v3061 = vunpack.c.l.b16 %v1636
        %v3062 = vunpack.c.l.b16 %v1639
        %v3063 = vunpack.c.l.b16 %v1643
        %v3064 = vunpack.c.l.b16 %v1646
        %v3065 = vunpack.c.l.b16 %v1650
        %v3066 = vunpack.c.l.b16 %v1653
        %v3067 = vunpack.c.l.b16 %v1657
        %v3068 = vunpack.c.l.b16 %v1660
        %v3069 = vunpack.c.l.b16 %v1664
        %v3070 = vunpack.c.l.b16 %v1667
        %v3071 = vunpack.c.l.b16 %v1671
        %v3072 = vunpack.c.l.b16 %v1674
        %v3073 = vunpack.c.l.b16 %v1678
        %v3074 = vunpack.c.l.b16 %v1681
        %v3075 = vpack.c.b16 %v3044, %v3043
        %v3076 = vpack.c.b16 %v3046, %v3045
        %v3077 = vpack.c.b16 %v3048, %v3047
        %v3078 = vpack.c.b16 %v3050, %v3049
        %v3079 = vpack.c.b16 %v3052, %v3051
        %v3080 = vpack.c.b16 %v3054, %v3053
        %v3081 = vpack.c.b16 %v3056, %v3055
        %v3082 = vpack.c.b16 %v3058, %v3057
        %v3083 = vpack.c.b16 %v3060, %v3059
        %v3084 = vpack.c.b16 %v3062, %v3061
        %v3085 = vpack.c.b16 %v3064, %v3063
        %v3086 = vpack.c.b16 %v3066, %v3065
        %v3087 = vpack.c.b16 %v3068, %v3067
        %v3088 = vpack.c.b16 %v3070, %v3069
        %v3089 = vpack.c.b16 %v3072, %v3071
        %v3090 = vpack.c.b16 %v3074, %v3073
        %v3123 = vunpack.c.l.b16 %v1682
        %v3124 = vunpack.c.l.b16 %v1683
        %v3125 = vunpack.c.l.b16 %v1684
        %v3126 = vunpack.c.l.b16 %v1685
        %v3127 = vunpack.c.l.b16 %v1686
        %v3128 = vunpack.c.l.b16 %v1687
        %v3129 = vunpack.c.l.b16 %v1688
        %v3130 = vunpack.c.l.b16 %v1689
        %v3131 = vunpack.c.l.b16 %v1690
        %v3132 = vunpack.c.l.b16 %v1691
        %v3133 = vunpack.c.l.b16 %v1692
        %v3134 = vunpack.c.l.b16 %v1693
        %v3135 = vunpack.c.l.b16 %v1694
        %v3136 = vunpack.c.l.b16 %v1695
        %v3137 = vunpack.c.l.b16 %v1696
        %v3138 = vunpack.c.l.b16 %v1697
        %v3139 = vunpack.c.l.b16 %v1698
        %v3140 = vunpack.c.l.b16 %v1699
        %v3141 = vunpack.c.l.b16 %v1700
        %v3142 = vunpack.c.l.b16 %v1701
        %v3143 = vunpack.c.l.b16 %v1702
        %v3144 = vunpack.c.l.b16 %v1703
        %v3145 = vunpack.c.l.b16 %v1704
        %v3146 = vunpack.c.l.b16 %v1705
        %v3147 = vunpack.c.l.b16 %v1706
        %v3148 = vunpack.c.l.b16 %v1707
        %v3149 = vunpack.c.l.b16 %v1708
        %v3150 = vunpack.c.l.b16 %v1709
        %v3151 = vunpack.c.l.b16 %v1710
        %v3152 = vunpack.c.l.b16 %v1711
        %v3153 = vunpack.c.l.b16 %v1712
        %v3154 = vunpack.c.l.b16 %v1713
        %v3155 = vpack.c.b16 %v3124, %v3123
        %v3156 = vpack.c.b16 %v3126, %v3125
        %v3157 = vpack.c.b16 %v3128, %v3127
        %v3158 = vpack.c.b16 %v3130, %v3129
        %v3159 = vpack.c.b16 %v3132, %v3131
        %v3160 = vpack.c.b16 %v3134, %v3133
        %v3161 = vpack.c.b16 %v3136, %v3135
        %v3162 = vpack.c.b16 %v3138, %v3137
        %v3163 = vpack.c.b16 %v3140, %v3139
        %v3164 = vpack.c.b16 %v3142, %v3141
        %v3165 = vpack.c.b16 %v3144, %v3143
        %v3166 = vpack.c.b16 %v3146, %v3145
        %v3167 = vpack.c.b16 %v3148, %v3147
        %v3168 = vpack.c.b16 %v3150, %v3149
        %v3169 = vpack.c.b16 %v3152, %v3151
        %v3170 = vpack.c.b16 %v3154, %v3153
        %v3187 = vunpack.c.l.b16 %v1743
        %v3188 = vunpack.c.l.b16 %v1753
        %v3189 = vunpack.c.l.b16 %v1767
        %v3190 = vunpack.c.l.b16 %v1777
        %v3191 = vunpack.c.l.b16 %v1791
        %v3192 = vunpack.c.l.b16 %v1801
        %v3193 = vunpack.c.l.b16 %v1815
        %v3194 = vunpack.c.l.b16 %v1825
        %v3195 = vunpack.c.l.b16 %v1839
        %v3196 = vunpack.c.l.b16 %v1849
        %v3197 = vunpack.c.l.b16 %v1863
        %v3198 = vunpack.c.l.b16 %v1873
        %v3199 = vunpack.c.l.b16 %v1887
        %v3200 = vunpack.c.l.b16 %v1897
        %v3201 = vunpack.c.l.b16 %v1911
        %v3202 = vunpack.c.l.b16 %v1921
        %v3203 = vunpack.c.l.b16 %v1935
        %v3204 = vunpack.c.l.b16 %v1945
        %v3205 = vunpack.c.l.b16 %v1959
        %v3206 = vunpack.c.l.b16 %v1969
        %v3207 = vunpack.c.l.b16 %v1983
        %v3208 = vunpack.c.l.b16 %v1993
        %v3209 = vunpack.c.l.b16 %v2007
        %v3210 = vunpack.c.l.b16 %v2017
        %v3211 = vunpack.c.l.b16 %v2031
        %v3212 = vunpack.c.l.b16 %v2041
        %v3213 = vunpack.c.l.b16 %v2055
        %v3214 = vunpack.c.l.b16 %v2065
        %v3215 = vunpack.c.l.b16 %v2079
        %v3216 = vunpack.c.l.b16 %v2089
        %v3217 = vunpack.c.l.b16 %v2103
        %v3218 = vunpack.c.l.b16 %v2113
        %v3219 = vpack.c.b16 %v3188, %v3187
        %v3220 = vpack.c.b16 %v3190, %v3189
        %v3221 = vpack.c.b16 %v3192, %v3191
        %v3222 = vpack.c.b16 %v3194, %v3193
        %v3223 = vpack.c.b16 %v3196, %v3195
        %v3224 = vpack.c.b16 %v3198, %v3197
        %v3225 = vpack.c.b16 %v3200, %v3199
        %v3226 = vpack.c.b16 %v3202, %v3201
        %v3227 = vpack.c.b16 %v3204, %v3203
        %v3228 = vpack.c.b16 %v3206, %v3205
        %v3229 = vpack.c.b16 %v3208, %v3207
        %v3230 = vpack.c.b16 %v3210, %v3209
        %v3231 = vpack.c.b16 %v3212, %v3211
        %v3232 = vpack.c.b16 %v3214, %v3213
        %v3233 = vpack.c.b16 %v3216, %v3215
        %v3234 = vpack.c.b16 %v3218, %v3217
        %v3251 = vunpack.c.l.b16 %v2181
        %v3252 = vunpack.c.l.b16 %v2184
        %v3253 = vunpack.c.l.b16 %v2188
        %v3254 = vunpack.c.l.b16 %v2191
        %v3255 = vunpack.c.l.b16 %v2195
        %v3256 = vunpack.c.l.b16 %v2198
        %v3257 = vunpack.c.l.b16 %v2202
        %v3258 = vunpack.c.l.b16 %v2205
        %v3259 = vunpack.c.l.b16 %v2209
        %v3260 = vunpack.c.l.b16 %v2212
        %v3261 = vunpack.c.l.b16 %v2216
        %v3262 = vunpack.c.l.b16 %v2219
        %v3263 = vunpack.c.l.b16 %v2223
        %v3264 = vunpack.c.l.b16 %v2226
        %v3265 = vunpack.c.l.b16 %v2230
        %v3266 = vunpack.c.l.b16 %v2233
        %v3267 = vunpack.c.l.b16 %v2237
        %v3268 = vunpack.c.l.b16 %v2240
        %v3269 = vunpack.c.l.b16 %v2244
        %v3270 = vunpack.c.l.b16 %v2247
        %v3271 = vunpack.c.l.b16 %v2251
        %v3272 = vunpack.c.l.b16 %v2254
        %v3273 = vunpack.c.l.b16 %v2258
        %v3274 = vunpack.c.l.b16 %v2261
        %v3275 = vunpack.c.l.b16 %v2265
        %v3276 = vunpack.c.l.b16 %v2268
        %v3277 = vunpack.c.l.b16 %v2272
        %v3278 = vunpack.c.l.b16 %v2275
        %v3279 = vunpack.c.l.b16 %v2279
        %v3280 = vunpack.c.l.b16 %v2282
        %v3281 = vunpack.c.l.b16 %v2286
        %v3282 = vunpack.c.l.b16 %v2289
        %v3283 = vpack.c.b16 %v3252, %v3251
        %v3284 = vpack.c.b16 %v3254, %v3253
        %v3285 = vpack.c.b16 %v3256, %v3255
        %v3286 = vpack.c.b16 %v3258, %v3257
        %v3287 = vpack.c.b16 %v3260, %v3259
        %v3288 = vpack.c.b16 %v3262, %v3261
        %v3289 = vpack.c.b16 %v3264, %v3263
        %v3290 = vpack.c.b16 %v3266, %v3265
        %v3291 = vpack.c.b16 %v3268, %v3267
        %v3292 = vpack.c.b16 %v3270, %v3269
        %v3293 = vpack.c.b16 %v3272, %v3271
        %v3294 = vpack.c.b16 %v3274, %v3273
        %v3295 = vpack.c.b16 %v3276, %v3275
        %v3296 = vpack.c.b16 %v3278, %v3277
        %v3297 = vpack.c.b16 %v3280, %v3279
        %v3298 = vpack.c.b16 %v3282, %v3281
        %v3331 = vunpack.c.l.b16 %v2291
        %v3332 = vunpack.c.l.b16 %v2292
        %v3333 = vunpack.c.l.b16 %v2293
        %v3334 = vunpack.c.l.b16 %v2294
        %v3335 = vunpack.c.l.b16 %v2295
        %v3336 = vunpack.c.l.b16 %v2296
        %v3337 = vunpack.c.l.b16 %v2297
        %v3338 = vunpack.c.l.b16 %v2298
        %v3339 = vunpack.c.l.b16 %v2299
        %v3340 = vunpack.c.l.b16 %v2300
        %v3341 = vunpack.c.l.b16 %v2301
        %v3342 = vunpack.c.l.b16 %v2302
        %v3343 = vunpack.c.l.b16 %v2303
        %v3344 = vunpack.c.l.b16 %v2304
        %v3345 = vunpack.c.l.b16 %v2305
        %v3346 = vunpack.c.l.b16 %v2306
        %v3347 = vunpack.c.l.b16 %v2307
        %v3348 = vunpack.c.l.b16 %v2308
        %v3349 = vunpack.c.l.b16 %v2309
        %v3350 = vunpack.c.l.b16 %v2310
        %v3351 = vunpack.c.l.b16 %v2311
        %v3352 = vunpack.c.l.b16 %v2312
        %v3353 = vunpack.c.l.b16 %v2313
        %v3354 = vunpack.c.l.b16 %v2314
        %v3355 = vunpack.c.l.b16 %v2315
        %v3356 = vunpack.c.l.b16 %v2316
        %v3357 = vunpack.c.l.b16 %v2317
        %v3358 = vunpack.c.l.b16 %v2318
        %v3359 = vunpack.c.l.b16 %v2319
        %v3360 = vunpack.c.l.b16 %v2320
        %v3361 = vunpack.c.l.b16 %v2321
        %v3362 = vunpack.c.l.b16 %v2322
        %v3363 = vpack.c.b16 %v3332, %v3331
        %v3364 = vpack.c.b16 %v3334, %v3333
        %v3365 = vpack.c.b16 %v3336, %v3335
        %v3366 = vpack.c.b16 %v3338, %v3337
        %v3367 = vpack.c.b16 %v3340, %v3339
        %v3368 = vpack.c.b16 %v3342, %v3341
        %v3369 = vpack.c.b16 %v3344, %v3343
        %v3370 = vpack.c.b16 %v3346, %v3345
        %v3371 = vpack.c.b16 %v3348, %v3347
        %v3372 = vpack.c.b16 %v3350, %v3349
        %v3373 = vpack.c.b16 %v3352, %v3351
        %v3374 = vpack.c.b16 %v3354, %v3353
        %v3375 = vpack.c.b16 %v3356, %v3355
        %v3376 = vpack.c.b16 %v3358, %v3357
        %v3377 = vpack.c.b16 %v3360, %v3359
        %v3378 = vpack.c.b16 %v3362, %v3361
        %v3395 = vunpack.c.l.b16 %v2352
        %v3396 = vunpack.c.l.b16 %v2362
        %v3397 = vunpack.c.l.b16 %v2376
        %v3398 = vunpack.c.l.b16 %v2386
        %v3399 = vunpack.c.l.b16 %v2400
        %v3400 = vunpack.c.l.b16 %v2410
        %v3401 = vunpack.c.l.b16 %v2424
        %v3402 = vunpack.c.l.b16 %v2434
        %v3403 = vunpack.c.l.b16 %v2448
        %v3404 = vunpack.c.l.b16 %v2458
        %v3405 = vunpack.c.l.b16 %v2472
        %v3406 = vunpack.c.l.b16 %v2482
        %v3407 = vunpack.c.l.b16 %v2496
        %v3408 = vunpack.c.l.b16 %v2506
        %v3409 = vunpack.c.l.b16 %v2520
        %v3410 = vunpack.c.l.b16 %v2530
        %v3411 = vunpack.c.l.b16 %v2544
        %v3412 = vunpack.c.l.b16 %v2554
        %v3413 = vunpack.c.l.b16 %v2568
        %v3414 = vunpack.c.l.b16 %v2578
        %v3415 = vunpack.c.l.b16 %v2592
        %v3416 = vunpack.c.l.b16 %v2602
        %v3417 = vunpack.c.l.b16 %v2616
        %v3418 = vunpack.c.l.b16 %v2626
        %v3419 = vunpack.c.l.b16 %v2640
        %v3420 = vunpack.c.l.b16 %v2650
        %v3421 = vunpack.c.l.b16 %v2664
        %v3422 = vunpack.c.l.b16 %v2674
        %v3423 = vunpack.c.l.b16 %v2688
        %v3424 = vunpack.c.l.b16 %v2698
        %v3425 = vunpack.c.l.b16 %v2712
        %v3426 = vunpack.c.l.b16 %v2722
        %v3427 = vpack.c.b16 %v3396, %v3395
        %v3428 = vpack.c.b16 %v3398, %v3397
        %v3429 = vpack.c.b16 %v3400, %v3399
        %v3430 = vpack.c.b16 %v3402, %v3401
        %v3431 = vpack.c.b16 %v3404, %v3403
        %v3432 = vpack.c.b16 %v3406, %v3405
        %v3433 = vpack.c.b16 %v3408, %v3407
        %v3434 = vpack.c.b16 %v3410, %v3409
        %v3435 = vpack.c.b16 %v3412, %v3411
        %v3436 = vpack.c.b16 %v3414, %v3413
        %v3437 = vpack.c.b16 %v3416, %v3415
        %v3438 = vpack.c.b16 %v3418, %v3417
        %v3439 = vpack.c.b16 %v3420, %v3419
        %v3440 = vpack.c.b16 %v3422, %v3421
        %v3441 = vpack.c.b16 %v3424, %v3423
        %v3442 = vpack.c.b16 %v3426, %v3425
        %v3459 = vunpack.c.l.b16 %v2790
        %v3460 = vunpack.c.l.b16 %v2793
        %v3461 = vunpack.c.l.b16 %v2797
        %v3462 = vunpack.c.l.b16 %v2800
        %v3463 = vunpack.c.l.b16 %v2804
        %v3464 = vunpack.c.l.b16 %v2807
        %v3465 = vunpack.c.l.b16 %v2811
        %v3466 = vunpack.c.l.b16 %v2814
        %v3467 = vunpack.c.l.b16 %v2818
        %v3468 = vunpack.c.l.b16 %v2821
        %v3469 = vunpack.c.l.b16 %v2825
        %v3470 = vunpack.c.l.b16 %v2828
        %v3471 = vunpack.c.l.b16 %v2832
        %v3472 = vunpack.c.l.b16 %v2835
        %v3473 = vunpack.c.l.b16 %v2839
        %v3474 = vunpack.c.l.b16 %v2842
        %v3475 = vunpack.c.l.b16 %v2846
        %v3476 = vunpack.c.l.b16 %v2849
        %v3477 = vunpack.c.l.b16 %v2853
        %v3478 = vunpack.c.l.b16 %v2856
        %v3479 = vunpack.c.l.b16 %v2860
        %v3480 = vunpack.c.l.b16 %v2863
        %v3481 = vunpack.c.l.b16 %v2867
        %v3482 = vunpack.c.l.b16 %v2870
        %v3483 = vunpack.c.l.b16 %v2874
        %v3484 = vunpack.c.l.b16 %v2877
        %v3485 = vunpack.c.l.b16 %v2881
        %v3486 = vunpack.c.l.b16 %v2884
        %v3487 = vunpack.c.l.b16 %v2888
        %v3488 = vunpack.c.l.b16 %v2891
        %v3489 = vunpack.c.l.b16 %v2895
        %v3490 = vunpack.c.l.b16 %v2898
        %v3491 = vpack.c.b16 %v3460, %v3459
        %v3492 = vpack.c.b16 %v3462, %v3461
        %v3493 = vpack.c.b16 %v3464, %v3463
        %v3494 = vpack.c.b16 %v3466, %v3465
        %v3495 = vpack.c.b16 %v3468, %v3467
        %v3496 = vpack.c.b16 %v3470, %v3469
        %v3497 = vpack.c.b16 %v3472, %v3471
        %v3498 = vpack.c.b16 %v3474, %v3473
        %v3499 = vpack.c.b16 %v3476, %v3475
        %v3500 = vpack.c.b16 %v3478, %v3477
        %v3501 = vpack.c.b16 %v3480, %v3479
        %v3502 = vpack.c.b16 %v3482, %v3481
        %v3503 = vpack.c.b16 %v3484, %v3483
        %v3504 = vpack.c.b16 %v3486, %v3485
        %v3505 = vpack.c.b16 %v3488, %v3487
        %v3506 = vpack.c.b16 %v3490, %v3489
        %v3523 = vld [vmem:[#allocation7] sm:$0xf]
        %v3524 = vld [vmem:[#allocation7 + $0x4] sm:$0xf]
        %v3525 = vld [vmem:[#allocation7 + $0x8] sm:$0xf]
        %v3526 = vld [vmem:[#allocation7 + $0xc] sm:$0xf]
        %v3527 = vld [vmem:[#allocation7 + $0x10] sm:$0xf]
        %v3528 = vld [vmem:[#allocation7 + $0x14] sm:$0xf]
        %v3529 = vld [vmem:[#allocation7 + $0x18] sm:$0xf]
        %v3530 = vld [vmem:[#allocation7 + $0x1c] sm:$0xf]
        %v3531 = vld [vmem:[#allocation7 + $0x20] sm:$0xf]
        %v3532 = vld [vmem:[#allocation7 + $0x24] sm:$0xf]
        %v3533 = vld [vmem:[#allocation7 + $0x28] sm:$0xf]
        %v3534 = vld [vmem:[#allocation7 + $0x2c] sm:$0xf]
        %v3535 = vld [vmem:[#allocation7 + $0x30] sm:$0xf]
        %v3536 = vld [vmem:[#allocation7 + $0x34] sm:$0xf]
        %v3537 = vld [vmem:[#allocation7 + $0x38] sm:$0xf]
        %v3538 = vld [vmem:[#allocation7 + $0x3c] sm:$0xf]
        %v3539 = vld [vmem:[#allocation7 + $0x40] sm:$0xf]
        %v3540 = vld [vmem:[#allocation7 + $0x44] sm:$0xf]
        %v3541 = vld [vmem:[#allocation7 + $0x48] sm:$0xf]
        %v3542 = vld [vmem:[#allocation7 + $0x4c] sm:$0xf]
        %v3543 = vld [vmem:[#allocation7 + $0x50] sm:$0xf]
        %v3544 = vld [vmem:[#allocation7 + $0x54] sm:$0xf]
        %v3545 = vld [vmem:[#allocation7 + $0x58] sm:$0xf]
        %v3546 = vld [vmem:[#allocation7 + $0x5c] sm:$0xf]
        %v3547 = vld [vmem:[#allocation7 + $0x60] sm:$0xf]
        %v3548 = vld [vmem:[#allocation7 + $0x64] sm:$0xf]
        %v3549 = vld [vmem:[#allocation7 + $0x68] sm:$0xf]
        %v3550 = vld [vmem:[#allocation7 + $0x6c] sm:$0xf]
        %v3551 = vld [vmem:[#allocation7 + $0x70] sm:$0xf]
        %v3552 = vld [vmem:[#allocation7 + $0x74] sm:$0xf]
        %v3553 = vld [vmem:[#allocation7 + $0x78] sm:$0xf]
        %v3554 = vld [vmem:[#allocation7 + $0x7c] sm:$0xf]
        %v3555 = vld [vmem:[#allocation7 + $0x80] sm:$0xf]
        %v3556 = vld [vmem:[#allocation7 + $0x84] sm:$0xf]
        %v3557 = vld [vmem:[#allocation7 + $0x88] sm:$0xf]
        %v3558 = vld [vmem:[#allocation7 + $0x8c] sm:$0xf]
        %v3559 = vld [vmem:[#allocation7 + $0x90] sm:$0xf]
        %v3560 = vld [vmem:[#allocation7 + $0x94] sm:$0xf]
        %v3561 = vld [vmem:[#allocation7 + $0x98] sm:$0xf]
        %v3562 = vld [vmem:[#allocation7 + $0x9c] sm:$0xf]
        %v3563 = vld [vmem:[#allocation7 + $0xa0] sm:$0xf]
        %v3564 = vld [vmem:[#allocation7 + $0xa4] sm:$0xf]
        %v3565 = vld [vmem:[#allocation7 + $0xa8] sm:$0xf]
        %v3566 = vld [vmem:[#allocation7 + $0xac] sm:$0xf]
        %v3567 = vld [vmem:[#allocation7 + $0xb0] sm:$0xf]
        %v3568 = vld [vmem:[#allocation7 + $0xb4] sm:$0xf]
        %v3569 = vld [vmem:[#allocation7 + $0xb8] sm:$0xf]
        %v3570 = vld [vmem:[#allocation7 + $0xbc] sm:$0xf]
        %v3571 = vld [vmem:[#allocation7 + $0xc0] sm:$0xf]
        %v3572 = vld [vmem:[#allocation7 + $0xc4] sm:$0xf]
        %v3573 = vld [vmem:[#allocation7 + $0xc8] sm:$0xf]
        %v3574 = vld [vmem:[#allocation7 + $0xcc] sm:$0xf]
        %v3575 = vld [vmem:[#allocation7 + $0xd0] sm:$0xf]
        %v3576 = vld [vmem:[#allocation7 + $0xd4] sm:$0xf]
        %v3577 = vld [vmem:[#allocation7 + $0xd8] sm:$0xf]
        %v3578 = vld [vmem:[#allocation7 + $0xdc] sm:$0xf]
        %v3579 = vld [vmem:[#allocation7 + $0xe0] sm:$0xf]
        %v3580 = vld [vmem:[#allocation7 + $0xe4] sm:$0xf]
        %v3581 = vld [vmem:[#allocation7 + $0xe8] sm:$0xf]
        %v3582 = vld [vmem:[#allocation7 + $0xec] sm:$0xf]
        %v3583 = vld [vmem:[#allocation7 + $0xf0] sm:$0xf]
        %v3584 = vld [vmem:[#allocation7 + $0xf4] sm:$0xf]
        %v3585 = vld [vmem:[#allocation7 + $0xf8] sm:$0xf]
        %v3586 = vld [vmem:[#allocation7 + $0xfc] sm:$0xf]
        %v3587 = vld [vmem:[#allocation7 + $0x100] sm:$0xf]
        %v3588 = vld [vmem:[#allocation7 + $0x104] sm:$0xf]
        %v3589 = vld [vmem:[#allocation7 + $0x108] sm:$0xf]
        %v3590 = vld [vmem:[#allocation7 + $0x10c] sm:$0xf]
        %v3591 = vld [vmem:[#allocation7 + $0x110] sm:$0xf]
        %v3592 = vld [vmem:[#allocation7 + $0x114] sm:$0xf]
        %v3593 = vld [vmem:[#allocation7 + $0x118] sm:$0xf]
        %v3594 = vld [vmem:[#allocation7 + $0x11c] sm:$0xf]
        %v3595 = vld [vmem:[#allocation7 + $0x120] sm:$0xf]
        %v3596 = vld [vmem:[#allocation7 + $0x124] sm:$0xf]
        %v3597 = vld [vmem:[#allocation7 + $0x128] sm:$0xf]
        %v3598 = vld [vmem:[#allocation7 + $0x12c] sm:$0xf]
        %v3599 = vld [vmem:[#allocation7 + $0x130] sm:$0xf]
        %v3600 = vld [vmem:[#allocation7 + $0x134] sm:$0xf]
        %v3601 = vld [vmem:[#allocation7 + $0x138] sm:$0xf]
        %v3602 = vld [vmem:[#allocation7 + $0x13c] sm:$0xf]
        %v3603 = vld [vmem:[#allocation7 + $0x140] sm:$0xf]
        %v3604 = vld [vmem:[#allocation7 + $0x144] sm:$0xf]
        %v3605 = vld [vmem:[#allocation7 + $0x148] sm:$0xf]
        %v3606 = vld [vmem:[#allocation7 + $0x14c] sm:$0xf]
        %v3607 = vld [vmem:[#allocation7 + $0x150] sm:$0xf]
        %v3608 = vld [vmem:[#allocation7 + $0x154] sm:$0xf]
        %v3609 = vld [vmem:[#allocation7 + $0x158] sm:$0xf]
        %v3610 = vld [vmem:[#allocation7 + $0x15c] sm:$0xf]
        %v3611 = vld [vmem:[#allocation7 + $0x160] sm:$0xf]
        %v3612 = vld [vmem:[#allocation7 + $0x164] sm:$0xf]
        %v3613 = vld [vmem:[#allocation7 + $0x168] sm:$0xf]
        %v3614 = vld [vmem:[#allocation7 + $0x16c] sm:$0xf]
        %v3615 = vld [vmem:[#allocation7 + $0x170] sm:$0xf]
        %v3616 = vld [vmem:[#allocation7 + $0x174] sm:$0xf]
        %v3617 = vld [vmem:[#allocation7 + $0x178] sm:$0xf]
        %v3618 = vld [vmem:[#allocation7 + $0x17c] sm:$0xf]
        %v3619 = vld [vmem:[#allocation7 + $0x180] sm:$0xf]
        %v3620 = vld [vmem:[#allocation7 + $0x184] sm:$0xf]
        %v3621 = vld [vmem:[#allocation7 + $0x188] sm:$0xf]
        %v3622 = vld [vmem:[#allocation7 + $0x18c] sm:$0xf]
        %v3623 = vld [vmem:[#allocation7 + $0x190] sm:$0xf]
        %v3624 = vld [vmem:[#allocation7 + $0x194] sm:$0xf]
        %v3625 = vld [vmem:[#allocation7 + $0x198] sm:$0xf]
        %v3626 = vld [vmem:[#allocation7 + $0x19c] sm:$0xf]
        %v3627 = vld [vmem:[#allocation7 + $0x1a0] sm:$0xf]
        %v3628 = vld [vmem:[#allocation7 + $0x1a4] sm:$0xf]
        %v3629 = vld [vmem:[#allocation7 + $0x1a8] sm:$0xf]
        %v3630 = vld [vmem:[#allocation7 + $0x1ac] sm:$0xf]
        %v3631 = vld [vmem:[#allocation7 + $0x1b0] sm:$0xf]
        %v3632 = vld [vmem:[#allocation7 + $0x1b4] sm:$0xf]
        %v3633 = vld [vmem:[#allocation7 + $0x1b8] sm:$0xf]
        %v3634 = vld [vmem:[#allocation7 + $0x1bc] sm:$0xf]
        %v3635 = vld [vmem:[#allocation7 + $0x1c0] sm:$0xf]
        %v3636 = vld [vmem:[#allocation7 + $0x1c4] sm:$0xf]
        %v3637 = vld [vmem:[#allocation7 + $0x1c8] sm:$0xf]
        %v3638 = vld [vmem:[#allocation7 + $0x1cc] sm:$0xf]
        %v3639 = vld [vmem:[#allocation7 + $0x1d0] sm:$0xf]
        %v3640 = vld [vmem:[#allocation7 + $0x1d4] sm:$0xf]
        %v3641 = vld [vmem:[#allocation7 + $0x1d8] sm:$0xf]
        %v3642 = vld [vmem:[#allocation7 + $0x1dc] sm:$0xf]
        %v3643 = vld [vmem:[#allocation7 + $0x1e0] sm:$0xf]
        %v3644 = vld [vmem:[#allocation7 + $0x1e4] sm:$0xf]
        %v3645 = vld [vmem:[#allocation7 + $0x1e8] sm:$0xf]
        %v3646 = vld [vmem:[#allocation7 + $0x1ec] sm:$0xf]
        %v3647 = vld [vmem:[#allocation7 + $0x1f0] sm:$0xf]
        %v3648 = vld [vmem:[#allocation7 + $0x1f4] sm:$0xf]
        %v3649 = vld [vmem:[#allocation7 + $0x1f8] sm:$0xf]
        %v3650 = vld [vmem:[#allocation7 + $0x1fc] sm:$0xf]
        %v3651 = vld [vmem:[#allocation7 + $0x200] sm:$0xf]
        %v3652 = vld [vmem:[#allocation7 + $0x204] sm:$0xf]
        %v3653 = vld [vmem:[#allocation7 + $0x208] sm:$0xf]
        %v3654 = vld [vmem:[#allocation7 + $0x20c] sm:$0xf]
        %v3655 = vld [vmem:[#allocation7 + $0x210] sm:$0xf]
        %v3656 = vld [vmem:[#allocation7 + $0x214] sm:$0xf]
        %v3657 = vld [vmem:[#allocation7 + $0x218] sm:$0xf]
        %v3658 = vld [vmem:[#allocation7 + $0x21c] sm:$0xf]
        %v3659 = vld [vmem:[#allocation7 + $0x220] sm:$0xf]
        %v3660 = vld [vmem:[#allocation7 + $0x224] sm:$0xf]
        %v3661 = vld [vmem:[#allocation7 + $0x228] sm:$0xf]
        %v3662 = vld [vmem:[#allocation7 + $0x22c] sm:$0xf]
        %v3663 = vld [vmem:[#allocation7 + $0x230] sm:$0xf]
        %v3664 = vld [vmem:[#allocation7 + $0x234] sm:$0xf]
        %v3665 = vld [vmem:[#allocation7 + $0x238] sm:$0xf]
        %v3666 = vld [vmem:[#allocation7 + $0x23c] sm:$0xf]
        %v3667 = vld [vmem:[%s2] sm:$0x1]
        %v3669 = vlaneseq
        %v3670 = vshrl.u32 %v3669, 7
        %v3671 = vsub.s32 0, %v3670
        %v3672 = vrot.slane %v3667, %v3671
        %v3818 = vunpack.c.l.b16 %v3523
        %v3819 = vunpack.c.l.b16 %v3524
        %v3820 = vunpack.c.l.b16 %v3525
        %v3821 = vunpack.c.l.b16 %v3526
        %v3822 = vunpack.c.l.b16 %v3527
        %v3823 = vunpack.c.l.b16 %v3528
        %v3824 = vunpack.c.l.b16 %v3529
        %v3825 = vunpack.c.l.b16 %v3530
        %v3826 = vunpack.c.l.b16 %v3531
        %v3827 = vunpack.c.l.b16 %v3532
        %v3828 = vunpack.c.l.b16 %v3533
        %v3829 = vunpack.c.l.b16 %v3534
        %v3830 = vunpack.c.l.b16 %v3535
        %v3831 = vunpack.c.l.b16 %v3536
        %v3832 = vunpack.c.l.b16 %v3537
        %v3833 = vunpack.c.l.b16 %v3538
        %v3834 = vunpack.c.l.b16 %v3539
        %v3835 = vunpack.c.l.b16 %v3540
        %v3836 = vunpack.c.l.b16 %v3541
        %v3837 = vunpack.c.l.b16 %v3542
        %v3838 = vunpack.c.l.b16 %v3543
        %v3839 = vunpack.c.l.b16 %v3544
        %v3840 = vunpack.c.l.b16 %v3545
        %v3841 = vunpack.c.l.b16 %v3546
        %v3842 = vunpack.c.l.b16 %v3547
        %v3843 = vunpack.c.l.b16 %v3548
        %v3844 = vunpack.c.l.b16 %v3549
        %v3845 = vunpack.c.l.b16 %v3550
        %v3846 = vunpack.c.l.b16 %v3551
        %v3847 = vunpack.c.l.b16 %v3552
        %v3848 = vunpack.c.l.b16 %v3553
        %v3849 = vunpack.c.l.b16 %v3554
        %v3850 = vunpack.c.l.b16 %v3555
        %v3851 = vunpack.c.l.b16 %v3556
        %v3852 = vunpack.c.l.b16 %v3557
        %v3853 = vunpack.c.l.b16 %v3558
        %v3854 = vunpack.c.l.b16 %v3559
        %v3855 = vunpack.c.l.b16 %v3560
        %v3856 = vunpack.c.l.b16 %v3561
        %v3857 = vunpack.c.l.b16 %v3562
        %v3858 = vunpack.c.l.b16 %v3563
        %v3859 = vunpack.c.l.b16 %v3564
        %v3860 = vunpack.c.l.b16 %v3565
        %v3861 = vunpack.c.l.b16 %v3566
        %v3862 = vunpack.c.l.b16 %v3567
        %v3863 = vunpack.c.l.b16 %v3568
        %v3864 = vunpack.c.l.b16 %v3569
        %v3865 = vunpack.c.l.b16 %v3570
        %v3866 = vunpack.c.l.b16 %v3571
        %v3867 = vunpack.c.l.b16 %v3572
        %v3868 = vunpack.c.l.b16 %v3573
        %v3869 = vunpack.c.l.b16 %v3574
        %v3870 = vunpack.c.l.b16 %v3575
        %v3871 = vunpack.c.l.b16 %v3576
        %v3872 = vunpack.c.l.b16 %v3577
        %v3873 = vunpack.c.l.b16 %v3578
        %v3874 = vunpack.c.l.b16 %v3579
        %v3875 = vunpack.c.l.b16 %v3580
        %v3876 = vunpack.c.l.b16 %v3581
        %v3877 = vunpack.c.l.b16 %v3582
        %v3878 = vunpack.c.l.b16 %v3583
        %v3879 = vunpack.c.l.b16 %v3584
        %v3880 = vunpack.c.l.b16 %v3585
        %v3881 = vunpack.c.l.b16 %v3586
        %v3882 = vunpack.c.l.b16 %v3587
        %v3883 = vunpack.c.l.b16 %v3588
        %v3884 = vunpack.c.l.b16 %v3589
        %v3885 = vunpack.c.l.b16 %v3590
        %v3886 = vunpack.c.l.b16 %v3591
        %v3887 = vunpack.c.l.b16 %v3592
        %v3888 = vunpack.c.l.b16 %v3593
        %v3889 = vunpack.c.l.b16 %v3594
        %v3890 = vunpack.c.l.b16 %v3595
        %v3891 = vunpack.c.l.b16 %v3596
        %v3892 = vunpack.c.l.b16 %v3597
        %v3893 = vunpack.c.l.b16 %v3598
        %v3894 = vunpack.c.l.b16 %v3599
        %v3895 = vunpack.c.l.b16 %v3600
        %v3896 = vunpack.c.l.b16 %v3601
        %v3897 = vunpack.c.l.b16 %v3602
        %v3898 = vunpack.c.l.b16 %v3603
        %v3899 = vunpack.c.l.b16 %v3604
        %v3900 = vunpack.c.l.b16 %v3605
        %v3901 = vunpack.c.l.b16 %v3606
        %v3902 = vunpack.c.l.b16 %v3607
        %v3903 = vunpack.c.l.b16 %v3608
        %v3904 = vunpack.c.l.b16 %v3609
        %v3905 = vunpack.c.l.b16 %v3610
        %v3906 = vunpack.c.l.b16 %v3611
        %v3907 = vunpack.c.l.b16 %v3612
        %v3908 = vunpack.c.l.b16 %v3613
        %v3909 = vunpack.c.l.b16 %v3614
        %v3910 = vunpack.c.l.b16 %v3615
        %v3911 = vunpack.c.l.b16 %v3616
        %v3912 = vunpack.c.l.b16 %v3617
        %v3913 = vunpack.c.l.b16 %v3618
        %v3914 = vunpack.c.l.b16 %v3619
        %v3915 = vunpack.c.l.b16 %v3620
        %v3916 = vunpack.c.l.b16 %v3621
        %v3917 = vunpack.c.l.b16 %v3622
        %v3918 = vunpack.c.l.b16 %v3623
        %v3919 = vunpack.c.l.b16 %v3624
        %v3920 = vunpack.c.l.b16 %v3625
        %v3921 = vunpack.c.l.b16 %v3626
        %v3922 = vunpack.c.l.b16 %v3627
        %v3923 = vunpack.c.l.b16 %v3628
        %v3924 = vunpack.c.l.b16 %v3629
        %v3925 = vunpack.c.l.b16 %v3630
        %v3926 = vunpack.c.l.b16 %v3631
        %v3927 = vunpack.c.l.b16 %v3632
        %v3928 = vunpack.c.l.b16 %v3633
        %v3929 = vunpack.c.l.b16 %v3634
        %v3930 = vunpack.c.l.b16 %v3635
        %v3931 = vunpack.c.l.b16 %v3636
        %v3932 = vunpack.c.l.b16 %v3637
        %v3933 = vunpack.c.l.b16 %v3638
        %v3934 = vunpack.c.l.b16 %v3639
        %v3935 = vunpack.c.l.b16 %v3640
        %v3936 = vunpack.c.l.b16 %v3641
        %v3937 = vunpack.c.l.b16 %v3642
        %v3938 = vunpack.c.l.b16 %v3643
        %v3939 = vunpack.c.l.b16 %v3644
        %v3940 = vunpack.c.l.b16 %v3645
        %v3941 = vunpack.c.l.b16 %v3646
        %v3942 = vunpack.c.l.b16 %v3647
        %v3943 = vunpack.c.l.b16 %v3648
        %v3944 = vunpack.c.l.b16 %v3649
        %v3945 = vunpack.c.l.b16 %v3650
        %v3946 = vunpack.c.l.b16 %v3651
        %v3947 = vunpack.c.l.b16 %v3652
        %v3948 = vunpack.c.l.b16 %v3653
        %v3949 = vunpack.c.l.b16 %v3654
        %v3950 = vunpack.c.l.b16 %v3655
        %v3951 = vunpack.c.l.b16 %v3656
        %v3952 = vunpack.c.l.b16 %v3657
        %v3953 = vunpack.c.l.b16 %v3658
        %v3954 = vunpack.c.l.b16 %v3659
        %v3955 = vunpack.c.l.b16 %v3660
        %v3956 = vunpack.c.l.b16 %v3661
        %v3957 = vunpack.c.l.b16 %v3662
        %v3958 = vunpack.c.l.b16 %v3663
        %v3959 = vunpack.c.l.b16 %v3664
        %v3960 = vunpack.c.l.b16 %v3665
        %v3961 = vunpack.c.l.b16 %v3666
        %v3962 = vpack.c.b16 %v3819, %v3818
        %v3963 = vpack.c.b16 %v3821, %v3820
        %v3964 = vpack.c.b16 %v3823, %v3822
        %v3965 = vpack.c.b16 %v3825, %v3824
        %v3966 = vpack.c.b16 %v3827, %v3826
        %v3967 = vpack.c.b16 %v3829, %v3828
        %v3968 = vpack.c.b16 %v3831, %v3830
        %v3969 = vpack.c.b16 %v3833, %v3832
        %v3970 = vpack.c.b16 %v3835, %v3834
        %v3971 = vpack.c.b16 %v3837, %v3836
        %v3972 = vpack.c.b16 %v3839, %v3838
        %v3973 = vpack.c.b16 %v3841, %v3840
        %v3974 = vpack.c.b16 %v3843, %v3842
        %v3975 = vpack.c.b16 %v3845, %v3844
        %v3976 = vpack.c.b16 %v3847, %v3846
        %v3977 = vpack.c.b16 %v3849, %v3848
        %v3978 = vpack.c.b16 %v3851, %v3850
        %v3979 = vpack.c.b16 %v3853, %v3852
        %v3980 = vpack.c.b16 %v3855, %v3854
        %v3981 = vpack.c.b16 %v3857, %v3856
        %v3982 = vpack.c.b16 %v3859, %v3858
        %v3983 = vpack.c.b16 %v3861, %v3860
        %v3984 = vpack.c.b16 %v3863, %v3862
        %v3985 = vpack.c.b16 %v3865, %v3864
        %v3986 = vpack.c.b16 %v3867, %v3866
        %v3987 = vpack.c.b16 %v3869, %v3868
        %v3988 = vpack.c.b16 %v3871, %v3870
        %v3989 = vpack.c.b16 %v3873, %v3872
        %v3990 = vpack.c.b16 %v3875, %v3874
        %v3991 = vpack.c.b16 %v3877, %v3876
        %v3992 = vpack.c.b16 %v3879, %v3878
        %v3993 = vpack.c.b16 %v3881, %v3880
        %v3994 = vpack.c.b16 %v3883, %v3882
        %v3995 = vpack.c.b16 %v3885, %v3884
        %v3996 = vpack.c.b16 %v3887, %v3886
        %v3997 = vpack.c.b16 %v3889, %v3888
        %v3998 = vpack.c.b16 %v3891, %v3890
        %v3999 = vpack.c.b16 %v3893, %v3892
        %v4000 = vpack.c.b16 %v3895, %v3894
        %v4001 = vpack.c.b16 %v3897, %v3896
        %v4002 = vpack.c.b16 %v3899, %v3898
        %v4003 = vpack.c.b16 %v3901, %v3900
        %v4004 = vpack.c.b16 %v3903, %v3902
        %v4005 = vpack.c.b16 %v3905, %v3904
        %v4006 = vpack.c.b16 %v3907, %v3906
        %v4007 = vpack.c.b16 %v3909, %v3908
        %v4008 = vpack.c.b16 %v3911, %v3910
        %v4009 = vpack.c.b16 %v3913, %v3912
        %v4010 = vpack.c.b16 %v3915, %v3914
        %v4011 = vpack.c.b16 %v3917, %v3916
        %v4012 = vpack.c.b16 %v3919, %v3918
        %v4013 = vpack.c.b16 %v3921, %v3920
        %v4014 = vpack.c.b16 %v3923, %v3922
        %v4015 = vpack.c.b16 %v3925, %v3924
        %v4016 = vpack.c.b16 %v3927, %v3926
        %v4017 = vpack.c.b16 %v3929, %v3928
        %v4018 = vpack.c.b16 %v3931, %v3930
        %v4019 = vpack.c.b16 %v3933, %v3932
        %v4020 = vpack.c.b16 %v3935, %v3934
        %v4021 = vpack.c.b16 %v3937, %v3936
        %v4022 = vpack.c.b16 %v3939, %v3938
        %v4023 = vpack.c.b16 %v3941, %v3940
        %v4024 = vpack.c.b16 %v3943, %v3942
        %v4025 = vpack.c.b16 %v3945, %v3944
        %v4026 = vpack.c.b16 %v3947, %v3946
        %v4027 = vpack.c.b16 %v3949, %v3948
        %v4028 = vpack.c.b16 %v3951, %v3950
        %v4029 = vpack.c.b16 %v3953, %v3952
        %v4030 = vpack.c.b16 %v3955, %v3954
        %v4031 = vpack.c.b16 %v3957, %v3956
        %v4032 = vpack.c.b16 %v3959, %v3958
        %v4033 = vpack.c.b16 %v3961, %v3960
        %4106 = vmatprep.subr.bf16.mxu0 0
        %4107 = vmatpush1.bf16.msra.mxu0 %v3969
        %4108 = vmatprep.subr.bf16.mxu0 0
        %4109 = vmatpush1.bf16.msra.mxu0 %v3968
        %4110 = vmatprep.subr.bf16.mxu0 0
        %4111 = vmatpush1.bf16.msra.mxu0 %v3967
        %4112 = vmatprep.subr.bf16.mxu0 0
        %4113 = vmatpush1.bf16.msra.mxu0 %v3966
        %4114 = vmatprep.subr.bf16.mxu0 0
        %4115 = vmatpush1.bf16.msra.mxu0 %v3965
        %4116 = vmatprep.subr.bf16.mxu0 0
        %4117 = vmatpush1.bf16.msra.mxu0 %v3964
        %4118 = vmatprep.subr.bf16.mxu0 0
        %4119 = vmatpush1.bf16.msra.mxu0 %v3963
        %4120 = vmatprep.subr.bf16.mxu0 0
        %4121 = vmatpush1.bf16.msra.mxu0 %v3962
        %4122 = vmatprep.subr.bf16.mxu0 0
        %4123 = vmatpush2.bf16.msra.mxu0 %v3977
        %4124 = vmatprep.subr.bf16.mxu0 0
        %4125 = vmatpush2.bf16.msra.mxu0 %v3976
        %4126 = vmatprep.subr.bf16.mxu0 0
        %4127 = vmatpush2.bf16.msra.mxu0 %v3975
        %4128 = vmatprep.subr.bf16.mxu0 0
        %4129 = vmatpush2.bf16.msra.mxu0 %v3974
        %4130 = vmatprep.subr.bf16.mxu0 0
        %4131 = vmatpush2.bf16.msra.mxu0 %v3973
        %4132 = vmatprep.subr.bf16.mxu0 0
        %4133 = vmatpush2.bf16.msra.mxu0 %v3972
        %4134 = vmatprep.subr.bf16.mxu0 0
        %4135 = vmatpush2.bf16.msra.mxu0 %v3971
        %4136 = vmatprep.subr.bf16.mxu0 0
        %4137 = vmatpush2.bf16.msra.mxu0 %v3970
        %4138 = vmatprep.mubr.bf16.mxu0 %v3011
        %4139 = vmatmul.mubr.bf16.gmra.mxu0 %v2947
        %v4140 = vpop.f32.mrf.mxu0
        %v4141 = vadd.f32 %v3672, %v4140
        %v4142 = vpop.f32.mrf.mxu0
        %v4143 = vpop.f32.mrf.mxu0
        %v4144 = vadd.f32 %v3672, %v4143
        %v4145 = vpop.f32.mrf.mxu0
        %4146 = vmatprep.mubr.bf16.mxu0 %v3012
        %4147 = vmatmul.mubr.bf16.gmra.mxu0 %v2948
        %v4148 = vpop.f32.mrf.mxu0
        %v4149 = vadd.f32 %v3672, %v4148
        %v4150 = vpop.f32.mrf.mxu0
        %v4151 = vpop.f32.mrf.mxu0
        %v4152 = vadd.f32 %v3672, %v4151
        %v4153 = vpop.f32.mrf.mxu0
        %4154 = vmatprep.mubr.bf16.mxu0 %v3013
        %4155 = vmatmul.mubr.bf16.gmra.mxu0 %v2949
        %v4156 = vpop.f32.mrf.mxu0
        %v4157 = vadd.f32 %v3672, %v4156
        %v4158 = vpop.f32.mrf.mxu0
        %v4159 = vpop.f32.mrf.mxu0
        %v4160 = vadd.f32 %v3672, %v4159
        %v4161 = vpop.f32.mrf.mxu0
        %4162 = vmatprep.mubr.bf16.mxu0 %v3014
        %4163 = vmatmul.mubr.bf16.gmra.mxu0 %v2950
        %v4164 = vpop.f32.mrf.mxu0
        %v4165 = vadd.f32 %v3672, %v4164
        %v4166 = vpop.f32.mrf.mxu0
        %v4167 = vpop.f32.mrf.mxu0
        %v4168 = vadd.f32 %v3672, %v4167
        %v4169 = vpop.f32.mrf.mxu0
        %4170 = vmatprep.mubr.bf16.mxu0 %v3015
        %4171 = vmatmul.mubr.bf16.gmra.mxu0 %v2951
        %v4172 = vpop.f32.mrf.mxu0
        %v4173 = vadd.f32 %v3672, %v4172
        %v4174 = vpop.f32.mrf.mxu0
        %v4175 = vpop.f32.mrf.mxu0
        %v4176 = vadd.f32 %v3672, %v4175
        %v4177 = vpop.f32.mrf.mxu0
        %4178 = vmatprep.mubr.bf16.mxu0 %v3016
        %4179 = vmatmul.mubr.bf16.gmra.mxu0 %v2952
        %v4180 = vpop.f32.mrf.mxu0
        %v4181 = vadd.f32 %v3672, %v4180
        %v4182 = vpop.f32.mrf.mxu0
        %v4183 = vpop.f32.mrf.mxu0
        %v4184 = vadd.f32 %v3672, %v4183
        %v4185 = vpop.f32.mrf.mxu0
        %4186 = vmatprep.mubr.bf16.mxu0 %v3017
        %4187 = vmatmul.mubr.bf16.gmra.mxu0 %v2953
        %v4188 = vpop.f32.mrf.mxu0
        %v4189 = vadd.f32 %v3672, %v4188
        %v4190 = vpop.f32.mrf.mxu0
        %v4191 = vpop.f32.mrf.mxu0
        %v4192 = vadd.f32 %v3672, %v4191
        %v4193 = vpop.f32.mrf.mxu0
        %4194 = vmatprep.mubr.bf16.mxu0 %v3018
        %4195 = vmatmul.mubr.bf16.gmra.mxu0 %v2954
        %v4196 = vpop.f32.mrf.mxu0
        %v4197 = vadd.f32 %v3672, %v4196
        %v4198 = vpop.f32.mrf.mxu0
        %v4199 = vpop.f32.mrf.mxu0
        %v4200 = vadd.f32 %v3672, %v4199
        %v4201 = vpop.f32.mrf.mxu0
        %4202 = vmatprep.mubr.bf16.mxu0 %v3019
        %4203 = vmatmul.mubr.bf16.gmra.mxu0 %v2955
        %v4204 = vpop.f32.mrf.mxu0
        %v4205 = vadd.f32 %v3672, %v4204
        %v4206 = vpop.f32.mrf.mxu0
        %v4207 = vpop.f32.mrf.mxu0
        %v4208 = vadd.f32 %v3672, %v4207
        %v4209 = vpop.f32.mrf.mxu0
        %4210 = vmatprep.mubr.bf16.mxu0 %v3020
        %4211 = vmatmul.mubr.bf16.gmra.mxu0 %v2956
        %v4212 = vpop.f32.mrf.mxu0
        %v4213 = vadd.f32 %v3672, %v4212
        %v4214 = vpop.f32.mrf.mxu0
        %v4215 = vpop.f32.mrf.mxu0
        %v4216 = vadd.f32 %v3672, %v4215
        %v4217 = vpop.f32.mrf.mxu0
        %4218 = vmatprep.mubr.bf16.mxu0 %v3021
        %4219 = vmatmul.mubr.bf16.gmra.mxu0 %v2957
        %v4220 = vpop.f32.mrf.mxu0
        %v4221 = vadd.f32 %v3672, %v4220
        %v4222 = vpop.f32.mrf.mxu0
        %v4223 = vpop.f32.mrf.mxu0
        %v4224 = vadd.f32 %v3672, %v4223
        %v4225 = vpop.f32.mrf.mxu0
        %4226 = vmatprep.mubr.bf16.mxu0 %v3022
        %4227 = vmatmul.mubr.bf16.gmra.mxu0 %v2958
        %v4228 = vpop.f32.mrf.mxu0
        %v4229 = vadd.f32 %v3672, %v4228
        %v4230 = vpop.f32.mrf.mxu0
        %v4231 = vpop.f32.mrf.mxu0
        %v4232 = vadd.f32 %v3672, %v4231
        %v4233 = vpop.f32.mrf.mxu0
        %4234 = vmatprep.mubr.bf16.mxu0 %v3023
        %4235 = vmatmul.mubr.bf16.gmra.mxu0 %v2959
        %v4236 = vpop.f32.mrf.mxu0
        %v4237 = vadd.f32 %v3672, %v4236
        %v4238 = vpop.f32.mrf.mxu0
        %v4239 = vpop.f32.mrf.mxu0
        %v4240 = vadd.f32 %v3672, %v4239
        %v4241 = vpop.f32.mrf.mxu0
        %4242 = vmatprep.mubr.bf16.mxu0 %v3024
        %4243 = vmatmul.mubr.bf16.gmra.mxu0 %v2960
        %v4244 = vpop.f32.mrf.mxu0
        %v4245 = vadd.f32 %v3672, %v4244
        %v4246 = vpop.f32.mrf.mxu0
        %v4247 = vpop.f32.mrf.mxu0
        %v4248 = vadd.f32 %v3672, %v4247
        %v4249 = vpop.f32.mrf.mxu0
        %4250 = vmatprep.mubr.bf16.mxu0 %v3025
        %4251 = vmatmul.mubr.bf16.gmra.mxu0 %v2961
        %v4252 = vpop.f32.mrf.mxu0
        %v4253 = vadd.f32 %v3672, %v4252
        %v4254 = vpop.f32.mrf.mxu0
        %v4255 = vpop.f32.mrf.mxu0
        %v4256 = vadd.f32 %v3672, %v4255
        %v4257 = vpop.f32.mrf.mxu0
        %4258 = vmatprep.mubr.bf16.mxu0 %v3026
        %4259 = vmatmul.mubr.bf16.gmra.mxu0 %v2962
        %v4260 = vpop.f32.mrf.mxu0
        %v4261 = vadd.f32 %v3672, %v4260
        %v4262 = vpop.f32.mrf.mxu0
        %v4263 = vpop.f32.mrf.mxu0
        %v4264 = vadd.f32 %v3672, %v4263
        %v4265 = vpop.f32.mrf.mxu0
        %4266 = vdwg.mxu0
        %4267 = vmatprep.subr.bf16.mxu0 0
        %4268 = vmatpush1.bf16.msra.mxu0 %v3985
        %4269 = vmatprep.subr.bf16.mxu0 0
        %4270 = vmatpush1.bf16.msra.mxu0 %v3984
        %4271 = vmatprep.subr.bf16.mxu0 0
        %4272 = vmatpush1.bf16.msra.mxu0 %v3983
        %4273 = vmatprep.subr.bf16.mxu0 0
        %4274 = vmatpush1.bf16.msra.mxu0 %v3982
        %4275 = vmatprep.subr.bf16.mxu0 0
        %4276 = vmatpush1.bf16.msra.mxu0 %v3981
        %4277 = vmatprep.subr.bf16.mxu0 0
        %4278 = vmatpush1.bf16.msra.mxu0 %v3980
        %4279 = vmatprep.subr.bf16.mxu0 0
        %4280 = vmatpush1.bf16.msra.mxu0 %v3979
        %4281 = vmatprep.subr.bf16.mxu0 0
        %4282 = vmatpush1.bf16.msra.mxu0 %v3978
        %4283 = vmatprep.subr.bf16.mxu0 0
        %4284 = vmatpush2.bf16.msra.mxu0 %v3993
        %4285 = vmatprep.subr.bf16.mxu0 0
        %4286 = vmatpush2.bf16.msra.mxu0 %v3992
        %4287 = vmatprep.subr.bf16.mxu0 0
        %4288 = vmatpush2.bf16.msra.mxu0 %v3991
        %4289 = vmatprep.subr.bf16.mxu0 0
        %4290 = vmatpush2.bf16.msra.mxu0 %v3990
        %4291 = vmatprep.subr.bf16.mxu0 0
        %4292 = vmatpush2.bf16.msra.mxu0 %v3989
        %4293 = vmatprep.subr.bf16.mxu0 0
        %4294 = vmatpush2.bf16.msra.mxu0 %v3988
        %4295 = vmatprep.subr.bf16.mxu0 0
        %4296 = vmatpush2.bf16.msra.mxu0 %v3987
        %4297 = vmatprep.subr.bf16.mxu0 0
        %4298 = vmatpush2.bf16.msra.mxu0 %v3986
        %4299 = vmatprep.mubr.bf16.mxu0 %v3155
        %4300 = vmatmul.mubr.bf16.gmra.mxu0 %v3075
        %v4301 = vpop.f32.mrf.mxu0
        %v4302 = vadd.f32 %v4141, %v4301
        %v4303 = vpop.f32.mrf.mxu0
        %v4304 = vpop.f32.mrf.mxu0
        %v4305 = vadd.f32 %v4144, %v4304
        %v4306 = vpop.f32.mrf.mxu0
        %4307 = vmatprep.mubr.bf16.mxu0 %v3156
        %4308 = vmatmul.mubr.bf16.gmra.mxu0 %v3076
        %v4309 = vpop.f32.mrf.mxu0
        %v4310 = vadd.f32 %v4149, %v4309
        %v4311 = vpop.f32.mrf.mxu0
        %v4312 = vpop.f32.mrf.mxu0
        %v4313 = vadd.f32 %v4152, %v4312
        %v4314 = vpop.f32.mrf.mxu0
        %4315 = vmatprep.mubr.bf16.mxu0 %v3157
        %4316 = vmatmul.mubr.bf16.gmra.mxu0 %v3077
        %v4317 = vpop.f32.mrf.mxu0
        %v4318 = vadd.f32 %v4157, %v4317
        %v4319 = vpop.f32.mrf.mxu0
        %v4320 = vpop.f32.mrf.mxu0
        %v4321 = vadd.f32 %v4160, %v4320
        %v4322 = vpop.f32.mrf.mxu0
        %4323 = vmatprep.mubr.bf16.mxu0 %v3158
        %4324 = vmatmul.mubr.bf16.gmra.mxu0 %v3078
        %v4325 = vpop.f32.mrf.mxu0
        %v4326 = vadd.f32 %v4165, %v4325
        %v4327 = vpop.f32.mrf.mxu0
        %v4328 = vpop.f32.mrf.mxu0
        %v4329 = vadd.f32 %v4168, %v4328
        %v4330 = vpop.f32.mrf.mxu0
        %4331 = vmatprep.mubr.bf16.mxu0 %v3159
        %4332 = vmatmul.mubr.bf16.gmra.mxu0 %v3079
        %v4333 = vpop.f32.mrf.mxu0
        %v4334 = vadd.f32 %v4173, %v4333
        %v4335 = vpop.f32.mrf.mxu0
        %v4336 = vpop.f32.mrf.mxu0
        %v4337 = vadd.f32 %v4176, %v4336
        %v4338 = vpop.f32.mrf.mxu0
        %4339 = vmatprep.mubr.bf16.mxu0 %v3160
        %4340 = vmatmul.mubr.bf16.gmra.mxu0 %v3080
        %v4341 = vpop.f32.mrf.mxu0
        %v4342 = vadd.f32 %v4181, %v4341
        %v4343 = vpop.f32.mrf.mxu0
        %v4344 = vpop.f32.mrf.mxu0
        %v4345 = vadd.f32 %v4184, %v4344
        %v4346 = vpop.f32.mrf.mxu0
        %4347 = vmatprep.mubr.bf16.mxu0 %v3161
        %4348 = vmatmul.mubr.bf16.gmra.mxu0 %v3081
        %v4349 = vpop.f32.mrf.mxu0
        %v4350 = vadd.f32 %v4189, %v4349
        %v4351 = vpop.f32.mrf.mxu0
        %v4352 = vpop.f32.mrf.mxu0
        %v4353 = vadd.f32 %v4192, %v4352
        %v4354 = vpop.f32.mrf.mxu0
        %4355 = vmatprep.mubr.bf16.mxu0 %v3162
        %4356 = vmatmul.mubr.bf16.gmra.mxu0 %v3082
        %v4357 = vpop.f32.mrf.mxu0
        %v4358 = vadd.f32 %v4197, %v4357
        %v4359 = vpop.f32.mrf.mxu0
        %v4360 = vpop.f32.mrf.mxu0
        %v4361 = vadd.f32 %v4200, %v4360
        %v4362 = vpop.f32.mrf.mxu0
        %4363 = vmatprep.mubr.bf16.mxu0 %v3163
        %4364 = vmatmul.mubr.bf16.gmra.mxu0 %v3083
        %v4365 = vpop.f32.mrf.mxu0
        %v4366 = vadd.f32 %v4205, %v4365
        %v4367 = vpop.f32.mrf.mxu0
        %v4368 = vpop.f32.mrf.mxu0
        %v4369 = vadd.f32 %v4208, %v4368
        %v4370 = vpop.f32.mrf.mxu0
        %4371 = vmatprep.mubr.bf16.mxu0 %v3164
        %4372 = vmatmul.mubr.bf16.gmra.mxu0 %v3084
        %v4373 = vpop.f32.mrf.mxu0
        %v4374 = vadd.f32 %v4213, %v4373
        %v4375 = vpop.f32.mrf.mxu0
        %v4376 = vpop.f32.mrf.mxu0
        %v4377 = vadd.f32 %v4216, %v4376
        %v4378 = vpop.f32.mrf.mxu0
        %4379 = vmatprep.mubr.bf16.mxu0 %v3165
        %4380 = vmatmul.mubr.bf16.gmra.mxu0 %v3085
        %v4381 = vpop.f32.mrf.mxu0
        %v4382 = vadd.f32 %v4221, %v4381
        %v4383 = vpop.f32.mrf.mxu0
        %v4384 = vpop.f32.mrf.mxu0
        %v4385 = vadd.f32 %v4224, %v4384
        %v4386 = vpop.f32.mrf.mxu0
        %4387 = vmatprep.mubr.bf16.mxu0 %v3166
        %4388 = vmatmul.mubr.bf16.gmra.mxu0 %v3086
        %v4389 = vpop.f32.mrf.mxu0
        %v4390 = vadd.f32 %v4229, %v4389
        %v4391 = vpop.f32.mrf.mxu0
        %v4392 = vpop.f32.mrf.mxu0
        %v4393 = vadd.f32 %v4232, %v4392
        %v4394 = vpop.f32.mrf.mxu0
        %4395 = vmatprep.mubr.bf16.mxu0 %v3167
        %4396 = vmatmul.mubr.bf16.gmra.mxu0 %v3087
        %v4397 = vpop.f32.mrf.mxu0
        %v4398 = vadd.f32 %v4237, %v4397
        %v4399 = vpop.f32.mrf.mxu0
        %v4400 = vpop.f32.mrf.mxu0
        %v4401 = vadd.f32 %v4240, %v4400
        %v4402 = vpop.f32.mrf.mxu0
        %4403 = vmatprep.mubr.bf16.mxu0 %v3168
        %4404 = vmatmul.mubr.bf16.gmra.mxu0 %v3088
        %v4405 = vpop.f32.mrf.mxu0
        %v4406 = vadd.f32 %v4245, %v4405
        %v4407 = vpop.f32.mrf.mxu0
        %v4408 = vpop.f32.mrf.mxu0
        %v4409 = vadd.f32 %v4248, %v4408
        %v4410 = vpop.f32.mrf.mxu0
        %4411 = vmatprep.mubr.bf16.mxu0 %v3169
        %4412 = vmatmul.mubr.bf16.gmra.mxu0 %v3089
        %v4413 = vpop.f32.mrf.mxu0
        %v4414 = vadd.f32 %v4253, %v4413
        %v4415 = vpop.f32.mrf.mxu0
        %v4416 = vpop.f32.mrf.mxu0
        %v4417 = vadd.f32 %v4256, %v4416
        %v4418 = vpop.f32.mrf.mxu0
        %4419 = vmatprep.mubr.bf16.mxu0 %v3170
        %4420 = vmatmul.mubr.bf16.gmra.mxu0 %v3090
        %v4421 = vpop.f32.mrf.mxu0
        %v4422 = vadd.f32 %v4261, %v4421
        %v4423 = vpop.f32.mrf.mxu0
        %v4424 = vpop.f32.mrf.mxu0
        %v4425 = vadd.f32 %v4264, %v4424
        %v4426 = vpop.f32.mrf.mxu0
        %4427 = vdwg.mxu0
        %4428 = vmatprep.subr.bf16.mxu0 0
        %4429 = vmatpush1.bf16.msra.mxu0 %v4001
        %4430 = vmatprep.subr.bf16.mxu0 0
        %4431 = vmatpush1.bf16.msra.mxu0 %v4000
        %4432 = vmatprep.subr.bf16.mxu0 0
        %4433 = vmatpush1.bf16.msra.mxu0 %v3999
        %4434 = vmatprep.subr.bf16.mxu0 0
        %4435 = vmatpush1.bf16.msra.mxu0 %v3998
        %4436 = vmatprep.subr.bf16.mxu0 0
        %4437 = vmatpush1.bf16.msra.mxu0 %v3997
        %4438 = vmatprep.subr.bf16.mxu0 0
        %4439 = vmatpush1.bf16.msra.mxu0 %v3996
        %4440 = vmatprep.subr.bf16.mxu0 0
        %4441 = vmatpush1.bf16.msra.mxu0 %v3995
        %4442 = vmatprep.subr.bf16.mxu0 0
        %4443 = vmatpush1.bf16.msra.mxu0 %v3994
        %4444 = vmatprep.subr.bf16.mxu0 0
        %4445 = vmatpush2.bf16.msra.mxu0 %v4009
        %4446 = vmatprep.subr.bf16.mxu0 0
        %4447 = vmatpush2.bf16.msra.mxu0 %v4008
        %4448 = vmatprep.subr.bf16.mxu0 0
        %4449 = vmatpush2.bf16.msra.mxu0 %v4007
        %4450 = vmatprep.subr.bf16.mxu0 0
        %4451 = vmatpush2.bf16.msra.mxu0 %v4006
        %4452 = vmatprep.subr.bf16.mxu0 0
        %4453 = vmatpush2.bf16.msra.mxu0 %v4005
        %4454 = vmatprep.subr.bf16.mxu0 0
        %4455 = vmatpush2.bf16.msra.mxu0 %v4004
        %4456 = vmatprep.subr.bf16.mxu0 0
        %4457 = vmatpush2.bf16.msra.mxu0 %v4003
        %4458 = vmatprep.subr.bf16.mxu0 0
        %4459 = vmatpush2.bf16.msra.mxu0 %v4002
        %4460 = vmatprep.mubr.bf16.mxu0 %v3283
        %4461 = vmatmul.mubr.bf16.gmra.mxu0 %v3219
        %v4462 = vpop.f32.mrf.mxu0
        %v4463 = vadd.f32 %v4302, %v4462
        %v4464 = vpop.f32.mrf.mxu0
        %v4465 = vpop.f32.mrf.mxu0
        %v4466 = vadd.f32 %v4305, %v4465
        %v4467 = vpop.f32.mrf.mxu0
        %4468 = vmatprep.mubr.bf16.mxu0 %v3284
        %4469 = vmatmul.mubr.bf16.gmra.mxu0 %v3220
        %v4470 = vpop.f32.mrf.mxu0
        %v4471 = vadd.f32 %v4310, %v4470
        %v4472 = vpop.f32.mrf.mxu0
        %v4473 = vpop.f32.mrf.mxu0
        %v4474 = vadd.f32 %v4313, %v4473
        %v4475 = vpop.f32.mrf.mxu0
        %4476 = vmatprep.mubr.bf16.mxu0 %v3285
        %4477 = vmatmul.mubr.bf16.gmra.mxu0 %v3221
        %v4478 = vpop.f32.mrf.mxu0
        %v4479 = vadd.f32 %v4318, %v4478
        %v4480 = vpop.f32.mrf.mxu0
        %v4481 = vpop.f32.mrf.mxu0
        %v4482 = vadd.f32 %v4321, %v4481
        %v4483 = vpop.f32.mrf.mxu0
        %4484 = vmatprep.mubr.bf16.mxu0 %v3286
        %4485 = vmatmul.mubr.bf16.gmra.mxu0 %v3222
        %v4486 = vpop.f32.mrf.mxu0
        %v4487 = vadd.f32 %v4326, %v4486
        %v4488 = vpop.f32.mrf.mxu0
        %v4489 = vpop.f32.mrf.mxu0
        %v4490 = vadd.f32 %v4329, %v4489
        %v4491 = vpop.f32.mrf.mxu0
        %4492 = vmatprep.mubr.bf16.mxu0 %v3287
        %4493 = vmatmul.mubr.bf16.gmra.mxu0 %v3223
        %v4494 = vpop.f32.mrf.mxu0
        %v4495 = vadd.f32 %v4334, %v4494
        %v4496 = vpop.f32.mrf.mxu0
        %v4497 = vpop.f32.mrf.mxu0
        %v4498 = vadd.f32 %v4337, %v4497
        %v4499 = vpop.f32.mrf.mxu0
        %4500 = vmatprep.mubr.bf16.mxu0 %v3288
        %4501 = vmatmul.mubr.bf16.gmra.mxu0 %v3224
        %v4502 = vpop.f32.mrf.mxu0
        %v4503 = vadd.f32 %v4342, %v4502
        %v4504 = vpop.f32.mrf.mxu0
        %v4505 = vpop.f32.mrf.mxu0
        %v4506 = vadd.f32 %v4345, %v4505
        %v4507 = vpop.f32.mrf.mxu0
        %4508 = vmatprep.mubr.bf16.mxu0 %v3289
        %4509 = vmatmul.mubr.bf16.gmra.mxu0 %v3225
        %v4510 = vpop.f32.mrf.mxu0
        %v4511 = vadd.f32 %v4350, %v4510
        %v4512 = vpop.f32.mrf.mxu0
        %v4513 = vpop.f32.mrf.mxu0
        %v4514 = vadd.f32 %v4353, %v4513
        %v4515 = vpop.f32.mrf.mxu0
        %4516 = vmatprep.mubr.bf16.mxu0 %v3290
        %4517 = vmatmul.mubr.bf16.gmra.mxu0 %v3226
        %v4518 = vpop.f32.mrf.mxu0
        %v4519 = vadd.f32 %v4358, %v4518
        %v4520 = vpop.f32.mrf.mxu0
        %v4521 = vpop.f32.mrf.mxu0
        %v4522 = vadd.f32 %v4361, %v4521
        %v4523 = vpop.f32.mrf.mxu0
        %4524 = vmatprep.mubr.bf16.mxu0 %v3291
        %4525 = vmatmul.mubr.bf16.gmra.mxu0 %v3227
        %v4526 = vpop.f32.mrf.mxu0
        %v4527 = vadd.f32 %v4366, %v4526
        %v4528 = vpop.f32.mrf.mxu0
        %v4529 = vpop.f32.mrf.mxu0
        %v4530 = vadd.f32 %v4369, %v4529
        %v4531 = vpop.f32.mrf.mxu0
        %4532 = vmatprep.mubr.bf16.mxu0 %v3292
        %4533 = vmatmul.mubr.bf16.gmra.mxu0 %v3228
        %v4534 = vpop.f32.mrf.mxu0
        %v4535 = vadd.f32 %v4374, %v4534
        %v4536 = vpop.f32.mrf.mxu0
        %v4537 = vpop.f32.mrf.mxu0
        %v4538 = vadd.f32 %v4377, %v4537
        %v4539 = vpop.f32.mrf.mxu0
        %4540 = vmatprep.mubr.bf16.mxu0 %v3293
        %4541 = vmatmul.mubr.bf16.gmra.mxu0 %v3229
        %v4542 = vpop.f32.mrf.mxu0
        %v4543 = vadd.f32 %v4382, %v4542
        %v4544 = vpop.f32.mrf.mxu0
        %v4545 = vpop.f32.mrf.mxu0
        %v4546 = vadd.f32 %v4385, %v4545
        %v4547 = vpop.f32.mrf.mxu0
        %4548 = vmatprep.mubr.bf16.mxu0 %v3294
        %4549 = vmatmul.mubr.bf16.gmra.mxu0 %v3230
        %v4550 = vpop.f32.mrf.mxu0
        %v4551 = vadd.f32 %v4390, %v4550
        %v4552 = vpop.f32.mrf.mxu0
        %v4553 = vpop.f32.mrf.mxu0
        %v4554 = vadd.f32 %v4393, %v4553
        %v4555 = vpop.f32.mrf.mxu0
        %4556 = vmatprep.mubr.bf16.mxu0 %v3295
        %4557 = vmatmul.mubr.bf16.gmra.mxu0 %v3231
        %v4558 = vpop.f32.mrf.mxu0
        %v4559 = vadd.f32 %v4398, %v4558
        %v4560 = vpop.f32.mrf.mxu0
        %v4561 = vpop.f32.mrf.mxu0
        %v4562 = vadd.f32 %v4401, %v4561
        %v4563 = vpop.f32.mrf.mxu0
        %4564 = vmatprep.mubr.bf16.mxu0 %v3296
        %4565 = vmatmul.mubr.bf16.gmra.mxu0 %v3232
        %v4566 = vpop.f32.mrf.mxu0
        %v4567 = vadd.f32 %v4406, %v4566
        %v4568 = vpop.f32.mrf.mxu0
        %v4569 = vpop.f32.mrf.mxu0
        %v4570 = vadd.f32 %v4409, %v4569
        %v4571 = vpop.f32.mrf.mxu0
        %4572 = vmatprep.mubr.bf16.mxu0 %v3297
        %4573 = vmatmul.mubr.bf16.gmra.mxu0 %v3233
        %v4574 = vpop.f32.mrf.mxu0
        %v4575 = vadd.f32 %v4414, %v4574
        %v4576 = vpop.f32.mrf.mxu0
        %v4577 = vpop.f32.mrf.mxu0
        %v4578 = vadd.f32 %v4417, %v4577
        %v4579 = vpop.f32.mrf.mxu0
        %4580 = vmatprep.mubr.bf16.mxu0 %v3298
        %4581 = vmatmul.mubr.bf16.gmra.mxu0 %v3234
        %v4582 = vpop.f32.mrf.mxu0
        %v4583 = vadd.f32 %v4422, %v4582
        %v4584 = vpop.f32.mrf.mxu0
        %v4585 = vpop.f32.mrf.mxu0
        %v4586 = vadd.f32 %v4425, %v4585
        %v4587 = vpop.f32.mrf.mxu0
        %4588 = vdwg.mxu0
        %4589 = vmatprep.subr.bf16.mxu0 0
        %4590 = vmatpush1.bf16.msra.mxu0 %v4017
        %4591 = vmatprep.subr.bf16.mxu0 0
        %4592 = vmatpush1.bf16.msra.mxu0 %v4016
        %4593 = vmatprep.subr.bf16.mxu0 0
        %4594 = vmatpush1.bf16.msra.mxu0 %v4015
        %4595 = vmatprep.subr.bf16.mxu0 0
        %4596 = vmatpush1.bf16.msra.mxu0 %v4014
        %4597 = vmatprep.subr.bf16.mxu0 0
        %4598 = vmatpush1.bf16.msra.mxu0 %v4013
        %4599 = vmatprep.subr.bf16.mxu0 0
        %4600 = vmatpush1.bf16.msra.mxu0 %v4012
        %4601 = vmatprep.subr.bf16.mxu0 0
        %4602 = vmatpush1.bf16.msra.mxu0 %v4011
        %4603 = vmatprep.subr.bf16.mxu0 0
        %4604 = vmatpush1.bf16.msra.mxu0 %v4010
        %4605 = vmatprep.subr.bf16.mxu0 0
        %4606 = vmatpush2.bf16.msra.mxu0 %v4025
        %4607 = vmatprep.subr.bf16.mxu0 0
        %4608 = vmatpush2.bf16.msra.mxu0 %v4024
        %4609 = vmatprep.subr.bf16.mxu0 0
        %4610 = vmatpush2.bf16.msra.mxu0 %v4023
        %4611 = vmatprep.subr.bf16.mxu0 0
        %4612 = vmatpush2.bf16.msra.mxu0 %v4022
        %4613 = vmatprep.subr.bf16.mxu0 0
        %4614 = vmatpush2.bf16.msra.mxu0 %v4021
        %4615 = vmatprep.subr.bf16.mxu0 0
        %4616 = vmatpush2.bf16.msra.mxu0 %v4020
        %4617 = vmatprep.subr.bf16.mxu0 0
        %4618 = vmatpush2.bf16.msra.mxu0 %v4019
        %4619 = vmatprep.subr.bf16.mxu0 0
        %4620 = vmatpush2.bf16.msra.mxu0 %v4018
        %4621 = vmatprep.mubr.bf16.mxu0 %v3427
        %4622 = vmatmul.mubr.bf16.gmra.mxu0 %v3363
        %v4623 = vpop.f32.mrf.mxu0
        %v4624 = vadd.f32 %v4463, %v4623
        %v4625 = vpop.f32.mrf.mxu0
        %v4626 = vpop.f32.mrf.mxu0
        %v4627 = vadd.f32 %v4466, %v4626
        %v4628 = vpop.f32.mrf.mxu0
        %4629 = vmatprep.mubr.bf16.mxu0 %v3428
        %4630 = vmatmul.mubr.bf16.gmra.mxu0 %v3364
        %v4631 = vpop.f32.mrf.mxu0
        %v4632 = vadd.f32 %v4471, %v4631
        %v4633 = vpop.f32.mrf.mxu0
        %v4634 = vpop.f32.mrf.mxu0
        %v4635 = vadd.f32 %v4474, %v4634
        %v4636 = vpop.f32.mrf.mxu0
        %4637 = vmatprep.mubr.bf16.mxu0 %v3429
        %4638 = vmatmul.mubr.bf16.gmra.mxu0 %v3365
        %v4639 = vpop.f32.mrf.mxu0
        %v4640 = vadd.f32 %v4479, %v4639
        %v4641 = vpop.f32.mrf.mxu0
        %v4642 = vpop.f32.mrf.mxu0
        %v4643 = vadd.f32 %v4482, %v4642
        %v4644 = vpop.f32.mrf.mxu0
        %4645 = vmatprep.mubr.bf16.mxu0 %v3430
        %4646 = vmatmul.mubr.bf16.gmra.mxu0 %v3366
        %v4647 = vpop.f32.mrf.mxu0
        %v4648 = vadd.f32 %v4487, %v4647
        %v4649 = vpop.f32.mrf.mxu0
        %v4650 = vpop.f32.mrf.mxu0
        %v4651 = vadd.f32 %v4490, %v4650
        %v4652 = vpop.f32.mrf.mxu0
        %4653 = vmatprep.mubr.bf16.mxu0 %v3431
        %4654 = vmatmul.mubr.bf16.gmra.mxu0 %v3367
        %v4655 = vpop.f32.mrf.mxu0
        %v4656 = vadd.f32 %v4495, %v4655
        %v4657 = vpop.f32.mrf.mxu0
        %v4658 = vpop.f32.mrf.mxu0
        %v4659 = vadd.f32 %v4498, %v4658
        %v4660 = vpop.f32.mrf.mxu0
        %4661 = vmatprep.mubr.bf16.mxu0 %v3432
        %4662 = vmatmul.mubr.bf16.gmra.mxu0 %v3368
        %v4663 = vpop.f32.mrf.mxu0
        %v4664 = vadd.f32 %v4503, %v4663
        %v4665 = vpop.f32.mrf.mxu0
        %v4666 = vpop.f32.mrf.mxu0
        %v4667 = vadd.f32 %v4506, %v4666
        %v4668 = vpop.f32.mrf.mxu0
        %4669 = vmatprep.mubr.bf16.mxu0 %v3433
        %4670 = vmatmul.mubr.bf16.gmra.mxu0 %v3369
        %v4671 = vpop.f32.mrf.mxu0
        %v4672 = vadd.f32 %v4511, %v4671
        %v4673 = vpop.f32.mrf.mxu0
        %v4674 = vpop.f32.mrf.mxu0
        %v4675 = vadd.f32 %v4514, %v4674
        %v4676 = vpop.f32.mrf.mxu0
        %4677 = vmatprep.mubr.bf16.mxu0 %v3434
        %4678 = vmatmul.mubr.bf16.gmra.mxu0 %v3370
        %v4679 = vpop.f32.mrf.mxu0
        %v4680 = vadd.f32 %v4519, %v4679
        %v4681 = vpop.f32.mrf.mxu0
        %v4682 = vpop.f32.mrf.mxu0
        %v4683 = vadd.f32 %v4522, %v4682
        %v4684 = vpop.f32.mrf.mxu0
        %4685 = vmatprep.mubr.bf16.mxu0 %v3435
        %4686 = vmatmul.mubr.bf16.gmra.mxu0 %v3371
        %v4687 = vpop.f32.mrf.mxu0
        %v4688 = vadd.f32 %v4527, %v4687
        %v4689 = vpop.f32.mrf.mxu0
        %v4690 = vpop.f32.mrf.mxu0
        %v4691 = vadd.f32 %v4530, %v4690
        %v4692 = vpop.f32.mrf.mxu0
        %4693 = vmatprep.mubr.bf16.mxu0 %v3436
        %4694 = vmatmul.mubr.bf16.gmra.mxu0 %v3372
        %v4695 = vpop.f32.mrf.mxu0
        %v4696 = vadd.f32 %v4535, %v4695
        %v4697 = vpop.f32.mrf.mxu0
        %v4698 = vpop.f32.mrf.mxu0
        %v4699 = vadd.f32 %v4538, %v4698
        %v4700 = vpop.f32.mrf.mxu0
        %4701 = vmatprep.mubr.bf16.mxu0 %v3437
        %4702 = vmatmul.mubr.bf16.gmra.mxu0 %v3373
        %v4703 = vpop.f32.mrf.mxu0
        %v4704 = vadd.f32 %v4543, %v4703
        %v4705 = vpop.f32.mrf.mxu0
        %v4706 = vpop.f32.mrf.mxu0
        %v4707 = vadd.f32 %v4546, %v4706
        %v4708 = vpop.f32.mrf.mxu0
        %4709 = vmatprep.mubr.bf16.mxu0 %v3438
        %4710 = vmatmul.mubr.bf16.gmra.mxu0 %v3374
        %v4711 = vpop.f32.mrf.mxu0
        %v4712 = vadd.f32 %v4551, %v4711
        %v4713 = vpop.f32.mrf.mxu0
        %v4714 = vpop.f32.mrf.mxu0
        %v4715 = vadd.f32 %v4554, %v4714
        %v4716 = vpop.f32.mrf.mxu0
        %4717 = vmatprep.mubr.bf16.mxu0 %v3439
        %4718 = vmatmul.mubr.bf16.gmra.mxu0 %v3375
        %v4719 = vpop.f32.mrf.mxu0
        %v4720 = vadd.f32 %v4559, %v4719
        %v4721 = vpop.f32.mrf.mxu0
        %v4722 = vpop.f32.mrf.mxu0
        %v4723 = vadd.f32 %v4562, %v4722
        %v4724 = vpop.f32.mrf.mxu0
        %4725 = vmatprep.mubr.bf16.mxu0 %v3440
        %4726 = vmatmul.mubr.bf16.gmra.mxu0 %v3376
        %v4727 = vpop.f32.mrf.mxu0
        %v4728 = vadd.f32 %v4567, %v4727
        %v4729 = vpop.f32.mrf.mxu0
        %v4730 = vpop.f32.mrf.mxu0
        %v4731 = vadd.f32 %v4570, %v4730
        %v4732 = vpop.f32.mrf.mxu0
        %4733 = vmatprep.mubr.bf16.mxu0 %v3441
        %4734 = vmatmul.mubr.bf16.gmra.mxu0 %v3377
        %v4735 = vpop.f32.mrf.mxu0
        %v4736 = vadd.f32 %v4575, %v4735
        %v4737 = vpop.f32.mrf.mxu0
        %v4738 = vpop.f32.mrf.mxu0
        %v4739 = vadd.f32 %v4578, %v4738
        %v4740 = vpop.f32.mrf.mxu0
        %4741 = vmatprep.mubr.bf16.mxu0 %v3442
        %4742 = vmatmul.mubr.bf16.gmra.mxu0 %v3378
        %v4743 = vpop.f32.mrf.mxu0
        %v4744 = vadd.f32 %v4583, %v4743
        %v4745 = vpop.f32.mrf.mxu0
        %v4746 = vpop.f32.mrf.mxu0
        %v4747 = vadd.f32 %v4586, %v4746
        %v4748 = vpop.f32.mrf.mxu0
        %4749 = vdwg.mxu0
        %4750 = vmatprep.subr.bf16.mxu0 0
        %4751 = vmatpush1.bf16.msra.mxu0 %v4033
        %4752 = vmatprep.subr.bf16.mxu0 0
        %4753 = vmatpush1.bf16.msra.mxu0 %v4032
        %4754 = vmatprep.subr.bf16.mxu0 0
        %4755 = vmatpush1.bf16.msra.mxu0 %v4031
        %4756 = vmatprep.subr.bf16.mxu0 0
        %4757 = vmatpush1.bf16.msra.mxu0 %v4030
        %4758 = vmatprep.subr.bf16.mxu0 0
        %4759 = vmatpush1.bf16.msra.mxu0 %v4029
        %4760 = vmatprep.subr.bf16.mxu0 0
        %4761 = vmatpush1.bf16.msra.mxu0 %v4028
        %4762 = vmatprep.subr.bf16.mxu0 0
        %4763 = vmatpush1.bf16.msra.mxu0 %v4027
        %4764 = vmatprep.subr.bf16.mxu0 0
        %4765 = vmatpush1.bf16.msra.mxu0 %v4026
        %4766 = vmatprep.subr.bf16.mxu0 0
        %4767 = vmatpush2.bf16.msra.mxu0 0
        %4768 = vmatprep.subr.bf16.mxu0 0
        %4769 = vmatpush2.bf16.msra.mxu0 0
        %4770 = vmatprep.subr.bf16.mxu0 0
        %4771 = vmatpush2.bf16.msra.mxu0 0
        %4772 = vmatprep.subr.bf16.mxu0 0
        %4773 = vmatpush2.bf16.msra.mxu0 0
        %4774 = vmatprep.subr.bf16.mxu0 0
        %4775 = vmatpush2.bf16.msra.mxu0 0
        %4776 = vmatprep.subr.bf16.mxu0 0
        %4777 = vmatpush2.bf16.msra.mxu0 0
        %4778 = vmatprep.subr.bf16.mxu0 0
        %4779 = vmatpush2.bf16.msra.mxu0 0
        %4780 = vmatprep.subr.bf16.mxu0 0
        %4781 = vmatpush2.bf16.msra.mxu0 0
        %4782 = vmatprep.mubr.bf16.mxu0 0
        %4783 = vmatmul.mubr.bf16.gmra.mxu0 %v3491
        %v4784 = vpop.f32.mrf.mxu0
        %v4785 = vadd.f32 %v4624, %v4784
        %v4786 = vpop.f32.mrf.mxu0
        %v4787 = vpop.f32.mrf.mxu0
        %v4788 = vadd.f32 %v4627, %v4787
        %v4789 = vpop.f32.mrf.mxu0
        %4790 = vmatprep.mubr.bf16.mxu0 0
        %4791 = vmatmul.mubr.bf16.gmra.mxu0 %v3492
        %v4792 = vpop.f32.mrf.mxu0
        %v4793 = vadd.f32 %v4632, %v4792
        %v4794 = vpop.f32.mrf.mxu0
        %v4795 = vpop.f32.mrf.mxu0
        %v4796 = vadd.f32 %v4635, %v4795
        %v4797 = vpop.f32.mrf.mxu0
        %4798 = vmatprep.mubr.bf16.mxu0 0
        %4799 = vmatmul.mubr.bf16.gmra.mxu0 %v3493
        %v4800 = vpop.f32.mrf.mxu0
        %v4801 = vadd.f32 %v4640, %v4800
        %v4802 = vpop.f32.mrf.mxu0
        %v4803 = vpop.f32.mrf.mxu0
        %v4804 = vadd.f32 %v4643, %v4803
        %v4805 = vpop.f32.mrf.mxu0
        %4806 = vmatprep.mubr.bf16.mxu0 0
        %4807 = vmatmul.mubr.bf16.gmra.mxu0 %v3494
        %v4808 = vpop.f32.mrf.mxu0
        %v4809 = vadd.f32 %v4648, %v4808
        %v4810 = vpop.f32.mrf.mxu0
        %v4811 = vpop.f32.mrf.mxu0
        %v4812 = vadd.f32 %v4651, %v4811
        %v4813 = vpop.f32.mrf.mxu0
        %4814 = vmatprep.mubr.bf16.mxu0 0
        %4815 = vmatmul.mubr.bf16.gmra.mxu0 %v3495
        %v4816 = vpop.f32.mrf.mxu0
        %v4817 = vadd.f32 %v4656, %v4816
        %v4818 = vpop.f32.mrf.mxu0
        %v4819 = vpop.f32.mrf.mxu0
        %v4820 = vadd.f32 %v4659, %v4819
        %v4821 = vpop.f32.mrf.mxu0
        %4822 = vmatprep.mubr.bf16.mxu0 0
        %4823 = vmatmul.mubr.bf16.gmra.mxu0 %v3496
        %v4824 = vpop.f32.mrf.mxu0
        %v4825 = vadd.f32 %v4664, %v4824
        %v4826 = vpop.f32.mrf.mxu0
        %v4827 = vpop.f32.mrf.mxu0
        %v4828 = vadd.f32 %v4667, %v4827
        %v4829 = vpop.f32.mrf.mxu0
        %4830 = vmatprep.mubr.bf16.mxu0 0
        %4831 = vmatmul.mubr.bf16.gmra.mxu0 %v3497
        %v4832 = vpop.f32.mrf.mxu0
        %v4833 = vadd.f32 %v4672, %v4832
        %v4834 = vpop.f32.mrf.mxu0
        %v4835 = vpop.f32.mrf.mxu0
        %v4836 = vadd.f32 %v4675, %v4835
        %v4837 = vpop.f32.mrf.mxu0
        %4838 = vmatprep.mubr.bf16.mxu0 0
        %4839 = vmatmul.mubr.bf16.gmra.mxu0 %v3498
        %v4840 = vpop.f32.mrf.mxu0
        %v4841 = vadd.f32 %v4680, %v4840
        %v4842 = vpop.f32.mrf.mxu0
        %v4843 = vpop.f32.mrf.mxu0
        %v4844 = vadd.f32 %v4683, %v4843
        %v4845 = vpop.f32.mrf.mxu0
        %4846 = vmatprep.mubr.bf16.mxu0 0
        %4847 = vmatmul.mubr.bf16.gmra.mxu0 %v3499
        %v4848 = vpop.f32.mrf.mxu0
        %v4849 = vadd.f32 %v4688, %v4848
        %v4850 = vpop.f32.mrf.mxu0
        %v4851 = vpop.f32.mrf.mxu0
        %v4852 = vadd.f32 %v4691, %v4851
        %v4853 = vpop.f32.mrf.mxu0
        %4854 = vmatprep.mubr.bf16.mxu0 0
        %4855 = vmatmul.mubr.bf16.gmra.mxu0 %v3500
        %v4856 = vpop.f32.mrf.mxu0
        %v4857 = vadd.f32 %v4696, %v4856
        %v4858 = vpop.f32.mrf.mxu0
        %v4859 = vpop.f32.mrf.mxu0
        %v4860 = vadd.f32 %v4699, %v4859
        %v4861 = vpop.f32.mrf.mxu0
        %4862 = vmatprep.mubr.bf16.mxu0 0
        %4863 = vmatmul.mubr.bf16.gmra.mxu0 %v3501
        %v4864 = vpop.f32.mrf.mxu0
        %v4865 = vadd.f32 %v4704, %v4864
        %v4866 = vpop.f32.mrf.mxu0
        %v4867 = vpop.f32.mrf.mxu0
        %v4868 = vadd.f32 %v4707, %v4867
        %v4869 = vpop.f32.mrf.mxu0
        %4870 = vmatprep.mubr.bf16.mxu0 0
        %4871 = vmatmul.mubr.bf16.gmra.mxu0 %v3502
        %v4872 = vpop.f32.mrf.mxu0
        %v4873 = vadd.f32 %v4712, %v4872
        %v4874 = vpop.f32.mrf.mxu0
        %v4875 = vpop.f32.mrf.mxu0
        %v4876 = vadd.f32 %v4715, %v4875
        %v4877 = vpop.f32.mrf.mxu0
        %4878 = vmatprep.mubr.bf16.mxu0 0
        %4879 = vmatmul.mubr.bf16.gmra.mxu0 %v3503
        %v4880 = vpop.f32.mrf.mxu0
        %v4881 = vadd.f32 %v4720, %v4880
        %v4882 = vpop.f32.mrf.mxu0
        %v4883 = vpop.f32.mrf.mxu0
        %v4884 = vadd.f32 %v4723, %v4883
        %v4885 = vpop.f32.mrf.mxu0
        %4886 = vmatprep.mubr.bf16.mxu0 0
        %4887 = vmatmul.mubr.bf16.gmra.mxu0 %v3504
        %v4888 = vpop.f32.mrf.mxu0
        %v4889 = vadd.f32 %v4728, %v4888
        %v4890 = vpop.f32.mrf.mxu0
        %v4891 = vpop.f32.mrf.mxu0
        %v4892 = vadd.f32 %v4731, %v4891
        %v4893 = vpop.f32.mrf.mxu0
        %4894 = vmatprep.mubr.bf16.mxu0 0
        %4895 = vmatmul.mubr.bf16.gmra.mxu0 %v3505
        %v4896 = vpop.f32.mrf.mxu0
        %v4897 = vadd.f32 %v4736, %v4896
        %v4898 = vpop.f32.mrf.mxu0
        %v4899 = vpop.f32.mrf.mxu0
        %v4900 = vadd.f32 %v4739, %v4899
        %v4901 = vpop.f32.mrf.mxu0
        %4902 = vmatprep.mubr.bf16.mxu0 0
        %4903 = vmatmul.mubr.bf16.gmra.mxu0 %v3506
        %v4904 = vpop.f32.mrf.mxu0
        %v4905 = vadd.f32 %v4744, %v4904
        %v4906 = vpop.f32.mrf.mxu0
        %v4907 = vpop.f32.mrf.mxu0
        %v4908 = vadd.f32 %v4747, %v4907
        %v4909 = vpop.f32.mrf.mxu0
        %4910 = vdwg.mxu0
        %v4911 = vmax.f32 %v4785, 0.0
        %v4912 = vmax.f32 %v4788, 0.0
        %v4913 = vmax.f32 %v4793, 0.0
        %v4914 = vmax.f32 %v4796, 0.0
        %v4915 = vmax.f32 %v4801, 0.0
        %v4916 = vmax.f32 %v4804, 0.0
        %v4917 = vmax.f32 %v4809, 0.0
        %v4918 = vmax.f32 %v4812, 0.0
        %v4919 = vmax.f32 %v4817, 0.0
        %v4920 = vmax.f32 %v4820, 0.0
        %v4921 = vmax.f32 %v4825, 0.0
        %v4922 = vmax.f32 %v4828, 0.0
        %v4923 = vmax.f32 %v4833, 0.0
        %v4924 = vmax.f32 %v4836, 0.0
        %v4925 = vmax.f32 %v4841, 0.0
        %v4926 = vmax.f32 %v4844, 0.0
        %v4927 = vmax.f32 %v4849, 0.0
        %v4928 = vmax.f32 %v4852, 0.0
        %v4929 = vmax.f32 %v4857, 0.0
        %v4930 = vmax.f32 %v4860, 0.0
        %v4931 = vmax.f32 %v4865, 0.0
        %v4932 = vmax.f32 %v4868, 0.0
        %v4933 = vmax.f32 %v4873, 0.0
        %v4934 = vmax.f32 %v4876, 0.0
        %v4935 = vmax.f32 %v4881, 0.0
        %v4936 = vmax.f32 %v4884, 0.0
        %v4937 = vmax.f32 %v4889, 0.0
        %v4938 = vmax.f32 %v4892, 0.0
        %v4939 = vmax.f32 %v4897, 0.0
        %v4940 = vmax.f32 %v4900, 0.0
        %v4941 = vmax.f32 %v4905, 0.0
        %v4942 = vmax.f32 %v4908, 0.0
        %v4943 = vpack.c.bf16 %v4912, %v4911
        %v4944 = vpack.c.bf16 %v4914, %v4913
        %v4945 = vpack.c.bf16 %v4916, %v4915
        %v4946 = vpack.c.bf16 %v4918, %v4917
        %v4947 = vpack.c.bf16 %v4920, %v4919
        %v4948 = vpack.c.bf16 %v4922, %v4921
        %v4949 = vpack.c.bf16 %v4924, %v4923
        %v4950 = vpack.c.bf16 %v4926, %v4925
        %v4951 = vpack.c.bf16 %v4928, %v4927
        %v4952 = vpack.c.bf16 %v4930, %v4929
        %v4953 = vpack.c.bf16 %v4932, %v4931
        %v4954 = vpack.c.bf16 %v4934, %v4933
        %v4955 = vpack.c.bf16 %v4936, %v4935
        %v4956 = vpack.c.bf16 %v4938, %v4937
        %v4957 = vpack.c.bf16 %v4940, %v4939
        %v4958 = vpack.c.bf16 %v4942, %v4941
        %v4975 = vunpack.c.l.b16 %v4943
        %v4976 = vunpack.c.h.b16 %v4943
        %v4977 = vunpack.c.l.b16 %v4944
        %v4978 = vunpack.c.h.b16 %v4944
        %v4979 = vunpack.c.l.b16 %v4945
        %v4980 = vunpack.c.h.b16 %v4945
        %v4981 = vunpack.c.l.b16 %v4946
        %v4982 = vunpack.c.h.b16 %v4946
        %v4983 = vunpack.c.l.b16 %v4947
        %v4984 = vunpack.c.h.b16 %v4947
        %v4985 = vunpack.c.l.b16 %v4948
        %v4986 = vunpack.c.h.b16 %v4948
        %v4987 = vunpack.c.l.b16 %v4949
        %v4988 = vunpack.c.h.b16 %v4949
        %v4989 = vunpack.c.l.b16 %v4950
        %v4990 = vunpack.c.h.b16 %v4950
        %v4991 = vunpack.c.l.b16 %v4951
        %v4992 = vunpack.c.h.b16 %v4951
        %v4993 = vunpack.c.l.b16 %v4952
        %v4994 = vunpack.c.h.b16 %v4952
        %v4995 = vunpack.c.l.b16 %v4953
        %v4996 = vunpack.c.h.b16 %v4953
        %v4997 = vunpack.c.l.b16 %v4954
        %v4998 = vunpack.c.h.b16 %v4954
        %v4999 = vunpack.c.l.b16 %v4955
        %v5000 = vunpack.c.h.b16 %v4955
        %v5001 = vunpack.c.l.b16 %v4956
        %v5002 = vunpack.c.h.b16 %v4956
        %v5003 = vunpack.c.l.b16 %v4957
        %v5004 = vunpack.c.h.b16 %v4957
        %v5005 = vunpack.c.l.b16 %v4958
        %v5006 = vunpack.c.h.b16 %v4958
        %v5007 = vpack.c.b16 %v4975, %v4975
        %v5008 = vpack.c.b16 %v4976, %v4976
        %v5009 = vpack.c.b16 %v4977, %v4977
        %v5010 = vpack.c.b16 %v4978, %v4978
        %v5011 = vpack.c.b16 %v4979, %v4979
        %v5012 = vpack.c.b16 %v4980, %v4980
        %v5013 = vpack.c.b16 %v4981, %v4981
        %v5014 = vpack.c.b16 %v4982, %v4982
        %v5015 = vpack.c.b16 %v4983, %v4983
        %v5016 = vpack.c.b16 %v4984, %v4984
        %v5017 = vpack.c.b16 %v4985, %v4985
        %v5018 = vpack.c.b16 %v4986, %v4986
        %v5019 = vpack.c.b16 %v4987, %v4987
        %v5020 = vpack.c.b16 %v4988, %v4988
        %v5021 = vpack.c.b16 %v4989, %v4989
        %v5022 = vpack.c.b16 %v4990, %v4990
        %v5023 = vpack.c.b16 %v4991, %v4991
        %v5024 = vpack.c.b16 %v4992, %v4992
        %v5025 = vpack.c.b16 %v4993, %v4993
        %v5026 = vpack.c.b16 %v4994, %v4994
        %v5027 = vpack.c.b16 %v4995, %v4995
        %v5028 = vpack.c.b16 %v4996, %v4996
        %v5029 = vpack.c.b16 %v4997, %v4997
        %v5030 = vpack.c.b16 %v4998, %v4998
        %v5031 = vpack.c.b16 %v4999, %v4999
        %v5032 = vpack.c.b16 %v5000, %v5000
        %v5033 = vpack.c.b16 %v5001, %v5001
        %v5034 = vpack.c.b16 %v5002, %v5002
        %v5035 = vpack.c.b16 %v5003, %v5003
        %v5036 = vpack.c.b16 %v5004, %v5004
        %v5037 = vpack.c.b16 %v5005, %v5005
        %v5038 = vpack.c.b16 %v5006, %v5006
        %v5040 = vshrl.u32 %v5007, 16
        %v5042 = vrot.slane %v5040, 7
        %v5043 = vshll.u32 %v5007, 16
        %v5045 = vor.u32 %v5042, %v5043
        %v5046 = vrot.slane %v5042, 4
        %v5048 = vshrl.u32 %v5008, 16
        %v5050 = vrot.slane %v5048, 7
        %v5051 = vshll.u32 %v5008, 16
        %v5053 = vor.u32 %v5050, %v5051
        %v5054 = vsel %vm632, %v5046, %v5053
        %v5055 = vrot.slane %v5050, 4
        %v5057 = vshrl.u32 %v5009, 16
        %v5059 = vrot.slane %v5057, 7
        %v5060 = vshll.u32 %v5009, 16
        %v5062 = vor.u32 %v5059, %v5060
        %v5063 = vrot.slane %v5059, 4
        %v5065 = vshrl.u32 %v5010, 16
        %v5067 = vrot.slane %v5065, 7
        %v5068 = vshll.u32 %v5010, 16
        %v5070 = vor.u32 %v5067, %v5068
        %v5071 = vsel %vm632, %v5063, %v5070
        %v5072 = vrot.slane %v5067, 4
        %v5074 = vshrl.u32 %v5011, 16
        %v5076 = vrot.slane %v5074, 7
        %v5077 = vshll.u32 %v5011, 16
        %v5079 = vor.u32 %v5076, %v5077
        %v5080 = vrot.slane %v5076, 4
        %v5082 = vshrl.u32 %v5012, 16
        %v5084 = vrot.slane %v5082, 7
        %v5085 = vshll.u32 %v5012, 16
        %v5087 = vor.u32 %v5084, %v5085
        %v5088 = vsel %vm632, %v5080, %v5087
        %v5089 = vrot.slane %v5084, 4
        %v5091 = vshrl.u32 %v5013, 16
        %v5093 = vrot.slane %v5091, 7
        %v5094 = vshll.u32 %v5013, 16
        %v5096 = vor.u32 %v5093, %v5094
        %v5097 = vrot.slane %v5093, 4
        %v5099 = vshrl.u32 %v5014, 16
        %v5101 = vrot.slane %v5099, 7
        %v5102 = vshll.u32 %v5014, 16
        %v5104 = vor.u32 %v5101, %v5102
        %v5105 = vsel %vm632, %v5097, %v5104
        %v5106 = vrot.slane %v5101, 4
        %v5108 = vshrl.u32 %v5015, 16
        %v5110 = vrot.slane %v5108, 7
        %v5111 = vshll.u32 %v5015, 16
        %v5113 = vor.u32 %v5110, %v5111
        %v5114 = vrot.slane %v5110, 4
        %v5116 = vshrl.u32 %v5016, 16
        %v5118 = vrot.slane %v5116, 7
        %v5119 = vshll.u32 %v5016, 16
        %v5121 = vor.u32 %v5118, %v5119
        %v5122 = vsel %vm632, %v5114, %v5121
        %v5123 = vrot.slane %v5118, 4
        %v5125 = vshrl.u32 %v5017, 16
        %v5127 = vrot.slane %v5125, 7
        %v5128 = vshll.u32 %v5017, 16
        %v5130 = vor.u32 %v5127, %v5128
        %v5131 = vrot.slane %v5127, 4
        %v5133 = vshrl.u32 %v5018, 16
        %v5135 = vrot.slane %v5133, 7
        %v5136 = vshll.u32 %v5018, 16
        %v5138 = vor.u32 %v5135, %v5136
        %v5139 = vsel %vm632, %v5131, %v5138
        %v5140 = vrot.slane %v5135, 4
        %v5142 = vshrl.u32 %v5019, 16
        %v5144 = vrot.slane %v5142, 7
        %v5145 = vshll.u32 %v5019, 16
        %v5147 = vor.u32 %v5144, %v5145
        %v5148 = vrot.slane %v5144, 4
        %v5150 = vshrl.u32 %v5020, 16
        %v5152 = vrot.slane %v5150, 7
        %v5153 = vshll.u32 %v5020, 16
        %v5155 = vor.u32 %v5152, %v5153
        %v5156 = vsel %vm632, %v5148, %v5155
        %v5157 = vrot.slane %v5152, 4
        %v5159 = vshrl.u32 %v5021, 16
        %v5161 = vrot.slane %v5159, 7
        %v5162 = vshll.u32 %v5021, 16
        %v5164 = vor.u32 %v5161, %v5162
        %v5165 = vrot.slane %v5161, 4
        %v5167 = vshrl.u32 %v5022, 16
        %v5169 = vrot.slane %v5167, 7
        %v5170 = vshll.u32 %v5022, 16
        %v5172 = vor.u32 %v5169, %v5170
        %v5173 = vsel %vm632, %v5165, %v5172
        %v5174 = vrot.slane %v5169, 4
        %v5176 = vshrl.u32 %v5023, 16
        %v5178 = vrot.slane %v5176, 7
        %v5179 = vshll.u32 %v5023, 16
        %v5181 = vor.u32 %v5178, %v5179
        %v5182 = vrot.slane %v5178, 4
        %v5184 = vshrl.u32 %v5024, 16
        %v5186 = vrot.slane %v5184, 7
        %v5187 = vshll.u32 %v5024, 16
        %v5189 = vor.u32 %v5186, %v5187
        %v5190 = vsel %vm632, %v5182, %v5189
        %v5191 = vrot.slane %v5186, 4
        %v5193 = vshrl.u32 %v5025, 16
        %v5195 = vrot.slane %v5193, 7
        %v5196 = vshll.u32 %v5025, 16
        %v5198 = vor.u32 %v5195, %v5196
        %v5199 = vrot.slane %v5195, 4
        %v5201 = vshrl.u32 %v5026, 16
        %v5203 = vrot.slane %v5201, 7
        %v5204 = vshll.u32 %v5026, 16
        %v5206 = vor.u32 %v5203, %v5204
        %v5207 = vsel %vm632, %v5199, %v5206
        %v5208 = vrot.slane %v5203, 4
        %v5210 = vshrl.u32 %v5027, 16
        %v5212 = vrot.slane %v5210, 7
        %v5213 = vshll.u32 %v5027, 16
        %v5215 = vor.u32 %v5212, %v5213
        %v5216 = vrot.slane %v5212, 4
        %v5218 = vshrl.u32 %v5028, 16
        %v5220 = vrot.slane %v5218, 7
        %v5221 = vshll.u32 %v5028, 16
        %v5223 = vor.u32 %v5220, %v5221
        %v5224 = vsel %vm632, %v5216, %v5223
        %v5225 = vrot.slane %v5220, 4
        %v5227 = vshrl.u32 %v5029, 16
        %v5229 = vrot.slane %v5227, 7
        %v5230 = vshll.u32 %v5029, 16
        %v5232 = vor.u32 %v5229, %v5230
        %v5233 = vrot.slane %v5229, 4
        %v5235 = vshrl.u32 %v5030, 16
        %v5237 = vrot.slane %v5235, 7
        %v5238 = vshll.u32 %v5030, 16
        %v5240 = vor.u32 %v5237, %v5238
        %v5241 = vsel %vm632, %v5233, %v5240
        %v5242 = vrot.slane %v5237, 4
        %v5244 = vshrl.u32 %v5031, 16
        %v5246 = vrot.slane %v5244, 7
        %v5247 = vshll.u32 %v5031, 16
        %v5249 = vor.u32 %v5246, %v5247
        %v5250 = vrot.slane %v5246, 4
        %v5252 = vshrl.u32 %v5032, 16
        %v5254 = vrot.slane %v5252, 7
        %v5255 = vshll.u32 %v5032, 16
        %v5257 = vor.u32 %v5254, %v5255
        %v5258 = vsel %vm632, %v5250, %v5257
        %v5259 = vrot.slane %v5254, 4
        %v5261 = vshrl.u32 %v5033, 16
        %v5263 = vrot.slane %v5261, 7
        %v5264 = vshll.u32 %v5033, 16
        %v5266 = vor.u32 %v5263, %v5264
        %v5267 = vrot.slane %v5263, 4
        %v5269 = vshrl.u32 %v5034, 16
        %v5271 = vrot.slane %v5269, 7
        %v5272 = vshll.u32 %v5034, 16
        %v5274 = vor.u32 %v5271, %v5272
        %v5275 = vsel %vm632, %v5267, %v5274
        %v5276 = vrot.slane %v5271, 4
        %v5278 = vshrl.u32 %v5035, 16
        %v5280 = vrot.slane %v5278, 7
        %v5281 = vshll.u32 %v5035, 16
        %v5283 = vor.u32 %v5280, %v5281
        %v5284 = vrot.slane %v5280, 4
        %v5286 = vshrl.u32 %v5036, 16
        %v5288 = vrot.slane %v5286, 7
        %v5289 = vshll.u32 %v5036, 16
        %v5291 = vor.u32 %v5288, %v5289
        %v5292 = vsel %vm632, %v5284, %v5291
        %v5293 = vrot.slane %v5288, 4
        %v5295 = vshrl.u32 %v5037, 16
        %v5297 = vrot.slane %v5295, 7
        %v5298 = vshll.u32 %v5037, 16
        %v5300 = vor.u32 %v5297, %v5298
        %v5301 = vrot.slane %v5297, 4
        %v5303 = vshrl.u32 %v5038, 16
        %v5305 = vrot.slane %v5303, 7
        %v5306 = vshll.u32 %v5038, 16
        %v5308 = vor.u32 %v5305, %v5306
        %v5309 = vsel %vm632, %v5301, %v5308
        %v5310 = vrot.slane %v5305, 4
        %v5359 = vsel %vm955, %v5045, %v1682
        %5360 = vst [vmem:[%s953] sm:$0xf] %v5359
        %5361 = vst [vmem:[%s953 + $0x4] sm:$0xf] %v5054
        %v5362 = vld [vmem:[%s953 + $0x8] sm:$0x1]
        %v5363 = vsel %vm392, %v5055, %v5362
        %5364 = vst [vmem:[%s953 + $0x8] sm:$0x1] %v5363
        %v5365 = vld [vmem:[%s953 + $0xc] sm:$0xf]
        %v5366 = vsel %vm955, %v5062, %v5365
        %5367 = vst [vmem:[%s953 + $0xc] sm:$0xf] %v5366
        %5368 = vst [vmem:[%s953 + $0x10] sm:$0xf] %v5071
        %v5369 = vld [vmem:[%s953 + $0x14] sm:$0x1]
        %v5370 = vsel %vm392, %v5072, %v5369
        %5371 = vst [vmem:[%s953 + $0x14] sm:$0x1] %v5370
        %v5372 = vld [vmem:[%s953 + $0x18] sm:$0xf]
        %v5373 = vsel %vm955, %v5079, %v5372
        %5374 = vst [vmem:[%s953 + $0x18] sm:$0xf] %v5373
        %5375 = vst [vmem:[%s953 + $0x1c] sm:$0xf] %v5088
        %v5376 = vld [vmem:[%s953 + $0x20] sm:$0x1]
        %v5377 = vsel %vm392, %v5089, %v5376
        %5378 = vst [vmem:[%s953 + $0x20] sm:$0x1] %v5377
        %v5379 = vld [vmem:[%s953 + $0x24] sm:$0xf]
        %v5380 = vsel %vm955, %v5096, %v5379
        %5381 = vst [vmem:[%s953 + $0x24] sm:$0xf] %v5380
        %5382 = vst [vmem:[%s953 + $0x28] sm:$0xf] %v5105
        %v5383 = vld [vmem:[%s953 + $0x2c] sm:$0x1]
        %v5384 = vsel %vm392, %v5106, %v5383
        %5385 = vst [vmem:[%s953 + $0x2c] sm:$0x1] %v5384
        %v5386 = vld [vmem:[%s953 + $0x30] sm:$0xf]
        %v5387 = vsel %vm955, %v5113, %v5386
        %5388 = vst [vmem:[%s953 + $0x30] sm:$0xf] %v5387
        %5389 = vst [vmem:[%s953 + $0x34] sm:$0xf] %v5122
        %v5390 = vld [vmem:[%s953 + $0x38] sm:$0x1]
        %v5391 = vsel %vm392, %v5123, %v5390
        %5392 = vst [vmem:[%s953 + $0x38] sm:$0x1] %v5391
        %v5393 = vld [vmem:[%s953 + $0x3c] sm:$0xf]
        %v5394 = vsel %vm955, %v5130, %v5393
        %5395 = vst [vmem:[%s953 + $0x3c] sm:$0xf] %v5394
        %5396 = vst [vmem:[%s953 + $0x40] sm:$0xf] %v5139
        %v5397 = vld [vmem:[%s953 + $0x44] sm:$0x1]
        %v5398 = vsel %vm392, %v5140, %v5397
        %5399 = vst [vmem:[%s953 + $0x44] sm:$0x1] %v5398
        %v5400 = vld [vmem:[%s953 + $0x48] sm:$0xf]
        %v5401 = vsel %vm955, %v5147, %v5400
        %5402 = vst [vmem:[%s953 + $0x48] sm:$0xf] %v5401
        %5403 = vst [vmem:[%s953 + $0x4c] sm:$0xf] %v5156
        %v5404 = vld [vmem:[%s953 + $0x50] sm:$0x1]
        %v5405 = vsel %vm392, %v5157, %v5404
        %5406 = vst [vmem:[%s953 + $0x50] sm:$0x1] %v5405
        %v5407 = vld [vmem:[%s953 + $0x54] sm:$0xf]
        %v5408 = vsel %vm955, %v5164, %v5407
        %5409 = vst [vmem:[%s953 + $0x54] sm:$0xf] %v5408
        %5410 = vst [vmem:[%s953 + $0x58] sm:$0xf] %v5173
        %v5411 = vld [vmem:[%s953 + $0x5c] sm:$0x1]
        %v5412 = vsel %vm392, %v5174, %v5411
        %5413 = vst [vmem:[%s953 + $0x5c] sm:$0x1] %v5412
        %v5414 = vld [vmem:[%s953 + $0x60] sm:$0xf]
        %v5415 = vsel %vm955, %v5181, %v5414
        %5416 = vst [vmem:[%s953 + $0x60] sm:$0xf] %v5415
        %5417 = vst [vmem:[%s953 + $0x64] sm:$0xf] %v5190
        %v5418 = vld [vmem:[%s953 + $0x68] sm:$0x1]
        %v5419 = vsel %vm392, %v5191, %v5418
        %5420 = vst [vmem:[%s953 + $0x68] sm:$0x1] %v5419
        %v5421 = vld [vmem:[%s953 + $0x6c] sm:$0xf]
        %v5422 = vsel %vm955, %v5198, %v5421
        %5423 = vst [vmem:[%s953 + $0x6c] sm:$0xf] %v5422
        %5424 = vst [vmem:[%s953 + $0x70] sm:$0xf] %v5207
        %v5425 = vld [vmem:[%s953 + $0x74] sm:$0x1]
        %v5426 = vsel %vm392, %v5208, %v5425
        %5427 = vst [vmem:[%s953 + $0x74] sm:$0x1] %v5426
        %v5428 = vld [vmem:[%s953 + $0x78] sm:$0xf]
        %v5429 = vsel %vm955, %v5215, %v5428
        %5430 = vst [vmem:[%s953 + $0x78] sm:$0xf] %v5429
        %5431 = vst [vmem:[%s953 + $0x7c] sm:$0xf] %v5224
        %v5432 = vld [vmem:[%s953 + $0x80] sm:$0x1]
        %v5433 = vsel %vm392, %v5225, %v5432
        %5434 = vst [vmem:[%s953 + $0x80] sm:$0x1] %v5433
        %v5435 = vld [vmem:[%s953 + $0x84] sm:$0xf]
        %v5436 = vsel %vm955, %v5232, %v5435
        %5437 = vst [vmem:[%s953 + $0x84] sm:$0xf] %v5436
        %5438 = vst [vmem:[%s953 + $0x88] sm:$0xf] %v5241
        %v5439 = vld [vmem:[%s953 + $0x8c] sm:$0x1]
        %v5440 = vsel %vm392, %v5242, %v5439
        %5441 = vst [vmem:[%s953 + $0x8c] sm:$0x1] %v5440
        %v5442 = vld [vmem:[%s953 + $0x90] sm:$0xf]
        %v5443 = vsel %vm955, %v5249, %v5442
        %5444 = vst [vmem:[%s953 + $0x90] sm:$0xf] %v5443
        %5445 = vst [vmem:[%s953 + $0x94] sm:$0xf] %v5258
        %v5446 = vld [vmem:[%s953 + $0x98] sm:$0x1]
        %v5447 = vsel %vm392, %v5259, %v5446
        %5448 = vst [vmem:[%s953 + $0x98] sm:$0x1] %v5447
        %v5449 = vld [vmem:[%s953 + $0x9c] sm:$0xf]
        %v5450 = vsel %vm955, %v5266, %v5449
        %5451 = vst [vmem:[%s953 + $0x9c] sm:$0xf] %v5450
        %5452 = vst [vmem:[%s953 + $0xa0] sm:$0xf] %v5275
        %v5453 = vld [vmem:[%s953 + $0xa4] sm:$0x1]
        %v5454 = vsel %vm392, %v5276, %v5453
        %5455 = vst [vmem:[%s953 + $0xa4] sm:$0x1] %v5454
        %v5456 = vld [vmem:[%s953 + $0xa8] sm:$0xf]
        %v5457 = vsel %vm955, %v5283, %v5456
        %5458 = vst [vmem:[%s953 + $0xa8] sm:$0xf] %v5457
        %5459 = vst [vmem:[%s953 + $0xac] sm:$0xf] %v5292
        %v5460 = vld [vmem:[%s953 + $0xb0] sm:$0x1]
        %v5461 = vsel %vm392, %v5293, %v5460
        %5462 = vst [vmem:[%s953 + $0xb0] sm:$0x1] %v5461
        %v5463 = vld [vmem:[%s953 + $0xb4] sm:$0xf]
        %v5464 = vsel %vm955, %v5300, %v5463
        %5465 = vst [vmem:[%s953 + $0xb4] sm:$0xf] %v5464
        %5466 = vst [vmem:[%s953 + $0xb8] sm:$0xf] %v5309
        %v5467 = vld [vmem:[%s953 + $0xbc] sm:$0x1]
        %v5468 = vsel %vm392, %v5310, %v5467
        %5469 = vst [vmem:[%s953 + $0xbc] sm:$0x1] %v5468
        %v5470 = vld [vmem:[#allocation2] sm:$0xf]
        %v5471 = vld [vmem:[#allocation2 + $0x4] sm:$0xf]
        %v5472 = vld [vmem:[#allocation2 + $0xc] sm:$0xf]
        %v5473 = vld [vmem:[#allocation2 + $0x10] sm:$0xf]
        %v5474 = vld [vmem:[#allocation2 + $0x18] sm:$0xf]
        %v5475 = vld [vmem:[#allocation2 + $0x1c] sm:$0xf]
        %v5476 = vld [vmem:[#allocation2 + $0x24] sm:$0xf]
        %v5477 = vld [vmem:[#allocation2 + $0x28] sm:$0xf]
        %v5478 = vld [vmem:[#allocation2 + $0x30] sm:$0xf]
        %v5479 = vld [vmem:[#allocation2 + $0x34] sm:$0xf]
        %v5480 = vld [vmem:[#allocation2 + $0x3c] sm:$0xf]
        %v5481 = vld [vmem:[#allocation2 + $0x40] sm:$0xf]
        %v5482 = vld [vmem:[#allocation2 + $0x48] sm:$0xf]
        %v5483 = vld [vmem:[#allocation2 + $0x4c] sm:$0xf]
        %v5484 = vld [vmem:[#allocation2 + $0x54] sm:$0xf]
        %v5485 = vld [vmem:[#allocation2 + $0x58] sm:$0xf]
        %v5486 = vld [vmem:[#allocation2 + $0x60] sm:$0xf]
        %v5487 = vld [vmem:[#allocation2 + $0x64] sm:$0xf]
        %v5488 = vld [vmem:[#allocation2 + $0x6c] sm:$0xf]
        %v5489 = vld [vmem:[#allocation2 + $0x70] sm:$0xf]
        %v5490 = vld [vmem:[#allocation2 + $0x78] sm:$0xf]
        %v5491 = vld [vmem:[#allocation2 + $0x7c] sm:$0xf]
        %v5492 = vld [vmem:[#allocation2 + $0x84] sm:$0xf]
        %v5493 = vld [vmem:[#allocation2 + $0x88] sm:$0xf]
        %v5494 = vld [vmem:[#allocation2 + $0x90] sm:$0xf]
        %v5495 = vld [vmem:[#allocation2 + $0x94] sm:$0xf]
        %v5496 = vld [vmem:[#allocation2 + $0x9c] sm:$0xf]
        %v5497 = vld [vmem:[#allocation2 + $0xa0] sm:$0xf]
        %v5498 = vld [vmem:[#allocation2 + $0xa8] sm:$0xf]
        %v5499 = vld [vmem:[#allocation2 + $0xac] sm:$0xf]
        %v5500 = vld [vmem:[#allocation2 + $0xb4] sm:$0xf]
        %v5501 = vld [vmem:[#allocation2 + $0xb8] sm:$0xf]
        %v5502 = vld [vmem:[#allocation2 + $0x8] sm:$0x1]
        %v5503 = vld [vmem:[#allocation2 + $0x14] sm:$0x1]
        %v5504 = vld [vmem:[#allocation2 + $0x20] sm:$0x1]
        %v5505 = vld [vmem:[#allocation2 + $0x2c] sm:$0x1]
        %v5506 = vld [vmem:[#allocation2 + $0x38] sm:$0x1]
        %v5507 = vld [vmem:[#allocation2 + $0x44] sm:$0x1]
        %v5508 = vld [vmem:[#allocation2 + $0x50] sm:$0x1]
        %v5509 = vld [vmem:[#allocation2 + $0x5c] sm:$0x1]
        %v5510 = vld [vmem:[#allocation2 + $0x68] sm:$0x1]
        %v5511 = vld [vmem:[#allocation2 + $0x74] sm:$0x1]
        %v5512 = vld [vmem:[#allocation2 + $0x80] sm:$0x1]
        %v5513 = vld [vmem:[#allocation2 + $0x8c] sm:$0x1]
        %v5514 = vld [vmem:[#allocation2 + $0x98] sm:$0x1]
        %v5515 = vld [vmem:[#allocation2 + $0xa4] sm:$0x1]
        %v5516 = vld [vmem:[#allocation2 + $0xb0] sm:$0x1]
        %v5517 = vld [vmem:[#allocation2 + $0xbc] sm:$0x1]
        %v5519 = vshrl.u32 %v5470, 16
        %v5521 = vrot.slane %v5519, 4
        %v5522 = vshll.u32 %v5470, 16
        %v5524 = vrot.slane %v5522, 5
        %v5525 = vor.u32 %v5521, %v5524
        %v5526 = vrot.slane %v5525, 4
        %v5528 = vshll.u32 %v5471, 16
        %v5530 = vrot.slane %v5528, 5
        %v5531 = vsel %vm1118, %v5526, %v5530
        %v5532 = vshrl.u32 %v5471, 16
        %v5534 = vrot.slane %v5532, 4
        %v5535 = vor.u32 %v5534, %v5530
        %v5536 = vrot.slane %v5535, 4
        %v5538 = vshll.u32 %v5502, 16
        %v5540 = vrot.slane %v5538, 5
        %v5541 = vsel %vm1118, %v5536, %v5540
        %v5543 = vshrl.u32 %v5472, 16
        %v5545 = vrot.slane %v5543, 4
        %v5546 = vshll.u32 %v5472, 16
        %v5548 = vrot.slane %v5546, 5
        %v5549 = vor.u32 %v5545, %v5548
        %v5550 = vrot.slane %v5549, 4
        %v5552 = vshll.u32 %v5473, 16
        %v5554 = vrot.slane %v5552, 5
        %v5555 = vsel %vm1118, %v5550, %v5554
        %v5556 = vshrl.u32 %v5473, 16
        %v5558 = vrot.slane %v5556, 4
        %v5559 = vor.u32 %v5558, %v5554
        %v5560 = vrot.slane %v5559, 4
        %v5562 = vshll.u32 %v5503, 16
        %v5564 = vrot.slane %v5562, 5
        %v5565 = vsel %vm1118, %v5560, %v5564
        %v5567 = vshrl.u32 %v5474, 16
        %v5569 = vrot.slane %v5567, 4
        %v5570 = vshll.u32 %v5474, 16
        %v5572 = vrot.slane %v5570, 5
        %v5573 = vor.u32 %v5569, %v5572
        %v5574 = vrot.slane %v5573, 4
        %v5576 = vshll.u32 %v5475, 16
        %v5578 = vrot.slane %v5576, 5
        %v5579 = vsel %vm1118, %v5574, %v5578
        %v5580 = vshrl.u32 %v5475, 16
        %v5582 = vrot.slane %v5580, 4
        %v5583 = vor.u32 %v5582, %v5578
        %v5584 = vrot.slane %v5583, 4
        %v5586 = vshll.u32 %v5504, 16
        %v5588 = vrot.slane %v5586, 5
        %v5589 = vsel %vm1118, %v5584, %v5588
        %v5591 = vshrl.u32 %v5476, 16
        %v5593 = vrot.slane %v5591, 4
        %v5594 = vshll.u32 %v5476, 16
        %v5596 = vrot.slane %v5594, 5
        %v5597 = vor.u32 %v5593, %v5596
        %v5598 = vrot.slane %v5597, 4
        %v5600 = vshll.u32 %v5477, 16
        %v5602 = vrot.slane %v5600, 5
        %v5603 = vsel %vm1118, %v5598, %v5602
        %v5604 = vshrl.u32 %v5477, 16
        %v5606 = vrot.slane %v5604, 4
        %v5607 = vor.u32 %v5606, %v5602
        %v5608 = vrot.slane %v5607, 4
        %v5610 = vshll.u32 %v5505, 16
        %v5612 = vrot.slane %v5610, 5
        %v5613 = vsel %vm1118, %v5608, %v5612
        %v5615 = vshrl.u32 %v5478, 16
        %v5617 = vrot.slane %v5615, 4
        %v5618 = vshll.u32 %v5478, 16
        %v5620 = vrot.slane %v5618, 5
        %v5621 = vor.u32 %v5617, %v5620
        %v5622 = vrot.slane %v5621, 4
        %v5624 = vshll.u32 %v5479, 16
        %v5626 = vrot.slane %v5624, 5
        %v5627 = vsel %vm1118, %v5622, %v5626
        %v5628 = vshrl.u32 %v5479, 16
        %v5630 = vrot.slane %v5628, 4
        %v5631 = vor.u32 %v5630, %v5626
        %v5632 = vrot.slane %v5631, 4
        %v5634 = vshll.u32 %v5506, 16
        %v5636 = vrot.slane %v5634, 5
        %v5637 = vsel %vm1118, %v5632, %v5636
        %v5639 = vshrl.u32 %v5480, 16
        %v5641 = vrot.slane %v5639, 4
        %v5642 = vshll.u32 %v5480, 16
        %v5644 = vrot.slane %v5642, 5
        %v5645 = vor.u32 %v5641, %v5644
        %v5646 = vrot.slane %v5645, 4
        %v5648 = vshll.u32 %v5481, 16
        %v5650 = vrot.slane %v5648, 5
        %v5651 = vsel %vm1118, %v5646, %v5650
        %v5652 = vshrl.u32 %v5481, 16
        %v5654 = vrot.slane %v5652, 4
        %v5655 = vor.u32 %v5654, %v5650
        %v5656 = vrot.slane %v5655, 4
        %v5658 = vshll.u32 %v5507, 16
        %v5660 = vrot.slane %v5658, 5
        %v5661 = vsel %vm1118, %v5656, %v5660
        %v5663 = vshrl.u32 %v5482, 16
        %v5665 = vrot.slane %v5663, 4
        %v5666 = vshll.u32 %v5482, 16
        %v5668 = vrot.slane %v5666, 5
        %v5669 = vor.u32 %v5665, %v5668
        %v5670 = vrot.slane %v5669, 4
        %v5672 = vshll.u32 %v5483, 16
        %v5674 = vrot.slane %v5672, 5
        %v5675 = vsel %vm1118, %v5670, %v5674
        %v5676 = vshrl.u32 %v5483, 16
        %v5678 = vrot.slane %v5676, 4
        %v5679 = vor.u32 %v5678, %v5674
        %v5680 = vrot.slane %v5679, 4
        %v5682 = vshll.u32 %v5508, 16
        %v5684 = vrot.slane %v5682, 5
        %v5685 = vsel %vm1118, %v5680, %v5684
        %v5687 = vshrl.u32 %v5484, 16
        %v5689 = vrot.slane %v5687, 4
        %v5690 = vshll.u32 %v5484, 16
        %v5692 = vrot.slane %v5690, 5
        %v5693 = vor.u32 %v5689, %v5692
        %v5694 = vrot.slane %v5693, 4
        %v5696 = vshll.u32 %v5485, 16
        %v5698 = vrot.slane %v5696, 5
        %v5699 = vsel %vm1118, %v5694, %v5698
        %v5700 = vshrl.u32 %v5485, 16
        %v5702 = vrot.slane %v5700, 4
        %v5703 = vor.u32 %v5702, %v5698
        %v5704 = vrot.slane %v5703, 4
        %v5706 = vshll.u32 %v5509, 16
        %v5708 = vrot.slane %v5706, 5
        %v5709 = vsel %vm1118, %v5704, %v5708
        %v5711 = vshrl.u32 %v5486, 16
        %v5713 = vrot.slane %v5711, 4
        %v5714 = vshll.u32 %v5486, 16
        %v5716 = vrot.slane %v5714, 5
        %v5717 = vor.u32 %v5713, %v5716
        %v5718 = vrot.slane %v5717, 4
        %v5720 = vshll.u32 %v5487, 16
        %v5722 = vrot.slane %v5720, 5
        %v5723 = vsel %vm1118, %v5718, %v5722
        %v5724 = vshrl.u32 %v5487, 16
        %v5726 = vrot.slane %v5724, 4
        %v5727 = vor.u32 %v5726, %v5722
        %v5728 = vrot.slane %v5727, 4
        %v5730 = vshll.u32 %v5510, 16
        %v5732 = vrot.slane %v5730, 5
        %v5733 = vsel %vm1118, %v5728, %v5732
        %v5735 = vshrl.u32 %v5488, 16
        %v5737 = vrot.slane %v5735, 4
        %v5738 = vshll.u32 %v5488, 16
        %v5740 = vrot.slane %v5738, 5
        %v5741 = vor.u32 %v5737, %v5740
        %v5742 = vrot.slane %v5741, 4
        %v5744 = vshll.u32 %v5489, 16
        %v5746 = vrot.slane %v5744, 5
        %v5747 = vsel %vm1118, %v5742, %v5746
        %v5748 = vshrl.u32 %v5489, 16
        %v5750 = vrot.slane %v5748, 4
        %v5751 = vor.u32 %v5750, %v5746
        %v5752 = vrot.slane %v5751, 4
        %v5754 = vshll.u32 %v5511, 16
        %v5756 = vrot.slane %v5754, 5
        %v5757 = vsel %vm1118, %v5752, %v5756
        %v5759 = vshrl.u32 %v5490, 16
        %v5761 = vrot.slane %v5759, 4
        %v5762 = vshll.u32 %v5490, 16
        %v5764 = vrot.slane %v5762, 5
        %v5765 = vor.u32 %v5761, %v5764
        %v5766 = vrot.slane %v5765, 4
        %v5768 = vshll.u32 %v5491, 16
        %v5770 = vrot.slane %v5768, 5
        %v5771 = vsel %vm1118, %v5766, %v5770
        %v5772 = vshrl.u32 %v5491, 16
        %v5774 = vrot.slane %v5772, 4
        %v5775 = vor.u32 %v5774, %v5770
        %v5776 = vrot.slane %v5775, 4
        %v5778 = vshll.u32 %v5512, 16
        %v5780 = vrot.slane %v5778, 5
        %v5781 = vsel %vm1118, %v5776, %v5780
        %v5783 = vshrl.u32 %v5492, 16
        %v5785 = vrot.slane %v5783, 4
        %v5786 = vshll.u32 %v5492, 16
        %v5788 = vrot.slane %v5786, 5
        %v5789 = vor.u32 %v5785, %v5788
        %v5790 = vrot.slane %v5789, 4
        %v5792 = vshll.u32 %v5493, 16
        %v5794 = vrot.slane %v5792, 5
        %v5795 = vsel %vm1118, %v5790, %v5794
        %v5796 = vshrl.u32 %v5493, 16
        %v5798 = vrot.slane %v5796, 4
        %v5799 = vor.u32 %v5798, %v5794
        %v5800 = vrot.slane %v5799, 4
        %v5802 = vshll.u32 %v5513, 16
        %v5804 = vrot.slane %v5802, 5
        %v5805 = vsel %vm1118, %v5800, %v5804
        %v5807 = vshrl.u32 %v5494, 16
        %v5809 = vrot.slane %v5807, 4
        %v5810 = vshll.u32 %v5494, 16
        %v5812 = vrot.slane %v5810, 5
        %v5813 = vor.u32 %v5809, %v5812
        %v5814 = vrot.slane %v5813, 4
        %v5816 = vshll.u32 %v5495, 16
        %v5818 = vrot.slane %v5816, 5
        %v5819 = vsel %vm1118, %v5814, %v5818
        %v5820 = vshrl.u32 %v5495, 16
        %v5822 = vrot.slane %v5820, 4
        %v5823 = vor.u32 %v5822, %v5818
        %v5824 = vrot.slane %v5823, 4
        %v5826 = vshll.u32 %v5514, 16
        %v5828 = vrot.slane %v5826, 5
        %v5829 = vsel %vm1118, %v5824, %v5828
        %v5831 = vshrl.u32 %v5496, 16
        %v5833 = vrot.slane %v5831, 4
        %v5834 = vshll.u32 %v5496, 16
        %v5836 = vrot.slane %v5834, 5
        %v5837 = vor.u32 %v5833, %v5836
        %v5838 = vrot.slane %v5837, 4
        %v5840 = vshll.u32 %v5497, 16
        %v5842 = vrot.slane %v5840, 5
        %v5843 = vsel %vm1118, %v5838, %v5842
        %v5844 = vshrl.u32 %v5497, 16
        %v5846 = vrot.slane %v5844, 4
        %v5847 = vor.u32 %v5846, %v5842
        %v5848 = vrot.slane %v5847, 4
        %v5850 = vshll.u32 %v5515, 16
        %v5852 = vrot.slane %v5850, 5
        %v5853 = vsel %vm1118, %v5848, %v5852
        %v5855 = vshrl.u32 %v5498, 16
        %v5857 = vrot.slane %v5855, 4
        %v5858 = vshll.u32 %v5498, 16
        %v5860 = vrot.slane %v5858, 5
        %v5861 = vor.u32 %v5857, %v5860
        %v5862 = vrot.slane %v5861, 4
        %v5864 = vshll.u32 %v5499, 16
        %v5866 = vrot.slane %v5864, 5
        %v5867 = vsel %vm1118, %v5862, %v5866
        %v5868 = vshrl.u32 %v5499, 16
        %v5870 = vrot.slane %v5868, 4
        %v5871 = vor.u32 %v5870, %v5866
        %v5872 = vrot.slane %v5871, 4
        %v5874 = vshll.u32 %v5516, 16
        %v5876 = vrot.slane %v5874, 5
        %v5877 = vsel %vm1118, %v5872, %v5876
        %v5879 = vshrl.u32 %v5500, 16
        %v5881 = vrot.slane %v5879, 4
        %v5882 = vshll.u32 %v5500, 16
        %v5884 = vrot.slane %v5882, 5
        %v5885 = vor.u32 %v5881, %v5884
        %v5886 = vrot.slane %v5885, 4
        %v5888 = vshll.u32 %v5501, 16
        %v5890 = vrot.slane %v5888, 5
        %v5891 = vsel %vm1118, %v5886, %v5890
        %v5892 = vshrl.u32 %v5501, 16
        %v5894 = vrot.slane %v5892, 4
        %v5895 = vor.u32 %v5894, %v5890
        %v5896 = vrot.slane %v5895, 4
        %v5898 = vshll.u32 %v5517, 16
        %v5900 = vrot.slane %v5898, 5
        %v5901 = vsel %vm1118, %v5896, %v5900
        %v5902 = vld [vmem:[#allocation2] sm:$0xe]
        %v5903 = vld [vmem:[#allocation2 + $0xc] sm:$0xe]
        %v5904 = vld [vmem:[#allocation2 + $0x18] sm:$0xe]
        %v5905 = vld [vmem:[#allocation2 + $0x24] sm:$0xe]
        %v5906 = vld [vmem:[#allocation2 + $0x30] sm:$0xe]
        %v5907 = vld [vmem:[#allocation2 + $0x3c] sm:$0xe]
        %v5908 = vld [vmem:[#allocation2 + $0x48] sm:$0xe]
        %v5909 = vld [vmem:[#allocation2 + $0x54] sm:$0xe]
        %v5910 = vld [vmem:[#allocation2 + $0x60] sm:$0xe]
        %v5911 = vld [vmem:[#allocation2 + $0x6c] sm:$0xe]
        %v5912 = vld [vmem:[#allocation2 + $0x78] sm:$0xe]
        %v5913 = vld [vmem:[#allocation2 + $0x84] sm:$0xe]
        %v5914 = vld [vmem:[#allocation2 + $0x90] sm:$0xe]
        %v5915 = vld [vmem:[#allocation2 + $0x9c] sm:$0xe]
        %v5916 = vld [vmem:[#allocation2 + $0xa8] sm:$0xe]
        %v5917 = vld [vmem:[#allocation2 + $0xb4] sm:$0xe]
        %v5966 = vrot.slane %v5902, 5
        %v5967 = vrot.slane %v5966, 4
        %v5968 = vrot.slane %v5471, 5
        %v5969 = vsel %vm1569, %v5967, %v5968
        %v5970 = vrot.slane %v5968, 4
        %v5971 = vrot.slane %v5502, 5
        %v5972 = vsel %vm1569, %v5970, %v5971
        %v5973 = vrot.slane %v5903, 5
        %v5974 = vrot.slane %v5973, 4
        %v5975 = vrot.slane %v5473, 5
        %v5976 = vsel %vm1569, %v5974, %v5975
        %v5977 = vrot.slane %v5975, 4
        %v5978 = vrot.slane %v5503, 5
        %v5979 = vsel %vm1569, %v5977, %v5978
        %v5980 = vrot.slane %v5904, 5
        %v5981 = vrot.slane %v5980, 4
        %v5982 = vrot.slane %v5475, 5
        %v5983 = vsel %vm1569, %v5981, %v5982
        %v5984 = vrot.slane %v5982, 4
        %v5985 = vrot.slane %v5504, 5
        %v5986 = vsel %vm1569, %v5984, %v5985
        %v5987 = vrot.slane %v5905, 5
        %v5988 = vrot.slane %v5987, 4
        %v5989 = vrot.slane %v5477, 5
        %v5990 = vsel %vm1569, %v5988, %v5989
        %v5991 = vrot.slane %v5989, 4
        %v5992 = vrot.slane %v5505, 5
        %v5993 = vsel %vm1569, %v5991, %v5992
        %v5994 = vrot.slane %v5906, 5
        %v5995 = vrot.slane %v5994, 4
        %v5996 = vrot.slane %v5479, 5
        %v5997 = vsel %vm1569, %v5995, %v5996
        %v5998 = vrot.slane %v5996, 4
        %v5999 = vrot.slane %v5506, 5
        %v6000 = vsel %vm1569, %v5998, %v5999
        %v6001 = vrot.slane %v5907, 5
        %v6002 = vrot.slane %v6001, 4
        %v6003 = vrot.slane %v5481, 5
        %v6004 = vsel %vm1569, %v6002, %v6003
        %v6005 = vrot.slane %v6003, 4
        %v6006 = vrot.slane %v5507, 5
        %v6007 = vsel %vm1569, %v6005, %v6006
        %v6008 = vrot.slane %v5908, 5
        %v6009 = vrot.slane %v6008, 4
        %v6010 = vrot.slane %v5483, 5
        %v6011 = vsel %vm1569, %v6009, %v6010
        %v6012 = vrot.slane %v6010, 4
        %v6013 = vrot.slane %v5508, 5
        %v6014 = vsel %vm1569, %v6012, %v6013
        %v6015 = vrot.slane %v5909, 5
        %v6016 = vrot.slane %v6015, 4
        %v6017 = vrot.slane %v5485, 5
        %v6018 = vsel %vm1569, %v6016, %v6017
        %v6019 = vrot.slane %v6017, 4
        %v6020 = vrot.slane %v5509, 5
        %v6021 = vsel %vm1569, %v6019, %v6020
        %v6022 = vrot.slane %v5910, 5
        %v6023 = vrot.slane %v6022, 4
        %v6024 = vrot.slane %v5487, 5
        %v6025 = vsel %vm1569, %v6023, %v6024
        %v6026 = vrot.slane %v6024, 4
        %v6027 = vrot.slane %v5510, 5
        %v6028 = vsel %vm1569, %v6026, %v6027
        %v6029 = vrot.slane %v5911, 5
        %v6030 = vrot.slane %v6029, 4
        %v6031 = vrot.slane %v5489, 5
        %v6032 = vsel %vm1569, %v6030, %v6031
        %v6033 = vrot.slane %v6031, 4
        %v6034 = vrot.slane %v5511, 5
        %v6035 = vsel %vm1569, %v6033, %v6034
        %v6036 = vrot.slane %v5912, 5
        %v6037 = vrot.slane %v6036, 4
        %v6038 = vrot.slane %v5491, 5
        %v6039 = vsel %vm1569, %v6037, %v6038
        %v6040 = vrot.slane %v6038, 4
        %v6041 = vrot.slane %v5512, 5
        %v6042 = vsel %vm1569, %v6040, %v6041
        %v6043 = vrot.slane %v5913, 5
        %v6044 = vrot.slane %v6043, 4
        %v6045 = vrot.slane %v5493, 5
        %v6046 = vsel %vm1569, %v6044, %v6045
        %v6047 = vrot.slane %v6045, 4
        %v6048 = vrot.slane %v5513, 5
        %v6049 = vsel %vm1569, %v6047, %v6048
        %v6050 = vrot.slane %v5914, 5
        %v6051 = vrot.slane %v6050, 4
        %v6052 = vrot.slane %v5495, 5
        %v6053 = vsel %vm1569, %v6051, %v6052
        %v6054 = vrot.slane %v6052, 4
        %v6055 = vrot.slane %v5514, 5
        %v6056 = vsel %vm1569, %v6054, %v6055
        %v6057 = vrot.slane %v5915, 5
        %v6058 = vrot.slane %v6057, 4
        %v6059 = vrot.slane %v5497, 5
        %v6060 = vsel %vm1569, %v6058, %v6059
        %v6061 = vrot.slane %v6059, 4
        %v6062 = vrot.slane %v5515, 5
        %v6063 = vsel %vm1569, %v6061, %v6062
        %v6064 = vrot.slane %v5916, 5
        %v6065 = vrot.slane %v6064, 4
        %v6066 = vrot.slane %v5499, 5
        %v6067 = vsel %vm1569, %v6065, %v6066
        %v6068 = vrot.slane %v6066, 4
        %v6069 = vrot.slane %v5516, 5
        %v6070 = vsel %vm1569, %v6068, %v6069
        %v6071 = vrot.slane %v5917, 5
        %v6072 = vrot.slane %v6071, 4
        %v6073 = vrot.slane %v5501, 5
        %v6074 = vsel %vm1569, %v6072, %v6073
        %v6075 = vrot.slane %v6073, 4
        %v6076 = vrot.slane %v5517, 5
        %v6077 = vsel %vm1569, %v6075, %v6076
        %v6078 = vld [vmem:[%s953] sm:$0xf]
        %v6079 = vld [vmem:[%s953 + $0x4] sm:$0xf]
        %v6080 = vld [vmem:[%s953 + $0xc] sm:$0xf]
        %v6081 = vld [vmem:[%s953 + $0x10] sm:$0xf]
        %v6082 = vld [vmem:[%s953 + $0x18] sm:$0xf]
        %v6083 = vld [vmem:[%s953 + $0x1c] sm:$0xf]
        %v6084 = vld [vmem:[%s953 + $0x24] sm:$0xf]
        %v6085 = vld [vmem:[%s953 + $0x28] sm:$0xf]
        %v6086 = vld [vmem:[%s953 + $0x30] sm:$0xf]
        %v6087 = vld [vmem:[%s953 + $0x34] sm:$0xf]
        %v6088 = vld [vmem:[%s953 + $0x3c] sm:$0xf]
        %v6089 = vld [vmem:[%s953 + $0x40] sm:$0xf]
        %v6090 = vld [vmem:[%s953 + $0x48] sm:$0xf]
        %v6091 = vld [vmem:[%s953 + $0x4c] sm:$0xf]
        %v6092 = vld [vmem:[%s953 + $0x54] sm:$0xf]
        %v6093 = vld [vmem:[%s953 + $0x58] sm:$0xf]
        %v6094 = vld [vmem:[%s953 + $0x60] sm:$0xf]
        %v6095 = vld [vmem:[%s953 + $0x64] sm:$0xf]
        %v6096 = vld [vmem:[%s953 + $0x6c] sm:$0xf]
        %v6097 = vld [vmem:[%s953 + $0x70] sm:$0xf]
        %v6098 = vld [vmem:[%s953 + $0x78] sm:$0xf]
        %v6099 = vld [vmem:[%s953 + $0x7c] sm:$0xf]
        %v6100 = vld [vmem:[%s953 + $0x84] sm:$0xf]
        %v6101 = vld [vmem:[%s953 + $0x88] sm:$0xf]
        %v6102 = vld [vmem:[%s953 + $0x90] sm:$0xf]
        %v6103 = vld [vmem:[%s953 + $0x94] sm:$0xf]
        %v6104 = vld [vmem:[%s953 + $0x9c] sm:$0xf]
        %v6105 = vld [vmem:[%s953 + $0xa0] sm:$0xf]
        %v6106 = vld [vmem:[%s953 + $0xa8] sm:$0xf]
        %v6107 = vld [vmem:[%s953 + $0xac] sm:$0xf]
        %v6108 = vld [vmem:[%s953 + $0xb4] sm:$0xf]
        %v6109 = vld [vmem:[%s953 + $0xb8] sm:$0xf]
        %v6110 = vld [vmem:[%s953 + $0x8] sm:$0x1]
        %v6111 = vld [vmem:[%s953 + $0x14] sm:$0x1]
        %v6112 = vld [vmem:[%s953 + $0x20] sm:$0x1]
        %v6113 = vld [vmem:[%s953 + $0x2c] sm:$0x1]
        %v6114 = vld [vmem:[%s953 + $0x38] sm:$0x1]
        %v6115 = vld [vmem:[%s953 + $0x44] sm:$0x1]
        %v6116 = vld [vmem:[%s953 + $0x50] sm:$0x1]
        %v6117 = vld [vmem:[%s953 + $0x5c] sm:$0x1]
        %v6118 = vld [vmem:[%s953 + $0x68] sm:$0x1]
        %v6119 = vld [vmem:[%s953 + $0x74] sm:$0x1]
        %v6120 = vld [vmem:[%s953 + $0x80] sm:$0x1]
        %v6121 = vld [vmem:[%s953 + $0x8c] sm:$0x1]
        %v6122 = vld [vmem:[%s953 + $0x98] sm:$0x1]
        %v6123 = vld [vmem:[%s953 + $0xa4] sm:$0x1]
        %v6124 = vld [vmem:[%s953 + $0xb0] sm:$0x1]
        %v6125 = vld [vmem:[%s953 + $0xbc] sm:$0x1]
        %v6127 = vshrl.u32 %v6078, 16
        %v6129 = vrot.slane %v6127, 4
        %v6130 = vshll.u32 %v6078, 16
        %v6132 = vrot.slane %v6130, 5
        %v6133 = vor.u32 %v6129, %v6132
        %v6134 = vrot.slane %v6133, 4
        %v6136 = vshll.u32 %v6079, 16
        %v6138 = vrot.slane %v6136, 5
        %v6139 = vsel %vm1118, %v6134, %v6138
        %v6140 = vshrl.u32 %v6079, 16
        %v6142 = vrot.slane %v6140, 4
        %v6143 = vor.u32 %v6142, %v6138
        %v6144 = vrot.slane %v6143, 4
        %v6146 = vshll.u32 %v6110, 16
        %v6148 = vrot.slane %v6146, 5
        %v6149 = vsel %vm1118, %v6144, %v6148
        %v6151 = vshrl.u32 %v6080, 16
        %v6153 = vrot.slane %v6151, 4
        %v6154 = vshll.u32 %v6080, 16
        %v6156 = vrot.slane %v6154, 5
        %v6157 = vor.u32 %v6153, %v6156
        %v6158 = vrot.slane %v6157, 4
        %v6160 = vshll.u32 %v6081, 16
        %v6162 = vrot.slane %v6160, 5
        %v6163 = vsel %vm1118, %v6158, %v6162
        %v6164 = vshrl.u32 %v6081, 16
        %v6166 = vrot.slane %v6164, 4
        %v6167 = vor.u32 %v6166, %v6162
        %v6168 = vrot.slane %v6167, 4
        %v6170 = vshll.u32 %v6111, 16
        %v6172 = vrot.slane %v6170, 5
        %v6173 = vsel %vm1118, %v6168, %v6172
        %v6175 = vshrl.u32 %v6082, 16
        %v6177 = vrot.slane %v6175, 4
        %v6178 = vshll.u32 %v6082, 16
        %v6180 = vrot.slane %v6178, 5
        %v6181 = vor.u32 %v6177, %v6180
        %v6182 = vrot.slane %v6181, 4
        %v6184 = vshll.u32 %v6083, 16
        %v6186 = vrot.slane %v6184, 5
        %v6187 = vsel %vm1118, %v6182, %v6186
        %v6188 = vshrl.u32 %v6083, 16
        %v6190 = vrot.slane %v6188, 4
        %v6191 = vor.u32 %v6190, %v6186
        %v6192 = vrot.slane %v6191, 4
        %v6194 = vshll.u32 %v6112, 16
        %v6196 = vrot.slane %v6194, 5
        %v6197 = vsel %vm1118, %v6192, %v6196
        %v6199 = vshrl.u32 %v6084, 16
        %v6201 = vrot.slane %v6199, 4
        %v6202 = vshll.u32 %v6084, 16
        %v6204 = vrot.slane %v6202, 5
        %v6205 = vor.u32 %v6201, %v6204
        %v6206 = vrot.slane %v6205, 4
        %v6208 = vshll.u32 %v6085, 16
        %v6210 = vrot.slane %v6208, 5
        %v6211 = vsel %vm1118, %v6206, %v6210
        %v6212 = vshrl.u32 %v6085, 16
        %v6214 = vrot.slane %v6212, 4
        %v6215 = vor.u32 %v6214, %v6210
        %v6216 = vrot.slane %v6215, 4
        %v6218 = vshll.u32 %v6113, 16
        %v6220 = vrot.slane %v6218, 5
        %v6221 = vsel %vm1118, %v6216, %v6220
        %v6223 = vshrl.u32 %v6086, 16
        %v6225 = vrot.slane %v6223, 4
        %v6226 = vshll.u32 %v6086, 16
        %v6228 = vrot.slane %v6226, 5
        %v6229 = vor.u32 %v6225, %v6228
        %v6230 = vrot.slane %v6229, 4
        %v6232 = vshll.u32 %v6087, 16
        %v6234 = vrot.slane %v6232, 5
        %v6235 = vsel %vm1118, %v6230, %v6234
        %v6236 = vshrl.u32 %v6087, 16
        %v6238 = vrot.slane %v6236, 4
        %v6239 = vor.u32 %v6238, %v6234
        %v6240 = vrot.slane %v6239, 4
        %v6242 = vshll.u32 %v6114, 16
        %v6244 = vrot.slane %v6242, 5
        %v6245 = vsel %vm1118, %v6240, %v6244
        %v6247 = vshrl.u32 %v6088, 16
        %v6249 = vrot.slane %v6247, 4
        %v6250 = vshll.u32 %v6088, 16
        %v6252 = vrot.slane %v6250, 5
        %v6253 = vor.u32 %v6249, %v6252
        %v6254 = vrot.slane %v6253, 4
        %v6256 = vshll.u32 %v6089, 16
        %v6258 = vrot.slane %v6256, 5
        %v6259 = vsel %vm1118, %v6254, %v6258
        %v6260 = vshrl.u32 %v6089, 16
        %v6262 = vrot.slane %v6260, 4
        %v6263 = vor.u32 %v6262, %v6258
        %v6264 = vrot.slane %v6263, 4
        %v6266 = vshll.u32 %v6115, 16
        %v6268 = vrot.slane %v6266, 5
        %v6269 = vsel %vm1118, %v6264, %v6268
        %v6271 = vshrl.u32 %v6090, 16
        %v6273 = vrot.slane %v6271, 4
        %v6274 = vshll.u32 %v6090, 16
        %v6276 = vrot.slane %v6274, 5
        %v6277 = vor.u32 %v6273, %v6276
        %v6278 = vrot.slane %v6277, 4
        %v6280 = vshll.u32 %v6091, 16
        %v6282 = vrot.slane %v6280, 5
        %v6283 = vsel %vm1118, %v6278, %v6282
        %v6284 = vshrl.u32 %v6091, 16
        %v6286 = vrot.slane %v6284, 4
        %v6287 = vor.u32 %v6286, %v6282
        %v6288 = vrot.slane %v6287, 4
        %v6290 = vshll.u32 %v6116, 16
        %v6292 = vrot.slane %v6290, 5
        %v6293 = vsel %vm1118, %v6288, %v6292
        %v6295 = vshrl.u32 %v6092, 16
        %v6297 = vrot.slane %v6295, 4
        %v6298 = vshll.u32 %v6092, 16
        %v6300 = vrot.slane %v6298, 5
        %v6301 = vor.u32 %v6297, %v6300
        %v6302 = vrot.slane %v6301, 4
        %v6304 = vshll.u32 %v6093, 16
        %v6306 = vrot.slane %v6304, 5
        %v6307 = vsel %vm1118, %v6302, %v6306
        %v6308 = vshrl.u32 %v6093, 16
        %v6310 = vrot.slane %v6308, 4
        %v6311 = vor.u32 %v6310, %v6306
        %v6312 = vrot.slane %v6311, 4
        %v6314 = vshll.u32 %v6117, 16
        %v6316 = vrot.slane %v6314, 5
        %v6317 = vsel %vm1118, %v6312, %v6316
        %v6319 = vshrl.u32 %v6094, 16
        %v6321 = vrot.slane %v6319, 4
        %v6322 = vshll.u32 %v6094, 16
        %v6324 = vrot.slane %v6322, 5
        %v6325 = vor.u32 %v6321, %v6324
        %v6326 = vrot.slane %v6325, 4
        %v6328 = vshll.u32 %v6095, 16
        %v6330 = vrot.slane %v6328, 5
        %v6331 = vsel %vm1118, %v6326, %v6330
        %v6332 = vshrl.u32 %v6095, 16
        %v6334 = vrot.slane %v6332, 4
        %v6335 = vor.u32 %v6334, %v6330
        %v6336 = vrot.slane %v6335, 4
        %v6338 = vshll.u32 %v6118, 16
        %v6340 = vrot.slane %v6338, 5
        %v6341 = vsel %vm1118, %v6336, %v6340
        %v6343 = vshrl.u32 %v6096, 16
        %v6345 = vrot.slane %v6343, 4
        %v6346 = vshll.u32 %v6096, 16
        %v6348 = vrot.slane %v6346, 5
        %v6349 = vor.u32 %v6345, %v6348
        %v6350 = vrot.slane %v6349, 4
        %v6352 = vshll.u32 %v6097, 16
        %v6354 = vrot.slane %v6352, 5
        %v6355 = vsel %vm1118, %v6350, %v6354
        %v6356 = vshrl.u32 %v6097, 16
        %v6358 = vrot.slane %v6356, 4
        %v6359 = vor.u32 %v6358, %v6354
        %v6360 = vrot.slane %v6359, 4
        %v6362 = vshll.u32 %v6119, 16
        %v6364 = vrot.slane %v6362, 5
        %v6365 = vsel %vm1118, %v6360, %v6364
        %v6367 = vshrl.u32 %v6098, 16
        %v6369 = vrot.slane %v6367, 4
        %v6370 = vshll.u32 %v6098, 16
        %v6372 = vrot.slane %v6370, 5
        %v6373 = vor.u32 %v6369, %v6372
        %v6374 = vrot.slane %v6373, 4
        %v6376 = vshll.u32 %v6099, 16
        %v6378 = vrot.slane %v6376, 5
        %v6379 = vsel %vm1118, %v6374, %v6378
        %v6380 = vshrl.u32 %v6099, 16
        %v6382 = vrot.slane %v6380, 4
        %v6383 = vor.u32 %v6382, %v6378
        %v6384 = vrot.slane %v6383, 4
        %v6386 = vshll.u32 %v6120, 16
        %v6388 = vrot.slane %v6386, 5
        %v6389 = vsel %vm1118, %v6384, %v6388
        %v6391 = vshrl.u32 %v6100, 16
        %v6393 = vrot.slane %v6391, 4
        %v6394 = vshll.u32 %v6100, 16
        %v6396 = vrot.slane %v6394, 5
        %v6397 = vor.u32 %v6393, %v6396
        %v6398 = vrot.slane %v6397, 4
        %v6400 = vshll.u32 %v6101, 16
        %v6402 = vrot.slane %v6400, 5
        %v6403 = vsel %vm1118, %v6398, %v6402
        %v6404 = vshrl.u32 %v6101, 16
        %v6406 = vrot.slane %v6404, 4
        %v6407 = vor.u32 %v6406, %v6402
        %v6408 = vrot.slane %v6407, 4
        %v6410 = vshll.u32 %v6121, 16
        %v6412 = vrot.slane %v6410, 5
        %v6413 = vsel %vm1118, %v6408, %v6412
        %v6415 = vshrl.u32 %v6102, 16
        %v6417 = vrot.slane %v6415, 4
        %v6418 = vshll.u32 %v6102, 16
        %v6420 = vrot.slane %v6418, 5
        %v6421 = vor.u32 %v6417, %v6420
        %v6422 = vrot.slane %v6421, 4
        %v6424 = vshll.u32 %v6103, 16
        %v6426 = vrot.slane %v6424, 5
        %v6427 = vsel %vm1118, %v6422, %v6426
        %v6428 = vshrl.u32 %v6103, 16
        %v6430 = vrot.slane %v6428, 4
        %v6431 = vor.u32 %v6430, %v6426
        %v6432 = vrot.slane %v6431, 4
        %v6434 = vshll.u32 %v6122, 16
        %v6436 = vrot.slane %v6434, 5
        %v6437 = vsel %vm1118, %v6432, %v6436
        %v6439 = vshrl.u32 %v6104, 16
        %v6441 = vrot.slane %v6439, 4
        %v6442 = vshll.u32 %v6104, 16
        %v6444 = vrot.slane %v6442, 5
        %v6445 = vor.u32 %v6441, %v6444
        %v6446 = vrot.slane %v6445, 4
        %v6448 = vshll.u32 %v6105, 16
        %v6450 = vrot.slane %v6448, 5
        %v6451 = vsel %vm1118, %v6446, %v6450
        %v6452 = vshrl.u32 %v6105, 16
        %v6454 = vrot.slane %v6452, 4
        %v6455 = vor.u32 %v6454, %v6450
        %v6456 = vrot.slane %v6455, 4
        %v6458 = vshll.u32 %v6123, 16
        %v6460 = vrot.slane %v6458, 5
        %v6461 = vsel %vm1118, %v6456, %v6460
        %v6463 = vshrl.u32 %v6106, 16
        %v6465 = vrot.slane %v6463, 4
        %v6466 = vshll.u32 %v6106, 16
        %v6468 = vrot.slane %v6466, 5
        %v6469 = vor.u32 %v6465, %v6468
        %v6470 = vrot.slane %v6469, 4
        %v6472 = vshll.u32 %v6107, 16
        %v6474 = vrot.slane %v6472, 5
        %v6475 = vsel %vm1118, %v6470, %v6474
        %v6476 = vshrl.u32 %v6107, 16
        %v6478 = vrot.slane %v6476, 4
        %v6479 = vor.u32 %v6478, %v6474
        %v6480 = vrot.slane %v6479, 4
        %v6482 = vshll.u32 %v6124, 16
        %v6484 = vrot.slane %v6482, 5
        %v6485 = vsel %vm1118, %v6480, %v6484
        %v6487 = vshrl.u32 %v6108, 16
        %v6489 = vrot.slane %v6487, 4
        %v6490 = vshll.u32 %v6108, 16
        %v6492 = vrot.slane %v6490, 5
        %v6493 = vor.u32 %v6489, %v6492
        %v6494 = vrot.slane %v6493, 4
        %v6496 = vshll.u32 %v6109, 16
        %v6498 = vrot.slane %v6496, 5
        %v6499 = vsel %vm1118, %v6494, %v6498
        %v6500 = vshrl.u32 %v6109, 16
        %v6502 = vrot.slane %v6500, 4
        %v6503 = vor.u32 %v6502, %v6498
        %v6504 = vrot.slane %v6503, 4
        %v6506 = vshll.u32 %v6125, 16
        %v6508 = vrot.slane %v6506, 5
        %v6509 = vsel %vm1118, %v6504, %v6508
        %v6510 = vld [vmem:[%s953] sm:$0xe]
        %v6511 = vld [vmem:[%s953 + $0xc] sm:$0xe]
        %v6512 = vld [vmem:[%s953 + $0x18] sm:$0xe]
        %v6513 = vld [vmem:[%s953 + $0x24] sm:$0xe]
        %v6514 = vld [vmem:[%s953 + $0x30] sm:$0xe]
        %v6515 = vld [vmem:[%s953 + $0x3c] sm:$0xe]
        %v6516 = vld [vmem:[%s953 + $0x48] sm:$0xe]
        %v6517 = vld [vmem:[%s953 + $0x54] sm:$0xe]
        %v6518 = vld [vmem:[%s953 + $0x60] sm:$0xe]
        %v6519 = vld [vmem:[%s953 + $0x6c] sm:$0xe]
        %v6520 = vld [vmem:[%s953 + $0x78] sm:$0xe]
        %v6521 = vld [vmem:[%s953 + $0x84] sm:$0xe]
        %v6522 = vld [vmem:[%s953 + $0x90] sm:$0xe]
        %v6523 = vld [vmem:[%s953 + $0x9c] sm:$0xe]
        %v6524 = vld [vmem:[%s953 + $0xa8] sm:$0xe]
        %v6525 = vld [vmem:[%s953 + $0xb4] sm:$0xe]
        %v6574 = vrot.slane %v6510, 5
        %v6575 = vrot.slane %v6574, 4
        %v6576 = vrot.slane %v6079, 5
        %v6577 = vsel %vm1569, %v6575, %v6576
        %v6578 = vrot.slane %v6576, 4
        %v6579 = vrot.slane %v6110, 5
        %v6580 = vsel %vm1569, %v6578, %v6579
        %v6581 = vrot.slane %v6511, 5
        %v6582 = vrot.slane %v6581, 4
        %v6583 = vrot.slane %v6081, 5
        %v6584 = vsel %vm1569, %v6582, %v6583
        %v6585 = vrot.slane %v6583, 4
        %v6586 = vrot.slane %v6111, 5
        %v6587 = vsel %vm1569, %v6585, %v6586
        %v6588 = vrot.slane %v6512, 5
        %v6589 = vrot.slane %v6588, 4
        %v6590 = vrot.slane %v6083, 5
        %v6591 = vsel %vm1569, %v6589, %v6590
        %v6592 = vrot.slane %v6590, 4
        %v6593 = vrot.slane %v6112, 5
        %v6594 = vsel %vm1569, %v6592, %v6593
        %v6595 = vrot.slane %v6513, 5
        %v6596 = vrot.slane %v6595, 4
        %v6597 = vrot.slane %v6085, 5
        %v6598 = vsel %vm1569, %v6596, %v6597
        %v6599 = vrot.slane %v6597, 4
        %v6600 = vrot.slane %v6113, 5
        %v6601 = vsel %vm1569, %v6599, %v6600
        %v6602 = vrot.slane %v6514, 5
        %v6603 = vrot.slane %v6602, 4
        %v6604 = vrot.slane %v6087, 5
        %v6605 = vsel %vm1569, %v6603, %v6604
        %v6606 = vrot.slane %v6604, 4
        %v6607 = vrot.slane %v6114, 5
        %v6608 = vsel %vm1569, %v6606, %v6607
        %v6609 = vrot.slane %v6515, 5
        %v6610 = vrot.slane %v6609, 4
        %v6611 = vrot.slane %v6089, 5
        %v6612 = vsel %vm1569, %v6610, %v6611
        %v6613 = vrot.slane %v6611, 4
        %v6614 = vrot.slane %v6115, 5
        %v6615 = vsel %vm1569, %v6613, %v6614
        %v6616 = vrot.slane %v6516, 5
        %v6617 = vrot.slane %v6616, 4
        %v6618 = vrot.slane %v6091, 5
        %v6619 = vsel %vm1569, %v6617, %v6618
        %v6620 = vrot.slane %v6618, 4
        %v6621 = vrot.slane %v6116, 5
        %v6622 = vsel %vm1569, %v6620, %v6621
        %v6623 = vrot.slane %v6517, 5
        %v6624 = vrot.slane %v6623, 4
        %v6625 = vrot.slane %v6093, 5
        %v6626 = vsel %vm1569, %v6624, %v6625
        %v6627 = vrot.slane %v6625, 4
        %v6628 = vrot.slane %v6117, 5
        %v6629 = vsel %vm1569, %v6627, %v6628
        %v6630 = vrot.slane %v6518, 5
        %v6631 = vrot.slane %v6630, 4
        %v6632 = vrot.slane %v6095, 5
        %v6633 = vsel %vm1569, %v6631, %v6632
        %v6634 = vrot.slane %v6632, 4
        %v6635 = vrot.slane %v6118, 5
        %v6636 = vsel %vm1569, %v6634, %v6635
        %v6637 = vrot.slane %v6519, 5
        %v6638 = vrot.slane %v6637, 4
        %v6639 = vrot.slane %v6097, 5
        %v6640 = vsel %vm1569, %v6638, %v6639
        %v6641 = vrot.slane %v6639, 4
        %v6642 = vrot.slane %v6119, 5
        %v6643 = vsel %vm1569, %v6641, %v6642
        %v6644 = vrot.slane %v6520, 5
        %v6645 = vrot.slane %v6644, 4
        %v6646 = vrot.slane %v6099, 5
        %v6647 = vsel %vm1569, %v6645, %v6646
        %v6648 = vrot.slane %v6646, 4
        %v6649 = vrot.slane %v6120, 5
        %v6650 = vsel %vm1569, %v6648, %v6649
        %v6651 = vrot.slane %v6521, 5
        %v6652 = vrot.slane %v6651, 4
        %v6653 = vrot.slane %v6101, 5
        %v6654 = vsel %vm1569, %v6652, %v6653
        %v6655 = vrot.slane %v6653, 4
        %v6656 = vrot.slane %v6121, 5
        %v6657 = vsel %vm1569, %v6655, %v6656
        %v6658 = vrot.slane %v6522, 5
        %v6659 = vrot.slane %v6658, 4
        %v6660 = vrot.slane %v6103, 5
        %v6661 = vsel %vm1569, %v6659, %v6660
        %v6662 = vrot.slane %v6660, 4
        %v6663 = vrot.slane %v6122, 5
        %v6664 = vsel %vm1569, %v6662, %v6663
        %v6665 = vrot.slane %v6523, 5
        %v6666 = vrot.slane %v6665, 4
        %v6667 = vrot.slane %v6105, 5
        %v6668 = vsel %vm1569, %v6666, %v6667
        %v6669 = vrot.slane %v6667, 4
        %v6670 = vrot.slane %v6123, 5
        %v6671 = vsel %vm1569, %v6669, %v6670
        %v6672 = vrot.slane %v6524, 5
        %v6673 = vrot.slane %v6672, 4
        %v6674 = vrot.slane %v6107, 5
        %v6675 = vsel %vm1569, %v6673, %v6674
        %v6676 = vrot.slane %v6674, 4
        %v6677 = vrot.slane %v6124, 5
        %v6678 = vsel %vm1569, %v6676, %v6677
        %v6679 = vrot.slane %v6525, 5
        %v6680 = vrot.slane %v6679, 4
        %v6681 = vrot.slane %v6109, 5
        %v6682 = vsel %vm1569, %v6680, %v6681
        %v6683 = vrot.slane %v6681, 4
        %v6684 = vrot.slane %v6125, 5
        %v6685 = vsel %vm1569, %v6683, %v6684
        %v6686 = vld [vmem:[%s2290] sm:$0xf]
        %v6687 = vld [vmem:[%s2290 + $0x4] sm:$0xf]
        %v6688 = vld [vmem:[%s2290 + $0xc] sm:$0xf]
        %v6689 = vld [vmem:[%s2290 + $0x10] sm:$0xf]
        %v6690 = vld [vmem:[%s2290 + $0x18] sm:$0xf]
        %v6691 = vld [vmem:[%s2290 + $0x1c] sm:$0xf]
        %v6692 = vld [vmem:[%s2290 + $0x24] sm:$0xf]
        %v6693 = vld [vmem:[%s2290 + $0x28] sm:$0xf]
        %v6694 = vld [vmem:[%s2290 + $0x30] sm:$0xf]
        %v6695 = vld [vmem:[%s2290 + $0x34] sm:$0xf]
        %v6696 = vld [vmem:[%s2290 + $0x3c] sm:$0xf]
        %v6697 = vld [vmem:[%s2290 + $0x40] sm:$0xf]
        %v6698 = vld [vmem:[%s2290 + $0x48] sm:$0xf]
        %v6699 = vld [vmem:[%s2290 + $0x4c] sm:$0xf]
        %v6700 = vld [vmem:[%s2290 + $0x54] sm:$0xf]
        %v6701 = vld [vmem:[%s2290 + $0x58] sm:$0xf]
        %v6702 = vld [vmem:[%s2290 + $0x60] sm:$0xf]
        %v6703 = vld [vmem:[%s2290 + $0x64] sm:$0xf]
        %v6704 = vld [vmem:[%s2290 + $0x6c] sm:$0xf]
        %v6705 = vld [vmem:[%s2290 + $0x70] sm:$0xf]
        %v6706 = vld [vmem:[%s2290 + $0x78] sm:$0xf]
        %v6707 = vld [vmem:[%s2290 + $0x7c] sm:$0xf]
        %v6708 = vld [vmem:[%s2290 + $0x84] sm:$0xf]
        %v6709 = vld [vmem:[%s2290 + $0x88] sm:$0xf]
        %v6710 = vld [vmem:[%s2290 + $0x90] sm:$0xf]
        %v6711 = vld [vmem:[%s2290 + $0x94] sm:$0xf]
        %v6712 = vld [vmem:[%s2290 + $0x9c] sm:$0xf]
        %v6713 = vld [vmem:[%s2290 + $0xa0] sm:$0xf]
        %v6714 = vld [vmem:[%s2290 + $0xa8] sm:$0xf]
        %v6715 = vld [vmem:[%s2290 + $0xac] sm:$0xf]
        %v6716 = vld [vmem:[%s2290 + $0xb4] sm:$0xf]
        %v6717 = vld [vmem:[%s2290 + $0xb8] sm:$0xf]
        %v6718 = vld [vmem:[%s2290 + $0x8] sm:$0x1]
        %v6719 = vld [vmem:[%s2290 + $0x14] sm:$0x1]
        %v6720 = vld [vmem:[%s2290 + $0x20] sm:$0x1]
        %v6721 = vld [vmem:[%s2290 + $0x2c] sm:$0x1]
        %v6722 = vld [vmem:[%s2290 + $0x38] sm:$0x1]
        %v6723 = vld [vmem:[%s2290 + $0x44] sm:$0x1]
        %v6724 = vld [vmem:[%s2290 + $0x50] sm:$0x1]
        %v6725 = vld [vmem:[%s2290 + $0x5c] sm:$0x1]
        %v6726 = vld [vmem:[%s2290 + $0x68] sm:$0x1]
        %v6727 = vld [vmem:[%s2290 + $0x74] sm:$0x1]
        %v6728 = vld [vmem:[%s2290 + $0x80] sm:$0x1]
        %v6729 = vld [vmem:[%s2290 + $0x8c] sm:$0x1]
        %v6730 = vld [vmem:[%s2290 + $0x98] sm:$0x1]
        %v6731 = vld [vmem:[%s2290 + $0xa4] sm:$0x1]
        %v6732 = vld [vmem:[%s2290 + $0xb0] sm:$0x1]
        %v6733 = vld [vmem:[%s2290 + $0xbc] sm:$0x1]
        %v6735 = vshrl.u32 %v6686, 16
        %v6737 = vrot.slane %v6735, 4
        %v6738 = vshll.u32 %v6686, 16
        %v6740 = vrot.slane %v6738, 5
        %v6741 = vor.u32 %v6737, %v6740
        %v6742 = vrot.slane %v6741, 4
        %v6744 = vshll.u32 %v6687, 16
        %v6746 = vrot.slane %v6744, 5
        %v6747 = vsel %vm1118, %v6742, %v6746
        %v6748 = vshrl.u32 %v6687, 16
        %v6750 = vrot.slane %v6748, 4
        %v6751 = vor.u32 %v6750, %v6746
        %v6752 = vrot.slane %v6751, 4
        %v6754 = vshll.u32 %v6718, 16
        %v6756 = vrot.slane %v6754, 5
        %v6757 = vsel %vm1118, %v6752, %v6756
        %v6759 = vshrl.u32 %v6688, 16
        %v6761 = vrot.slane %v6759, 4
        %v6762 = vshll.u32 %v6688, 16
        %v6764 = vrot.slane %v6762, 5
        %v6765 = vor.u32 %v6761, %v6764
        %v6766 = vrot.slane %v6765, 4
        %v6768 = vshll.u32 %v6689, 16
        %v6770 = vrot.slane %v6768, 5
        %v6771 = vsel %vm1118, %v6766, %v6770
        %v6772 = vshrl.u32 %v6689, 16
        %v6774 = vrot.slane %v6772, 4
        %v6775 = vor.u32 %v6774, %v6770
        %v6776 = vrot.slane %v6775, 4
        %v6778 = vshll.u32 %v6719, 16
        %v6780 = vrot.slane %v6778, 5
        %v6781 = vsel %vm1118, %v6776, %v6780
        %v6783 = vshrl.u32 %v6690, 16
        %v6785 = vrot.slane %v6783, 4
        %v6786 = vshll.u32 %v6690, 16
        %v6788 = vrot.slane %v6786, 5
        %v6789 = vor.u32 %v6785, %v6788
        %v6790 = vrot.slane %v6789, 4
        %v6792 = vshll.u32 %v6691, 16
        %v6794 = vrot.slane %v6792, 5
        %v6795 = vsel %vm1118, %v6790, %v6794
        %v6796 = vshrl.u32 %v6691, 16
        %v6798 = vrot.slane %v6796, 4
        %v6799 = vor.u32 %v6798, %v6794
        %v6800 = vrot.slane %v6799, 4
        %v6802 = vshll.u32 %v6720, 16
        %v6804 = vrot.slane %v6802, 5
        %v6805 = vsel %vm1118, %v6800, %v6804
        %v6807 = vshrl.u32 %v6692, 16
        %v6809 = vrot.slane %v6807, 4
        %v6810 = vshll.u32 %v6692, 16
        %v6812 = vrot.slane %v6810, 5
        %v6813 = vor.u32 %v6809, %v6812
        %v6814 = vrot.slane %v6813, 4
        %v6816 = vshll.u32 %v6693, 16
        %v6818 = vrot.slane %v6816, 5
        %v6819 = vsel %vm1118, %v6814, %v6818
        %v6820 = vshrl.u32 %v6693, 16
        %v6822 = vrot.slane %v6820, 4
        %v6823 = vor.u32 %v6822, %v6818
        %v6824 = vrot.slane %v6823, 4
        %v6826 = vshll.u32 %v6721, 16
        %v6828 = vrot.slane %v6826, 5
        %v6829 = vsel %vm1118, %v6824, %v6828
        %v6831 = vshrl.u32 %v6694, 16
        %v6833 = vrot.slane %v6831, 4
        %v6834 = vshll.u32 %v6694, 16
        %v6836 = vrot.slane %v6834, 5
        %v6837 = vor.u32 %v6833, %v6836
        %v6838 = vrot.slane %v6837, 4
        %v6840 = vshll.u32 %v6695, 16
        %v6842 = vrot.slane %v6840, 5
        %v6843 = vsel %vm1118, %v6838, %v6842
        %v6844 = vshrl.u32 %v6695, 16
        %v6846 = vrot.slane %v6844, 4
        %v6847 = vor.u32 %v6846, %v6842
        %v6848 = vrot.slane %v6847, 4
        %v6850 = vshll.u32 %v6722, 16
        %v6852 = vrot.slane %v6850, 5
        %v6853 = vsel %vm1118, %v6848, %v6852
        %v6855 = vshrl.u32 %v6696, 16
        %v6857 = vrot.slane %v6855, 4
        %v6858 = vshll.u32 %v6696, 16
        %v6860 = vrot.slane %v6858, 5
        %v6861 = vor.u32 %v6857, %v6860
        %v6862 = vrot.slane %v6861, 4
        %v6864 = vshll.u32 %v6697, 16
        %v6866 = vrot.slane %v6864, 5
        %v6867 = vsel %vm1118, %v6862, %v6866
        %v6868 = vshrl.u32 %v6697, 16
        %v6870 = vrot.slane %v6868, 4
        %v6871 = vor.u32 %v6870, %v6866
        %v6872 = vrot.slane %v6871, 4
        %v6874 = vshll.u32 %v6723, 16
        %v6876 = vrot.slane %v6874, 5
        %v6877 = vsel %vm1118, %v6872, %v6876
        %v6879 = vshrl.u32 %v6698, 16
        %v6881 = vrot.slane %v6879, 4
        %v6882 = vshll.u32 %v6698, 16
        %v6884 = vrot.slane %v6882, 5
        %v6885 = vor.u32 %v6881, %v6884
        %v6886 = vrot.slane %v6885, 4
        %v6888 = vshll.u32 %v6699, 16
        %v6890 = vrot.slane %v6888, 5
        %v6891 = vsel %vm1118, %v6886, %v6890
        %v6892 = vshrl.u32 %v6699, 16
        %v6894 = vrot.slane %v6892, 4
        %v6895 = vor.u32 %v6894, %v6890
        %v6896 = vrot.slane %v6895, 4
        %v6898 = vshll.u32 %v6724, 16
        %v6900 = vrot.slane %v6898, 5
        %v6901 = vsel %vm1118, %v6896, %v6900
        %v6903 = vshrl.u32 %v6700, 16
        %v6905 = vrot.slane %v6903, 4
        %v6906 = vshll.u32 %v6700, 16
        %v6908 = vrot.slane %v6906, 5
        %v6909 = vor.u32 %v6905, %v6908
        %v6910 = vrot.slane %v6909, 4
        %v6912 = vshll.u32 %v6701, 16
        %v6914 = vrot.slane %v6912, 5
        %v6915 = vsel %vm1118, %v6910, %v6914
        %v6916 = vshrl.u32 %v6701, 16
        %v6918 = vrot.slane %v6916, 4
        %v6919 = vor.u32 %v6918, %v6914
        %v6920 = vrot.slane %v6919, 4
        %v6922 = vshll.u32 %v6725, 16
        %v6924 = vrot.slane %v6922, 5
        %v6925 = vsel %vm1118, %v6920, %v6924
        %v6927 = vshrl.u32 %v6702, 16
        %v6929 = vrot.slane %v6927, 4
        %v6930 = vshll.u32 %v6702, 16
        %v6932 = vrot.slane %v6930, 5
        %v6933 = vor.u32 %v6929, %v6932
        %v6934 = vrot.slane %v6933, 4
        %v6936 = vshll.u32 %v6703, 16
        %v6938 = vrot.slane %v6936, 5
        %v6939 = vsel %vm1118, %v6934, %v6938
        %v6940 = vshrl.u32 %v6703, 16
        %v6942 = vrot.slane %v6940, 4
        %v6943 = vor.u32 %v6942, %v6938
        %v6944 = vrot.slane %v6943, 4
        %v6946 = vshll.u32 %v6726, 16
        %v6948 = vrot.slane %v6946, 5
        %v6949 = vsel %vm1118, %v6944, %v6948
        %v6951 = vshrl.u32 %v6704, 16
        %v6953 = vrot.slane %v6951, 4
        %v6954 = vshll.u32 %v6704, 16
        %v6956 = vrot.slane %v6954, 5
        %v6957 = vor.u32 %v6953, %v6956
        %v6958 = vrot.slane %v6957, 4
        %v6960 = vshll.u32 %v6705, 16
        %v6962 = vrot.slane %v6960, 5
        %v6963 = vsel %vm1118, %v6958, %v6962
        %v6964 = vshrl.u32 %v6705, 16
        %v6966 = vrot.slane %v6964, 4
        %v6967 = vor.u32 %v6966, %v6962
        %v6968 = vrot.slane %v6967, 4
        %v6970 = vshll.u32 %v6727, 16
        %v6972 = vrot.slane %v6970, 5
        %v6973 = vsel %vm1118, %v6968, %v6972
        %v6975 = vshrl.u32 %v6706, 16
        %v6977 = vrot.slane %v6975, 4
        %v6978 = vshll.u32 %v6706, 16
        %v6980 = vrot.slane %v6978, 5
        %v6981 = vor.u32 %v6977, %v6980
        %v6982 = vrot.slane %v6981, 4
        %v6984 = vshll.u32 %v6707, 16
        %v6986 = vrot.slane %v6984, 5
        %v6987 = vsel %vm1118, %v6982, %v6986
        %v6988 = vshrl.u32 %v6707, 16
        %v6990 = vrot.slane %v6988, 4
        %v6991 = vor.u32 %v6990, %v6986
        %v6992 = vrot.slane %v6991, 4
        %v6994 = vshll.u32 %v6728, 16
        %v6996 = vrot.slane %v6994, 5
        %v6997 = vsel %vm1118, %v6992, %v6996
        %v6999 = vshrl.u32 %v6708, 16
        %v7001 = vrot.slane %v6999, 4
        %v7002 = vshll.u32 %v6708, 16
        %v7004 = vrot.slane %v7002, 5
        %v7005 = vor.u32 %v7001, %v7004
        %v7006 = vrot.slane %v7005, 4
        %v7008 = vshll.u32 %v6709, 16
        %v7010 = vrot.slane %v7008, 5
        %v7011 = vsel %vm1118, %v7006, %v7010
        %v7012 = vshrl.u32 %v6709, 16
        %v7014 = vrot.slane %v7012, 4
        %v7015 = vor.u32 %v7014, %v7010
        %v7016 = vrot.slane %v7015, 4
        %v7018 = vshll.u32 %v6729, 16
        %v7020 = vrot.slane %v7018, 5
        %v7021 = vsel %vm1118, %v7016, %v7020
        %v7023 = vshrl.u32 %v6710, 16
        %v7025 = vrot.slane %v7023, 4
        %v7026 = vshll.u32 %v6710, 16
        %v7028 = vrot.slane %v7026, 5
        %v7029 = vor.u32 %v7025, %v7028
        %v7030 = vrot.slane %v7029, 4
        %v7032 = vshll.u32 %v6711, 16
        %v7034 = vrot.slane %v7032, 5
        %v7035 = vsel %vm1118, %v7030, %v7034
        %v7036 = vshrl.u32 %v6711, 16
        %v7038 = vrot.slane %v7036, 4
        %v7039 = vor.u32 %v7038, %v7034
        %v7040 = vrot.slane %v7039, 4
        %v7042 = vshll.u32 %v6730, 16
        %v7044 = vrot.slane %v7042, 5
        %v7045 = vsel %vm1118, %v7040, %v7044
        %v7047 = vshrl.u32 %v6712, 16
        %v7049 = vrot.slane %v7047, 4
        %v7050 = vshll.u32 %v6712, 16
        %v7052 = vrot.slane %v7050, 5
        %v7053 = vor.u32 %v7049, %v7052
        %v7054 = vrot.slane %v7053, 4
        %v7056 = vshll.u32 %v6713, 16
        %v7058 = vrot.slane %v7056, 5
        %v7059 = vsel %vm1118, %v7054, %v7058
        %v7060 = vshrl.u32 %v6713, 16
        %v7062 = vrot.slane %v7060, 4
        %v7063 = vor.u32 %v7062, %v7058
        %v7064 = vrot.slane %v7063, 4
        %v7066 = vshll.u32 %v6731, 16
        %v7068 = vrot.slane %v7066, 5
        %v7069 = vsel %vm1118, %v7064, %v7068
        %v7071 = vshrl.u32 %v6714, 16
        %v7073 = vrot.slane %v7071, 4
        %v7074 = vshll.u32 %v6714, 16
        %v7076 = vrot.slane %v7074, 5
        %v7077 = vor.u32 %v7073, %v7076
        %v7078 = vrot.slane %v7077, 4
        %v7080 = vshll.u32 %v6715, 16
        %v7082 = vrot.slane %v7080, 5
        %v7083 = vsel %vm1118, %v7078, %v7082
        %v7084 = vshrl.u32 %v6715, 16
        %v7086 = vrot.slane %v7084, 4
        %v7087 = vor.u32 %v7086, %v7082
        %v7088 = vrot.slane %v7087, 4
        %v7090 = vshll.u32 %v6732, 16
        %v7092 = vrot.slane %v7090, 5
        %v7093 = vsel %vm1118, %v7088, %v7092
        %v7095 = vshrl.u32 %v6716, 16
        %v7097 = vrot.slane %v7095, 4
        %v7098 = vshll.u32 %v6716, 16
        %v7100 = vrot.slane %v7098, 5
        %v7101 = vor.u32 %v7097, %v7100
        %v7102 = vrot.slane %v7101, 4
        %v7104 = vshll.u32 %v6717, 16
        %v7106 = vrot.slane %v7104, 5
        %v7107 = vsel %vm1118, %v7102, %v7106
        %v7108 = vshrl.u32 %v6717, 16
        %v7110 = vrot.slane %v7108, 4
        %v7111 = vor.u32 %v7110, %v7106
        %v7112 = vrot.slane %v7111, 4
        %v7114 = vshll.u32 %v6733, 16
        %v7116 = vrot.slane %v7114, 5
        %v7117 = vsel %vm1118, %v7112, %v7116
        %v7118 = vld [vmem:[%s2290] sm:$0xe]
        %v7119 = vld [vmem:[%s2290 + $0xc] sm:$0xe]
        %v7120 = vld [vmem:[%s2290 + $0x18] sm:$0xe]
        %v7121 = vld [vmem:[%s2290 + $0x24] sm:$0xe]
        %v7122 = vld [vmem:[%s2290 + $0x30] sm:$0xe]
        %v7123 = vld [vmem:[%s2290 + $0x3c] sm:$0xe]
        %v7124 = vld [vmem:[%s2290 + $0x48] sm:$0xe]
        %v7125 = vld [vmem:[%s2290 + $0x54] sm:$0xe]
        %v7126 = vld [vmem:[%s2290 + $0x60] sm:$0xe]
        %v7127 = vld [vmem:[%s2290 + $0x6c] sm:$0xe]
        %v7128 = vld [vmem:[%s2290 + $0x78] sm:$0xe]
        %v7129 = vld [vmem:[%s2290 + $0x84] sm:$0xe]
        %v7130 = vld [vmem:[%s2290 + $0x90] sm:$0xe]
        %v7131 = vld [vmem:[%s2290 + $0x9c] sm:$0xe]
        %v7132 = vld [vmem:[%s2290 + $0xa8] sm:$0xe]
        %v7133 = vld [vmem:[%s2290 + $0xb4] sm:$0xe]
        %v7182 = vrot.slane %v7118, 5
        %v7183 = vrot.slane %v7182, 4
        %v7184 = vrot.slane %v6687, 5
        %v7185 = vsel %vm1569, %v7183, %v7184
        %v7186 = vrot.slane %v7184, 4
        %v7187 = vrot.slane %v6718, 5
        %v7188 = vsel %vm1569, %v7186, %v7187
        %v7189 = vrot.slane %v7119, 5
        %v7190 = vrot.slane %v7189, 4
        %v7191 = vrot.slane %v6689, 5
        %v7192 = vsel %vm1569, %v7190, %v7191
        %v7193 = vrot.slane %v7191, 4
        %v7194 = vrot.slane %v6719, 5
        %v7195 = vsel %vm1569, %v7193, %v7194
        %v7196 = vrot.slane %v7120, 5
        %v7197 = vrot.slane %v7196, 4
        %v7198 = vrot.slane %v6691, 5
        %v7199 = vsel %vm1569, %v7197, %v7198
        %v7200 = vrot.slane %v7198, 4
        %v7201 = vrot.slane %v6720, 5
        %v7202 = vsel %vm1569, %v7200, %v7201
        %v7203 = vrot.slane %v7121, 5
        %v7204 = vrot.slane %v7203, 4
        %v7205 = vrot.slane %v6693, 5
        %v7206 = vsel %vm1569, %v7204, %v7205
        %v7207 = vrot.slane %v7205, 4
        %v7208 = vrot.slane %v6721, 5
        %v7209 = vsel %vm1569, %v7207, %v7208
        %v7210 = vrot.slane %v7122, 5
        %v7211 = vrot.slane %v7210, 4
        %v7212 = vrot.slane %v6695, 5
        %v7213 = vsel %vm1569, %v7211, %v7212
        %v7214 = vrot.slane %v7212, 4
        %v7215 = vrot.slane %v6722, 5
        %v7216 = vsel %vm1569, %v7214, %v7215
        %v7217 = vrot.slane %v7123, 5
        %v7218 = vrot.slane %v7217, 4
        %v7219 = vrot.slane %v6697, 5
        %v7220 = vsel %vm1569, %v7218, %v7219
        %v7221 = vrot.slane %v7219, 4
        %v7222 = vrot.slane %v6723, 5
        %v7223 = vsel %vm1569, %v7221, %v7222
        %v7224 = vrot.slane %v7124, 5
        %v7225 = vrot.slane %v7224, 4
        %v7226 = vrot.slane %v6699, 5
        %v7227 = vsel %vm1569, %v7225, %v7226
        %v7228 = vrot.slane %v7226, 4
        %v7229 = vrot.slane %v6724, 5
        %v7230 = vsel %vm1569, %v7228, %v7229
        %v7231 = vrot.slane %v7125, 5
        %v7232 = vrot.slane %v7231, 4
        %v7233 = vrot.slane %v6701, 5
        %v7234 = vsel %vm1569, %v7232, %v7233
        %v7235 = vrot.slane %v7233, 4
        %v7236 = vrot.slane %v6725, 5
        %v7237 = vsel %vm1569, %v7235, %v7236
        %v7238 = vrot.slane %v7126, 5
        %v7239 = vrot.slane %v7238, 4
        %v7240 = vrot.slane %v6703, 5
        %v7241 = vsel %vm1569, %v7239, %v7240
        %v7242 = vrot.slane %v7240, 4
        %v7243 = vrot.slane %v6726, 5
        %v7244 = vsel %vm1569, %v7242, %v7243
        %v7245 = vrot.slane %v7127, 5
        %v7246 = vrot.slane %v7245, 4
        %v7247 = vrot.slane %v6705, 5
        %v7248 = vsel %vm1569, %v7246, %v7247
        %v7249 = vrot.slane %v7247, 4
        %v7250 = vrot.slane %v6727, 5
        %v7251 = vsel %vm1569, %v7249, %v7250
        %v7252 = vrot.slane %v7128, 5
        %v7253 = vrot.slane %v7252, 4
        %v7254 = vrot.slane %v6707, 5
        %v7255 = vsel %vm1569, %v7253, %v7254
        %v7256 = vrot.slane %v7254, 4
        %v7257 = vrot.slane %v6728, 5
        %v7258 = vsel %vm1569, %v7256, %v7257
        %v7259 = vrot.slane %v7129, 5
        %v7260 = vrot.slane %v7259, 4
        %v7261 = vrot.slane %v6709, 5
        %v7262 = vsel %vm1569, %v7260, %v7261
        %v7263 = vrot.slane %v7261, 4
        %v7264 = vrot.slane %v6729, 5
        %v7265 = vsel %vm1569, %v7263, %v7264
        %v7266 = vrot.slane %v7130, 5
        %v7267 = vrot.slane %v7266, 4
        %v7268 = vrot.slane %v6711, 5
        %v7269 = vsel %vm1569, %v7267, %v7268
        %v7270 = vrot.slane %v7268, 4
        %v7271 = vrot.slane %v6730, 5
        %v7272 = vsel %vm1569, %v7270, %v7271
        %v7273 = vrot.slane %v7131, 5
        %v7274 = vrot.slane %v7273, 4
        %v7275 = vrot.slane %v6713, 5
        %v7276 = vsel %vm1569, %v7274, %v7275
        %v7277 = vrot.slane %v7275, 4
        %v7278 = vrot.slane %v6731, 5
        %v7279 = vsel %vm1569, %v7277, %v7278
        %v7280 = vrot.slane %v7132, 5
        %v7281 = vrot.slane %v7280, 4
        %v7282 = vrot.slane %v6715, 5
        %v7283 = vsel %vm1569, %v7281, %v7282
        %v7284 = vrot.slane %v7282, 4
        %v7285 = vrot.slane %v6732, 5
        %v7286 = vsel %vm1569, %v7284, %v7285
        %v7287 = vrot.slane %v7133, 5
        %v7288 = vrot.slane %v7287, 4
        %v7289 = vrot.slane %v6717, 5
        %v7290 = vsel %vm1569, %v7288, %v7289
        %v7291 = vrot.slane %v7289, 4
        %v7292 = vrot.slane %v6733, 5
        %v7293 = vsel %vm1569, %v7291, %v7292
        %v7310 = vunpack.c.l.b16 %v5470
        %v7311 = vunpack.c.l.b16 %v5471
        %v7312 = vunpack.c.l.b16 %v5472
        %v7313 = vunpack.c.l.b16 %v5473
        %v7314 = vunpack.c.l.b16 %v5474
        %v7315 = vunpack.c.l.b16 %v5475
        %v7316 = vunpack.c.l.b16 %v5476
        %v7317 = vunpack.c.l.b16 %v5477
        %v7318 = vunpack.c.l.b16 %v5478
        %v7319 = vunpack.c.l.b16 %v5479
        %v7320 = vunpack.c.l.b16 %v5480
        %v7321 = vunpack.c.l.b16 %v5481
        %v7322 = vunpack.c.l.b16 %v5482
        %v7323 = vunpack.c.l.b16 %v5483
        %v7324 = vunpack.c.l.b16 %v5484
        %v7325 = vunpack.c.l.b16 %v5485
        %v7326 = vunpack.c.l.b16 %v5486
        %v7327 = vunpack.c.l.b16 %v5487
        %v7328 = vunpack.c.l.b16 %v5488
        %v7329 = vunpack.c.l.b16 %v5489
        %v7330 = vunpack.c.l.b16 %v5490
        %v7331 = vunpack.c.l.b16 %v5491
        %v7332 = vunpack.c.l.b16 %v5492
        %v7333 = vunpack.c.l.b16 %v5493
        %v7334 = vunpack.c.l.b16 %v5494
        %v7335 = vunpack.c.l.b16 %v5495
        %v7336 = vunpack.c.l.b16 %v5496
        %v7337 = vunpack.c.l.b16 %v5497
        %v7338 = vunpack.c.l.b16 %v5498
        %v7339 = vunpack.c.l.b16 %v5499
        %v7340 = vunpack.c.l.b16 %v5500
        %v7341 = vunpack.c.l.b16 %v5501
        %v7342 = vpack.c.b16 %v7311, %v7310
        %v7343 = vpack.c.b16 %v7313, %v7312
        %v7344 = vpack.c.b16 %v7315, %v7314
        %v7345 = vpack.c.b16 %v7317, %v7316
        %v7346 = vpack.c.b16 %v7319, %v7318
        %v7347 = vpack.c.b16 %v7321, %v7320
        %v7348 = vpack.c.b16 %v7323, %v7322
        %v7349 = vpack.c.b16 %v7325, %v7324
        %v7350 = vpack.c.b16 %v7327, %v7326
        %v7351 = vpack.c.b16 %v7329, %v7328
        %v7352 = vpack.c.b16 %v7331, %v7330
        %v7353 = vpack.c.b16 %v7333, %v7332
        %v7354 = vpack.c.b16 %v7335, %v7334
        %v7355 = vpack.c.b16 %v7337, %v7336
        %v7356 = vpack.c.b16 %v7339, %v7338
        %v7357 = vpack.c.b16 %v7341, %v7340
        %v7374 = vunpack.c.l.b16 %v5531
        %v7375 = vunpack.c.l.b16 %v5541
        %v7376 = vunpack.c.l.b16 %v5555
        %v7377 = vunpack.c.l.b16 %v5565
        %v7378 = vunpack.c.l.b16 %v5579
        %v7379 = vunpack.c.l.b16 %v5589
        %v7380 = vunpack.c.l.b16 %v5603
        %v7381 = vunpack.c.l.b16 %v5613
        %v7382 = vunpack.c.l.b16 %v5627
        %v7383 = vunpack.c.l.b16 %v5637
        %v7384 = vunpack.c.l.b16 %v5651
        %v7385 = vunpack.c.l.b16 %v5661
        %v7386 = vunpack.c.l.b16 %v5675
        %v7387 = vunpack.c.l.b16 %v5685
        %v7388 = vunpack.c.l.b16 %v5699
        %v7389 = vunpack.c.l.b16 %v5709
        %v7390 = vunpack.c.l.b16 %v5723
        %v7391 = vunpack.c.l.b16 %v5733
        %v7392 = vunpack.c.l.b16 %v5747
        %v7393 = vunpack.c.l.b16 %v5757
        %v7394 = vunpack.c.l.b16 %v5771
        %v7395 = vunpack.c.l.b16 %v5781
        %v7396 = vunpack.c.l.b16 %v5795
        %v7397 = vunpack.c.l.b16 %v5805
        %v7398 = vunpack.c.l.b16 %v5819
        %v7399 = vunpack.c.l.b16 %v5829
        %v7400 = vunpack.c.l.b16 %v5843
        %v7401 = vunpack.c.l.b16 %v5853
        %v7402 = vunpack.c.l.b16 %v5867
        %v7403 = vunpack.c.l.b16 %v5877
        %v7404 = vunpack.c.l.b16 %v5891
        %v7405 = vunpack.c.l.b16 %v5901
        %v7406 = vpack.c.b16 %v7375, %v7374
        %v7407 = vpack.c.b16 %v7377, %v7376
        %v7408 = vpack.c.b16 %v7379, %v7378
        %v7409 = vpack.c.b16 %v7381, %v7380
        %v7410 = vpack.c.b16 %v7383, %v7382
        %v7411 = vpack.c.b16 %v7385, %v7384
        %v7412 = vpack.c.b16 %v7387, %v7386
        %v7413 = vpack.c.b16 %v7389, %v7388
        %v7414 = vpack.c.b16 %v7391, %v7390
        %v7415 = vpack.c.b16 %v7393, %v7392
        %v7416 = vpack.c.b16 %v7395, %v7394
        %v7417 = vpack.c.b16 %v7397, %v7396
        %v7418 = vpack.c.b16 %v7399, %v7398
        %v7419 = vpack.c.b16 %v7401, %v7400
        %v7420 = vpack.c.b16 %v7403, %v7402
        %v7421 = vpack.c.b16 %v7405, %v7404
        %v7438 = vunpack.c.l.b16 %v5969
        %v7439 = vunpack.c.l.b16 %v5972
        %v7440 = vunpack.c.l.b16 %v5976
        %v7441 = vunpack.c.l.b16 %v5979
        %v7442 = vunpack.c.l.b16 %v5983
        %v7443 = vunpack.c.l.b16 %v5986
        %v7444 = vunpack.c.l.b16 %v5990
        %v7445 = vunpack.c.l.b16 %v5993
        %v7446 = vunpack.c.l.b16 %v5997
        %v7447 = vunpack.c.l.b16 %v6000
        %v7448 = vunpack.c.l.b16 %v6004
        %v7449 = vunpack.c.l.b16 %v6007
        %v7450 = vunpack.c.l.b16 %v6011
        %v7451 = vunpack.c.l.b16 %v6014
        %v7452 = vunpack.c.l.b16 %v6018
        %v7453 = vunpack.c.l.b16 %v6021
        %v7454 = vunpack.c.l.b16 %v6025
        %v7455 = vunpack.c.l.b16 %v6028
        %v7456 = vunpack.c.l.b16 %v6032
        %v7457 = vunpack.c.l.b16 %v6035
        %v7458 = vunpack.c.l.b16 %v6039
        %v7459 = vunpack.c.l.b16 %v6042
        %v7460 = vunpack.c.l.b16 %v6046
        %v7461 = vunpack.c.l.b16 %v6049
        %v7462 = vunpack.c.l.b16 %v6053
        %v7463 = vunpack.c.l.b16 %v6056
        %v7464 = vunpack.c.l.b16 %v6060
        %v7465 = vunpack.c.l.b16 %v6063
        %v7466 = vunpack.c.l.b16 %v6067
        %v7467 = vunpack.c.l.b16 %v6070
        %v7468 = vunpack.c.l.b16 %v6074
        %v7469 = vunpack.c.l.b16 %v6077
        %v7470 = vpack.c.b16 %v7439, %v7438
        %v7471 = vpack.c.b16 %v7441, %v7440
        %v7472 = vpack.c.b16 %v7443, %v7442
        %v7473 = vpack.c.b16 %v7445, %v7444
        %v7474 = vpack.c.b16 %v7447, %v7446
        %v7475 = vpack.c.b16 %v7449, %v7448
        %v7476 = vpack.c.b16 %v7451, %v7450
        %v7477 = vpack.c.b16 %v7453, %v7452
        %v7478 = vpack.c.b16 %v7455, %v7454
        %v7479 = vpack.c.b16 %v7457, %v7456
        %v7480 = vpack.c.b16 %v7459, %v7458
        %v7481 = vpack.c.b16 %v7461, %v7460
        %v7482 = vpack.c.b16 %v7463, %v7462
        %v7483 = vpack.c.b16 %v7465, %v7464
        %v7484 = vpack.c.b16 %v7467, %v7466
        %v7485 = vpack.c.b16 %v7469, %v7468
        %v7518 = vunpack.c.l.b16 %v6078
        %v7519 = vunpack.c.l.b16 %v6079
        %v7520 = vunpack.c.l.b16 %v6080
        %v7521 = vunpack.c.l.b16 %v6081
        %v7522 = vunpack.c.l.b16 %v6082
        %v7523 = vunpack.c.l.b16 %v6083
        %v7524 = vunpack.c.l.b16 %v6084
        %v7525 = vunpack.c.l.b16 %v6085
        %v7526 = vunpack.c.l.b16 %v6086
        %v7527 = vunpack.c.l.b16 %v6087
        %v7528 = vunpack.c.l.b16 %v6088
        %v7529 = vunpack.c.l.b16 %v6089
        %v7530 = vunpack.c.l.b16 %v6090
        %v7531 = vunpack.c.l.b16 %v6091
        %v7532 = vunpack.c.l.b16 %v6092
        %v7533 = vunpack.c.l.b16 %v6093
        %v7534 = vunpack.c.l.b16 %v6094
        %v7535 = vunpack.c.l.b16 %v6095
        %v7536 = vunpack.c.l.b16 %v6096
        %v7537 = vunpack.c.l.b16 %v6097
        %v7538 = vunpack.c.l.b16 %v6098
        %v7539 = vunpack.c.l.b16 %v6099
        %v7540 = vunpack.c.l.b16 %v6100
        %v7541 = vunpack.c.l.b16 %v6101
        %v7542 = vunpack.c.l.b16 %v6102
        %v7543 = vunpack.c.l.b16 %v6103
        %v7544 = vunpack.c.l.b16 %v6104
        %v7545 = vunpack.c.l.b16 %v6105
        %v7546 = vunpack.c.l.b16 %v6106
        %v7547 = vunpack.c.l.b16 %v6107
        %v7548 = vunpack.c.l.b16 %v6108
        %v7549 = vunpack.c.l.b16 %v6109
        %v7550 = vpack.c.b16 %v7519, %v7518
        %v7551 = vpack.c.b16 %v7521, %v7520
        %v7552 = vpack.c.b16 %v7523, %v7522
        %v7553 = vpack.c.b16 %v7525, %v7524
        %v7554 = vpack.c.b16 %v7527, %v7526
        %v7555 = vpack.c.b16 %v7529, %v7528
        %v7556 = vpack.c.b16 %v7531, %v7530
        %v7557 = vpack.c.b16 %v7533, %v7532
        %v7558 = vpack.c.b16 %v7535, %v7534
        %v7559 = vpack.c.b16 %v7537, %v7536
        %v7560 = vpack.c.b16 %v7539, %v7538
        %v7561 = vpack.c.b16 %v7541, %v7540
        %v7562 = vpack.c.b16 %v7543, %v7542
        %v7563 = vpack.c.b16 %v7545, %v7544
        %v7564 = vpack.c.b16 %v7547, %v7546
        %v7565 = vpack.c.b16 %v7549, %v7548
        %v7582 = vunpack.c.l.b16 %v6139
        %v7583 = vunpack.c.l.b16 %v6149
        %v7584 = vunpack.c.l.b16 %v6163
        %v7585 = vunpack.c.l.b16 %v6173
        %v7586 = vunpack.c.l.b16 %v6187
        %v7587 = vunpack.c.l.b16 %v6197
        %v7588 = vunpack.c.l.b16 %v6211
        %v7589 = vunpack.c.l.b16 %v6221
        %v7590 = vunpack.c.l.b16 %v6235
        %v7591 = vunpack.c.l.b16 %v6245
        %v7592 = vunpack.c.l.b16 %v6259
        %v7593 = vunpack.c.l.b16 %v6269
        %v7594 = vunpack.c.l.b16 %v6283
        %v7595 = vunpack.c.l.b16 %v6293
        %v7596 = vunpack.c.l.b16 %v6307
        %v7597 = vunpack.c.l.b16 %v6317
        %v7598 = vunpack.c.l.b16 %v6331
        %v7599 = vunpack.c.l.b16 %v6341
        %v7600 = vunpack.c.l.b16 %v6355
        %v7601 = vunpack.c.l.b16 %v6365
        %v7602 = vunpack.c.l.b16 %v6379
        %v7603 = vunpack.c.l.b16 %v6389
        %v7604 = vunpack.c.l.b16 %v6403
        %v7605 = vunpack.c.l.b16 %v6413
        %v7606 = vunpack.c.l.b16 %v6427
        %v7607 = vunpack.c.l.b16 %v6437
        %v7608 = vunpack.c.l.b16 %v6451
        %v7609 = vunpack.c.l.b16 %v6461
        %v7610 = vunpack.c.l.b16 %v6475
        %v7611 = vunpack.c.l.b16 %v6485
        %v7612 = vunpack.c.l.b16 %v6499
        %v7613 = vunpack.c.l.b16 %v6509
        %v7614 = vpack.c.b16 %v7583, %v7582
        %v7615 = vpack.c.b16 %v7585, %v7584
        %v7616 = vpack.c.b16 %v7587, %v7586
        %v7617 = vpack.c.b16 %v7589, %v7588
        %v7618 = vpack.c.b16 %v7591, %v7590
        %v7619 = vpack.c.b16 %v7593, %v7592
        %v7620 = vpack.c.b16 %v7595, %v7594
        %v7621 = vpack.c.b16 %v7597, %v7596
        %v7622 = vpack.c.b16 %v7599, %v7598
        %v7623 = vpack.c.b16 %v7601, %v7600
        %v7624 = vpack.c.b16 %v7603, %v7602
        %v7625 = vpack.c.b16 %v7605, %v7604
        %v7626 = vpack.c.b16 %v7607, %v7606
        %v7627 = vpack.c.b16 %v7609, %v7608
        %v7628 = vpack.c.b16 %v7611, %v7610
        %v7629 = vpack.c.b16 %v7613, %v7612
        %v7646 = vunpack.c.l.b16 %v6577
        %v7647 = vunpack.c.l.b16 %v6580
        %v7648 = vunpack.c.l.b16 %v6584
        %v7649 = vunpack.c.l.b16 %v6587
        %v7650 = vunpack.c.l.b16 %v6591
        %v7651 = vunpack.c.l.b16 %v6594
        %v7652 = vunpack.c.l.b16 %v6598
        %v7653 = vunpack.c.l.b16 %v6601
        %v7654 = vunpack.c.l.b16 %v6605
        %v7655 = vunpack.c.l.b16 %v6608
        %v7656 = vunpack.c.l.b16 %v6612
        %v7657 = vunpack.c.l.b16 %v6615
        %v7658 = vunpack.c.l.b16 %v6619
        %v7659 = vunpack.c.l.b16 %v6622
        %v7660 = vunpack.c.l.b16 %v6626
        %v7661 = vunpack.c.l.b16 %v6629
        %v7662 = vunpack.c.l.b16 %v6633
        %v7663 = vunpack.c.l.b16 %v6636
        %v7664 = vunpack.c.l.b16 %v6640
        %v7665 = vunpack.c.l.b16 %v6643
        %v7666 = vunpack.c.l.b16 %v6647
        %v7667 = vunpack.c.l.b16 %v6650
        %v7668 = vunpack.c.l.b16 %v6654
        %v7669 = vunpack.c.l.b16 %v6657
        %v7670 = vunpack.c.l.b16 %v6661
        %v7671 = vunpack.c.l.b16 %v6664
        %v7672 = vunpack.c.l.b16 %v6668
        %v7673 = vunpack.c.l.b16 %v6671
        %v7674 = vunpack.c.l.b16 %v6675
        %v7675 = vunpack.c.l.b16 %v6678
        %v7676 = vunpack.c.l.b16 %v6682
        %v7677 = vunpack.c.l.b16 %v6685
        %v7678 = vpack.c.b16 %v7647, %v7646
        %v7679 = vpack.c.b16 %v7649, %v7648
        %v7680 = vpack.c.b16 %v7651, %v7650
        %v7681 = vpack.c.b16 %v7653, %v7652
        %v7682 = vpack.c.b16 %v7655, %v7654
        %v7683 = vpack.c.b16 %v7657, %v7656
        %v7684 = vpack.c.b16 %v7659, %v7658
        %v7685 = vpack.c.b16 %v7661, %v7660
        %v7686 = vpack.c.b16 %v7663, %v7662
        %v7687 = vpack.c.b16 %v7665, %v7664
        %v7688 = vpack.c.b16 %v7667, %v7666
        %v7689 = vpack.c.b16 %v7669, %v7668
        %v7690 = vpack.c.b16 %v7671, %v7670
        %v7691 = vpack.c.b16 %v7673, %v7672
        %v7692 = vpack.c.b16 %v7675, %v7674
        %v7693 = vpack.c.b16 %v7677, %v7676
        %v7726 = vunpack.c.l.b16 %v6686
        %v7727 = vunpack.c.l.b16 %v6687
        %v7728 = vunpack.c.l.b16 %v6688
        %v7729 = vunpack.c.l.b16 %v6689
        %v7730 = vunpack.c.l.b16 %v6690
        %v7731 = vunpack.c.l.b16 %v6691
        %v7732 = vunpack.c.l.b16 %v6692
        %v7733 = vunpack.c.l.b16 %v6693
        %v7734 = vunpack.c.l.b16 %v6694
        %v7735 = vunpack.c.l.b16 %v6695
        %v7736 = vunpack.c.l.b16 %v6696
        %v7737 = vunpack.c.l.b16 %v6697
        %v7738 = vunpack.c.l.b16 %v6698
        %v7739 = vunpack.c.l.b16 %v6699
        %v7740 = vunpack.c.l.b16 %v6700
        %v7741 = vunpack.c.l.b16 %v6701
        %v7742 = vunpack.c.l.b16 %v6702
        %v7743 = vunpack.c.l.b16 %v6703
        %v7744 = vunpack.c.l.b16 %v6704
        %v7745 = vunpack.c.l.b16 %v6705
        %v7746 = vunpack.c.l.b16 %v6706
        %v7747 = vunpack.c.l.b16 %v6707
        %v7748 = vunpack.c.l.b16 %v6708
        %v7749 = vunpack.c.l.b16 %v6709
        %v7750 = vunpack.c.l.b16 %v6710
        %v7751 = vunpack.c.l.b16 %v6711
        %v7752 = vunpack.c.l.b16 %v6712
        %v7753 = vunpack.c.l.b16 %v6713
        %v7754 = vunpack.c.l.b16 %v6714
        %v7755 = vunpack.c.l.b16 %v6715
        %v7756 = vunpack.c.l.b16 %v6716
        %v7757 = vunpack.c.l.b16 %v6717
        %v7758 = vpack.c.b16 %v7727, %v7726
        %v7759 = vpack.c.b16 %v7729, %v7728
        %v7760 = vpack.c.b16 %v7731, %v7730
        %v7761 = vpack.c.b16 %v7733, %v7732
        %v7762 = vpack.c.b16 %v7735, %v7734
        %v7763 = vpack.c.b16 %v7737, %v7736
        %v7764 = vpack.c.b16 %v7739, %v7738
        %v7765 = vpack.c.b16 %v7741, %v7740
        %v7766 = vpack.c.b16 %v7743, %v7742
        %v7767 = vpack.c.b16 %v7745, %v7744
        %v7768 = vpack.c.b16 %v7747, %v7746
        %v7769 = vpack.c.b16 %v7749, %v7748
        %v7770 = vpack.c.b16 %v7751, %v7750
        %v7771 = vpack.c.b16 %v7753, %v7752
        %v7772 = vpack.c.b16 %v7755, %v7754
        %v7773 = vpack.c.b16 %v7757, %v7756
        %v7790 = vunpack.c.l.b16 %v6747
        %v7791 = vunpack.c.l.b16 %v6757
        %v7792 = vunpack.c.l.b16 %v6771
        %v7793 = vunpack.c.l.b16 %v6781
        %v7794 = vunpack.c.l.b16 %v6795
        %v7795 = vunpack.c.l.b16 %v6805
        %v7796 = vunpack.c.l.b16 %v6819
        %v7797 = vunpack.c.l.b16 %v6829
        %v7798 = vunpack.c.l.b16 %v6843
        %v7799 = vunpack.c.l.b16 %v6853
        %v7800 = vunpack.c.l.b16 %v6867
        %v7801 = vunpack.c.l.b16 %v6877
        %v7802 = vunpack.c.l.b16 %v6891
        %v7803 = vunpack.c.l.b16 %v6901
        %v7804 = vunpack.c.l.b16 %v6915
        %v7805 = vunpack.c.l.b16 %v6925
        %v7806 = vunpack.c.l.b16 %v6939
        %v7807 = vunpack.c.l.b16 %v6949
        %v7808 = vunpack.c.l.b16 %v6963
        %v7809 = vunpack.c.l.b16 %v6973
        %v7810 = vunpack.c.l.b16 %v6987
        %v7811 = vunpack.c.l.b16 %v6997
        %v7812 = vunpack.c.l.b16 %v7011
        %v7813 = vunpack.c.l.b16 %v7021
        %v7814 = vunpack.c.l.b16 %v7035
        %v7815 = vunpack.c.l.b16 %v7045
        %v7816 = vunpack.c.l.b16 %v7059
        %v7817 = vunpack.c.l.b16 %v7069
        %v7818 = vunpack.c.l.b16 %v7083
        %v7819 = vunpack.c.l.b16 %v7093
        %v7820 = vunpack.c.l.b16 %v7107
        %v7821 = vunpack.c.l.b16 %v7117
        %v7822 = vpack.c.b16 %v7791, %v7790
        %v7823 = vpack.c.b16 %v7793, %v7792
        %v7824 = vpack.c.b16 %v7795, %v7794
        %v7825 = vpack.c.b16 %v7797, %v7796
        %v7826 = vpack.c.b16 %v7799, %v7798
        %v7827 = vpack.c.b16 %v7801, %v7800
        %v7828 = vpack.c.b16 %v7803, %v7802
        %v7829 = vpack.c.b16 %v7805, %v7804
        %v7830 = vpack.c.b16 %v7807, %v7806
        %v7831 = vpack.c.b16 %v7809, %v7808
        %v7832 = vpack.c.b16 %v7811, %v7810
        %v7833 = vpack.c.b16 %v7813, %v7812
        %v7834 = vpack.c.b16 %v7815, %v7814
        %v7835 = vpack.c.b16 %v7817, %v7816
        %v7836 = vpack.c.b16 %v7819, %v7818
        %v7837 = vpack.c.b16 %v7821, %v7820
        %v7854 = vunpack.c.l.b16 %v7185
        %v7855 = vunpack.c.l.b16 %v7188
        %v7856 = vunpack.c.l.b16 %v7192
        %v7857 = vunpack.c.l.b16 %v7195
        %v7858 = vunpack.c.l.b16 %v7199
        %v7859 = vunpack.c.l.b16 %v7202
        %v7860 = vunpack.c.l.b16 %v7206
        %v7861 = vunpack.c.l.b16 %v7209
        %v7862 = vunpack.c.l.b16 %v7213
        %v7863 = vunpack.c.l.b16 %v7216
        %v7864 = vunpack.c.l.b16 %v7220
        %v7865 = vunpack.c.l.b16 %v7223
        %v7866 = vunpack.c.l.b16 %v7227
        %v7867 = vunpack.c.l.b16 %v7230
        %v7868 = vunpack.c.l.b16 %v7234
        %v7869 = vunpack.c.l.b16 %v7237
        %v7870 = vunpack.c.l.b16 %v7241
        %v7871 = vunpack.c.l.b16 %v7244
        %v7872 = vunpack.c.l.b16 %v7248
        %v7873 = vunpack.c.l.b16 %v7251
        %v7874 = vunpack.c.l.b16 %v7255
        %v7875 = vunpack.c.l.b16 %v7258
        %v7876 = vunpack.c.l.b16 %v7262
        %v7877 = vunpack.c.l.b16 %v7265
        %v7878 = vunpack.c.l.b16 %v7269
        %v7879 = vunpack.c.l.b16 %v7272
        %v7880 = vunpack.c.l.b16 %v7276
        %v7881 = vunpack.c.l.b16 %v7279
        %v7882 = vunpack.c.l.b16 %v7283
        %v7883 = vunpack.c.l.b16 %v7286
        %v7884 = vunpack.c.l.b16 %v7290
        %v7885 = vunpack.c.l.b16 %v7293
        %v7886 = vpack.c.b16 %v7855, %v7854
        %v7887 = vpack.c.b16 %v7857, %v7856
        %v7888 = vpack.c.b16 %v7859, %v7858
        %v7889 = vpack.c.b16 %v7861, %v7860
        %v7890 = vpack.c.b16 %v7863, %v7862
        %v7891 = vpack.c.b16 %v7865, %v7864
        %v7892 = vpack.c.b16 %v7867, %v7866
        %v7893 = vpack.c.b16 %v7869, %v7868
        %v7894 = vpack.c.b16 %v7871, %v7870
        %v7895 = vpack.c.b16 %v7873, %v7872
        %v7896 = vpack.c.b16 %v7875, %v7874
        %v7897 = vpack.c.b16 %v7877, %v7876
        %v7898 = vpack.c.b16 %v7879, %v7878
        %v7899 = vpack.c.b16 %v7881, %v7880
        %v7900 = vpack.c.b16 %v7883, %v7882
        %v7901 = vpack.c.b16 %v7885, %v7884
        %v7918 = vld [vmem:[#allocation9] sm:$0xf]
        %v7919 = vld [vmem:[#allocation9 + $0x4] sm:$0xf]
        %v7920 = vld [vmem:[#allocation9 + $0x8] sm:$0xf]
        %v7921 = vld [vmem:[#allocation9 + $0xc] sm:$0xf]
        %v7922 = vld [vmem:[#allocation9 + $0x10] sm:$0xf]
        %v7923 = vld [vmem:[#allocation9 + $0x14] sm:$0xf]
        %v7924 = vld [vmem:[#allocation9 + $0x18] sm:$0xf]
        %v7925 = vld [vmem:[#allocation9 + $0x1c] sm:$0xf]
        %v7926 = vld [vmem:[#allocation9 + $0x20] sm:$0xf]
        %v7927 = vld [vmem:[#allocation9 + $0x24] sm:$0xf]
        %v7928 = vld [vmem:[#allocation9 + $0x28] sm:$0xf]
        %v7929 = vld [vmem:[#allocation9 + $0x2c] sm:$0xf]
        %v7930 = vld [vmem:[#allocation9 + $0x30] sm:$0xf]
        %v7931 = vld [vmem:[#allocation9 + $0x34] sm:$0xf]
        %v7932 = vld [vmem:[#allocation9 + $0x38] sm:$0xf]
        %v7933 = vld [vmem:[#allocation9 + $0x3c] sm:$0xf]
        %v7934 = vld [vmem:[#allocation9 + $0x40] sm:$0xf]
        %v7935 = vld [vmem:[#allocation9 + $0x44] sm:$0xf]
        %v7936 = vld [vmem:[#allocation9 + $0x48] sm:$0xf]
        %v7937 = vld [vmem:[#allocation9 + $0x4c] sm:$0xf]
        %v7938 = vld [vmem:[#allocation9 + $0x50] sm:$0xf]
        %v7939 = vld [vmem:[#allocation9 + $0x54] sm:$0xf]
        %v7940 = vld [vmem:[#allocation9 + $0x58] sm:$0xf]
        %v7941 = vld [vmem:[#allocation9 + $0x5c] sm:$0xf]
        %v7942 = vld [vmem:[#allocation9 + $0x60] sm:$0xf]
        %v7943 = vld [vmem:[#allocation9 + $0x64] sm:$0xf]
        %v7944 = vld [vmem:[#allocation9 + $0x68] sm:$0xf]
        %v7945 = vld [vmem:[#allocation9 + $0x6c] sm:$0xf]
        %v7946 = vld [vmem:[#allocation9 + $0x70] sm:$0xf]
        %v7947 = vld [vmem:[#allocation9 + $0x74] sm:$0xf]
        %v7948 = vld [vmem:[#allocation9 + $0x78] sm:$0xf]
        %v7949 = vld [vmem:[#allocation9 + $0x7c] sm:$0xf]
        %v7950 = vld [vmem:[#allocation9 + $0x80] sm:$0xf]
        %v7951 = vld [vmem:[#allocation9 + $0x84] sm:$0xf]
        %v7952 = vld [vmem:[#allocation9 + $0x88] sm:$0xf]
        %v7953 = vld [vmem:[#allocation9 + $0x8c] sm:$0xf]
        %v7954 = vld [vmem:[#allocation9 + $0x90] sm:$0xf]
        %v7955 = vld [vmem:[#allocation9 + $0x94] sm:$0xf]
        %v7956 = vld [vmem:[#allocation9 + $0x98] sm:$0xf]
        %v7957 = vld [vmem:[#allocation9 + $0x9c] sm:$0xf]
        %v7958 = vld [vmem:[#allocation9 + $0xa0] sm:$0xf]
        %v7959 = vld [vmem:[#allocation9 + $0xa4] sm:$0xf]
        %v7960 = vld [vmem:[#allocation9 + $0xa8] sm:$0xf]
        %v7961 = vld [vmem:[#allocation9 + $0xac] sm:$0xf]
        %v7962 = vld [vmem:[#allocation9 + $0xb0] sm:$0xf]
        %v7963 = vld [vmem:[#allocation9 + $0xb4] sm:$0xf]
        %v7964 = vld [vmem:[#allocation9 + $0xb8] sm:$0xf]
        %v7965 = vld [vmem:[#allocation9 + $0xbc] sm:$0xf]
        %v7966 = vld [vmem:[#allocation9 + $0xc0] sm:$0xf]
        %v7967 = vld [vmem:[#allocation9 + $0xc4] sm:$0xf]
        %v7968 = vld [vmem:[#allocation9 + $0xc8] sm:$0xf]
        %v7969 = vld [vmem:[#allocation9 + $0xcc] sm:$0xf]
        %v7970 = vld [vmem:[#allocation9 + $0xd0] sm:$0xf]
        %v7971 = vld [vmem:[#allocation9 + $0xd4] sm:$0xf]
        %v7972 = vld [vmem:[#allocation9 + $0xd8] sm:$0xf]
        %v7973 = vld [vmem:[#allocation9 + $0xdc] sm:$0xf]
        %v7974 = vld [vmem:[#allocation9 + $0xe0] sm:$0xf]
        %v7975 = vld [vmem:[#allocation9 + $0xe4] sm:$0xf]
        %v7976 = vld [vmem:[#allocation9 + $0xe8] sm:$0xf]
        %v7977 = vld [vmem:[#allocation9 + $0xec] sm:$0xf]
        %v7978 = vld [vmem:[#allocation9 + $0xf0] sm:$0xf]
        %v7979 = vld [vmem:[#allocation9 + $0xf4] sm:$0xf]
        %v7980 = vld [vmem:[#allocation9 + $0xf8] sm:$0xf]
        %v7981 = vld [vmem:[#allocation9 + $0xfc] sm:$0xf]
        %v7982 = vld [vmem:[#allocation9 + $0x100] sm:$0xf]
        %v7983 = vld [vmem:[#allocation9 + $0x104] sm:$0xf]
        %v7984 = vld [vmem:[#allocation9 + $0x108] sm:$0xf]
        %v7985 = vld [vmem:[#allocation9 + $0x10c] sm:$0xf]
        %v7986 = vld [vmem:[#allocation9 + $0x110] sm:$0xf]
        %v7987 = vld [vmem:[#allocation9 + $0x114] sm:$0xf]
        %v7988 = vld [vmem:[#allocation9 + $0x118] sm:$0xf]
        %v7989 = vld [vmem:[#allocation9 + $0x11c] sm:$0xf]
        %v7990 = vld [vmem:[#allocation9 + $0x120] sm:$0xf]
        %v7991 = vld [vmem:[#allocation9 + $0x124] sm:$0xf]
        %v7992 = vld [vmem:[#allocation9 + $0x128] sm:$0xf]
        %v7993 = vld [vmem:[#allocation9 + $0x12c] sm:$0xf]
        %v7994 = vld [vmem:[#allocation9 + $0x130] sm:$0xf]
        %v7995 = vld [vmem:[#allocation9 + $0x134] sm:$0xf]
        %v7996 = vld [vmem:[#allocation9 + $0x138] sm:$0xf]
        %v7997 = vld [vmem:[#allocation9 + $0x13c] sm:$0xf]
        %v7998 = vld [vmem:[#allocation9 + $0x140] sm:$0xf]
        %v7999 = vld [vmem:[#allocation9 + $0x144] sm:$0xf]
        %v8000 = vld [vmem:[#allocation9 + $0x148] sm:$0xf]
        %v8001 = vld [vmem:[#allocation9 + $0x14c] sm:$0xf]
        %v8002 = vld [vmem:[#allocation9 + $0x150] sm:$0xf]
        %v8003 = vld [vmem:[#allocation9 + $0x154] sm:$0xf]
        %v8004 = vld [vmem:[#allocation9 + $0x158] sm:$0xf]
        %v8005 = vld [vmem:[#allocation9 + $0x15c] sm:$0xf]
        %v8006 = vld [vmem:[#allocation9 + $0x160] sm:$0xf]
        %v8007 = vld [vmem:[#allocation9 + $0x164] sm:$0xf]
        %v8008 = vld [vmem:[#allocation9 + $0x168] sm:$0xf]
        %v8009 = vld [vmem:[#allocation9 + $0x16c] sm:$0xf]
        %v8010 = vld [vmem:[#allocation9 + $0x170] sm:$0xf]
        %v8011 = vld [vmem:[#allocation9 + $0x174] sm:$0xf]
        %v8012 = vld [vmem:[#allocation9 + $0x178] sm:$0xf]
        %v8013 = vld [vmem:[#allocation9 + $0x17c] sm:$0xf]
        %v8014 = vld [vmem:[#allocation9 + $0x180] sm:$0xf]
        %v8015 = vld [vmem:[#allocation9 + $0x184] sm:$0xf]
        %v8016 = vld [vmem:[#allocation9 + $0x188] sm:$0xf]
        %v8017 = vld [vmem:[#allocation9 + $0x18c] sm:$0xf]
        %v8018 = vld [vmem:[#allocation9 + $0x190] sm:$0xf]
        %v8019 = vld [vmem:[#allocation9 + $0x194] sm:$0xf]
        %v8020 = vld [vmem:[#allocation9 + $0x198] sm:$0xf]
        %v8021 = vld [vmem:[#allocation9 + $0x19c] sm:$0xf]
        %v8022 = vld [vmem:[#allocation9 + $0x1a0] sm:$0xf]
        %v8023 = vld [vmem:[#allocation9 + $0x1a4] sm:$0xf]
        %v8024 = vld [vmem:[#allocation9 + $0x1a8] sm:$0xf]
        %v8025 = vld [vmem:[#allocation9 + $0x1ac] sm:$0xf]
        %v8026 = vld [vmem:[#allocation9 + $0x1b0] sm:$0xf]
        %v8027 = vld [vmem:[#allocation9 + $0x1b4] sm:$0xf]
        %v8028 = vld [vmem:[#allocation9 + $0x1b8] sm:$0xf]
        %v8029 = vld [vmem:[#allocation9 + $0x1bc] sm:$0xf]
        %v8030 = vld [vmem:[#allocation9 + $0x1c0] sm:$0xf]
        %v8031 = vld [vmem:[#allocation9 + $0x1c4] sm:$0xf]
        %v8032 = vld [vmem:[#allocation9 + $0x1c8] sm:$0xf]
        %v8033 = vld [vmem:[#allocation9 + $0x1cc] sm:$0xf]
        %v8034 = vld [vmem:[#allocation9 + $0x1d0] sm:$0xf]
        %v8035 = vld [vmem:[#allocation9 + $0x1d4] sm:$0xf]
        %v8036 = vld [vmem:[#allocation9 + $0x1d8] sm:$0xf]
        %v8037 = vld [vmem:[#allocation9 + $0x1dc] sm:$0xf]
        %v8038 = vld [vmem:[#allocation9 + $0x1e0] sm:$0xf]
        %v8039 = vld [vmem:[#allocation9 + $0x1e4] sm:$0xf]
        %v8040 = vld [vmem:[#allocation9 + $0x1e8] sm:$0xf]
        %v8041 = vld [vmem:[#allocation9 + $0x1ec] sm:$0xf]
        %v8042 = vld [vmem:[#allocation9 + $0x1f0] sm:$0xf]
        %v8043 = vld [vmem:[#allocation9 + $0x1f4] sm:$0xf]
        %v8044 = vld [vmem:[#allocation9 + $0x1f8] sm:$0xf]
        %v8045 = vld [vmem:[#allocation9 + $0x1fc] sm:$0xf]
        %v8046 = vld [vmem:[#allocation9 + $0x200] sm:$0xf]
        %v8047 = vld [vmem:[#allocation9 + $0x204] sm:$0xf]
        %v8048 = vld [vmem:[#allocation9 + $0x208] sm:$0xf]
        %v8049 = vld [vmem:[#allocation9 + $0x20c] sm:$0xf]
        %v8050 = vld [vmem:[#allocation9 + $0x210] sm:$0xf]
        %v8051 = vld [vmem:[#allocation9 + $0x214] sm:$0xf]
        %v8052 = vld [vmem:[#allocation9 + $0x218] sm:$0xf]
        %v8053 = vld [vmem:[#allocation9 + $0x21c] sm:$0xf]
        %v8054 = vld [vmem:[#allocation9 + $0x220] sm:$0xf]
        %v8055 = vld [vmem:[#allocation9 + $0x224] sm:$0xf]
        %v8056 = vld [vmem:[#allocation9 + $0x228] sm:$0xf]
        %v8057 = vld [vmem:[#allocation9 + $0x22c] sm:$0xf]
        %v8058 = vld [vmem:[#allocation9 + $0x230] sm:$0xf]
        %v8059 = vld [vmem:[#allocation9 + $0x234] sm:$0xf]
        %v8060 = vld [vmem:[#allocation9 + $0x238] sm:$0xf]
        %v8061 = vld [vmem:[#allocation9 + $0x23c] sm:$0xf]
        %v8062 = vld [vmem:[%s4] sm:$0x1]
        %v8064 = vlaneseq
        %v8065 = vshrl.u32 %v8064, 7
        %v8066 = vsub.s32 0, %v8065
        %v8067 = vrot.slane %v8062, %v8066
        %v8213 = vunpack.c.l.b16 %v7918
        %v8214 = vunpack.c.l.b16 %v7919
        %v8215 = vunpack.c.l.b16 %v7920
        %v8216 = vunpack.c.l.b16 %v7921
        %v8217 = vunpack.c.l.b16 %v7922
        %v8218 = vunpack.c.l.b16 %v7923
        %v8219 = vunpack.c.l.b16 %v7924
        %v8220 = vunpack.c.l.b16 %v7925
        %v8221 = vunpack.c.l.b16 %v7926
        %v8222 = vunpack.c.l.b16 %v7927
        %v8223 = vunpack.c.l.b16 %v7928
        %v8224 = vunpack.c.l.b16 %v7929
        %v8225 = vunpack.c.l.b16 %v7930
        %v8226 = vunpack.c.l.b16 %v7931
        %v8227 = vunpack.c.l.b16 %v7932
        %v8228 = vunpack.c.l.b16 %v7933
        %v8229 = vunpack.c.l.b16 %v7934
        %v8230 = vunpack.c.l.b16 %v7935
        %v8231 = vunpack.c.l.b16 %v7936
        %v8232 = vunpack.c.l.b16 %v7937
        %v8233 = vunpack.c.l.b16 %v7938
        %v8234 = vunpack.c.l.b16 %v7939
        %v8235 = vunpack.c.l.b16 %v7940
        %v8236 = vunpack.c.l.b16 %v7941
        %v8237 = vunpack.c.l.b16 %v7942
        %v8238 = vunpack.c.l.b16 %v7943
        %v8239 = vunpack.c.l.b16 %v7944
        %v8240 = vunpack.c.l.b16 %v7945
        %v8241 = vunpack.c.l.b16 %v7946
        %v8242 = vunpack.c.l.b16 %v7947
        %v8243 = vunpack.c.l.b16 %v7948
        %v8244 = vunpack.c.l.b16 %v7949
        %v8245 = vunpack.c.l.b16 %v7950
        %v8246 = vunpack.c.l.b16 %v7951
        %v8247 = vunpack.c.l.b16 %v7952
        %v8248 = vunpack.c.l.b16 %v7953
        %v8249 = vunpack.c.l.b16 %v7954
        %v8250 = vunpack.c.l.b16 %v7955
        %v8251 = vunpack.c.l.b16 %v7956
        %v8252 = vunpack.c.l.b16 %v7957
        %v8253 = vunpack.c.l.b16 %v7958
        %v8254 = vunpack.c.l.b16 %v7959
        %v8255 = vunpack.c.l.b16 %v7960
        %v8256 = vunpack.c.l.b16 %v7961
        %v8257 = vunpack.c.l.b16 %v7962
        %v8258 = vunpack.c.l.b16 %v7963
        %v8259 = vunpack.c.l.b16 %v7964
        %v8260 = vunpack.c.l.b16 %v7965
        %v8261 = vunpack.c.l.b16 %v7966
        %v8262 = vunpack.c.l.b16 %v7967
        %v8263 = vunpack.c.l.b16 %v7968
        %v8264 = vunpack.c.l.b16 %v7969
        %v8265 = vunpack.c.l.b16 %v7970
        %v8266 = vunpack.c.l.b16 %v7971
        %v8267 = vunpack.c.l.b16 %v7972
        %v8268 = vunpack.c.l.b16 %v7973
        %v8269 = vunpack.c.l.b16 %v7974
        %v8270 = vunpack.c.l.b16 %v7975
        %v8271 = vunpack.c.l.b16 %v7976
        %v8272 = vunpack.c.l.b16 %v7977
        %v8273 = vunpack.c.l.b16 %v7978
        %v8274 = vunpack.c.l.b16 %v7979
        %v8275 = vunpack.c.l.b16 %v7980
        %v8276 = vunpack.c.l.b16 %v7981
        %v8277 = vunpack.c.l.b16 %v7982
        %v8278 = vunpack.c.l.b16 %v7983
        %v8279 = vunpack.c.l.b16 %v7984
        %v8280 = vunpack.c.l.b16 %v7985
        %v8281 = vunpack.c.l.b16 %v7986
        %v8282 = vunpack.c.l.b16 %v7987
        %v8283 = vunpack.c.l.b16 %v7988
        %v8284 = vunpack.c.l.b16 %v7989
        %v8285 = vunpack.c.l.b16 %v7990
        %v8286 = vunpack.c.l.b16 %v7991
        %v8287 = vunpack.c.l.b16 %v7992
        %v8288 = vunpack.c.l.b16 %v7993
        %v8289 = vunpack.c.l.b16 %v7994
        %v8290 = vunpack.c.l.b16 %v7995
        %v8291 = vunpack.c.l.b16 %v7996
        %v8292 = vunpack.c.l.b16 %v7997
        %v8293 = vunpack.c.l.b16 %v7998
        %v8294 = vunpack.c.l.b16 %v7999
        %v8295 = vunpack.c.l.b16 %v8000
        %v8296 = vunpack.c.l.b16 %v8001
        %v8297 = vunpack.c.l.b16 %v8002
        %v8298 = vunpack.c.l.b16 %v8003
        %v8299 = vunpack.c.l.b16 %v8004
        %v8300 = vunpack.c.l.b16 %v8005
        %v8301 = vunpack.c.l.b16 %v8006
        %v8302 = vunpack.c.l.b16 %v8007
        %v8303 = vunpack.c.l.b16 %v8008
        %v8304 = vunpack.c.l.b16 %v8009
        %v8305 = vunpack.c.l.b16 %v8010
        %v8306 = vunpack.c.l.b16 %v8011
        %v8307 = vunpack.c.l.b16 %v8012
        %v8308 = vunpack.c.l.b16 %v8013
        %v8309 = vunpack.c.l.b16 %v8014
        %v8310 = vunpack.c.l.b16 %v8015
        %v8311 = vunpack.c.l.b16 %v8016
        %v8312 = vunpack.c.l.b16 %v8017
        %v8313 = vunpack.c.l.b16 %v8018
        %v8314 = vunpack.c.l.b16 %v8019
        %v8315 = vunpack.c.l.b16 %v8020
        %v8316 = vunpack.c.l.b16 %v8021
        %v8317 = vunpack.c.l.b16 %v8022
        %v8318 = vunpack.c.l.b16 %v8023
        %v8319 = vunpack.c.l.b16 %v8024
        %v8320 = vunpack.c.l.b16 %v8025
        %v8321 = vunpack.c.l.b16 %v8026
        %v8322 = vunpack.c.l.b16 %v8027
        %v8323 = vunpack.c.l.b16 %v8028
        %v8324 = vunpack.c.l.b16 %v8029
        %v8325 = vunpack.c.l.b16 %v8030
        %v8326 = vunpack.c.l.b16 %v8031
        %v8327 = vunpack.c.l.b16 %v8032
        %v8328 = vunpack.c.l.b16 %v8033
        %v8329 = vunpack.c.l.b16 %v8034
        %v8330 = vunpack.c.l.b16 %v8035
        %v8331 = vunpack.c.l.b16 %v8036
        %v8332 = vunpack.c.l.b16 %v8037
        %v8333 = vunpack.c.l.b16 %v8038
        %v8334 = vunpack.c.l.b16 %v8039
        %v8335 = vunpack.c.l.b16 %v8040
        %v8336 = vunpack.c.l.b16 %v8041
        %v8337 = vunpack.c.l.b16 %v8042
        %v8338 = vunpack.c.l.b16 %v8043
        %v8339 = vunpack.c.l.b16 %v8044
        %v8340 = vunpack.c.l.b16 %v8045
        %v8341 = vunpack.c.l.b16 %v8046
        %v8342 = vunpack.c.l.b16 %v8047
        %v8343 = vunpack.c.l.b16 %v8048
        %v8344 = vunpack.c.l.b16 %v8049
        %v8345 = vunpack.c.l.b16 %v8050
        %v8346 = vunpack.c.l.b16 %v8051
        %v8347 = vunpack.c.l.b16 %v8052
        %v8348 = vunpack.c.l.b16 %v8053
        %v8349 = vunpack.c.l.b16 %v8054
        %v8350 = vunpack.c.l.b16 %v8055
        %v8351 = vunpack.c.l.b16 %v8056
        %v8352 = vunpack.c.l.b16 %v8057
        %v8353 = vunpack.c.l.b16 %v8058
        %v8354 = vunpack.c.l.b16 %v8059
        %v8355 = vunpack.c.l.b16 %v8060
        %v8356 = vunpack.c.l.b16 %v8061
        %v8357 = vpack.c.b16 %v8214, %v8213
        %v8358 = vpack.c.b16 %v8216, %v8215
        %v8359 = vpack.c.b16 %v8218, %v8217
        %v8360 = vpack.c.b16 %v8220, %v8219
        %v8361 = vpack.c.b16 %v8222, %v8221
        %v8362 = vpack.c.b16 %v8224, %v8223
        %v8363 = vpack.c.b16 %v8226, %v8225
        %v8364 = vpack.c.b16 %v8228, %v8227
        %v8365 = vpack.c.b16 %v8230, %v8229
        %v8366 = vpack.c.b16 %v8232, %v8231
        %v8367 = vpack.c.b16 %v8234, %v8233
        %v8368 = vpack.c.b16 %v8236, %v8235
        %v8369 = vpack.c.b16 %v8238, %v8237
        %v8370 = vpack.c.b16 %v8240, %v8239
        %v8371 = vpack.c.b16 %v8242, %v8241
        %v8372 = vpack.c.b16 %v8244, %v8243
        %v8373 = vpack.c.b16 %v8246, %v8245
        %v8374 = vpack.c.b16 %v8248, %v8247
        %v8375 = vpack.c.b16 %v8250, %v8249
        %v8376 = vpack.c.b16 %v8252, %v8251
        %v8377 = vpack.c.b16 %v8254, %v8253
        %v8378 = vpack.c.b16 %v8256, %v8255
        %v8379 = vpack.c.b16 %v8258, %v8257
        %v8380 = vpack.c.b16 %v8260, %v8259
        %v8381 = vpack.c.b16 %v8262, %v8261
        %v8382 = vpack.c.b16 %v8264, %v8263
        %v8383 = vpack.c.b16 %v8266, %v8265
        %v8384 = vpack.c.b16 %v8268, %v8267
        %v8385 = vpack.c.b16 %v8270, %v8269
        %v8386 = vpack.c.b16 %v8272, %v8271
        %v8387 = vpack.c.b16 %v8274, %v8273
        %v8388 = vpack.c.b16 %v8276, %v8275
        %v8389 = vpack.c.b16 %v8278, %v8277
        %v8390 = vpack.c.b16 %v8280, %v8279
        %v8391 = vpack.c.b16 %v8282, %v8281
        %v8392 = vpack.c.b16 %v8284, %v8283
        %v8393 = vpack.c.b16 %v8286, %v8285
        %v8394 = vpack.c.b16 %v8288, %v8287
        %v8395 = vpack.c.b16 %v8290, %v8289
        %v8396 = vpack.c.b16 %v8292, %v8291
        %v8397 = vpack.c.b16 %v8294, %v8293
        %v8398 = vpack.c.b16 %v8296, %v8295
        %v8399 = vpack.c.b16 %v8298, %v8297
        %v8400 = vpack.c.b16 %v8300, %v8299
        %v8401 = vpack.c.b16 %v8302, %v8301
        %v8402 = vpack.c.b16 %v8304, %v8303
        %v8403 = vpack.c.b16 %v8306, %v8305
        %v8404 = vpack.c.b16 %v8308, %v8307
        %v8405 = vpack.c.b16 %v8310, %v8309
        %v8406 = vpack.c.b16 %v8312, %v8311
        %v8407 = vpack.c.b16 %v8314, %v8313
        %v8408 = vpack.c.b16 %v8316, %v8315
        %v8409 = vpack.c.b16 %v8318, %v8317
        %v8410 = vpack.c.b16 %v8320, %v8319
        %v8411 = vpack.c.b16 %v8322, %v8321
        %v8412 = vpack.c.b16 %v8324, %v8323
        %v8413 = vpack.c.b16 %v8326, %v8325
        %v8414 = vpack.c.b16 %v8328, %v8327
        %v8415 = vpack.c.b16 %v8330, %v8329
        %v8416 = vpack.c.b16 %v8332, %v8331
        %v8417 = vpack.c.b16 %v8334, %v8333
        %v8418 = vpack.c.b16 %v8336, %v8335
        %v8419 = vpack.c.b16 %v8338, %v8337
        %v8420 = vpack.c.b16 %v8340, %v8339
        %v8421 = vpack.c.b16 %v8342, %v8341
        %v8422 = vpack.c.b16 %v8344, %v8343
        %v8423 = vpack.c.b16 %v8346, %v8345
        %v8424 = vpack.c.b16 %v8348, %v8347
        %v8425 = vpack.c.b16 %v8350, %v8349
        %v8426 = vpack.c.b16 %v8352, %v8351
        %v8427 = vpack.c.b16 %v8354, %v8353
        %v8428 = vpack.c.b16 %v8356, %v8355
        %8501 = vmatprep.subr.bf16.mxu0 0
        %8502 = vmatpush1.bf16.msra.mxu0 %v8364
        %8503 = vmatprep.subr.bf16.mxu0 0
        %8504 = vmatpush1.bf16.msra.mxu0 %v8363
        %8505 = vmatprep.subr.bf16.mxu0 0
        %8506 = vmatpush1.bf16.msra.mxu0 %v8362
        %8507 = vmatprep.subr.bf16.mxu0 0
        %8508 = vmatpush1.bf16.msra.mxu0 %v8361
        %8509 = vmatprep.subr.bf16.mxu0 0
        %8510 = vmatpush1.bf16.msra.mxu0 %v8360
        %8511 = vmatprep.subr.bf16.mxu0 0
        %8512 = vmatpush1.bf16.msra.mxu0 %v8359
        %8513 = vmatprep.subr.bf16.mxu0 0
        %8514 = vmatpush1.bf16.msra.mxu0 %v8358
        %8515 = vmatprep.subr.bf16.mxu0 0
        %8516 = vmatpush1.bf16.msra.mxu0 %v8357
        %8517 = vmatprep.subr.bf16.mxu0 0
        %8518 = vmatpush2.bf16.msra.mxu0 %v8372
        %8519 = vmatprep.subr.bf16.mxu0 0
        %8520 = vmatpush2.bf16.msra.mxu0 %v8371
        %8521 = vmatprep.subr.bf16.mxu0 0
        %8522 = vmatpush2.bf16.msra.mxu0 %v8370
        %8523 = vmatprep.subr.bf16.mxu0 0
        %8524 = vmatpush2.bf16.msra.mxu0 %v8369
        %8525 = vmatprep.subr.bf16.mxu0 0
        %8526 = vmatpush2.bf16.msra.mxu0 %v8368
        %8527 = vmatprep.subr.bf16.mxu0 0
        %8528 = vmatpush2.bf16.msra.mxu0 %v8367
        %8529 = vmatprep.subr.bf16.mxu0 0
        %8530 = vmatpush2.bf16.msra.mxu0 %v8366
        %8531 = vmatprep.subr.bf16.mxu0 0
        %8532 = vmatpush2.bf16.msra.mxu0 %v8365
        %8533 = vmatprep.mubr.bf16.mxu0 %v7406
        %8534 = vmatmul.mubr.bf16.gmra.mxu0 %v7342
        %v8535 = vpop.f32.mrf.mxu0
        %v8536 = vadd.f32 %v8067, %v8535
        %v8537 = vpop.f32.mrf.mxu0
        %v8538 = vpop.f32.mrf.mxu0
        %v8539 = vadd.f32 %v8067, %v8538
        %v8540 = vpop.f32.mrf.mxu0
        %8541 = vmatprep.mubr.bf16.mxu0 %v7407
        %8542 = vmatmul.mubr.bf16.gmra.mxu0 %v7343
        %v8543 = vpop.f32.mrf.mxu0
        %v8544 = vadd.f32 %v8067, %v8543
        %v8545 = vpop.f32.mrf.mxu0
        %v8546 = vpop.f32.mrf.mxu0
        %v8547 = vadd.f32 %v8067, %v8546
        %v8548 = vpop.f32.mrf.mxu0
        %8549 = vmatprep.mubr.bf16.mxu0 %v7408
        %8550 = vmatmul.mubr.bf16.gmra.mxu0 %v7344
        %v8551 = vpop.f32.mrf.mxu0
        %v8552 = vadd.f32 %v8067, %v8551
        %v8553 = vpop.f32.mrf.mxu0
        %v8554 = vpop.f32.mrf.mxu0
        %v8555 = vadd.f32 %v8067, %v8554
        %v8556 = vpop.f32.mrf.mxu0
        %8557 = vmatprep.mubr.bf16.mxu0 %v7409
        %8558 = vmatmul.mubr.bf16.gmra.mxu0 %v7345
        %v8559 = vpop.f32.mrf.mxu0
        %v8560 = vadd.f32 %v8067, %v8559
        %v8561 = vpop.f32.mrf.mxu0
        %v8562 = vpop.f32.mrf.mxu0
        %v8563 = vadd.f32 %v8067, %v8562
        %v8564 = vpop.f32.mrf.mxu0
        %8565 = vmatprep.mubr.bf16.mxu0 %v7410
        %8566 = vmatmul.mubr.bf16.gmra.mxu0 %v7346
        %v8567 = vpop.f32.mrf.mxu0
        %v8568 = vadd.f32 %v8067, %v8567
        %v8569 = vpop.f32.mrf.mxu0
        %v8570 = vpop.f32.mrf.mxu0
        %v8571 = vadd.f32 %v8067, %v8570
        %v8572 = vpop.f32.mrf.mxu0
        %8573 = vmatprep.mubr.bf16.mxu0 %v7411
        %8574 = vmatmul.mubr.bf16.gmra.mxu0 %v7347
        %v8575 = vpop.f32.mrf.mxu0
        %v8576 = vadd.f32 %v8067, %v8575
        %v8577 = vpop.f32.mrf.mxu0
        %v8578 = vpop.f32.mrf.mxu0
        %v8579 = vadd.f32 %v8067, %v8578
        %v8580 = vpop.f32.mrf.mxu0
        %8581 = vmatprep.mubr.bf16.mxu0 %v7412
        %8582 = vmatmul.mubr.bf16.gmra.mxu0 %v7348
        %v8583 = vpop.f32.mrf.mxu0
        %v8584 = vadd.f32 %v8067, %v8583
        %v8585 = vpop.f32.mrf.mxu0
        %v8586 = vpop.f32.mrf.mxu0
        %v8587 = vadd.f32 %v8067, %v8586
        %v8588 = vpop.f32.mrf.mxu0
        %8589 = vmatprep.mubr.bf16.mxu0 %v7413
        %8590 = vmatmul.mubr.bf16.gmra.mxu0 %v7349
        %v8591 = vpop.f32.mrf.mxu0
        %v8592 = vadd.f32 %v8067, %v8591
        %v8593 = vpop.f32.mrf.mxu0
        %v8594 = vpop.f32.mrf.mxu0
        %v8595 = vadd.f32 %v8067, %v8594
        %v8596 = vpop.f32.mrf.mxu0
        %8597 = vmatprep.mubr.bf16.mxu0 %v7414
        %8598 = vmatmul.mubr.bf16.gmra.mxu0 %v7350
        %v8599 = vpop.f32.mrf.mxu0
        %v8600 = vadd.f32 %v8067, %v8599
        %v8601 = vpop.f32.mrf.mxu0
        %v8602 = vpop.f32.mrf.mxu0
        %v8603 = vadd.f32 %v8067, %v8602
        %v8604 = vpop.f32.mrf.mxu0
        %8605 = vmatprep.mubr.bf16.mxu0 %v7415
        %8606 = vmatmul.mubr.bf16.gmra.mxu0 %v7351
        %v8607 = vpop.f32.mrf.mxu0
        %v8608 = vadd.f32 %v8067, %v8607
        %v8609 = vpop.f32.mrf.mxu0
        %v8610 = vpop.f32.mrf.mxu0
        %v8611 = vadd.f32 %v8067, %v8610
        %v8612 = vpop.f32.mrf.mxu0
        %8613 = vmatprep.mubr.bf16.mxu0 %v7416
        %8614 = vmatmul.mubr.bf16.gmra.mxu0 %v7352
        %v8615 = vpop.f32.mrf.mxu0
        %v8616 = vadd.f32 %v8067, %v8615
        %v8617 = vpop.f32.mrf.mxu0
        %v8618 = vpop.f32.mrf.mxu0
        %v8619 = vadd.f32 %v8067, %v8618
        %v8620 = vpop.f32.mrf.mxu0
        %8621 = vmatprep.mubr.bf16.mxu0 %v7417
        %8622 = vmatmul.mubr.bf16.gmra.mxu0 %v7353
        %v8623 = vpop.f32.mrf.mxu0
        %v8624 = vadd.f32 %v8067, %v8623
        %v8625 = vpop.f32.mrf.mxu0
        %v8626 = vpop.f32.mrf.mxu0
        %v8627 = vadd.f32 %v8067, %v8626
        %v8628 = vpop.f32.mrf.mxu0
        %8629 = vmatprep.mubr.bf16.mxu0 %v7418
        %8630 = vmatmul.mubr.bf16.gmra.mxu0 %v7354
        %v8631 = vpop.f32.mrf.mxu0
        %v8632 = vadd.f32 %v8067, %v8631
        %v8633 = vpop.f32.mrf.mxu0
        %v8634 = vpop.f32.mrf.mxu0
        %v8635 = vadd.f32 %v8067, %v8634
        %v8636 = vpop.f32.mrf.mxu0
        %8637 = vmatprep.mubr.bf16.mxu0 %v7419
        %8638 = vmatmul.mubr.bf16.gmra.mxu0 %v7355
        %v8639 = vpop.f32.mrf.mxu0
        %v8640 = vadd.f32 %v8067, %v8639
        %v8641 = vpop.f32.mrf.mxu0
        %v8642 = vpop.f32.mrf.mxu0
        %v8643 = vadd.f32 %v8067, %v8642
        %v8644 = vpop.f32.mrf.mxu0
        %8645 = vmatprep.mubr.bf16.mxu0 %v7420
        %8646 = vmatmul.mubr.bf16.gmra.mxu0 %v7356
        %v8647 = vpop.f32.mrf.mxu0
        %v8648 = vadd.f32 %v8067, %v8647
        %v8649 = vpop.f32.mrf.mxu0
        %v8650 = vpop.f32.mrf.mxu0
        %v8651 = vadd.f32 %v8067, %v8650
        %v8652 = vpop.f32.mrf.mxu0
        %8653 = vmatprep.mubr.bf16.mxu0 %v7421
        %8654 = vmatmul.mubr.bf16.gmra.mxu0 %v7357
        %v8655 = vpop.f32.mrf.mxu0
        %v8656 = vadd.f32 %v8067, %v8655
        %v8657 = vpop.f32.mrf.mxu0
        %v8658 = vpop.f32.mrf.mxu0
        %v8659 = vadd.f32 %v8067, %v8658
        %v8660 = vpop.f32.mrf.mxu0
        %8661 = vdwg.mxu0
        %8662 = vmatprep.subr.bf16.mxu0 0
        %8663 = vmatpush1.bf16.msra.mxu0 %v8380
        %8664 = vmatprep.subr.bf16.mxu0 0
        %8665 = vmatpush1.bf16.msra.mxu0 %v8379
        %8666 = vmatprep.subr.bf16.mxu0 0
        %8667 = vmatpush1.bf16.msra.mxu0 %v8378
        %8668 = vmatprep.subr.bf16.mxu0 0
        %8669 = vmatpush1.bf16.msra.mxu0 %v8377
        %8670 = vmatprep.subr.bf16.mxu0 0
        %8671 = vmatpush1.bf16.msra.mxu0 %v8376
        %8672 = vmatprep.subr.bf16.mxu0 0
        %8673 = vmatpush1.bf16.msra.mxu0 %v8375
        %8674 = vmatprep.subr.bf16.mxu0 0
        %8675 = vmatpush1.bf16.msra.mxu0 %v8374
        %8676 = vmatprep.subr.bf16.mxu0 0
        %8677 = vmatpush1.bf16.msra.mxu0 %v8373
        %8678 = vmatprep.subr.bf16.mxu0 0
        %8679 = vmatpush2.bf16.msra.mxu0 %v8388
        %8680 = vmatprep.subr.bf16.mxu0 0
        %8681 = vmatpush2.bf16.msra.mxu0 %v8387
        %8682 = vmatprep.subr.bf16.mxu0 0
        %8683 = vmatpush2.bf16.msra.mxu0 %v8386
        %8684 = vmatprep.subr.bf16.mxu0 0
        %8685 = vmatpush2.bf16.msra.mxu0 %v8385
        %8686 = vmatprep.subr.bf16.mxu0 0
        %8687 = vmatpush2.bf16.msra.mxu0 %v8384
        %8688 = vmatprep.subr.bf16.mxu0 0
        %8689 = vmatpush2.bf16.msra.mxu0 %v8383
        %8690 = vmatprep.subr.bf16.mxu0 0
        %8691 = vmatpush2.bf16.msra.mxu0 %v8382
        %8692 = vmatprep.subr.bf16.mxu0 0
        %8693 = vmatpush2.bf16.msra.mxu0 %v8381
        %8694 = vmatprep.mubr.bf16.mxu0 %v7550
        %8695 = vmatmul.mubr.bf16.gmra.mxu0 %v7470
        %v8696 = vpop.f32.mrf.mxu0
        %v8697 = vadd.f32 %v8536, %v8696
        %v8698 = vpop.f32.mrf.mxu0
        %v8699 = vpop.f32.mrf.mxu0
        %v8700 = vadd.f32 %v8539, %v8699
        %v8701 = vpop.f32.mrf.mxu0
        %8702 = vmatprep.mubr.bf16.mxu0 %v7551
        %8703 = vmatmul.mubr.bf16.gmra.mxu0 %v7471
        %v8704 = vpop.f32.mrf.mxu0
        %v8705 = vadd.f32 %v8544, %v8704
        %v8706 = vpop.f32.mrf.mxu0
        %v8707 = vpop.f32.mrf.mxu0
        %v8708 = vadd.f32 %v8547, %v8707
        %v8709 = vpop.f32.mrf.mxu0
        %8710 = vmatprep.mubr.bf16.mxu0 %v7552
        %8711 = vmatmul.mubr.bf16.gmra.mxu0 %v7472
        %v8712 = vpop.f32.mrf.mxu0
        %v8713 = vadd.f32 %v8552, %v8712
        %v8714 = vpop.f32.mrf.mxu0
        %v8715 = vpop.f32.mrf.mxu0
        %v8716 = vadd.f32 %v8555, %v8715
        %v8717 = vpop.f32.mrf.mxu0
        %8718 = vmatprep.mubr.bf16.mxu0 %v7553
        %8719 = vmatmul.mubr.bf16.gmra.mxu0 %v7473
        %v8720 = vpop.f32.mrf.mxu0
        %v8721 = vadd.f32 %v8560, %v8720
        %v8722 = vpop.f32.mrf.mxu0
        %v8723 = vpop.f32.mrf.mxu0
        %v8724 = vadd.f32 %v8563, %v8723
        %v8725 = vpop.f32.mrf.mxu0
        %8726 = vmatprep.mubr.bf16.mxu0 %v7554
        %8727 = vmatmul.mubr.bf16.gmra.mxu0 %v7474
        %v8728 = vpop.f32.mrf.mxu0
        %v8729 = vadd.f32 %v8568, %v8728
        %v8730 = vpop.f32.mrf.mxu0
        %v8731 = vpop.f32.mrf.mxu0
        %v8732 = vadd.f32 %v8571, %v8731
        %v8733 = vpop.f32.mrf.mxu0
        %8734 = vmatprep.mubr.bf16.mxu0 %v7555
        %8735 = vmatmul.mubr.bf16.gmra.mxu0 %v7475
        %v8736 = vpop.f32.mrf.mxu0
        %v8737 = vadd.f32 %v8576, %v8736
        %v8738 = vpop.f32.mrf.mxu0
        %v8739 = vpop.f32.mrf.mxu0
        %v8740 = vadd.f32 %v8579, %v8739
        %v8741 = vpop.f32.mrf.mxu0
        %8742 = vmatprep.mubr.bf16.mxu0 %v7556
        %8743 = vmatmul.mubr.bf16.gmra.mxu0 %v7476
        %v8744 = vpop.f32.mrf.mxu0
        %v8745 = vadd.f32 %v8584, %v8744
        %v8746 = vpop.f32.mrf.mxu0
        %v8747 = vpop.f32.mrf.mxu0
        %v8748 = vadd.f32 %v8587, %v8747
        %v8749 = vpop.f32.mrf.mxu0
        %8750 = vmatprep.mubr.bf16.mxu0 %v7557
        %8751 = vmatmul.mubr.bf16.gmra.mxu0 %v7477
        %v8752 = vpop.f32.mrf.mxu0
        %v8753 = vadd.f32 %v8592, %v8752
        %v8754 = vpop.f32.mrf.mxu0
        %v8755 = vpop.f32.mrf.mxu0
        %v8756 = vadd.f32 %v8595, %v8755
        %v8757 = vpop.f32.mrf.mxu0
        %8758 = vmatprep.mubr.bf16.mxu0 %v7558
        %8759 = vmatmul.mubr.bf16.gmra.mxu0 %v7478
        %v8760 = vpop.f32.mrf.mxu0
        %v8761 = vadd.f32 %v8600, %v8760
        %v8762 = vpop.f32.mrf.mxu0
        %v8763 = vpop.f32.mrf.mxu0
        %v8764 = vadd.f32 %v8603, %v8763
        %v8765 = vpop.f32.mrf.mxu0
        %8766 = vmatprep.mubr.bf16.mxu0 %v7559
        %8767 = vmatmul.mubr.bf16.gmra.mxu0 %v7479
        %v8768 = vpop.f32.mrf.mxu0
        %v8769 = vadd.f32 %v8608, %v8768
        %v8770 = vpop.f32.mrf.mxu0
        %v8771 = vpop.f32.mrf.mxu0
        %v8772 = vadd.f32 %v8611, %v8771
        %v8773 = vpop.f32.mrf.mxu0
        %8774 = vmatprep.mubr.bf16.mxu0 %v7560
        %8775 = vmatmul.mubr.bf16.gmra.mxu0 %v7480
        %v8776 = vpop.f32.mrf.mxu0
        %v8777 = vadd.f32 %v8616, %v8776
        %v8778 = vpop.f32.mrf.mxu0
        %v8779 = vpop.f32.mrf.mxu0
        %v8780 = vadd.f32 %v8619, %v8779
        %v8781 = vpop.f32.mrf.mxu0
        %8782 = vmatprep.mubr.bf16.mxu0 %v7561
        %8783 = vmatmul.mubr.bf16.gmra.mxu0 %v7481
        %v8784 = vpop.f32.mrf.mxu0
        %v8785 = vadd.f32 %v8624, %v8784
        %v8786 = vpop.f32.mrf.mxu0
        %v8787 = vpop.f32.mrf.mxu0
        %v8788 = vadd.f32 %v8627, %v8787
        %v8789 = vpop.f32.mrf.mxu0
        %8790 = vmatprep.mubr.bf16.mxu0 %v7562
        %8791 = vmatmul.mubr.bf16.gmra.mxu0 %v7482
        %v8792 = vpop.f32.mrf.mxu0
        %v8793 = vadd.f32 %v8632, %v8792
        %v8794 = vpop.f32.mrf.mxu0
        %v8795 = vpop.f32.mrf.mxu0
        %v8796 = vadd.f32 %v8635, %v8795
        %v8797 = vpop.f32.mrf.mxu0
        %8798 = vmatprep.mubr.bf16.mxu0 %v7563
        %8799 = vmatmul.mubr.bf16.gmra.mxu0 %v7483
        %v8800 = vpop.f32.mrf.mxu0
        %v8801 = vadd.f32 %v8640, %v8800
        %v8802 = vpop.f32.mrf.mxu0
        %v8803 = vpop.f32.mrf.mxu0
        %v8804 = vadd.f32 %v8643, %v8803
        %v8805 = vpop.f32.mrf.mxu0
        %8806 = vmatprep.mubr.bf16.mxu0 %v7564
        %8807 = vmatmul.mubr.bf16.gmra.mxu0 %v7484
        %v8808 = vpop.f32.mrf.mxu0
        %v8809 = vadd.f32 %v8648, %v8808
        %v8810 = vpop.f32.mrf.mxu0
        %v8811 = vpop.f32.mrf.mxu0
        %v8812 = vadd.f32 %v8651, %v8811
        %v8813 = vpop.f32.mrf.mxu0
        %8814 = vmatprep.mubr.bf16.mxu0 %v7565
        %8815 = vmatmul.mubr.bf16.gmra.mxu0 %v7485
        %v8816 = vpop.f32.mrf.mxu0
        %v8817 = vadd.f32 %v8656, %v8816
        %v8818 = vpop.f32.mrf.mxu0
        %v8819 = vpop.f32.mrf.mxu0
        %v8820 = vadd.f32 %v8659, %v8819
        %v8821 = vpop.f32.mrf.mxu0
        %8822 = vdwg.mxu0
        %8823 = vmatprep.subr.bf16.mxu0 0
        %8824 = vmatpush1.bf16.msra.mxu0 %v8396
        %8825 = vmatprep.subr.bf16.mxu0 0
        %8826 = vmatpush1.bf16.msra.mxu0 %v8395
        %8827 = vmatprep.subr.bf16.mxu0 0
        %8828 = vmatpush1.bf16.msra.mxu0 %v8394
        %8829 = vmatprep.subr.bf16.mxu0 0
        %8830 = vmatpush1.bf16.msra.mxu0 %v8393
        %8831 = vmatprep.subr.bf16.mxu0 0
        %8832 = vmatpush1.bf16.msra.mxu0 %v8392
        %8833 = vmatprep.subr.bf16.mxu0 0
        %8834 = vmatpush1.bf16.msra.mxu0 %v8391
        %8835 = vmatprep.subr.bf16.mxu0 0
        %8836 = vmatpush1.bf16.msra.mxu0 %v8390
        %8837 = vmatprep.subr.bf16.mxu0 0
        %8838 = vmatpush1.bf16.msra.mxu0 %v8389
        %8839 = vmatprep.subr.bf16.mxu0 0
        %8840 = vmatpush2.bf16.msra.mxu0 %v8404
        %8841 = vmatprep.subr.bf16.mxu0 0
        %8842 = vmatpush2.bf16.msra.mxu0 %v8403
        %8843 = vmatprep.subr.bf16.mxu0 0
        %8844 = vmatpush2.bf16.msra.mxu0 %v8402
        %8845 = vmatprep.subr.bf16.mxu0 0
        %8846 = vmatpush2.bf16.msra.mxu0 %v8401
        %8847 = vmatprep.subr.bf16.mxu0 0
        %8848 = vmatpush2.bf16.msra.mxu0 %v8400
        %8849 = vmatprep.subr.bf16.mxu0 0
        %8850 = vmatpush2.bf16.msra.mxu0 %v8399
        %8851 = vmatprep.subr.bf16.mxu0 0
        %8852 = vmatpush2.bf16.msra.mxu0 %v8398
        %8853 = vmatprep.subr.bf16.mxu0 0
        %8854 = vmatpush2.bf16.msra.mxu0 %v8397
        %8855 = vmatprep.mubr.bf16.mxu0 %v7678
        %8856 = vmatmul.mubr.bf16.gmra.mxu0 %v7614
        %v8857 = vpop.f32.mrf.mxu0
        %v8858 = vadd.f32 %v8697, %v8857
        %v8859 = vpop.f32.mrf.mxu0
        %v8860 = vpop.f32.mrf.mxu0
        %v8861 = vadd.f32 %v8700, %v8860
        %v8862 = vpop.f32.mrf.mxu0
        %8863 = vmatprep.mubr.bf16.mxu0 %v7679
        %8864 = vmatmul.mubr.bf16.gmra.mxu0 %v7615
        %v8865 = vpop.f32.mrf.mxu0
        %v8866 = vadd.f32 %v8705, %v8865
        %v8867 = vpop.f32.mrf.mxu0
        %v8868 = vpop.f32.mrf.mxu0
        %v8869 = vadd.f32 %v8708, %v8868
        %v8870 = vpop.f32.mrf.mxu0
        %8871 = vmatprep.mubr.bf16.mxu0 %v7680
        %8872 = vmatmul.mubr.bf16.gmra.mxu0 %v7616
        %v8873 = vpop.f32.mrf.mxu0
        %v8874 = vadd.f32 %v8713, %v8873
        %v8875 = vpop.f32.mrf.mxu0
        %v8876 = vpop.f32.mrf.mxu0
        %v8877 = vadd.f32 %v8716, %v8876
        %v8878 = vpop.f32.mrf.mxu0
        %8879 = vmatprep.mubr.bf16.mxu0 %v7681
        %8880 = vmatmul.mubr.bf16.gmra.mxu0 %v7617
        %v8881 = vpop.f32.mrf.mxu0
        %v8882 = vadd.f32 %v8721, %v8881
        %v8883 = vpop.f32.mrf.mxu0
        %v8884 = vpop.f32.mrf.mxu0
        %v8885 = vadd.f32 %v8724, %v8884
        %v8886 = vpop.f32.mrf.mxu0
        %8887 = vmatprep.mubr.bf16.mxu0 %v7682
        %8888 = vmatmul.mubr.bf16.gmra.mxu0 %v7618
        %v8889 = vpop.f32.mrf.mxu0
        %v8890 = vadd.f32 %v8729, %v8889
        %v8891 = vpop.f32.mrf.mxu0
        %v8892 = vpop.f32.mrf.mxu0
        %v8893 = vadd.f32 %v8732, %v8892
        %v8894 = vpop.f32.mrf.mxu0
        %8895 = vmatprep.mubr.bf16.mxu0 %v7683
        %8896 = vmatmul.mubr.bf16.gmra.mxu0 %v7619
        %v8897 = vpop.f32.mrf.mxu0
        %v8898 = vadd.f32 %v8737, %v8897
        %v8899 = vpop.f32.mrf.mxu0
        %v8900 = vpop.f32.mrf.mxu0
        %v8901 = vadd.f32 %v8740, %v8900
        %v8902 = vpop.f32.mrf.mxu0
        %8903 = vmatprep.mubr.bf16.mxu0 %v7684
        %8904 = vmatmul.mubr.bf16.gmra.mxu0 %v7620
        %v8905 = vpop.f32.mrf.mxu0
        %v8906 = vadd.f32 %v8745, %v8905
        %v8907 = vpop.f32.mrf.mxu0
        %v8908 = vpop.f32.mrf.mxu0
        %v8909 = vadd.f32 %v8748, %v8908
        %v8910 = vpop.f32.mrf.mxu0
        %8911 = vmatprep.mubr.bf16.mxu0 %v7685
        %8912 = vmatmul.mubr.bf16.gmra.mxu0 %v7621
        %v8913 = vpop.f32.mrf.mxu0
        %v8914 = vadd.f32 %v8753, %v8913
        %v8915 = vpop.f32.mrf.mxu0
        %v8916 = vpop.f32.mrf.mxu0
        %v8917 = vadd.f32 %v8756, %v8916
        %v8918 = vpop.f32.mrf.mxu0
        %8919 = vmatprep.mubr.bf16.mxu0 %v7686
        %8920 = vmatmul.mubr.bf16.gmra.mxu0 %v7622
        %v8921 = vpop.f32.mrf.mxu0
        %v8922 = vadd.f32 %v8761, %v8921
        %v8923 = vpop.f32.mrf.mxu0
        %v8924 = vpop.f32.mrf.mxu0
        %v8925 = vadd.f32 %v8764, %v8924
        %v8926 = vpop.f32.mrf.mxu0
        %8927 = vmatprep.mubr.bf16.mxu0 %v7687
        %8928 = vmatmul.mubr.bf16.gmra.mxu0 %v7623
        %v8929 = vpop.f32.mrf.mxu0
        %v8930 = vadd.f32 %v8769, %v8929
        %v8931 = vpop.f32.mrf.mxu0
        %v8932 = vpop.f32.mrf.mxu0
        %v8933 = vadd.f32 %v8772, %v8932
        %v8934 = vpop.f32.mrf.mxu0
        %8935 = vmatprep.mubr.bf16.mxu0 %v7688
        %8936 = vmatmul.mubr.bf16.gmra.mxu0 %v7624
        %v8937 = vpop.f32.mrf.mxu0
        %v8938 = vadd.f32 %v8777, %v8937
        %v8939 = vpop.f32.mrf.mxu0
        %v8940 = vpop.f32.mrf.mxu0
        %v8941 = vadd.f32 %v8780, %v8940
        %v8942 = vpop.f32.mrf.mxu0
        %8943 = vmatprep.mubr.bf16.mxu0 %v7689
        %8944 = vmatmul.mubr.bf16.gmra.mxu0 %v7625
        %v8945 = vpop.f32.mrf.mxu0
        %v8946 = vadd.f32 %v8785, %v8945
        %v8947 = vpop.f32.mrf.mxu0
        %v8948 = vpop.f32.mrf.mxu0
        %v8949 = vadd.f32 %v8788, %v8948
        %v8950 = vpop.f32.mrf.mxu0
        %8951 = vmatprep.mubr.bf16.mxu0 %v7690
        %8952 = vmatmul.mubr.bf16.gmra.mxu0 %v7626
        %v8953 = vpop.f32.mrf.mxu0
        %v8954 = vadd.f32 %v8793, %v8953
        %v8955 = vpop.f32.mrf.mxu0
        %v8956 = vpop.f32.mrf.mxu0
        %v8957 = vadd.f32 %v8796, %v8956
        %v8958 = vpop.f32.mrf.mxu0
        %8959 = vmatprep.mubr.bf16.mxu0 %v7691
        %8960 = vmatmul.mubr.bf16.gmra.mxu0 %v7627
        %v8961 = vpop.f32.mrf.mxu0
        %v8962 = vadd.f32 %v8801, %v8961
        %v8963 = vpop.f32.mrf.mxu0
        %v8964 = vpop.f32.mrf.mxu0
        %v8965 = vadd.f32 %v8804, %v8964
        %v8966 = vpop.f32.mrf.mxu0
        %8967 = vmatprep.mubr.bf16.mxu0 %v7692
        %8968 = vmatmul.mubr.bf16.gmra.mxu0 %v7628
        %v8969 = vpop.f32.mrf.mxu0
        %v8970 = vadd.f32 %v8809, %v8969
        %v8971 = vpop.f32.mrf.mxu0
        %v8972 = vpop.f32.mrf.mxu0
        %v8973 = vadd.f32 %v8812, %v8972
        %v8974 = vpop.f32.mrf.mxu0
        %8975 = vmatprep.mubr.bf16.mxu0 %v7693
        %8976 = vmatmul.mubr.bf16.gmra.mxu0 %v7629
        %v8977 = vpop.f32.mrf.mxu0
        %v8978 = vadd.f32 %v8817, %v8977
        %v8979 = vpop.f32.mrf.mxu0
        %v8980 = vpop.f32.mrf.mxu0
        %v8981 = vadd.f32 %v8820, %v8980
        %v8982 = vpop.f32.mrf.mxu0
        %8983 = vdwg.mxu0
        %8984 = vmatprep.subr.bf16.mxu0 0
        %8985 = vmatpush1.bf16.msra.mxu0 %v8412
        %8986 = vmatprep.subr.bf16.mxu0 0
        %8987 = vmatpush1.bf16.msra.mxu0 %v8411
        %8988 = vmatprep.subr.bf16.mxu0 0
        %8989 = vmatpush1.bf16.msra.mxu0 %v8410
        %8990 = vmatprep.subr.bf16.mxu0 0
        %8991 = vmatpush1.bf16.msra.mxu0 %v8409
        %8992 = vmatprep.subr.bf16.mxu0 0
        %8993 = vmatpush1.bf16.msra.mxu0 %v8408
        %8994 = vmatprep.subr.bf16.mxu0 0
        %8995 = vmatpush1.bf16.msra.mxu0 %v8407
        %8996 = vmatprep.subr.bf16.mxu0 0
        %8997 = vmatpush1.bf16.msra.mxu0 %v8406
        %8998 = vmatprep.subr.bf16.mxu0 0
        %8999 = vmatpush1.bf16.msra.mxu0 %v8405
        %9000 = vmatprep.subr.bf16.mxu0 0
        %9001 = vmatpush2.bf16.msra.mxu0 %v8420
        %9002 = vmatprep.subr.bf16.mxu0 0
        %9003 = vmatpush2.bf16.msra.mxu0 %v8419
        %9004 = vmatprep.subr.bf16.mxu0 0
        %9005 = vmatpush2.bf16.msra.mxu0 %v8418
        %9006 = vmatprep.subr.bf16.mxu0 0
        %9007 = vmatpush2.bf16.msra.mxu0 %v8417
        %9008 = vmatprep.subr.bf16.mxu0 0
        %9009 = vmatpush2.bf16.msra.mxu0 %v8416
        %9010 = vmatprep.subr.bf16.mxu0 0
        %9011 = vmatpush2.bf16.msra.mxu0 %v8415
        %9012 = vmatprep.subr.bf16.mxu0 0
        %9013 = vmatpush2.bf16.msra.mxu0 %v8414
        %9014 = vmatprep.subr.bf16.mxu0 0
        %9015 = vmatpush2.bf16.msra.mxu0 %v8413
        %9016 = vmatprep.mubr.bf16.mxu0 %v7822
        %9017 = vmatmul.mubr.bf16.gmra.mxu0 %v7758
        %v9018 = vpop.f32.mrf.mxu0
        %v9019 = vadd.f32 %v8858, %v9018
        %v9020 = vpop.f32.mrf.mxu0
        %v9021 = vpop.f32.mrf.mxu0
        %v9022 = vadd.f32 %v8861, %v9021
        %v9023 = vpop.f32.mrf.mxu0
        %9024 = vmatprep.mubr.bf16.mxu0 %v7823
        %9025 = vmatmul.mubr.bf16.gmra.mxu0 %v7759
        %v9026 = vpop.f32.mrf.mxu0
        %v9027 = vadd.f32 %v8866, %v9026
        %v9028 = vpop.f32.mrf.mxu0
        %v9029 = vpop.f32.mrf.mxu0
        %v9030 = vadd.f32 %v8869, %v9029
        %v9031 = vpop.f32.mrf.mxu0
        %9032 = vmatprep.mubr.bf16.mxu0 %v7824
        %9033 = vmatmul.mubr.bf16.gmra.mxu0 %v7760
        %v9034 = vpop.f32.mrf.mxu0
        %v9035 = vadd.f32 %v8874, %v9034
        %v9036 = vpop.f32.mrf.mxu0
        %v9037 = vpop.f32.mrf.mxu0
        %v9038 = vadd.f32 %v8877, %v9037
        %v9039 = vpop.f32.mrf.mxu0
        %9040 = vmatprep.mubr.bf16.mxu0 %v7825
        %9041 = vmatmul.mubr.bf16.gmra.mxu0 %v7761
        %v9042 = vpop.f32.mrf.mxu0
        %v9043 = vadd.f32 %v8882, %v9042
        %v9044 = vpop.f32.mrf.mxu0
        %v9045 = vpop.f32.mrf.mxu0
        %v9046 = vadd.f32 %v8885, %v9045
        %v9047 = vpop.f32.mrf.mxu0
        %9048 = vmatprep.mubr.bf16.mxu0 %v7826
        %9049 = vmatmul.mubr.bf16.gmra.mxu0 %v7762
        %v9050 = vpop.f32.mrf.mxu0
        %v9051 = vadd.f32 %v8890, %v9050
        %v9052 = vpop.f32.mrf.mxu0
        %v9053 = vpop.f32.mrf.mxu0
        %v9054 = vadd.f32 %v8893, %v9053
        %v9055 = vpop.f32.mrf.mxu0
        %9056 = vmatprep.mubr.bf16.mxu0 %v7827
        %9057 = vmatmul.mubr.bf16.gmra.mxu0 %v7763
        %v9058 = vpop.f32.mrf.mxu0
        %v9059 = vadd.f32 %v8898, %v9058
        %v9060 = vpop.f32.mrf.mxu0
        %v9061 = vpop.f32.mrf.mxu0
        %v9062 = vadd.f32 %v8901, %v9061
        %v9063 = vpop.f32.mrf.mxu0
        %9064 = vmatprep.mubr.bf16.mxu0 %v7828
        %9065 = vmatmul.mubr.bf16.gmra.mxu0 %v7764
        %v9066 = vpop.f32.mrf.mxu0
        %v9067 = vadd.f32 %v8906, %v9066
        %v9068 = vpop.f32.mrf.mxu0
        %v9069 = vpop.f32.mrf.mxu0
        %v9070 = vadd.f32 %v8909, %v9069
        %v9071 = vpop.f32.mrf.mxu0
        %9072 = vmatprep.mubr.bf16.mxu0 %v7829
        %9073 = vmatmul.mubr.bf16.gmra.mxu0 %v7765
        %v9074 = vpop.f32.mrf.mxu0
        %v9075 = vadd.f32 %v8914, %v9074
        %v9076 = vpop.f32.mrf.mxu0
        %v9077 = vpop.f32.mrf.mxu0
        %v9078 = vadd.f32 %v8917, %v9077
        %v9079 = vpop.f32.mrf.mxu0
        %9080 = vmatprep.mubr.bf16.mxu0 %v7830
        %9081 = vmatmul.mubr.bf16.gmra.mxu0 %v7766
        %v9082 = vpop.f32.mrf.mxu0
        %v9083 = vadd.f32 %v8922, %v9082
        %v9084 = vpop.f32.mrf.mxu0
        %v9085 = vpop.f32.mrf.mxu0
        %v9086 = vadd.f32 %v8925, %v9085
        %v9087 = vpop.f32.mrf.mxu0
        %9088 = vmatprep.mubr.bf16.mxu0 %v7831
        %9089 = vmatmul.mubr.bf16.gmra.mxu0 %v7767
        %v9090 = vpop.f32.mrf.mxu0
        %v9091 = vadd.f32 %v8930, %v9090
        %v9092 = vpop.f32.mrf.mxu0
        %v9093 = vpop.f32.mrf.mxu0
        %v9094 = vadd.f32 %v8933, %v9093
        %v9095 = vpop.f32.mrf.mxu0
        %9096 = vmatprep.mubr.bf16.mxu0 %v7832
        %9097 = vmatmul.mubr.bf16.gmra.mxu0 %v7768
        %v9098 = vpop.f32.mrf.mxu0
        %v9099 = vadd.f32 %v8938, %v9098
        %v9100 = vpop.f32.mrf.mxu0
        %v9101 = vpop.f32.mrf.mxu0
        %v9102 = vadd.f32 %v8941, %v9101
        %v9103 = vpop.f32.mrf.mxu0
        %9104 = vmatprep.mubr.bf16.mxu0 %v7833
        %9105 = vmatmul.mubr.bf16.gmra.mxu0 %v7769
        %v9106 = vpop.f32.mrf.mxu0
        %v9107 = vadd.f32 %v8946, %v9106
        %v9108 = vpop.f32.mrf.mxu0
        %v9109 = vpop.f32.mrf.mxu0
        %v9110 = vadd.f32 %v8949, %v9109
        %v9111 = vpop.f32.mrf.mxu0
        %9112 = vmatprep.mubr.bf16.mxu0 %v7834
        %9113 = vmatmul.mubr.bf16.gmra.mxu0 %v7770
        %v9114 = vpop.f32.mrf.mxu0
        %v9115 = vadd.f32 %v8954, %v9114
        %v9116 = vpop.f32.mrf.mxu0
        %v9117 = vpop.f32.mrf.mxu0
        %v9118 = vadd.f32 %v8957, %v9117
        %v9119 = vpop.f32.mrf.mxu0
        %9120 = vmatprep.mubr.bf16.mxu0 %v7835
        %9121 = vmatmul.mubr.bf16.gmra.mxu0 %v7771
        %v9122 = vpop.f32.mrf.mxu0
        %v9123 = vadd.f32 %v8962, %v9122
        %v9124 = vpop.f32.mrf.mxu0
        %v9125 = vpop.f32.mrf.mxu0
        %v9126 = vadd.f32 %v8965, %v9125
        %v9127 = vpop.f32.mrf.mxu0
        %9128 = vmatprep.mubr.bf16.mxu0 %v7836
        %9129 = vmatmul.mubr.bf16.gmra.mxu0 %v7772
        %v9130 = vpop.f32.mrf.mxu0
        %v9131 = vadd.f32 %v8970, %v9130
        %v9132 = vpop.f32.mrf.mxu0
        %v9133 = vpop.f32.mrf.mxu0
        %v9134 = vadd.f32 %v8973, %v9133
        %v9135 = vpop.f32.mrf.mxu0
        %9136 = vmatprep.mubr.bf16.mxu0 %v7837
        %9137 = vmatmul.mubr.bf16.gmra.mxu0 %v7773
        %v9138 = vpop.f32.mrf.mxu0
        %v9139 = vadd.f32 %v8978, %v9138
        %v9140 = vpop.f32.mrf.mxu0
        %v9141 = vpop.f32.mrf.mxu0
        %v9142 = vadd.f32 %v8981, %v9141
        %v9143 = vpop.f32.mrf.mxu0
        %9144 = vdwg.mxu0
        %9145 = vmatprep.subr.bf16.mxu0 0
        %9146 = vmatpush1.bf16.msra.mxu0 %v8428
        %9147 = vmatprep.subr.bf16.mxu0 0
        %9148 = vmatpush1.bf16.msra.mxu0 %v8427
        %9149 = vmatprep.subr.bf16.mxu0 0
        %9150 = vmatpush1.bf16.msra.mxu0 %v8426
        %9151 = vmatprep.subr.bf16.mxu0 0
        %9152 = vmatpush1.bf16.msra.mxu0 %v8425
        %9153 = vmatprep.subr.bf16.mxu0 0
        %9154 = vmatpush1.bf16.msra.mxu0 %v8424
        %9155 = vmatprep.subr.bf16.mxu0 0
        %9156 = vmatpush1.bf16.msra.mxu0 %v8423
        %9157 = vmatprep.subr.bf16.mxu0 0
        %9158 = vmatpush1.bf16.msra.mxu0 %v8422
        %9159 = vmatprep.subr.bf16.mxu0 0
        %9160 = vmatpush1.bf16.msra.mxu0 %v8421
        %9161 = vmatprep.subr.bf16.mxu0 0
        %9162 = vmatpush2.bf16.msra.mxu0 0
        %9163 = vmatprep.subr.bf16.mxu0 0
        %9164 = vmatpush2.bf16.msra.mxu0 0
        %9165 = vmatprep.subr.bf16.mxu0 0
        %9166 = vmatpush2.bf16.msra.mxu0 0
        %9167 = vmatprep.subr.bf16.mxu0 0
        %9168 = vmatpush2.bf16.msra.mxu0 0
        %9169 = vmatprep.subr.bf16.mxu0 0
        %9170 = vmatpush2.bf16.msra.mxu0 0
        %9171 = vmatprep.subr.bf16.mxu0 0
        %9172 = vmatpush2.bf16.msra.mxu0 0
        %9173 = vmatprep.subr.bf16.mxu0 0
        %9174 = vmatpush2.bf16.msra.mxu0 0
        %9175 = vmatprep.subr.bf16.mxu0 0
        %9176 = vmatpush2.bf16.msra.mxu0 0
        %9177 = vmatprep.mubr.bf16.mxu0 0
        %9178 = vmatmul.mubr.bf16.gmra.mxu0 %v7886
        %v9179 = vpop.f32.mrf.mxu0
        %v9180 = vadd.f32 %v9019, %v9179
        %v9181 = vpop.f32.mrf.mxu0
        %v9182 = vpop.f32.mrf.mxu0
        %v9183 = vadd.f32 %v9022, %v9182
        %v9184 = vpop.f32.mrf.mxu0
        %9185 = vmatprep.mubr.bf16.mxu0 0
        %9186 = vmatmul.mubr.bf16.gmra.mxu0 %v7887
        %v9187 = vpop.f32.mrf.mxu0
        %v9188 = vadd.f32 %v9027, %v9187
        %v9189 = vpop.f32.mrf.mxu0
        %v9190 = vpop.f32.mrf.mxu0
        %v9191 = vadd.f32 %v9030, %v9190
        %v9192 = vpop.f32.mrf.mxu0
        %9193 = vmatprep.mubr.bf16.mxu0 0
        %9194 = vmatmul.mubr.bf16.gmra.mxu0 %v7888
        %v9195 = vpop.f32.mrf.mxu0
        %v9196 = vadd.f32 %v9035, %v9195
        %v9197 = vpop.f32.mrf.mxu0
        %v9198 = vpop.f32.mrf.mxu0
        %v9199 = vadd.f32 %v9038, %v9198
        %v9200 = vpop.f32.mrf.mxu0
        %9201 = vmatprep.mubr.bf16.mxu0 0
        %9202 = vmatmul.mubr.bf16.gmra.mxu0 %v7889
        %v9203 = vpop.f32.mrf.mxu0
        %v9204 = vadd.f32 %v9043, %v9203
        %v9205 = vpop.f32.mrf.mxu0
        %v9206 = vpop.f32.mrf.mxu0
        %v9207 = vadd.f32 %v9046, %v9206
        %v9208 = vpop.f32.mrf.mxu0
        %9209 = vmatprep.mubr.bf16.mxu0 0
        %9210 = vmatmul.mubr.bf16.gmra.mxu0 %v7890
        %v9211 = vpop.f32.mrf.mxu0
        %v9212 = vadd.f32 %v9051, %v9211
        %v9213 = vpop.f32.mrf.mxu0
        %v9214 = vpop.f32.mrf.mxu0
        %v9215 = vadd.f32 %v9054, %v9214
        %v9216 = vpop.f32.mrf.mxu0
        %9217 = vmatprep.mubr.bf16.mxu0 0
        %9218 = vmatmul.mubr.bf16.gmra.mxu0 %v7891
        %v9219 = vpop.f32.mrf.mxu0
        %v9220 = vadd.f32 %v9059, %v9219
        %v9221 = vpop.f32.mrf.mxu0
        %v9222 = vpop.f32.mrf.mxu0
        %v9223 = vadd.f32 %v9062, %v9222
        %v9224 = vpop.f32.mrf.mxu0
        %9225 = vmatprep.mubr.bf16.mxu0 0
        %9226 = vmatmul.mubr.bf16.gmra.mxu0 %v7892
        %v9227 = vpop.f32.mrf.mxu0
        %v9228 = vadd.f32 %v9067, %v9227
        %v9229 = vpop.f32.mrf.mxu0
        %v9230 = vpop.f32.mrf.mxu0
        %v9231 = vadd.f32 %v9070, %v9230
        %v9232 = vpop.f32.mrf.mxu0
        %9233 = vmatprep.mubr.bf16.mxu0 0
        %9234 = vmatmul.mubr.bf16.gmra.mxu0 %v7893
        %v9235 = vpop.f32.mrf.mxu0
        %v9236 = vadd.f32 %v9075, %v9235
        %v9237 = vpop.f32.mrf.mxu0
        %v9238 = vpop.f32.mrf.mxu0
        %v9239 = vadd.f32 %v9078, %v9238
        %v9240 = vpop.f32.mrf.mxu0
        %9241 = vmatprep.mubr.bf16.mxu0 0
        %9242 = vmatmul.mubr.bf16.gmra.mxu0 %v7894
        %v9243 = vpop.f32.mrf.mxu0
        %v9244 = vadd.f32 %v9083, %v9243
        %v9245 = vpop.f32.mrf.mxu0
        %v9246 = vpop.f32.mrf.mxu0
        %v9247 = vadd.f32 %v9086, %v9246
        %v9248 = vpop.f32.mrf.mxu0
        %9249 = vmatprep.mubr.bf16.mxu0 0
        %9250 = vmatmul.mubr.bf16.gmra.mxu0 %v7895
        %v9251 = vpop.f32.mrf.mxu0
        %v9252 = vadd.f32 %v9091, %v9251
        %v9253 = vpop.f32.mrf.mxu0
        %v9254 = vpop.f32.mrf.mxu0
        %v9255 = vadd.f32 %v9094, %v9254
        %v9256 = vpop.f32.mrf.mxu0
        %9257 = vmatprep.mubr.bf16.mxu0 0
        %9258 = vmatmul.mubr.bf16.gmra.mxu0 %v7896
        %v9259 = vpop.f32.mrf.mxu0
        %v9260 = vadd.f32 %v9099, %v9259
        %v9261 = vpop.f32.mrf.mxu0
        %v9262 = vpop.f32.mrf.mxu0
        %v9263 = vadd.f32 %v9102, %v9262
        %v9264 = vpop.f32.mrf.mxu0
        %9265 = vmatprep.mubr.bf16.mxu0 0
        %9266 = vmatmul.mubr.bf16.gmra.mxu0 %v7897
        %v9267 = vpop.f32.mrf.mxu0
        %v9268 = vadd.f32 %v9107, %v9267
        %v9269 = vpop.f32.mrf.mxu0
        %v9270 = vpop.f32.mrf.mxu0
        %v9271 = vadd.f32 %v9110, %v9270
        %v9272 = vpop.f32.mrf.mxu0
        %9273 = vmatprep.mubr.bf16.mxu0 0
        %9274 = vmatmul.mubr.bf16.gmra.mxu0 %v7898
        %v9275 = vpop.f32.mrf.mxu0
        %v9276 = vadd.f32 %v9115, %v9275
        %v9277 = vpop.f32.mrf.mxu0
        %v9278 = vpop.f32.mrf.mxu0
        %v9279 = vadd.f32 %v9118, %v9278
        %v9280 = vpop.f32.mrf.mxu0
        %9281 = vmatprep.mubr.bf16.mxu0 0
        %9282 = vmatmul.mubr.bf16.gmra.mxu0 %v7899
        %v9283 = vpop.f32.mrf.mxu0
        %v9284 = vadd.f32 %v9123, %v9283
        %v9285 = vpop.f32.mrf.mxu0
        %v9286 = vpop.f32.mrf.mxu0
        %v9287 = vadd.f32 %v9126, %v9286
        %v9288 = vpop.f32.mrf.mxu0
        %9289 = vmatprep.mubr.bf16.mxu0 0
        %9290 = vmatmul.mubr.bf16.gmra.mxu0 %v7900
        %v9291 = vpop.f32.mrf.mxu0
        %v9292 = vadd.f32 %v9131, %v9291
        %v9293 = vpop.f32.mrf.mxu0
        %v9294 = vpop.f32.mrf.mxu0
        %v9295 = vadd.f32 %v9134, %v9294
        %v9296 = vpop.f32.mrf.mxu0
        %9297 = vmatprep.mubr.bf16.mxu0 0
        %9298 = vmatmul.mubr.bf16.gmra.mxu0 %v7901
        %v9299 = vpop.f32.mrf.mxu0
        %v9300 = vadd.f32 %v9139, %v9299
        %v9301 = vpop.f32.mrf.mxu0
        %v9302 = vpop.f32.mrf.mxu0
        %v9303 = vadd.f32 %v9142, %v9302
        %v9304 = vpop.f32.mrf.mxu0
        %9305 = vdwg.mxu0
        %v9306 = vadd.f32 %v9180, %v9183
        %v9307 = vadd.f32 %v9306, %v9188
        %v9308 = vadd.f32 %v9307, %v9191
        %v9309 = vadd.f32 %v9308, %v9196
        %v9310 = vadd.f32 %v9309, %v9199
        %v9311 = vadd.f32 %v9310, %v9204
        %v9312 = vadd.f32 %v9311, %v9207
        %v9313 = vadd.f32 %v9312, %v9212
        %v9314 = vadd.f32 %v9313, %v9215
        %v9315 = vadd.f32 %v9314, %v9220
        %v9316 = vadd.f32 %v9315, %v9223
        %v9317 = vadd.f32 %v9316, %v9228
        %v9318 = vadd.f32 %v9317, %v9231
        %v9319 = vadd.f32 %v9318, %v9236
        %v9320 = vadd.f32 %v9319, %v9239
        %v9321 = vadd.f32 %v9320, %v9244
        %v9322 = vadd.f32 %v9321, %v9247
        %v9323 = vadd.f32 %v9322, %v9252
        %v9324 = vadd.f32 %v9323, %v9255
        %v9325 = vadd.f32 %v9324, %v9260
        %v9326 = vadd.f32 %v9325, %v9263
        %v9327 = vadd.f32 %v9326, %v9268
        %v9328 = vadd.f32 %v9327, %v9271
        %v9329 = vadd.f32 %v9328, %v9276
        %v9330 = vadd.f32 %v9329, %v9279
        %v9331 = vadd.f32 %v9330, %v9284
        %v9332 = vadd.f32 %v9331, %v9287
        %v9333 = vadd.f32 %v9332, %v9292
        %v9334 = vadd.f32 %v9333, %v9295
        %v9335 = vadd.f32 %v9334, %v9300
        %v9336 = vadd.f32 %v9335, %v9303
        %v9337 = vrot.slane %v9336, 4
        %v9338 = vadd.f32 %v9336, %v9337
        %v9339 = vrot.slane %v9338, 2
        %v9340 = vadd.f32 %v9338, %v9339
        %v9341 = vrot.slane %v9340, 1
        %v9342 = vadd.f32 %v9340, %v9341
        %v9343 = vrcp.pop 256.0
        %v9344 = vmul.f32 %v9342, %v9343
        %v9345 = vld [vmem:[%s5] sm:$0x1]
        %v9346 = vmul.f32 %v9344, %v9345
        %vm9347 = vcmask 1040384
        %v9348 = vsel %vm9347, %v9346, 0.0
        %9349 = vadd.xlane.f32.xlu0 %v9348
        %v9350 = vpop.xlane.xlu0 %9349
        %v9351 = vrot.slane %v9350, 4
        %v9352 = vadd.f32 %v9350, %v9351
        %v9353 = vrot.slane %v9352, 2
        %v9354 = vadd.f32 %v9352, %v9353
        %v9355 = vrot.slane %v9354, 1
        %v9356 = vadd.f32 %v9354, %v9355
        %s9357 = vtos %v9356
        %v9358 = vld [vmem:[#allocation3] sm:$0x1]
        %s9359 = vtos %v9358
        %s9360 = sadd.f32 %s9357, %s9359
        %s9361 = smax.f32 %s9360, 0.0
        %v9362 = vld [vmem:[%s7] sm:$0x1]
        %v9363 = vstv %s9361
        %v9364 = vmul.f32 %v9363, %v9362
        %v9365 = vld [vmem:[%s8] sm:$0x1]
        %v9366 = vadd.f32 %v9364, %v9365
        %v9367 = vrcp.pop 6.0
        %v9368 = vmul.f32 %v9366, %v9367
        %v9369 = vadd.f32 %v9368, 0.5
        %v9370 = vmax.f32 %v9369, 0.0
        %v9371 = vmin.f32 %v9370, 1.0
        %v9373 = vlaneseq
        %v9374 = vshrl.u32 %v9373, 7
        %v9375 = vsub.s32 0, %v9374
        %v9376 = vrot.slane %v9371, %v9375
        %v9378 = vmul.f32 %v9180, %v9376
        %v9379 = vmul.f32 %v9183, %v9376
        %v9380 = vmul.f32 %v9188, %v9376
        %v9381 = vmul.f32 %v9191, %v9376
        %v9382 = vmul.f32 %v9196, %v9376
        %v9383 = vmul.f32 %v9199, %v9376
        %v9384 = vmul.f32 %v9204, %v9376
        %v9385 = vmul.f32 %v9207, %v9376
        %v9386 = vmul.f32 %v9212, %v9376
        %v9387 = vmul.f32 %v9215, %v9376
        %v9388 = vmul.f32 %v9220, %v9376
        %v9389 = vmul.f32 %v9223, %v9376
        %v9390 = vmul.f32 %v9228, %v9376
        %v9391 = vmul.f32 %v9231, %v9376
        %v9392 = vmul.f32 %v9236, %v9376
        %v9393 = vmul.f32 %v9239, %v9376
        %v9394 = vmul.f32 %v9244, %v9376
        %v9395 = vmul.f32 %v9247, %v9376
        %v9396 = vmul.f32 %v9252, %v9376
        %v9397 = vmul.f32 %v9255, %v9376
        %v9398 = vmul.f32 %v9260, %v9376
        %v9399 = vmul.f32 %v9263, %v9376
        %v9400 = vmul.f32 %v9268, %v9376
        %v9401 = vmul.f32 %v9271, %v9376
        %v9402 = vmul.f32 %v9276, %v9376
        %v9403 = vmul.f32 %v9279, %v9376
        %v9404 = vmul.f32 %v9284, %v9376
        %v9405 = vmul.f32 %v9287, %v9376
        %v9406 = vmul.f32 %v9292, %v9376
        %v9407 = vmul.f32 %v9295, %v9376
        %v9408 = vmul.f32 %v9300, %v9376
        %v9409 = vmul.f32 %v9303, %v9376
        %v9410 = vadd.f32 %v9378, %v503
        %v9411 = vadd.f32 %v9379, %v504
        %v9412 = vadd.f32 %v9380, %v505
        %v9413 = vadd.f32 %v9381, %v506
        %v9414 = vadd.f32 %v9382, %v507
        %v9415 = vadd.f32 %v9383, %v508
        %v9416 = vadd.f32 %v9384, %v509
        %v9417 = vadd.f32 %v9385, %v510
        %v9418 = vadd.f32 %v9386, %v511
        %v9419 = vadd.f32 %v9387, %v512
        %v9420 = vadd.f32 %v9388, %v513
        %v9421 = vadd.f32 %v9389, %v514
        %v9422 = vadd.f32 %v9390, %v515
        %v9423 = vadd.f32 %v9391, %v516
        %v9424 = vadd.f32 %v9392, %v517
        %v9425 = vadd.f32 %v9393, %v518
        %v9426 = vadd.f32 %v9394, %v519
        %v9427 = vadd.f32 %v9395, %v520
        %v9428 = vadd.f32 %v9396, %v521
        %v9429 = vadd.f32 %v9397, %v522
        %v9430 = vadd.f32 %v9398, %v523
        %v9431 = vadd.f32 %v9399, %v524
        %v9432 = vadd.f32 %v9400, %v525
        %v9433 = vadd.f32 %v9401, %v526
        %v9434 = vadd.f32 %v9402, %v527
        %v9435 = vadd.f32 %v9403, %v528
        %v9436 = vadd.f32 %v9404, %v529
        %v9437 = vadd.f32 %v9405, %v530
        %v9438 = vadd.f32 %v9406, %v531
        %v9439 = vadd.f32 %v9407, %v532
        %v9440 = vadd.f32 %v9408, %v533
        %v9441 = vadd.f32 %v9409, %v534
        %9442 = vst [vmem:[%s381] sm:$0xff] %v9410
        %9443 = vst [vmem:[%s381 + $0x8] sm:$0xff] %v9411
        %9444 = vst [vmem:[%s381 + $0x10] sm:$0xff] %v9412
        %9445 = vst [vmem:[%s381 + $0x18] sm:$0xff] %v9413
        %9446 = vst [vmem:[%s381 + $0x20] sm:$0xff] %v9414
        %9447 = vst [vmem:[%s381 + $0x28] sm:$0xff] %v9415
        %9448 = vst [vmem:[%s381 + $0x30] sm:$0xff] %v9416
        %9449 = vst [vmem:[%s381 + $0x38] sm:$0xff] %v9417
        %9450 = vst [vmem:[%s381 + $0x40] sm:$0xff] %v9418
        %9451 = vst [vmem:[%s381 + $0x48] sm:$0xff] %v9419
        %9452 = vst [vmem:[%s381 + $0x50] sm:$0xff] %v9420
        %9453 = vst [vmem:[%s381 + $0x58] sm:$0xff] %v9421
        %9454 = vst [vmem:[%s381 + $0x60] sm:$0xff] %v9422
        %9455 = vst [vmem:[%s381 + $0x68] sm:$0xff] %v9423
        %9456 = vst [vmem:[%s381 + $0x70] sm:$0xff] %v9424
        %9457 = vst [vmem:[%s381 + $0x78] sm:$0xff] %v9425
        %9458 = vst [vmem:[%s381 + $0x80] sm:$0xff] %v9426
        %9459 = vst [vmem:[%s381 + $0x88] sm:$0xff] %v9427
        %9460 = vst [vmem:[%s381 + $0x90] sm:$0xff] %v9428
        %9461 = vst [vmem:[%s381 + $0x98] sm:$0xff] %v9429
        %9462 = vst [vmem:[%s381 + $0xa0] sm:$0xff] %v9430
        %9463 = vst [vmem:[%s381 + $0xa8] sm:$0xff] %v9431
        %9464 = vst [vmem:[%s381 + $0xb0] sm:$0xff] %v9432
        %9465 = vst [vmem:[%s381 + $0xb8] sm:$0xff] %v9433
        %9466 = vst [vmem:[%s381 + $0xc0] sm:$0xff] %v9434
        %9467 = vst [vmem:[%s381 + $0xc8] sm:$0xff] %v9435
        %9468 = vst [vmem:[%s381 + $0xd0] sm:$0xff] %v9436
        %9469 = vst [vmem:[%s381 + $0xd8] sm:$0xff] %v9437
        %9470 = vst [vmem:[%s381 + $0xe0] sm:$0xff] %v9438
        %9471 = vst [vmem:[%s381 + $0xe8] sm:$0xff] %v9439
        %9472 = vst [vmem:[%s381 + $0xf0] sm:$0xff] %v9440
        %9473 = vst [vmem:[%s381 + $0xf8] sm:$0xff] %v9441
        %s9474 = sand.u32 %s231, 1
        %s9475 = scalar_lea.sflag [#allocation6], %s9474
        %s9476 = sand.u32 %s231, 1
        %s9477 = smul.addr %s9476, 256
        %s9478 = scalar_lea.vmem [#allocation10], %s9477
        // Predicated region
        $region69: #{tpu_custom_call.1} parent=55 // pred_check
          %p9479 = pneg %p241
        $region70: #{tpu_custom_call.1} parent=55 // pred_check_branch
          %9481 = sbr.rel (%p9479) target = $region72
        $region71: #{tpu_custom_call.1} parent=55 // pred_region
          %s9483 = ssub.s32 4096, 4096
          %9484 = vsyncadd %s9475, %s9483
          %s9485 = smul.addr %s29, 32
          %s9486 = smul.addr %s9485, 128
          %s9487 = scalar_lea.hbm %s9, %s9486
          %s9488 = sshll.u32 %s9478, 4
          %s9489 = int_to_ptr.vmem [resolvable:$true] %s9488
          %9494 = dma.vmem_to_hbm [thread:$0]  %s9489, 4096, %s9487, %s9475, 128, 128, 8
        $region72: #{tpu_custom_call.1} parent=55 // pred_fallthru
          _
      $region56: #{tpu_custom_call.1} parent=5 // pred_fallthru
        _
      %p9495 = scmp.le.s32.totalorder 2, %s24
      // Predicated region
      $region73: #{tpu_custom_call.1} parent=5 // pred_check
        %p9496 = pneg %p9495
      $region74: #{tpu_custom_call.1} parent=5 // pred_check_branch
        %9498 = sbr.rel (%p9496) target = $region76
      $region75: #{tpu_custom_call.1} parent=5 // pred_region
        %s9499 = ssub.s32 %s24, 2
        // Predicated region
        $region77: #{tpu_custom_call.1} parent=75 // pred_check
          %p9500 = pneg %p247
        $region78: #{tpu_custom_call.1} parent=75 // pred_check_branch
          %9502 = sbr.rel (%p9500) target = $region80
        $region79: #{tpu_custom_call.1} parent=75 // pred_region
          %s9503 = sand.u32 %s232, 1
          %s9504 = scalar_lea.sflag [#allocation6], %s9503
          %s9505 = sand.u32 %s232, 1
          %s9506 = smul.addr %s9505, 256
          %s9507 = scalar_lea.vmem [#allocation10], %s9506
          %9508 = dma.done %s9504, 4096
        $region80: #{tpu_custom_call.1} parent=75 // pred_fallthru
          _
      $region76: #{tpu_custom_call.1} parent=5 // pred_fallthru
        _
    $region6: #{tpu_custom_call.1} parent=1 // loop_footer
      %s28 = sadd.s32 1, %s24
    $region7: #{tpu_custom_call.1} parent=1 // loop_footer_branch
      %23 = sbr.rel target = $region3
    $region8: #{tpu_custom_call.1} parent=1 // loop_exit
      _
    %9509 = vsyncpa [#allocation5], 1
    %s9510 = scalar_lea.sflag [#allocation5], 1
    %9511 = vsyncpa %s9510, 1
    %9512 = vsyncpa [#allocation8], 1
    %9513 = vsyncpa [#allocation6], 1
    %s9514 = scalar_lea.sflag [#allocation6], 1
    %9515 = vsyncpa %s9514, 1

</llo_original>
